<compile_context>
chip_gen: v5e
topology: v5e:2x2
jax: 0.10.0
libtpu: 0.0.40
codegen_flags: <defaults>
</compile_context>

<pallas_src>
import functools

import numpy as np

import jax
import jax.numpy as jnp
from jax.experimental import pallas as pl
from jax.experimental.pallas import tpu as pltpu


# ------------------------- host-side constant builders ---------------------- #

def _tap_masks(h, w):
    """(9, h*w) 0/1 masks: tap t is valid where the shifted neighbour is in-bounds."""
    y, x = np.meshgrid(np.arange(h), np.arange(w), indexing="ij")
    rows = []
    for oy in (-1, 0, 1):
        for ox in (-1, 0, 1):
            ok = (y + oy >= 0) & (y + oy < h) & (x + ox >= 0) & (x + ox < w)
            rows.append(ok.reshape(-1))
    return np.stack(rows).astype(np.float32)


def _pool_select(h, w):
    """(h*w, h*w/4) 0/1 decimation matrix picking the top-left pixel of each 2x2 window."""
    h2, w2 = h // 2, w // 2
    s = np.zeros((h * w, h2 * w2), np.float32)
    oy, ox = np.meshgrid(np.arange(h2), np.arange(w2), indexing="ij")
    s[((2 * oy) * w + 2 * ox).reshape(-1), (oy * w2 + ox).reshape(-1)] = 1.0
    return s


def _up_select(h, w):
    """(h*w, 4*h*w) 0/1 nearest-neighbour 2x upsample matrix."""
    ho, wo = 2 * h, 2 * w
    s = np.zeros((h * w, ho * wo), np.float32)
    y, x = np.meshgrid(np.arange(ho), np.arange(wo), indexing="ij")
    s[((y // 2) * w + (x // 2)).reshape(-1), (y * wo + x).reshape(-1)] = 1.0
    return s


# ------------------------------ fused kernel -------------------------------- #

def _unet_kernel(x_ref,
                 m1_ref, m2_ref, m3_ref,            # tap masks per level (9, hw)
                 p1sel_ref, p2sel_ref,              # pool decimation (hw, hw/4)
                 u2sel_ref, u1sel_ref,              # upsample selection (hw, 4*hw)
                 w_e1a, b_e1a, w_e1b, b_e1b,
                 w_e2a, b_e2a, w_e2b, b_e2b,
                 w_ba, b_ba, w_bb, b_bb,
                 w_d2a, b_d2a, w_d2b, b_d2b,
                 w_d1a, b_d1a, w_d1b, b_d1b,
                 w_out, b_out, w_tf, b_tf,
                 y_ref, t_ref,
                 patch,                              # bf16 (9*(c3+c2), H*W) scratch
                 *, H, W, cin, c1, c2, c3):
    """Whole-UNet forward for one batch element; all activations stay in VMEM."""
    f32, bf16 = jnp.float32, jnp.bfloat16
    H2, W2, H4, W4 = H // 2, W // 2, H // 4, W // 4
    HW, HW2, HW4 = H * W, H2 * W2, H4 * W4

    m1 = m1_ref[...]
    m2 = m2_ref[...]
    m3 = m3_ref[...]

    # tap order matches the host-side mask builder: (oy, ox) row-major
    OFFS = ((-1, -1), (-1, 0), (-1, 1),
            (0, -1), (0, 0), (0, 1),
            (1, -1), (1, 0), (1, 1))

    def im2col(act, masks, h, w, c, row0=0):
        # Write the 9 shifted taps of act (c, h*w) into patch rows
        # [row0, row0 + 9c).  Shifts happen along the flat pixel (lane) axis;
        # the precomputed masks zero out-of-image neighbours (this also kills
        # every position where the circular roll wraps, so roll == zero-padded
        # shift).  Stores are sublane-offset and lane-dense, in bf16.
        hw = h * w
        xb = act.astype(bf16)
        for t, (oy, ox) in enumerate(OFFS):
            s = oy * w + ox
            if s == 0:
                tap = xb                             # centre tap: mask is all-ones
            else:
                tap = jnp.roll(xb, -s, axis=1) * masks[t:t + 1, :]
            patch[row0 + t * c: row0 + (t + 1) * c, 0:hw] = tap

    def conv(w_ref, b_ref, krows, hw):
        # One big-K bf16 MXU matmul with f32 accumulation, N = hw (lane-dense).
        acc = jnp.dot(w_ref[...], patch[0:krows, 0:hw], preferred_element_type=f32)
        return jnp.maximum(acc + b_ref[...], 0.0)     # bias + ReLU in f32

    def maxpool2(act, w, dsel_ref):
        # 2x2 max-pool: pairwise max with the right / lower neighbour (rolls
        # are XLU work), then a precomputed 0/1 decimation matmul picks the
        # top-left of every window.  Row/column wrap only lands on positions
        # the decimation never selects.
        m = jnp.maximum(act, jnp.roll(act, -1, axis=1))
        m = jnp.maximum(m, jnp.roll(m, -w, axis=1))
        return jnp.dot(m.astype(bf16), dsel_ref[...], preferred_element_type=f32)

    def upsample2(act, usel_ref):
        # Nearest-neighbour 2x upsample as a single precomputed 0/1 matmul.
        return jnp.dot(act.astype(bf16), usel_ref[...], preferred_element_type=f32)

    x0 = x_ref[0]                                                   # (cin, HW) f32

    # ------------------------------ encoder ---------------------------------
    im2col(x0, m1, H, W, cin)
    e1 = conv(w_e1a, b_e1a, 9 * cin, HW)                            # (c1, HW)
    im2col(e1, m1, H, W, c1)
    e1 = conv(w_e1b, b_e1b, 9 * c1, HW)

    p1 = maxpool2(e1, W, p1sel_ref)                                 # (c1, HW2)
    im2col(p1, m2, H2, W2, c1)
    e2 = conv(w_e2a, b_e2a, 9 * c1, HW2)                            # (c2, HW2)
    im2col(e2, m2, H2, W2, c2)
    e2 = conv(w_e2b, b_e2b, 9 * c2, HW2)

    # ----------------------------- bottleneck -------------------------------
    p2 = maxpool2(e2, W2, p2sel_ref)                                # (c2, HW4)
    im2col(p2, m3, H4, W4, c2)
    bt = conv(w_ba, b_ba, 9 * c2, HW4)                              # (c3, HW4)
    im2col(bt, m3, H4, W4, c3)
    bt = conv(w_bb, b_bb, 9 * c3, HW4)

    # ------------------------------ decoder ----------------------------------
    # concat-free skips: up part and skip part side by side along K, one matmul
    u2 = upsample2(bt, u2sel_ref)                                   # (c3, HW2)
    im2col(u2, m2, H2, W2, c3, 0)
    im2col(e2, m2, H2, W2, c2, 9 * c3)
    d2 = conv(w_d2a, b_d2a, 9 * (c3 + c2), HW2)                     # (c2, HW2)
    im2col(d2, m2, H2, W2, c2)
    d2 = conv(w_d2b, b_d2b, 9 * c2, HW2)

    u1 = upsample2(d2, u1sel_ref)                                   # (c2, HW)
    im2col(u1, m1, H, W, c2, 0)
    im2col(e1, m1, H, W, c1, 9 * c2)
    d1 = conv(w_d1a, b_d1a, 9 * (c2 + c1), HW)                      # (c1, HW)
    im2col(d1, m1, H, W, c1)
    d1 = conv(w_d1b, b_d1b, 9 * c1, HW)                             # (c1, HW)

    # 1x1-conv segmentation head: lane-dense (n_classes, HW), already NCHW order
    y = jnp.dot(w_out[...], d1.astype(bf16), preferred_element_type=f32)
    y_ref[0] = y + b_out[...]

    # time head: Linear(c3, 8) over the GAP of the bottleneck.  GAP commutes
    # with the linear layer, so compute W @ bt (same matmul pattern as the
    # convs) and reduce over the pixels afterwards.
    tt = jnp.dot(w_tf[...], bt, preferred_element_type=f32)         # (8, HW4)
    t_ref[0] = jnp.mean(tt, axis=1, keepdims=True) + b_tf[...]      # (8, 1)


# ------------------------ parameters (deterministic) ------------------------ #

def init_unet_params(key, in_channels, n_classes, base=8):
    c1, c2, c3 = base, base * 2, base * 4

    def conv_w(k, cin_k, cout):
        fan_in, fan_out = 9 * cin_k, 9 * cout
        bound = float(np.sqrt(6.0 / (fan_in + fan_out)))            # xavier_uniform_
        w = jax.random.uniform(k, (cout, 9 * cin_k), jnp.float32, -bound, bound)
        return w.astype(jnp.bfloat16)                               # bf16 MXU weights

    def conv_b(cout):
        return jnp.full((cout, 1), 0.1, jnp.float32)                # bias = 0.1

    keys = jax.random.split(key, 12)
    params = {
        "enc1a": (conv_w(keys[0], in_channels, c1), conv_b(c1)),
        "enc1b": (conv_w(keys[1], c1, c1), conv_b(c1)),
        "enc2a": (conv_w(keys[2], c1, c2), conv_b(c2)),
        "enc2b": (conv_w(keys[3], c2, c2), conv_b(c2)),
        "bota":  (conv_w(keys[4], c2, c3), conv_b(c3)),
        "botb":  (conv_w(keys[5], c3, c3), conv_b(c3)),
        # decoder 'a' convs consume concat([upsampled, skip]); the weight is
        # stored fused with K = 9*(c_up + c_skip) to match the fused patch.
        "dec2a": (conv_w(keys[6], c3 + c2, c2), conv_b(c2)),
        "dec2b": (conv_w(keys[7], c2, c2), conv_b(c2)),
        "dec1a": (conv_w(keys[8], c2 + c1, c1), conv_b(c1)),
        "dec1b": (conv_w(keys[9], c1, c1), conv_b(c1)),
    }
    # 1x1 output conv, stored (n_classes, c1) for the lane-dense transposed head
    bound = float(np.sqrt(6.0 / (c1 + n_classes)))
    w_out = jax.random.uniform(keys[10], (n_classes, c1), jnp.float32, -bound, bound)
    params["outc"] = (w_out.astype(jnp.bfloat16),
                      jnp.full((n_classes, 1), 0.1, jnp.float32))
    # time head: Linear(c3, 8), weight ~ N(0, 0.01), bias = 0
    w_t = 0.01 * jax.random.normal(keys[11], (8, c3), jnp.float32)
    params["time_fc"] = (w_t, jnp.zeros((8, 1), jnp.float32))
    return params


# ------------------------------ forward pass -------------------------------- #

def unet_trainer_forward(params, x_nchw):
    """Equivalent of UNetTrainer.forward(x): returns (y_hat NCHW, time_hat)."""
    B, cin, H, W = x_nchw.shape
    assert H % 4 == 0 and W % 4 == 0
    c1 = params["enc1a"][0].shape[0]
    c2 = params["enc2a"][0].shape[0]
    c3 = params["bota"][0].shape[0]
    n_classes = params["outc"][0].shape[0]
    H2, W2, H4, W4 = H // 2, W // 2, H // 4, W // 4

    # NCHW is already channel-major: a free reshape gives the lane-dense layout.
    x = x_nchw.reshape(B, cin, H * W).astype(jnp.float32)

    bf = jnp.bfloat16
    consts = [
        jnp.asarray(_tap_masks(H, W), bf),          # m1   (9, H*W)
        jnp.asarray(_tap_masks(H2, W2), bf),        # m2   (9, H*W/4)
        jnp.asarray(_tap_masks(H4, W4), bf),        # m3   (9, H*W/16)
        jnp.asarray(_pool_select(H, W), bf),        # p1sel
        jnp.asarray(_pool_select(H2, W2), bf),      # p2sel
        jnp.asarray(_up_select(H4, W4), bf),        # u2sel
        jnp.asarray(_up_select(H2, W2), bf),        # u1sel
    ]

    flat = [
        *params["enc1a"], *params["enc1b"],
        *params["enc2a"], *params["enc2b"],
        *params["bota"], *params["botb"],
        *params["dec2a"], *params["dec2b"],
        *params["dec1a"], *params["dec1b"],
        *params["outc"], *params["time_fc"],
    ]

    kernel = functools.partial(_unet_kernel, H=H, W=W, cin=cin,
                               c1=c1, c2=c2, c3=c3)

    # constants / weights: full-array blocks, constant index_map -> fetched
    # once and VMEM-resident across the grid (no per-step re-DMA).
    in_specs = [pl.BlockSpec((1, cin, H * W), lambda b: (b, 0, 0))]
    in_specs += [pl.BlockSpec(a.shape, lambda b: (0, 0)) for a in consts + flat]

    out_shape = (jax.ShapeDtypeStruct((B, n_classes, H * W), jnp.float32),
                 jax.ShapeDtypeStruct((B, 8, 1), jnp.float32))
    out_specs = (pl.BlockSpec((1, n_classes, H * W), lambda b: (b, 0, 0)),
                 pl.BlockSpec((1, 8, 1), lambda b: (b, 0, 0)))

    # single bf16 im2col patch scratch, sized for the widest (fused-skip) conv
    scratch_shapes = [pltpu.VMEM((9 * (c3 + c2), H * W), jnp.bfloat16)]

    y_flat, t_col = pl.pallas_call(
        kernel,
        out_shape=out_shape,
        grid=(B,),
        in_specs=in_specs,
        out_specs=out_specs,
        scratch_shapes=scratch_shapes,
        compiler_params=pltpu.CompilerParams(
            dimension_semantics=("parallel",)),      # v7x: one image per TensorCore
    )(x, *consts, *flat)

    # (B, n_classes, H*W) is already NCHW-ordered -> free reshape.
    return y_flat.reshape(B, n_classes, H, W), t_col.reshape(B, 8)


# ---------------------------------- main ------------------------------------ #

if __name__ == "__main__":
    B, C_IN, H, W = 2, 4, 16, 16
    N_CLASSES = 4                                    # 4 rain thresholds
    key = jax.random.PRNGKey(0)
    pkey, xkey = jax.random.split(key)
    params = init_unet_params(pkey, C_IN, N_CLASSES)
    x = jax.random.normal(xkey, (B, C_IN, H, W), jnp.float32)

    fwd = jax.jit(functools.partial(unet_trainer_forward, params))
    y_hat, time_hat = fwd(x)
    jax.block_until_ready((y_hat, time_hat))

    assert y_hat.shape == (B, N_CLASSES, H, W)
    assert time_hat.shape == (B, 8)
    assert y_hat.dtype == jnp.float32 and time_hat.dtype == jnp.float32
    assert bool(jnp.all(jnp.isfinite(y_hat))) and bool(jnp.all(jnp.isfinite(time_hat)))
    print("KERNEL_OK")
</pallas_src>

<mosaic_0001>
module attributes {stable_mosaic.version = 11 : i64} {
  func.func @_unet_kernel(%arg0: i32, %arg1: memref<1x4x256xf32, #tpu.memory_space<vmem>>, %arg2: memref<9x256xbf16, #tpu.memory_space<vmem>>, %arg3: memref<9x64xbf16, #tpu.memory_space<vmem>>, %arg4: memref<9x16xbf16, #tpu.memory_space<vmem>>, %arg5: memref<256x64xbf16, #tpu.memory_space<vmem>>, %arg6: memref<64x16xbf16, #tpu.memory_space<vmem>>, %arg7: memref<16x64xbf16, #tpu.memory_space<vmem>>, %arg8: memref<64x256xbf16, #tpu.memory_space<vmem>>, %arg9: memref<8x36xbf16, #tpu.memory_space<vmem>>, %arg10: memref<8x1xf32, #tpu.memory_space<vmem>>, %arg11: memref<8x72xbf16, #tpu.memory_space<vmem>>, %arg12: memref<8x1xf32, #tpu.memory_space<vmem>>, %arg13: memref<16x72xbf16, #tpu.memory_space<vmem>>, %arg14: memref<16x1xf32, #tpu.memory_space<vmem>>, %arg15: memref<16x144xbf16, #tpu.memory_space<vmem>>, %arg16: memref<16x1xf32, #tpu.memory_space<vmem>>, %arg17: memref<32x144xbf16, #tpu.memory_space<vmem>>, %arg18: memref<32x1xf32, #tpu.memory_space<vmem>>, %arg19: memref<32x288xbf16, #tpu.memory_space<vmem>>, %arg20: memref<32x1xf32, #tpu.memory_space<vmem>>, %arg21: memref<16x432xbf16, #tpu.memory_space<vmem>>, %arg22: memref<16x1xf32, #tpu.memory_space<vmem>>, %arg23: memref<16x144xbf16, #tpu.memory_space<vmem>>, %arg24: memref<16x1xf32, #tpu.memory_space<vmem>>, %arg25: memref<8x216xbf16, #tpu.memory_space<vmem>>, %arg26: memref<8x1xf32, #tpu.memory_space<vmem>>, %arg27: memref<8x72xbf16, #tpu.memory_space<vmem>>, %arg28: memref<8x1xf32, #tpu.memory_space<vmem>>, %arg29: memref<4x8xbf16, #tpu.memory_space<vmem>>, %arg30: memref<4x1xf32, #tpu.memory_space<vmem>>, %arg31: memref<8x32xf32, #tpu.memory_space<vmem>>, %arg32: memref<8x1xf32, #tpu.memory_space<vmem>>, %arg33: memref<1x4x256xf32, #tpu.memory_space<vmem>>, %arg34: memref<1x8x1xf32, #tpu.memory_space<vmem>>, %arg35: memref<432x256xbf16, #tpu.memory_space<vmem>>) attributes {dimension_semantics = [#tpu.dimension_semantics<parallel>], iteration_bounds = array<i64: 2>, scalar_prefetch = 0 : i64, scratch_operands = 1 : i64, tpu.core_type = #tpu.core_type<tc>, window_params = [{transform_indices = @transform_0, window_bounds = array<i64: 1, 4, 256>}, {pipeline_mode = #tpu.pipeline_mode<synchronous>, transform_indices = @transform_1, window_bounds = array<i64: 9, 256>}, {pipeline_mode = #tpu.pipeline_mode<synchronous>, transform_indices = @transform_2, window_bounds = array<i64: 9, 64>}, {pipeline_mode = #tpu.pipeline_mode<synchronous>, transform_indices = @transform_3, window_bounds = array<i64: 9, 16>}, {pipeline_mode = #tpu.pipeline_mode<synchronous>, transform_indices = @transform_4, window_bounds = array<i64: 256, 64>}, {pipeline_mode = #tpu.pipeline_mode<synchronous>, transform_indices = @transform_5, window_bounds = array<i64: 64, 16>}, {pipeline_mode = #tpu.pipeline_mode<synchronous>, transform_indices = @transform_6, window_bounds = array<i64: 16, 64>}, {pipeline_mode = #tpu.pipeline_mode<synchronous>, transform_indices = @transform_7, window_bounds = array<i64: 64, 256>}, {pipeline_mode = #tpu.pipeline_mode<synchronous>, transform_indices = @transform_8, window_bounds = array<i64: 8, 36>}, {pipeline_mode = #tpu.pipeline_mode<synchronous>, transform_indices = @transform_9, window_bounds = array<i64: 8, 1>}, {pipeline_mode = #tpu.pipeline_mode<synchronous>, transform_indices = @transform_10, window_bounds = array<i64: 8, 72>}, {pipeline_mode = #tpu.pipeline_mode<synchronous>, transform_indices = @transform_11, window_bounds = array<i64: 8, 1>}, {pipeline_mode = #tpu.pipeline_mode<synchronous>, transform_indices = @transform_12, window_bounds = array<i64: 16, 72>}, {pipeline_mode = #tpu.pipeline_mode<synchronous>, transform_indices = @transform_13, window_bounds = array<i64: 16, 1>}, {pipeline_mode = #tpu.pipeline_mode<synchronous>, transform_indices = @transform_14, window_bounds = array<i64: 16, 144>}, {pipeline_mode = #tpu.pipeline_mode<synchronous>, transform_indices = @transform_15, window_bounds = array<i64: 16, 1>}, {pipeline_mode = #tpu.pipeline_mode<synchronous>, transform_indices = @transform_16, window_bounds = array<i64: 32, 144>}, {pipeline_mode = #tpu.pipeline_mode<synchronous>, transform_indices = @transform_17, window_bounds = array<i64: 32, 1>}, {pipeline_mode = #tpu.pipeline_mode<synchronous>, transform_indices = @transform_18, window_bounds = array<i64: 32, 288>}, {pipeline_mode = #tpu.pipeline_mode<synchronous>, transform_indices = @transform_19, window_bounds = array<i64: 32, 1>}, {pipeline_mode = #tpu.pipeline_mode<synchronous>, transform_indices = @transform_20, window_bounds = array<i64: 16, 432>}, {pipeline_mode = #tpu.pipeline_mode<synchronous>, transform_indices = @transform_21, window_bounds = array<i64: 16, 1>}, {pipeline_mode = #tpu.pipeline_mode<synchronous>, transform_indices = @transform_22, window_bounds = array<i64: 16, 144>}, {pipeline_mode = #tpu.pipeline_mode<synchronous>, transform_indices = @transform_23, window_bounds = array<i64: 16, 1>}, {pipeline_mode = #tpu.pipeline_mode<synchronous>, transform_indices = @transform_24, window_bounds = array<i64: 8, 216>}, {pipeline_mode = #tpu.pipeline_mode<synchronous>, transform_indices = @transform_25, window_bounds = array<i64: 8, 1>}, {pipeline_mode = #tpu.pipeline_mode<synchronous>, transform_indices = @transform_26, window_bounds = array<i64: 8, 72>}, {pipeline_mode = #tpu.pipeline_mode<synchronous>, transform_indices = @transform_27, window_bounds = array<i64: 8, 1>}, {pipeline_mode = #tpu.pipeline_mode<synchronous>, transform_indices = @transform_28, window_bounds = array<i64: 4, 8>}, {pipeline_mode = #tpu.pipeline_mode<synchronous>, transform_indices = @transform_29, window_bounds = array<i64: 4, 1>}, {pipeline_mode = #tpu.pipeline_mode<synchronous>, transform_indices = @transform_30, window_bounds = array<i64: 8, 32>}, {pipeline_mode = #tpu.pipeline_mode<synchronous>, transform_indices = @transform_31, window_bounds = array<i64: 8, 1>}, {transform_indices = @transform_32, window_bounds = array<i64: 1, 4, 256>}, {transform_indices = @transform_33, window_bounds = array<i64: 1, 8, 1>}]} {
    %c0 = arith.constant 0 : index
    %c0_0 = arith.constant 0 : index
    %0 = vector.load %arg2[%c0, %c0_0] : memref<9x256xbf16, #tpu.memory_space<vmem>>, vector<9x256xbf16>
    %c0_1 = arith.constant 0 : index
    %c0_2 = arith.constant 0 : index
    %1 = vector.load %arg3[%c0_1, %c0_2] : memref<9x64xbf16, #tpu.memory_space<vmem>>, vector<9x64xbf16>
    %c0_3 = arith.constant 0 : index
    %c0_4 = arith.constant 0 : index
    %2 = vector.load %arg4[%c0_3, %c0_4] : memref<9x16xbf16, #tpu.memory_space<vmem>>, vector<9x16xbf16>
    %c0_5 = arith.constant 0 : index
    %c0_6 = arith.constant 0 : index
    %c0_7 = arith.constant 0 : index
    %3 = vector.load %arg1[%c0_5, %c0_6, %c0_7] : memref<1x4x256xf32, #tpu.memory_space<vmem>>, vector<1x4x256xf32>
    %4 = vector.shape_cast %3 : vector<1x4x256xf32> to vector<4x256xf32>
    %5 = arith.truncf %4 : vector<4x256xf32> to vector<4x256xbf16>
    %6 = vector.extract_strided_slice %5 {offsets = [0, 239], sizes = [4, 17], strides = [1, 1]} : vector<4x256xbf16> to vector<4x17xbf16>
    %7 = vector.extract_strided_slice %5 {offsets = [0, 0], sizes = [4, 239], strides = [1, 1]} : vector<4x256xbf16> to vector<4x239xbf16>
    %8 = tpu.concatenate %6, %7 in 1 : vector<4x17xbf16>, vector<4x239xbf16> -> vector<4x256xbf16>
    %9 = vector.extract_strided_slice %0 {offsets = [0, 0], sizes = [1, 256], strides = [1, 1]} : vector<9x256xbf16> to vector<1x256xbf16>
    %10 = vector.broadcast %9 : vector<1x256xbf16> to vector<4x256xbf16>
    %11 = arith.mulf %8, %10 : vector<4x256xbf16>
    %c0_8 = arith.constant 0 : index
    %c0_9 = arith.constant 0 : index
    %12 = vector.load %arg35[%c0_8, %c0_9] : memref<432x256xbf16, #tpu.memory_space<vmem>>, vector<4x256xbf16>
    tpu.vector_store %arg35[%c0_8, %c0_9], %11 {strides = array<i32>} : memref<432x256xbf16, #tpu.memory_space<vmem>>, vector<4x256xbf16>,
    %13 = vector.extract_strided_slice %5 {offsets = [0, 240], sizes = [4, 16], strides = [1, 1]} : vector<4x256xbf16> to vector<4x16xbf16>
    %14 = vector.extract_strided_slice %5 {offsets = [0, 0], sizes = [4, 240], strides = [1, 1]} : vector<4x256xbf16> to vector<4x240xbf16>
    %15 = tpu.concatenate %13, %14 in 1 : vector<4x16xbf16>, vector<4x240xbf16> -> vector<4x256xbf16>
    %16 = vector.extract_strided_slice %0 {offsets = [1, 0], sizes = [1, 256], strides = [1, 1]} : vector<9x256xbf16> to vector<1x256xbf16>
    %17 = vector.broadcast %16 : vector<1x256xbf16> to vector<4x256xbf16>
    %18 = arith.mulf %15, %17 : vector<4x256xbf16>
    %c4 = arith.constant 4 : index
    %c0_10 = arith.constant 0 : index
    %19 = vector.load %arg35[%c4, %c0_10] : memref<432x256xbf16, #tpu.memory_space<vmem>>, vector<4x256xbf16>
    tpu.vector_store %arg35[%c4, %c0_10], %18 {strides = array<i32>} : memref<432x256xbf16, #tpu.memory_space<vmem>>, vector<4x256xbf16>,
    %20 = vector.extract_strided_slice %5 {offsets = [0, 241], sizes = [4, 15], strides = [1, 1]} : vector<4x256xbf16> to vector<4x15xbf16>
    %21 = vector.extract_strided_slice %5 {offsets = [0, 0], sizes = [4, 241], strides = [1, 1]} : vector<4x256xbf16> to vector<4x241xbf16>
    %22 = tpu.concatenate %20, %21 in 1 : vector<4x15xbf16>, vector<4x241xbf16> -> vector<4x256xbf16>
    %23 = vector.extract_strided_slice %0 {offsets = [2, 0], sizes = [1, 256], strides = [1, 1]} : vector<9x256xbf16> to vector<1x256xbf16>
    %24 = vector.broadcast %23 : vector<1x256xbf16> to vector<4x256xbf16>
    %25 = arith.mulf %22, %24 : vector<4x256xbf16>
    %c8 = arith.constant 8 : index
    %c0_11 = arith.constant 0 : index
    %26 = vector.load %arg35[%c8, %c0_11] : memref<432x256xbf16, #tpu.memory_space<vmem>>, vector<4x256xbf16>
    tpu.vector_store %arg35[%c8, %c0_11], %25 {strides = array<i32>} : memref<432x256xbf16, #tpu.memory_space<vmem>>, vector<4x256xbf16>,
    %27 = vector.extract_strided_slice %5 {offsets = [0, 255], sizes = [4, 1], strides = [1, 1]} : vector<4x256xbf16> to vector<4x1xbf16>
    %28 = vector.extract_strided_slice %5 {offsets = [0, 0], sizes = [4, 255], strides = [1, 1]} : vector<4x256xbf16> to vector<4x255xbf16>
    %29 = tpu.concatenate %27, %28 in 1 : vector<4x1xbf16>, vector<4x255xbf16> -> vector<4x256xbf16>
    %30 = vector.extract_strided_slice %0 {offsets = [3, 0], sizes = [1, 256], strides = [1, 1]} : vector<9x256xbf16> to vector<1x256xbf16>
    %31 = vector.broadcast %30 : vector<1x256xbf16> to vector<4x256xbf16>
    %32 = arith.mulf %29, %31 : vector<4x256xbf16>
    %c12 = arith.constant 12 : index
    %c0_12 = arith.constant 0 : index
    %33 = vector.load %arg35[%c12, %c0_12] : memref<432x256xbf16, #tpu.memory_space<vmem>>, vector<4x256xbf16>
    tpu.vector_store %arg35[%c12, %c0_12], %32 {strides = array<i32>} : memref<432x256xbf16, #tpu.memory_space<vmem>>, vector<4x256xbf16>,
    %c16 = arith.constant 16 : index
    %c0_13 = arith.constant 0 : index
    %34 = vector.load %arg35[%c16, %c0_13] : memref<432x256xbf16, #tpu.memory_space<vmem>>, vector<4x256xbf16>
    tpu.vector_store %arg35[%c16, %c0_13], %5 {strides = array<i32>} : memref<432x256xbf16, #tpu.memory_space<vmem>>, vector<4x256xbf16>,
    %35 = vector.extract_strided_slice %5 {offsets = [0, 1], sizes = [4, 255], strides = [1, 1]} : vector<4x256xbf16> to vector<4x255xbf16>
    %36 = vector.extract_strided_slice %5 {offsets = [0, 0], sizes = [4, 1], strides = [1, 1]} : vector<4x256xbf16> to vector<4x1xbf16>
    %37 = tpu.concatenate %35, %36 in 1 : vector<4x255xbf16>, vector<4x1xbf16> -> vector<4x256xbf16>
    %38 = vector.extract_strided_slice %0 {offsets = [5, 0], sizes = [1, 256], strides = [1, 1]} : vector<9x256xbf16> to vector<1x256xbf16>
    %39 = vector.broadcast %38 : vector<1x256xbf16> to vector<4x256xbf16>
    %40 = arith.mulf %37, %39 : vector<4x256xbf16>
    %c20 = arith.constant 20 : index
    %c0_14 = arith.constant 0 : index
    %41 = vector.load %arg35[%c20, %c0_14] : memref<432x256xbf16, #tpu.memory_space<vmem>>, vector<4x256xbf16>
    tpu.vector_store %arg35[%c20, %c0_14], %40 {strides = array<i32>} : memref<432x256xbf16, #tpu.memory_space<vmem>>, vector<4x256xbf16>,
    %42 = vector.extract_strided_slice %5 {offsets = [0, 15], sizes = [4, 241], strides = [1, 1]} : vector<4x256xbf16> to vector<4x241xbf16>
    %43 = vector.extract_strided_slice %5 {offsets = [0, 0], sizes = [4, 15], strides = [1, 1]} : vector<4x256xbf16> to vector<4x15xbf16>
    %44 = tpu.concatenate %42, %43 in 1 : vector<4x241xbf16>, vector<4x15xbf16> -> vector<4x256xbf16>
    %45 = vector.extract_strided_slice %0 {offsets = [6, 0], sizes = [1, 256], strides = [1, 1]} : vector<9x256xbf16> to vector<1x256xbf16>
    %46 = vector.broadcast %45 : vector<1x256xbf16> to vector<4x256xbf16>
    %47 = arith.mulf %44, %46 : vector<4x256xbf16>
    %c24 = arith.constant 24 : index
    %c0_15 = arith.constant 0 : index
    %48 = vector.load %arg35[%c24, %c0_15] : memref<432x256xbf16, #tpu.memory_space<vmem>>, vector<4x256xbf16>
    tpu.vector_store %arg35[%c24, %c0_15], %47 {strides = array<i32>} : memref<432x256xbf16, #tpu.memory_space<vmem>>, vector<4x256xbf16>,
    %49 = vector.extract_strided_slice %5 {offsets = [0, 16], sizes = [4, 240], strides = [1, 1]} : vector<4x256xbf16> to vector<4x240xbf16>
    %50 = vector.extract_strided_slice %5 {offsets = [0, 0], sizes = [4, 16], strides = [1, 1]} : vector<4x256xbf16> to vector<4x16xbf16>
    %51 = tpu.concatenate %49, %50 in 1 : vector<4x240xbf16>, vector<4x16xbf16> -> vector<4x256xbf16>
    %52 = vector.extract_strided_slice %0 {offsets = [7, 0], sizes = [1, 256], strides = [1, 1]} : vector<9x256xbf16> to vector<1x256xbf16>
    %53 = vector.broadcast %52 : vector<1x256xbf16> to vector<4x256xbf16>
    %54 = arith.mulf %51, %53 : vector<4x256xbf16>
    %c28 = arith.constant 28 : index
    %c0_16 = arith.constant 0 : index
    %55 = vector.load %arg35[%c28, %c0_16] : memref<432x256xbf16, #tpu.memory_space<vmem>>, vector<4x256xbf16>
    tpu.vector_store %arg35[%c28, %c0_16], %54 {strides = array<i32>} : memref<432x256xbf16, #tpu.memory_space<vmem>>, vector<4x256xbf16>,
    %56 = vector.extract_strided_slice %5 {offsets = [0, 17], sizes = [4, 239], strides = [1, 1]} : vector<4x256xbf16> to vector<4x239xbf16>
    %57 = vector.extract_strided_slice %5 {offsets = [0, 0], sizes = [4, 17], strides = [1, 1]} : vector<4x256xbf16> to vector<4x17xbf16>
    %58 = tpu.concatenate %56, %57 in 1 : vector<4x239xbf16>, vector<4x17xbf16> -> vector<4x256xbf16>
    %59 = vector.extract_strided_slice %0 {offsets = [8, 0], sizes = [1, 256], strides = [1, 1]} : vector<9x256xbf16> to vector<1x256xbf16>
    %60 = vector.broadcast %59 : vector<1x256xbf16> to vector<4x256xbf16>
    %61 = arith.mulf %58, %60 : vector<4x256xbf16>
    %c32 = arith.constant 32 : index
    %c0_17 = arith.constant 0 : index
    %62 = vector.load %arg35[%c32, %c0_17] : memref<432x256xbf16, #tpu.memory_space<vmem>>, vector<4x256xbf16>
    tpu.vector_store %arg35[%c32, %c0_17], %61 {strides = array<i32>} : memref<432x256xbf16, #tpu.memory_space<vmem>>, vector<4x256xbf16>,
    %c0_18 = arith.constant 0 : index
    %c0_19 = arith.constant 0 : index
    %63 = vector.load %arg9[%c0_18, %c0_19] : memref<8x36xbf16, #tpu.memory_space<vmem>>, vector<8x36xbf16>
    %c0_20 = arith.constant 0 : index
    %c0_21 = arith.constant 0 : index
    %64 = vector.load %arg35[%c0_20, %c0_21] : memref<432x256xbf16, #tpu.memory_space<vmem>>, vector<36x256xbf16>
    %cst = arith.constant dense<0.000000e+00> : vector<8x256xf32>
    %65 = tpu.matmul %63, %64, %cst {dimension_numbers = #tpu.dot_dimension_numbers<[1], [0], [0], [1], [0, 0, 1, 1], [], []>} : vector<8x36xbf16>, vector<36x256xbf16>, vector<8x256xf32> -> vector<8x256xf32>
    %c0_22 = arith.constant 0 : index
    %c0_23 = arith.constant 0 : index
    %66 = vector.load %arg10[%c0_22, %c0_23] : memref<8x1xf32, #tpu.memory_space<vmem>>, vector<8x1xf32>
    %67 = vector.broadcast %66 : vector<8x1xf32> to vector<8x256xf32>
    %68 = arith.addf %65, %67 : vector<8x256xf32>
    %cst_24 = arith.constant 0.000000e+00 : f32
    %69 = vector.broadcast %cst_24 : f32 to vector<8x256xf32>
    %70 = arith.maximumf %68, %69 : vector<8x256xf32>
    %71 = arith.truncf %70 : vector<8x256xf32> to vector<8x256xbf16>
    %72 = vector.extract_strided_slice %71 {offsets = [0, 239], sizes = [8, 17], strides = [1, 1]} : vector<8x256xbf16> to vector<8x17xbf16>
    %73 = vector.extract_strided_slice %71 {offsets = [0, 0], sizes = [8, 239], strides = [1, 1]} : vector<8x256xbf16> to vector<8x239xbf16>
    %74 = tpu.concatenate %72, %73 in 1 : vector<8x17xbf16>, vector<8x239xbf16> -> vector<8x256xbf16>
    %75 = vector.extract_strided_slice %0 {offsets = [0, 0], sizes = [1, 256], strides = [1, 1]} : vector<9x256xbf16> to vector<1x256xbf16>
    %76 = vector.broadcast %75 : vector<1x256xbf16> to vector<8x256xbf16>
    %77 = arith.mulf %74, %76 : vector<8x256xbf16>
    %c0_25 = arith.constant 0 : index
    %c0_26 = arith.constant 0 : index
    %78 = vector.load %arg35[%c0_25, %c0_26] : memref<432x256xbf16, #tpu.memory_space<vmem>>, vector<8x256xbf16>
    tpu.vector_store %arg35[%c0_25, %c0_26], %77 {strides = array<i32>} : memref<432x256xbf16, #tpu.memory_space<vmem>>, vector<8x256xbf16>,
    %79 = vector.extract_strided_slice %71 {offsets = [0, 240], sizes = [8, 16], strides = [1, 1]} : vector<8x256xbf16> to vector<8x16xbf16>
    %80 = vector.extract_strided_slice %71 {offsets = [0, 0], sizes = [8, 240], strides = [1, 1]} : vector<8x256xbf16> to vector<8x240xbf16>
    %81 = tpu.concatenate %79, %80 in 1 : vector<8x16xbf16>, vector<8x240xbf16> -> vector<8x256xbf16>
    %82 = vector.extract_strided_slice %0 {offsets = [1, 0], sizes = [1, 256], strides = [1, 1]} : vector<9x256xbf16> to vector<1x256xbf16>
    %83 = vector.broadcast %82 : vector<1x256xbf16> to vector<8x256xbf16>
    %84 = arith.mulf %81, %83 : vector<8x256xbf16>
    %c8_27 = arith.constant 8 : index
    %c0_28 = arith.constant 0 : index
    %85 = vector.load %arg35[%c8_27, %c0_28] : memref<432x256xbf16, #tpu.memory_space<vmem>>, vector<8x256xbf16>
    tpu.vector_store %arg35[%c8_27, %c0_28], %84 {strides = array<i32>} : memref<432x256xbf16, #tpu.memory_space<vmem>>, vector<8x256xbf16>,
    %86 = vector.extract_strided_slice %71 {offsets = [0, 241], sizes = [8, 15], strides = [1, 1]} : vector<8x256xbf16> to vector<8x15xbf16>
    %87 = vector.extract_strided_slice %71 {offsets = [0, 0], sizes = [8, 241], strides = [1, 1]} : vector<8x256xbf16> to vector<8x241xbf16>
    %88 = tpu.concatenate %86, %87 in 1 : vector<8x15xbf16>, vector<8x241xbf16> -> vector<8x256xbf16>
    %89 = vector.extract_strided_slice %0 {offsets = [2, 0], sizes = [1, 256], strides = [1, 1]} : vector<9x256xbf16> to vector<1x256xbf16>
    %90 = vector.broadcast %89 : vector<1x256xbf16> to vector<8x256xbf16>
    %91 = arith.mulf %88, %90 : vector<8x256xbf16>
    %c16_29 = arith.constant 16 : index
    %c0_30 = arith.constant 0 : index
    %92 = vector.load %arg35[%c16_29, %c0_30] : memref<432x256xbf16, #tpu.memory_space<vmem>>, vector<8x256xbf16>
    tpu.vector_store %arg35[%c16_29, %c0_30], %91 {strides = array<i32>} : memref<432x256xbf16, #tpu.memory_space<vmem>>, vector<8x256xbf16>,
    %93 = vector.extract_strided_slice %71 {offsets = [0, 255], sizes = [8, 1], strides = [1, 1]} : vector<8x256xbf16> to vector<8x1xbf16>
    %94 = vector.extract_strided_slice %71 {offsets = [0, 0], sizes = [8, 255], strides = [1, 1]} : vector<8x256xbf16> to vector<8x255xbf16>
    %95 = tpu.concatenate %93, %94 in 1 : vector<8x1xbf16>, vector<8x255xbf16> -> vector<8x256xbf16>
    %96 = vector.extract_strided_slice %0 {offsets = [3, 0], sizes = [1, 256], strides = [1, 1]} : vector<9x256xbf16> to vector<1x256xbf16>
    %97 = vector.broadcast %96 : vector<1x256xbf16> to vector<8x256xbf16>
    %98 = arith.mulf %95, %97 : vector<8x256xbf16>
    %c24_31 = arith.constant 24 : index
    %c0_32 = arith.constant 0 : index
    %99 = vector.load %arg35[%c24_31, %c0_32] : memref<432x256xbf16, #tpu.memory_space<vmem>>, vector<8x256xbf16>
    tpu.vector_store %arg35[%c24_31, %c0_32], %98 {strides = array<i32>} : memref<432x256xbf16, #tpu.memory_space<vmem>>, vector<8x256xbf16>,
    %c32_33 = arith.constant 32 : index
    %c0_34 = arith.constant 0 : index
    %100 = vector.load %arg35[%c32_33, %c0_34] : memref<432x256xbf16, #tpu.memory_space<vmem>>, vector<8x256xbf16>
    tpu.vector_store %arg35[%c32_33, %c0_34], %71 {strides = array<i32>} : memref<432x256xbf16, #tpu.memory_space<vmem>>, vector<8x256xbf16>,
    %101 = vector.extract_strided_slice %71 {offsets = [0, 1], sizes = [8, 255], strides = [1, 1]} : vector<8x256xbf16> to vector<8x255xbf16>
    %102 = vector.extract_strided_slice %71 {offsets = [0, 0], sizes = [8, 1], strides = [1, 1]} : vector<8x256xbf16> to vector<8x1xbf16>
    %103 = tpu.concatenate %101, %102 in 1 : vector<8x255xbf16>, vector<8x1xbf16> -> vector<8x256xbf16>
    %104 = vector.extract_strided_slice %0 {offsets = [5, 0], sizes = [1, 256], strides = [1, 1]} : vector<9x256xbf16> to vector<1x256xbf16>
    %105 = vector.broadcast %104 : vector<1x256xbf16> to vector<8x256xbf16>
    %106 = arith.mulf %103, %105 : vector<8x256xbf16>
    %c40 = arith.constant 40 : index
    %c0_35 = arith.constant 0 : index
    %107 = vector.load %arg35[%c40, %c0_35] : memref<432x256xbf16, #tpu.memory_space<vmem>>, vector<8x256xbf16>
    tpu.vector_store %arg35[%c40, %c0_35], %106 {strides = array<i32>} : memref<432x256xbf16, #tpu.memory_space<vmem>>, vector<8x256xbf16>,
    %108 = vector.extract_strided_slice %71 {offsets = [0, 15], sizes = [8, 241], strides = [1, 1]} : vector<8x256xbf16> to vector<8x241xbf16>
    %109 = vector.extract_strided_slice %71 {offsets = [0, 0], sizes = [8, 15], strides = [1, 1]} : vector<8x256xbf16> to vector<8x15xbf16>
    %110 = tpu.concatenate %108, %109 in 1 : vector<8x241xbf16>, vector<8x15xbf16> -> vector<8x256xbf16>
    %111 = vector.extract_strided_slice %0 {offsets = [6, 0], sizes = [1, 256], strides = [1, 1]} : vector<9x256xbf16> to vector<1x256xbf16>
    %112 = vector.broadcast %111 : vector<1x256xbf16> to vector<8x256xbf16>
    %113 = arith.mulf %110, %112 : vector<8x256xbf16>
    %c48 = arith.constant 48 : index
    %c0_36 = arith.constant 0 : index
    %114 = vector.load %arg35[%c48, %c0_36] : memref<432x256xbf16, #tpu.memory_space<vmem>>, vector<8x256xbf16>
    tpu.vector_store %arg35[%c48, %c0_36], %113 {strides = array<i32>} : memref<432x256xbf16, #tpu.memory_space<vmem>>, vector<8x256xbf16>,
    %115 = vector.extract_strided_slice %71 {offsets = [0, 16], sizes = [8, 240], strides = [1, 1]} : vector<8x256xbf16> to vector<8x240xbf16>
    %116 = vector.extract_strided_slice %71 {offsets = [0, 0], sizes = [8, 16], strides = [1, 1]} : vector<8x256xbf16> to vector<8x16xbf16>
    %117 = tpu.concatenate %115, %116 in 1 : vector<8x240xbf16>, vector<8x16xbf16> -> vector<8x256xbf16>
    %118 = vector.extract_strided_slice %0 {offsets = [7, 0], sizes = [1, 256], strides = [1, 1]} : vector<9x256xbf16> to vector<1x256xbf16>
    %119 = vector.broadcast %118 : vector<1x256xbf16> to vector<8x256xbf16>
    %120 = arith.mulf %117, %119 : vector<8x256xbf16>
    %c56 = arith.constant 56 : index
    %c0_37 = arith.constant 0 : index
    %121 = vector.load %arg35[%c56, %c0_37] : memref<432x256xbf16, #tpu.memory_space<vmem>>, vector<8x256xbf16>
    tpu.vector_store %arg35[%c56, %c0_37], %120 {strides = array<i32>} : memref<432x256xbf16, #tpu.memory_space<vmem>>, vector<8x256xbf16>,
    %122 = vector.extract_strided_slice %71 {offsets = [0, 17], sizes = [8, 239], strides = [1, 1]} : vector<8x256xbf16> to vector<8x239xbf16>
    %123 = vector.extract_strided_slice %71 {offsets = [0, 0], sizes = [8, 17], strides = [1, 1]} : vector<8x256xbf16> to vector<8x17xbf16>
    %124 = tpu.concatenate %122, %123 in 1 : vector<8x239xbf16>, vector<8x17xbf16> -> vector<8x256xbf16>
    %125 = vector.extract_strided_slice %0 {offsets = [8, 0], sizes = [1, 256], strides = [1, 1]} : vector<9x256xbf16> to vector<1x256xbf16>
    %126 = vector.broadcast %125 : vector<1x256xbf16> to vector<8x256xbf16>
    %127 = arith.mulf %124, %126 : vector<8x256xbf16>
    %c64 = arith.constant 64 : index
    %c0_38 = arith.constant 0 : index
    %128 = vector.load %arg35[%c64, %c0_38] : memref<432x256xbf16, #tpu.memory_space<vmem>>, vector<8x256xbf16>
    tpu.vector_store %arg35[%c64, %c0_38], %127 {strides = array<i32>} : memref<432x256xbf16, #tpu.memory_space<vmem>>, vector<8x256xbf16>,
    %c0_39 = arith.constant 0 : index
    %c0_40 = arith.constant 0 : index
    %129 = vector.load %arg11[%c0_39, %c0_40] : memref<8x72xbf16, #tpu.memory_space<vmem>>, vector<8x72xbf16>
    %c0_41 = arith.constant 0 : index
    %c0_42 = arith.constant 0 : index
    %130 = vector.load %arg35[%c0_41, %c0_42] : memref<432x256xbf16, #tpu.memory_space<vmem>>, vector<72x256xbf16>
    %cst_43 = arith.constant dense<0.000000e+00> : vector<8x256xf32>
    %131 = tpu.matmul %129, %130, %cst_43 {dimension_numbers = #tpu.dot_dimension_numbers<[1], [0], [0], [1], [0, 0, 1, 1], [], []>} : vector<8x72xbf16>, vector<72x256xbf16>, vector<8x256xf32> -> vector<8x256xf32>
    %c0_44 = arith.constant 0 : index
    %c0_45 = arith.constant 0 : index
    %132 = vector.load %arg12[%c0_44, %c0_45] : memref<8x1xf32, #tpu.memory_space<vmem>>, vector<8x1xf32>
    %133 = vector.broadcast %132 : vector<8x1xf32> to vector<8x256xf32>
    %134 = arith.addf %131, %133 : vector<8x256xf32>
    %cst_46 = arith.constant 0.000000e+00 : f32
    %135 = vector.broadcast %cst_46 : f32 to vector<8x256xf32>
    %136 = arith.maximumf %134, %135 : vector<8x256xf32>
    %137 = vector.extract_strided_slice %136 {offsets = [0, 1], sizes = [8, 255], strides = [1, 1]} : vector<8x256xf32> to vector<8x255xf32>
    %138 = vector.extract_strided_slice %136 {offsets = [0, 0], sizes = [8, 1], strides = [1, 1]} : vector<8x256xf32> to vector<8x1xf32>
    %139 = tpu.concatenate %137, %138 in 1 : vector<8x255xf32>, vector<8x1xf32> -> vector<8x256xf32>
    %140 = arith.maximumf %136, %139 : vector<8x256xf32>
    %141 = vector.extract_strided_slice %140 {offsets = [0, 16], sizes = [8, 240], strides = [1, 1]} : vector<8x256xf32> to vector<8x240xf32>
    %142 = vector.extract_strided_slice %140 {offsets = [0, 0], sizes = [8, 16], strides = [1, 1]} : vector<8x256xf32> to vector<8x16xf32>
    %143 = tpu.concatenate %141, %142 in 1 : vector<8x240xf32>, vector<8x16xf32> -> vector<8x256xf32>
    %144 = arith.maximumf %140, %143 : vector<8x256xf32>
    %145 = arith.truncf %144 : vector<8x256xf32> to vector<8x256xbf16>
    %c0_47 = arith.constant 0 : index
    %c0_48 = arith.constant 0 : index
    %146 = vector.load %arg5[%c0_47, %c0_48] : memref<256x64xbf16, #tpu.memory_space<vmem>>, vector<256x64xbf16>
    %cst_49 = arith.constant dense<0.000000e+00> : vector<8x64xf32>
    %147 = tpu.matmul %145, %146, %cst_49 {dimension_numbers = #tpu.dot_dimension_numbers<[1], [0], [0], [1], [0, 0, 1, 1], [], []>} : vector<8x256xbf16>, vector<256x64xbf16>, vector<8x64xf32> -> vector<8x64xf32>
    %148 = arith.truncf %147 : vector<8x64xf32> to vector<8x64xbf16>
    %149 = vector.extract_strided_slice %148 {offsets = [0, 55], sizes = [8, 9], strides = [1, 1]} : vector<8x64xbf16> to vector<8x9xbf16>
    %150 = vector.extract_strided_slice %148 {offsets = [0, 0], sizes = [8, 55], strides = [1, 1]} : vector<8x64xbf16> to vector<8x55xbf16>
    %151 = tpu.concatenate %149, %150 in 1 : vector<8x9xbf16>, vector<8x55xbf16> -> vector<8x64xbf16>
    %152 = vector.extract_strided_slice %1 {offsets = [0, 0], sizes = [1, 64], strides = [1, 1]} : vector<9x64xbf16> to vector<1x64xbf16>
    %153 = vector.broadcast %152 : vector<1x64xbf16> to vector<8x64xbf16>
    %154 = arith.mulf %151, %153 : vector<8x64xbf16>
    %c0_50 = arith.constant 0 : index
    %c0_51 = arith.constant 0 : index
    %155 = vector.load %arg35[%c0_50, %c0_51] : memref<432x256xbf16, #tpu.memory_space<vmem>>, vector<8x64xbf16>
    tpu.vector_store %arg35[%c0_50, %c0_51], %154 {strides = array<i32>} : memref<432x256xbf16, #tpu.memory_space<vmem>>, vector<8x64xbf16>,
    %156 = vector.extract_strided_slice %148 {offsets = [0, 56], sizes = [8, 8], strides = [1, 1]} : vector<8x64xbf16> to vector<8x8xbf16>
    %157 = vector.extract_strided_slice %148 {offsets = [0, 0], sizes = [8, 56], strides = [1, 1]} : vector<8x64xbf16> to vector<8x56xbf16>
    %158 = tpu.concatenate %156, %157 in 1 : vector<8x8xbf16>, vector<8x56xbf16> -> vector<8x64xbf16>
    %159 = vector.extract_strided_slice %1 {offsets = [1, 0], sizes = [1, 64], strides = [1, 1]} : vector<9x64xbf16> to vector<1x64xbf16>
    %160 = vector.broadcast %159 : vector<1x64xbf16> to vector<8x64xbf16>
    %161 = arith.mulf %158, %160 : vector<8x64xbf16>
    %c8_52 = arith.constant 8 : index
    %c0_53 = arith.constant 0 : index
    %162 = vector.load %arg35[%c8_52, %c0_53] : memref<432x256xbf16, #tpu.memory_space<vmem>>, vector<8x64xbf16>
    tpu.vector_store %arg35[%c8_52, %c0_53], %161 {strides = array<i32>} : memref<432x256xbf16, #tpu.memory_space<vmem>>, vector<8x64xbf16>,
    %163 = vector.extract_strided_slice %148 {offsets = [0, 57], sizes = [8, 7], strides = [1, 1]} : vector<8x64xbf16> to vector<8x7xbf16>
    %164 = vector.extract_strided_slice %148 {offsets = [0, 0], sizes = [8, 57], strides = [1, 1]} : vector<8x64xbf16> to vector<8x57xbf16>
    %165 = tpu.concatenate %163, %164 in 1 : vector<8x7xbf16>, vector<8x57xbf16> -> vector<8x64xbf16>
    %166 = vector.extract_strided_slice %1 {offsets = [2, 0], sizes = [1, 64], strides = [1, 1]} : vector<9x64xbf16> to vector<1x64xbf16>
    %167 = vector.broadcast %166 : vector<1x64xbf16> to vector<8x64xbf16>
    %168 = arith.mulf %165, %167 : vector<8x64xbf16>
    %c16_54 = arith.constant 16 : index
    %c0_55 = arith.constant 0 : index
    %169 = vector.load %arg35[%c16_54, %c0_55] : memref<432x256xbf16, #tpu.memory_space<vmem>>, vector<8x64xbf16>
    tpu.vector_store %arg35[%c16_54, %c0_55], %168 {strides = array<i32>} : memref<432x256xbf16, #tpu.memory_space<vmem>>, vector<8x64xbf16>,
    %170 = vector.extract_strided_slice %148 {offsets = [0, 63], sizes = [8, 1], strides = [1, 1]} : vector<8x64xbf16> to vector<8x1xbf16>
    %171 = vector.extract_strided_slice %148 {offsets = [0, 0], sizes = [8, 63], strides = [1, 1]} : vector<8x64xbf16> to vector<8x63xbf16>
    %172 = tpu.concatenate %170, %171 in 1 : vector<8x1xbf16>, vector<8x63xbf16> -> vector<8x64xbf16>
    %173 = vector.extract_strided_slice %1 {offsets = [3, 0], sizes = [1, 64], strides = [1, 1]} : vector<9x64xbf16> to vector<1x64xbf16>
    %174 = vector.broadcast %173 : vector<1x64xbf16> to vector<8x64xbf16>
    %175 = arith.mulf %172, %174 : vector<8x64xbf16>
    %c24_56 = arith.constant 24 : index
    %c0_57 = arith.constant 0 : index
    %176 = vector.load %arg35[%c24_56, %c0_57] : memref<432x256xbf16, #tpu.memory_space<vmem>>, vector<8x64xbf16>
    tpu.vector_store %arg35[%c24_56, %c0_57], %175 {strides = array<i32>} : memref<432x256xbf16, #tpu.memory_space<vmem>>, vector<8x64xbf16>,
    %c32_58 = arith.constant 32 : index
    %c0_59 = arith.constant 0 : index
    %177 = vector.load %arg35[%c32_58, %c0_59] : memref<432x256xbf16, #tpu.memory_space<vmem>>, vector<8x64xbf16>
    tpu.vector_store %arg35[%c32_58, %c0_59], %148 {strides = array<i32>} : memref<432x256xbf16, #tpu.memory_space<vmem>>, vector<8x64xbf16>,
    %178 = vector.extract_strided_slice %148 {offsets = [0, 1], sizes = [8, 63], strides = [1, 1]} : vector<8x64xbf16> to vector<8x63xbf16>
    %179 = vector.extract_strided_slice %148 {offsets = [0, 0], sizes = [8, 1], strides = [1, 1]} : vector<8x64xbf16> to vector<8x1xbf16>
    %180 = tpu.concatenate %178, %179 in 1 : vector<8x63xbf16>, vector<8x1xbf16> -> vector<8x64xbf16>
    %181 = vector.extract_strided_slice %1 {offsets = [5, 0], sizes = [1, 64], strides = [1, 1]} : vector<9x64xbf16> to vector<1x64xbf16>
    %182 = vector.broadcast %181 : vector<1x64xbf16> to vector<8x64xbf16>
    %183 = arith.mulf %180, %182 : vector<8x64xbf16>
    %c40_60 = arith.constant 40 : index
    %c0_61 = arith.constant 0 : index
    %184 = vector.load %arg35[%c40_60, %c0_61] : memref<432x256xbf16, #tpu.memory_space<vmem>>, vector<8x64xbf16>
    tpu.vector_store %arg35[%c40_60, %c0_61], %183 {strides = array<i32>} : memref<432x256xbf16, #tpu.memory_space<vmem>>, vector<8x64xbf16>,
    %185 = vector.extract_strided_slice %148 {offsets = [0, 7], sizes = [8, 57], strides = [1, 1]} : vector<8x64xbf16> to vector<8x57xbf16>
    %186 = vector.extract_strided_slice %148 {offsets = [0, 0], sizes = [8, 7], strides = [1, 1]} : vector<8x64xbf16> to vector<8x7xbf16>
    %187 = tpu.concatenate %185, %186 in 1 : vector<8x57xbf16>, vector<8x7xbf16> -> vector<8x64xbf16>
    %188 = vector.extract_strided_slice %1 {offsets = [6, 0], sizes = [1, 64], strides = [1, 1]} : vector<9x64xbf16> to vector<1x64xbf16>
    %189 = vector.broadcast %188 : vector<1x64xbf16> to vector<8x64xbf16>
    %190 = arith.mulf %187, %189 : vector<8x64xbf16>
    %c48_62 = arith.constant 48 : index
    %c0_63 = arith.constant 0 : index
    %191 = vector.load %arg35[%c48_62, %c0_63] : memref<432x256xbf16, #tpu.memory_space<vmem>>, vector<8x64xbf16>
    tpu.vector_store %arg35[%c48_62, %c0_63], %190 {strides = array<i32>} : memref<432x256xbf16, #tpu.memory_space<vmem>>, vector<8x64xbf16>,
    %192 = vector.extract_strided_slice %148 {offsets = [0, 8], sizes = [8, 56], strides = [1, 1]} : vector<8x64xbf16> to vector<8x56xbf16>
    %193 = vector.extract_strided_slice %148 {offsets = [0, 0], sizes = [8, 8], strides = [1, 1]} : vector<8x64xbf16> to vector<8x8xbf16>
    %194 = tpu.concatenate %192, %193 in 1 : vector<8x56xbf16>, vector<8x8xbf16> -> vector<8x64xbf16>
    %195 = vector.extract_strided_slice %1 {offsets = [7, 0], sizes = [1, 64], strides = [1, 1]} : vector<9x64xbf16> to vector<1x64xbf16>
    %196 = vector.broadcast %195 : vector<1x64xbf16> to vector<8x64xbf16>
    %197 = arith.mulf %194, %196 : vector<8x64xbf16>
    %c56_64 = arith.constant 56 : index
    %c0_65 = arith.constant 0 : index
    %198 = vector.load %arg35[%c56_64, %c0_65] : memref<432x256xbf16, #tpu.memory_space<vmem>>, vector<8x64xbf16>
    tpu.vector_store %arg35[%c56_64, %c0_65], %197 {strides = array<i32>} : memref<432x256xbf16, #tpu.memory_space<vmem>>, vector<8x64xbf16>,
    %199 = vector.extract_strided_slice %148 {offsets = [0, 9], sizes = [8, 55], strides = [1, 1]} : vector<8x64xbf16> to vector<8x55xbf16>
    %200 = vector.extract_strided_slice %148 {offsets = [0, 0], sizes = [8, 9], strides = [1, 1]} : vector<8x64xbf16> to vector<8x9xbf16>
    %201 = tpu.concatenate %199, %200 in 1 : vector<8x55xbf16>, vector<8x9xbf16> -> vector<8x64xbf16>
    %202 = vector.extract_strided_slice %1 {offsets = [8, 0], sizes = [1, 64], strides = [1, 1]} : vector<9x64xbf16> to vector<1x64xbf16>
    %203 = vector.broadcast %202 : vector<1x64xbf16> to vector<8x64xbf16>
    %204 = arith.mulf %201, %203 : vector<8x64xbf16>
    %c64_66 = arith.constant 64 : index
    %c0_67 = arith.constant 0 : index
    %205 = vector.load %arg35[%c64_66, %c0_67] : memref<432x256xbf16, #tpu.memory_space<vmem>>, vector<8x64xbf16>
    tpu.vector_store %arg35[%c64_66, %c0_67], %204 {strides = array<i32>} : memref<432x256xbf16, #tpu.memory_space<vmem>>, vector<8x64xbf16>,
    %c0_68 = arith.constant 0 : index
    %c0_69 = arith.constant 0 : index
    %206 = vector.load %arg13[%c0_68, %c0_69] : memref<16x72xbf16, #tpu.memory_space<vmem>>, vector<16x72xbf16>
    %c0_70 = arith.constant 0 : index
    %c0_71 = arith.constant 0 : index
    %207 = vector.load %arg35[%c0_70, %c0_71] : memref<432x256xbf16, #tpu.memory_space<vmem>>, vector<72x64xbf16>
    %cst_72 = arith.constant dense<0.000000e+00> : vector<16x64xf32>
    %208 = tpu.matmul %206, %207, %cst_72 {dimension_numbers = #tpu.dot_dimension_numbers<[1], [0], [0], [1], [0, 0, 1, 1], [], []>} : vector<16x72xbf16>, vector<72x64xbf16>, vector<16x64xf32> -> vector<16x64xf32>
    %c0_73 = arith.constant 0 : index
    %c0_74 = arith.constant 0 : index
    %209 = vector.load %arg14[%c0_73, %c0_74] : memref<16x1xf32, #tpu.memory_space<vmem>>, vector<16x1xf32>
    %210 = vector.broadcast %209 : vector<16x1xf32> to vector<16x64xf32>
    %211 = arith.addf %208, %210 : vector<16x64xf32>
    %cst_75 = arith.constant 0.000000e+00 : f32
    %212 = vector.broadcast %cst_75 : f32 to vector<16x64xf32>
    %213 = arith.maximumf %211, %212 : vector<16x64xf32>
    %214 = arith.truncf %213 : vector<16x64xf32> to vector<16x64xbf16>
    %215 = vector.extract_strided_slice %214 {offsets = [0, 55], sizes = [16, 9], strides = [1, 1]} : vector<16x64xbf16> to vector<16x9xbf16>
    %216 = vector.extract_strided_slice %214 {offsets = [0, 0], sizes = [16, 55], strides = [1, 1]} : vector<16x64xbf16> to vector<16x55xbf16>
    %217 = tpu.concatenate %215, %216 in 1 : vector<16x9xbf16>, vector<16x55xbf16> -> vector<16x64xbf16>
    %218 = vector.extract_strided_slice %1 {offsets = [0, 0], sizes = [1, 64], strides = [1, 1]} : vector<9x64xbf16> to vector<1x64xbf16>
    %219 = vector.broadcast %218 : vector<1x64xbf16> to vector<16x64xbf16>
    %220 = arith.mulf %217, %219 : vector<16x64xbf16>
    %c0_76 = arith.constant 0 : index
    %c0_77 = arith.constant 0 : index
    %221 = vector.load %arg35[%c0_76, %c0_77] : memref<432x256xbf16, #tpu.memory_space<vmem>>, vector<16x64xbf16>
    tpu.vector_store %arg35[%c0_76, %c0_77], %220 {strides = array<i32>} : memref<432x256xbf16, #tpu.memory_space<vmem>>, vector<16x64xbf16>,
    %222 = vector.extract_strided_slice %214 {offsets = [0, 56], sizes = [16, 8], strides = [1, 1]} : vector<16x64xbf16> to vector<16x8xbf16>
    %223 = vector.extract_strided_slice %214 {offsets = [0, 0], sizes = [16, 56], strides = [1, 1]} : vector<16x64xbf16> to vector<16x56xbf16>
    %224 = tpu.concatenate %222, %223 in 1 : vector<16x8xbf16>, vector<16x56xbf16> -> vector<16x64xbf16>
    %225 = vector.extract_strided_slice %1 {offsets = [1, 0], sizes = [1, 64], strides = [1, 1]} : vector<9x64xbf16> to vector<1x64xbf16>
    %226 = vector.broadcast %225 : vector<1x64xbf16> to vector<16x64xbf16>
    %227 = arith.mulf %224, %226 : vector<16x64xbf16>
    %c16_78 = arith.constant 16 : index
    %c0_79 = arith.constant 0 : index
    %228 = vector.load %arg35[%c16_78, %c0_79] : memref<432x256xbf16, #tpu.memory_space<vmem>>, vector<16x64xbf16>
    tpu.vector_store %arg35[%c16_78, %c0_79], %227 {strides = array<i32>} : memref<432x256xbf16, #tpu.memory_space<vmem>>, vector<16x64xbf16>,
    %229 = vector.extract_strided_slice %214 {offsets = [0, 57], sizes = [16, 7], strides = [1, 1]} : vector<16x64xbf16> to vector<16x7xbf16>
    %230 = vector.extract_strided_slice %214 {offsets = [0, 0], sizes = [16, 57], strides = [1, 1]} : vector<16x64xbf16> to vector<16x57xbf16>
    %231 = tpu.concatenate %229, %230 in 1 : vector<16x7xbf16>, vector<16x57xbf16> -> vector<16x64xbf16>
    %232 = vector.extract_strided_slice %1 {offsets = [2, 0], sizes = [1, 64], strides = [1, 1]} : vector<9x64xbf16> to vector<1x64xbf16>
    %233 = vector.broadcast %232 : vector<1x64xbf16> to vector<16x64xbf16>
    %234 = arith.mulf %231, %233 : vector<16x64xbf16>
    %c32_80 = arith.constant 32 : index
    %c0_81 = arith.constant 0 : index
    %235 = vector.load %arg35[%c32_80, %c0_81] : memref<432x256xbf16, #tpu.memory_space<vmem>>, vector<16x64xbf16>
    tpu.vector_store %arg35[%c32_80, %c0_81], %234 {strides = array<i32>} : memref<432x256xbf16, #tpu.memory_space<vmem>>, vector<16x64xbf16>,
    %236 = vector.extract_strided_slice %214 {offsets = [0, 63], sizes = [16, 1], strides = [1, 1]} : vector<16x64xbf16> to vector<16x1xbf16>
    %237 = vector.extract_strided_slice %214 {offsets = [0, 0], sizes = [16, 63], strides = [1, 1]} : vector<16x64xbf16> to vector<16x63xbf16>
    %238 = tpu.concatenate %236, %237 in 1 : vector<16x1xbf16>, vector<16x63xbf16> -> vector<16x64xbf16>
    %239 = vector.extract_strided_slice %1 {offsets = [3, 0], sizes = [1, 64], strides = [1, 1]} : vector<9x64xbf16> to vector<1x64xbf16>
    %240 = vector.broadcast %239 : vector<1x64xbf16> to vector<16x64xbf16>
    %241 = arith.mulf %238, %240 : vector<16x64xbf16>
    %c48_82 = arith.constant 48 : index
    %c0_83 = arith.constant 0 : index
    %242 = vector.load %arg35[%c48_82, %c0_83] : memref<432x256xbf16, #tpu.memory_space<vmem>>, vector<16x64xbf16>
    tpu.vector_store %arg35[%c48_82, %c0_83], %241 {strides = array<i32>} : memref<432x256xbf16, #tpu.memory_space<vmem>>, vector<16x64xbf16>,
    %c64_84 = arith.constant 64 : index
    %c0_85 = arith.constant 0 : index
    %243 = vector.load %arg35[%c64_84, %c0_85] : memref<432x256xbf16, #tpu.memory_space<vmem>>, vector<16x64xbf16>
    tpu.vector_store %arg35[%c64_84, %c0_85], %214 {strides = array<i32>} : memref<432x256xbf16, #tpu.memory_space<vmem>>, vector<16x64xbf16>,
    %244 = vector.extract_strided_slice %214 {offsets = [0, 1], sizes = [16, 63], strides = [1, 1]} : vector<16x64xbf16> to vector<16x63xbf16>
    %245 = vector.extract_strided_slice %214 {offsets = [0, 0], sizes = [16, 1], strides = [1, 1]} : vector<16x64xbf16> to vector<16x1xbf16>
    %246 = tpu.concatenate %244, %245 in 1 : vector<16x63xbf16>, vector<16x1xbf16> -> vector<16x64xbf16>
    %247 = vector.extract_strided_slice %1 {offsets = [5, 0], sizes = [1, 64], strides = [1, 1]} : vector<9x64xbf16> to vector<1x64xbf16>
    %248 = vector.broadcast %247 : vector<1x64xbf16> to vector<16x64xbf16>
    %249 = arith.mulf %246, %248 : vector<16x64xbf16>
    %c80 = arith.constant 80 : index
    %c0_86 = arith.constant 0 : index
    %250 = vector.load %arg35[%c80, %c0_86] : memref<432x256xbf16, #tpu.memory_space<vmem>>, vector<16x64xbf16>
    tpu.vector_store %arg35[%c80, %c0_86], %249 {strides = array<i32>} : memref<432x256xbf16, #tpu.memory_space<vmem>>, vector<16x64xbf16>,
    %251 = vector.extract_strided_slice %214 {offsets = [0, 7], sizes = [16, 57], strides = [1, 1]} : vector<16x64xbf16> to vector<16x57xbf16>
    %252 = vector.extract_strided_slice %214 {offsets = [0, 0], sizes = [16, 7], strides = [1, 1]} : vector<16x64xbf16> to vector<16x7xbf16>
    %253 = tpu.concatenate %251, %252 in 1 : vector<16x57xbf16>, vector<16x7xbf16> -> vector<16x64xbf16>
    %254 = vector.extract_strided_slice %1 {offsets = [6, 0], sizes = [1, 64], strides = [1, 1]} : vector<9x64xbf16> to vector<1x64xbf16>
    %255 = vector.broadcast %254 : vector<1x64xbf16> to vector<16x64xbf16>
    %256 = arith.mulf %253, %255 : vector<16x64xbf16>
    %c96 = arith.constant 96 : index
    %c0_87 = arith.constant 0 : index
    %257 = vector.load %arg35[%c96, %c0_87] : memref<432x256xbf16, #tpu.memory_space<vmem>>, vector<16x64xbf16>
    tpu.vector_store %arg35[%c96, %c0_87], %256 {strides = array<i32>} : memref<432x256xbf16, #tpu.memory_space<vmem>>, vector<16x64xbf16>,
    %258 = vector.extract_strided_slice %214 {offsets = [0, 8], sizes = [16, 56], strides = [1, 1]} : vector<16x64xbf16> to vector<16x56xbf16>
    %259 = vector.extract_strided_slice %214 {offsets = [0, 0], sizes = [16, 8], strides = [1, 1]} : vector<16x64xbf16> to vector<16x8xbf16>
    %260 = tpu.concatenate %258, %259 in 1 : vector<16x56xbf16>, vector<16x8xbf16> -> vector<16x64xbf16>
    %261 = vector.extract_strided_slice %1 {offsets = [7, 0], sizes = [1, 64], strides = [1, 1]} : vector<9x64xbf16> to vector<1x64xbf16>
    %262 = vector.broadcast %261 : vector<1x64xbf16> to vector<16x64xbf16>
    %263 = arith.mulf %260, %262 : vector<16x64xbf16>
    %c112 = arith.constant 112 : index
    %c0_88 = arith.constant 0 : index
    %264 = vector.load %arg35[%c112, %c0_88] : memref<432x256xbf16, #tpu.memory_space<vmem>>, vector<16x64xbf16>
    tpu.vector_store %arg35[%c112, %c0_88], %263 {strides = array<i32>} : memref<432x256xbf16, #tpu.memory_space<vmem>>, vector<16x64xbf16>,
    %265 = vector.extract_strided_slice %214 {offsets = [0, 9], sizes = [16, 55], strides = [1, 1]} : vector<16x64xbf16> to vector<16x55xbf16>
    %266 = vector.extract_strided_slice %214 {offsets = [0, 0], sizes = [16, 9], strides = [1, 1]} : vector<16x64xbf16> to vector<16x9xbf16>
    %267 = tpu.concatenate %265, %266 in 1 : vector<16x55xbf16>, vector<16x9xbf16> -> vector<16x64xbf16>
    %268 = vector.extract_strided_slice %1 {offsets = [8, 0], sizes = [1, 64], strides = [1, 1]} : vector<9x64xbf16> to vector<1x64xbf16>
    %269 = vector.broadcast %268 : vector<1x64xbf16> to vector<16x64xbf16>
    %270 = arith.mulf %267, %269 : vector<16x64xbf16>
    %c128 = arith.constant 128 : index
    %c0_89 = arith.constant 0 : index
    %271 = vector.load %arg35[%c128, %c0_89] : memref<432x256xbf16, #tpu.memory_space<vmem>>, vector<16x64xbf16>
    tpu.vector_store %arg35[%c128, %c0_89], %270 {strides = array<i32>} : memref<432x256xbf16, #tpu.memory_space<vmem>>, vector<16x64xbf16>,
    %c0_90 = arith.constant 0 : index
    %c0_91 = arith.constant 0 : index
    %272 = vector.load %arg15[%c0_90, %c0_91] : memref<16x144xbf16, #tpu.memory_space<vmem>>, vector<16x144xbf16>
    %c0_92 = arith.constant 0 : index
    %c0_93 = arith.constant 0 : index
    %273 = vector.load %arg35[%c0_92, %c0_93] : memref<432x256xbf16, #tpu.memory_space<vmem>>, vector<144x64xbf16>
    %cst_94 = arith.constant dense<0.000000e+00> : vector<16x64xf32>
    %274 = tpu.matmul %272, %273, %cst_94 {dimension_numbers = #tpu.dot_dimension_numbers<[1], [0], [0], [1], [0, 0, 1, 1], [], []>} : vector<16x144xbf16>, vector<144x64xbf16>, vector<16x64xf32> -> vector<16x64xf32>
    %c0_95 = arith.constant 0 : index
    %c0_96 = arith.constant 0 : index
    %275 = vector.load %arg16[%c0_95, %c0_96] : memref<16x1xf32, #tpu.memory_space<vmem>>, vector<16x1xf32>
    %276 = vector.broadcast %275 : vector<16x1xf32> to vector<16x64xf32>
    %277 = arith.addf %274, %276 : vector<16x64xf32>
    %cst_97 = arith.constant 0.000000e+00 : f32
    %278 = vector.broadcast %cst_97 : f32 to vector<16x64xf32>
    %279 = arith.maximumf %277, %278 : vector<16x64xf32>
    %280 = vector.extract_strided_slice %279 {offsets = [0, 1], sizes = [16, 63], strides = [1, 1]} : vector<16x64xf32> to vector<16x63xf32>
    %281 = vector.extract_strided_slice %279 {offsets = [0, 0], sizes = [16, 1], strides = [1, 1]} : vector<16x64xf32> to vector<16x1xf32>
    %282 = tpu.concatenate %280, %281 in 1 : vector<16x63xf32>, vector<16x1xf32> -> vector<16x64xf32>
    %283 = arith.maximumf %279, %282 : vector<16x64xf32>
    %284 = vector.extract_strided_slice %283 {offsets = [0, 8], sizes = [16, 56], strides = [1, 1]} : vector<16x64xf32> to vector<16x56xf32>
    %285 = vector.extract_strided_slice %283 {offsets = [0, 0], sizes = [16, 8], strides = [1, 1]} : vector<16x64xf32> to vector<16x8xf32>
    %286 = tpu.concatenate %284, %285 in 1 : vector<16x56xf32>, vector<16x8xf32> -> vector<16x64xf32>
    %287 = arith.maximumf %283, %286 : vector<16x64xf32>
    %288 = arith.truncf %287 : vector<16x64xf32> to vector<16x64xbf16>
    %c0_98 = arith.constant 0 : index
    %c0_99 = arith.constant 0 : index
    %289 = vector.load %arg6[%c0_98, %c0_99] : memref<64x16xbf16, #tpu.memory_space<vmem>>, vector<64x16xbf16>
    %cst_100 = arith.constant dense<0.000000e+00> : vector<16x16xf32>
    %290 = tpu.matmul %288, %289, %cst_100 {dimension_numbers = #tpu.dot_dimension_numbers<[1], [0], [0], [1], [0, 0, 1, 1], [], []>} : vector<16x64xbf16>, vector<64x16xbf16>, vector<16x16xf32> -> vector<16x16xf32>
    %291 = arith.truncf %290 : vector<16x16xf32> to vector<16x16xbf16>
    %292 = vector.extract_strided_slice %291 {offsets = [0, 11], sizes = [16, 5], strides = [1, 1]} : vector<16x16xbf16> to vector<16x5xbf16>
    %293 = vector.extract_strided_slice %291 {offsets = [0, 0], sizes = [16, 11], strides = [1, 1]} : vector<16x16xbf16> to vector<16x11xbf16>
    %294 = tpu.concatenate %292, %293 in 1 : vector<16x5xbf16>, vector<16x11xbf16> -> vector<16x16xbf16>
    %295 = vector.extract_strided_slice %2 {offsets = [0, 0], sizes = [1, 16], strides = [1, 1]} : vector<9x16xbf16> to vector<1x16xbf16>
    %296 = vector.broadcast %295 : vector<1x16xbf16> to vector<16x16xbf16>
    %297 = arith.mulf %294, %296 : vector<16x16xbf16>
    %c0_101 = arith.constant 0 : index
    %c0_102 = arith.constant 0 : index
    %298 = vector.load %arg35[%c0_101, %c0_102] : memref<432x256xbf16, #tpu.memory_space<vmem>>, vector<16x16xbf16>
    tpu.vector_store %arg35[%c0_101, %c0_102], %297 {strides = array<i32>} : memref<432x256xbf16, #tpu.memory_space<vmem>>, vector<16x16xbf16>,
    %299 = vector.extract_strided_slice %291 {offsets = [0, 12], sizes = [16, 4], strides = [1, 1]} : vector<16x16xbf16> to vector<16x4xbf16>
    %300 = vector.extract_strided_slice %291 {offsets = [0, 0], sizes = [16, 12], strides = [1, 1]} : vector<16x16xbf16> to vector<16x12xbf16>
    %301 = tpu.concatenate %299, %300 in 1 : vector<16x4xbf16>, vector<16x12xbf16> -> vector<16x16xbf16>
    %302 = vector.extract_strided_slice %2 {offsets = [1, 0], sizes = [1, 16], strides = [1, 1]} : vector<9x16xbf16> to vector<1x16xbf16>
    %303 = vector.broadcast %302 : vector<1x16xbf16> to vector<16x16xbf16>
    %304 = arith.mulf %301, %303 : vector<16x16xbf16>
    %c16_103 = arith.constant 16 : index
    %c0_104 = arith.constant 0 : index
    %305 = vector.load %arg35[%c16_103, %c0_104] : memref<432x256xbf16, #tpu.memory_space<vmem>>, vector<16x16xbf16>
    tpu.vector_store %arg35[%c16_103, %c0_104], %304 {strides = array<i32>} : memref<432x256xbf16, #tpu.memory_space<vmem>>, vector<16x16xbf16>,
    %306 = vector.extract_strided_slice %291 {offsets = [0, 13], sizes = [16, 3], strides = [1, 1]} : vector<16x16xbf16> to vector<16x3xbf16>
    %307 = vector.extract_strided_slice %291 {offsets = [0, 0], sizes = [16, 13], strides = [1, 1]} : vector<16x16xbf16> to vector<16x13xbf16>
    %308 = tpu.concatenate %306, %307 in 1 : vector<16x3xbf16>, vector<16x13xbf16> -> vector<16x16xbf16>
    %309 = vector.extract_strided_slice %2 {offsets = [2, 0], sizes = [1, 16], strides = [1, 1]} : vector<9x16xbf16> to vector<1x16xbf16>
    %310 = vector.broadcast %309 : vector<1x16xbf16> to vector<16x16xbf16>
    %311 = arith.mulf %308, %310 : vector<16x16xbf16>
    %c32_105 = arith.constant 32 : index
    %c0_106 = arith.constant 0 : index
    %312 = vector.load %arg35[%c32_105, %c0_106] : memref<432x256xbf16, #tpu.memory_space<vmem>>, vector<16x16xbf16>
    tpu.vector_store %arg35[%c32_105, %c0_106], %311 {strides = array<i32>} : memref<432x256xbf16, #tpu.memory_space<vmem>>, vector<16x16xbf16>,
    %313 = vector.extract_strided_slice %291 {offsets = [0, 15], sizes = [16, 1], strides = [1, 1]} : vector<16x16xbf16> to vector<16x1xbf16>
    %314 = vector.extract_strided_slice %291 {offsets = [0, 0], sizes = [16, 15], strides = [1, 1]} : vector<16x16xbf16> to vector<16x15xbf16>
    %315 = tpu.concatenate %313, %314 in 1 : vector<16x1xbf16>, vector<16x15xbf16> -> vector<16x16xbf16>
    %316 = vector.extract_strided_slice %2 {offsets = [3, 0], sizes = [1, 16], strides = [1, 1]} : vector<9x16xbf16> to vector<1x16xbf16>
    %317 = vector.broadcast %316 : vector<1x16xbf16> to vector<16x16xbf16>
    %318 = arith.mulf %315, %317 : vector<16x16xbf16>
    %c48_107 = arith.constant 48 : index
    %c0_108 = arith.constant 0 : index
    %319 = vector.load %arg35[%c48_107, %c0_108] : memref<432x256xbf16, #tpu.memory_space<vmem>>, vector<16x16xbf16>
    tpu.vector_store %arg35[%c48_107, %c0_108], %318 {strides = array<i32>} : memref<432x256xbf16, #tpu.memory_space<vmem>>, vector<16x16xbf16>,
    %c64_109 = arith.constant 64 : index
    %c0_110 = arith.constant 0 : index
    %320 = vector.load %arg35[%c64_109, %c0_110] : memref<432x256xbf16, #tpu.memory_space<vmem>>, vector<16x16xbf16>
    tpu.vector_store %arg35[%c64_109, %c0_110], %291 {strides = array<i32>} : memref<432x256xbf16, #tpu.memory_space<vmem>>, vector<16x16xbf16>,
    %321 = vector.extract_strided_slice %291 {offsets = [0, 1], sizes = [16, 15], strides = [1, 1]} : vector<16x16xbf16> to vector<16x15xbf16>
    %322 = vector.extract_strided_slice %291 {offsets = [0, 0], sizes = [16, 1], strides = [1, 1]} : vector<16x16xbf16> to vector<16x1xbf16>
    %323 = tpu.concatenate %321, %322 in 1 : vector<16x15xbf16>, vector<16x1xbf16> -> vector<16x16xbf16>
    %324 = vector.extract_strided_slice %2 {offsets = [5, 0], sizes = [1, 16], strides = [1, 1]} : vector<9x16xbf16> to vector<1x16xbf16>
    %325 = vector.broadcast %324 : vector<1x16xbf16> to vector<16x16xbf16>
    %326 = arith.mulf %323, %325 : vector<16x16xbf16>
    %c80_111 = arith.constant 80 : index
    %c0_112 = arith.constant 0 : index
    %327 = vector.load %arg35[%c80_111, %c0_112] : memref<432x256xbf16, #tpu.memory_space<vmem>>, vector<16x16xbf16>
    tpu.vector_store %arg35[%c80_111, %c0_112], %326 {strides = array<i32>} : memref<432x256xbf16, #tpu.memory_space<vmem>>, vector<16x16xbf16>,
    %328 = vector.extract_strided_slice %291 {offsets = [0, 3], sizes = [16, 13], strides = [1, 1]} : vector<16x16xbf16> to vector<16x13xbf16>
    %329 = vector.extract_strided_slice %291 {offsets = [0, 0], sizes = [16, 3], strides = [1, 1]} : vector<16x16xbf16> to vector<16x3xbf16>
    %330 = tpu.concatenate %328, %329 in 1 : vector<16x13xbf16>, vector<16x3xbf16> -> vector<16x16xbf16>
    %331 = vector.extract_strided_slice %2 {offsets = [6, 0], sizes = [1, 16], strides = [1, 1]} : vector<9x16xbf16> to vector<1x16xbf16>
    %332 = vector.broadcast %331 : vector<1x16xbf16> to vector<16x16xbf16>
    %333 = arith.mulf %330, %332 : vector<16x16xbf16>
    %c96_113 = arith.constant 96 : index
    %c0_114 = arith.constant 0 : index
    %334 = vector.load %arg35[%c96_113, %c0_114] : memref<432x256xbf16, #tpu.memory_space<vmem>>, vector<16x16xbf16>
    tpu.vector_store %arg35[%c96_113, %c0_114], %333 {strides = array<i32>} : memref<432x256xbf16, #tpu.memory_space<vmem>>, vector<16x16xbf16>,
    %335 = vector.extract_strided_slice %291 {offsets = [0, 4], sizes = [16, 12], strides = [1, 1]} : vector<16x16xbf16> to vector<16x12xbf16>
    %336 = vector.extract_strided_slice %291 {offsets = [0, 0], sizes = [16, 4], strides = [1, 1]} : vector<16x16xbf16> to vector<16x4xbf16>
    %337 = tpu.concatenate %335, %336 in 1 : vector<16x12xbf16>, vector<16x4xbf16> -> vector<16x16xbf16>
    %338 = vector.extract_strided_slice %2 {offsets = [7, 0], sizes = [1, 16], strides = [1, 1]} : vector<9x16xbf16> to vector<1x16xbf16>
    %339 = vector.broadcast %338 : vector<1x16xbf16> to vector<16x16xbf16>
    %340 = arith.mulf %337, %339 : vector<16x16xbf16>
    %c112_115 = arith.constant 112 : index
    %c0_116 = arith.constant 0 : index
    %341 = vector.load %arg35[%c112_115, %c0_116] : memref<432x256xbf16, #tpu.memory_space<vmem>>, vector<16x16xbf16>
    tpu.vector_store %arg35[%c112_115, %c0_116], %340 {strides = array<i32>} : memref<432x256xbf16, #tpu.memory_space<vmem>>, vector<16x16xbf16>,
    %342 = vector.extract_strided_slice %291 {offsets = [0, 5], sizes = [16, 11], strides = [1, 1]} : vector<16x16xbf16> to vector<16x11xbf16>
    %343 = vector.extract_strided_slice %291 {offsets = [0, 0], sizes = [16, 5], strides = [1, 1]} : vector<16x16xbf16> to vector<16x5xbf16>
    %344 = tpu.concatenate %342, %343 in 1 : vector<16x11xbf16>, vector<16x5xbf16> -> vector<16x16xbf16>
    %345 = vector.extract_strided_slice %2 {offsets = [8, 0], sizes = [1, 16], strides = [1, 1]} : vector<9x16xbf16> to vector<1x16xbf16>
    %346 = vector.broadcast %345 : vector<1x16xbf16> to vector<16x16xbf16>
    %347 = arith.mulf %344, %346 : vector<16x16xbf16>
    %c128_117 = arith.constant 128 : index
    %c0_118 = arith.constant 0 : index
    %348 = vector.load %arg35[%c128_117, %c0_118] : memref<432x256xbf16, #tpu.memory_space<vmem>>, vector<16x16xbf16>
    tpu.vector_store %arg35[%c128_117, %c0_118], %347 {strides = array<i32>} : memref<432x256xbf16, #tpu.memory_space<vmem>>, vector<16x16xbf16>,
    %c0_119 = arith.constant 0 : index
    %c0_120 = arith.constant 0 : index
    %349 = vector.load %arg17[%c0_119, %c0_120] : memref<32x144xbf16, #tpu.memory_space<vmem>>, vector<32x144xbf16>
    %c0_121 = arith.constant 0 : index
    %c0_122 = arith.constant 0 : index
    %350 = vector.load %arg35[%c0_121, %c0_122] : memref<432x256xbf16, #tpu.memory_space<vmem>>, vector<144x16xbf16>
    %cst_123 = arith.constant dense<0.000000e+00> : vector<32x16xf32>
    %351 = tpu.matmul %349, %350, %cst_123 {dimension_numbers = #tpu.dot_dimension_numbers<[1], [0], [0], [1], [0, 0, 1, 1], [], []>} : vector<32x144xbf16>, vector<144x16xbf16>, vector<32x16xf32> -> vector<32x16xf32>
    %c0_124 = arith.constant 0 : index
    %c0_125 = arith.constant 0 : index
    %352 = vector.load %arg18[%c0_124, %c0_125] : memref<32x1xf32, #tpu.memory_space<vmem>>, vector<32x1xf32>
    %353 = vector.broadcast %352 : vector<32x1xf32> to vector<32x16xf32>
    %354 = arith.addf %351, %353 : vector<32x16xf32>
    %cst_126 = arith.constant 0.000000e+00 : f32
    %355 = vector.broadcast %cst_126 : f32 to vector<32x16xf32>
    %356 = arith.maximumf %354, %355 : vector<32x16xf32>
    %357 = arith.truncf %356 : vector<32x16xf32> to vector<32x16xbf16>
    %358 = vector.extract_strided_slice %357 {offsets = [0, 11], sizes = [32, 5], strides = [1, 1]} : vector<32x16xbf16> to vector<32x5xbf16>
    %359 = vector.extract_strided_slice %357 {offsets = [0, 0], sizes = [32, 11], strides = [1, 1]} : vector<32x16xbf16> to vector<32x11xbf16>
    %360 = tpu.concatenate %358, %359 in 1 : vector<32x5xbf16>, vector<32x11xbf16> -> vector<32x16xbf16>
    %361 = vector.extract_strided_slice %2 {offsets = [0, 0], sizes = [1, 16], strides = [1, 1]} : vector<9x16xbf16> to vector<1x16xbf16>
    %362 = vector.broadcast %361 : vector<1x16xbf16> to vector<32x16xbf16>
    %363 = arith.mulf %360, %362 : vector<32x16xbf16>
    %c0_127 = arith.constant 0 : index
    %c0_128 = arith.constant 0 : index
    %364 = vector.load %arg35[%c0_127, %c0_128] : memref<432x256xbf16, #tpu.memory_space<vmem>>, vector<32x16xbf16>
    tpu.vector_store %arg35[%c0_127, %c0_128], %363 {strides = array<i32>} : memref<432x256xbf16, #tpu.memory_space<vmem>>, vector<32x16xbf16>,
    %365 = vector.extract_strided_slice %357 {offsets = [0, 12], sizes = [32, 4], strides = [1, 1]} : vector<32x16xbf16> to vector<32x4xbf16>
    %366 = vector.extract_strided_slice %357 {offsets = [0, 0], sizes = [32, 12], strides = [1, 1]} : vector<32x16xbf16> to vector<32x12xbf16>
    %367 = tpu.concatenate %365, %366 in 1 : vector<32x4xbf16>, vector<32x12xbf16> -> vector<32x16xbf16>
    %368 = vector.extract_strided_slice %2 {offsets = [1, 0], sizes = [1, 16], strides = [1, 1]} : vector<9x16xbf16> to vector<1x16xbf16>
    %369 = vector.broadcast %368 : vector<1x16xbf16> to vector<32x16xbf16>
    %370 = arith.mulf %367, %369 : vector<32x16xbf16>
    %c32_129 = arith.constant 32 : index
    %c0_130 = arith.constant 0 : index
    %371 = vector.load %arg35[%c32_129, %c0_130] : memref<432x256xbf16, #tpu.memory_space<vmem>>, vector<32x16xbf16>
    tpu.vector_store %arg35[%c32_129, %c0_130], %370 {strides = array<i32>} : memref<432x256xbf16, #tpu.memory_space<vmem>>, vector<32x16xbf16>,
    %372 = vector.extract_strided_slice %357 {offsets = [0, 13], sizes = [32, 3], strides = [1, 1]} : vector<32x16xbf16> to vector<32x3xbf16>
    %373 = vector.extract_strided_slice %357 {offsets = [0, 0], sizes = [32, 13], strides = [1, 1]} : vector<32x16xbf16> to vector<32x13xbf16>
    %374 = tpu.concatenate %372, %373 in 1 : vector<32x3xbf16>, vector<32x13xbf16> -> vector<32x16xbf16>
    %375 = vector.extract_strided_slice %2 {offsets = [2, 0], sizes = [1, 16], strides = [1, 1]} : vector<9x16xbf16> to vector<1x16xbf16>
    %376 = vector.broadcast %375 : vector<1x16xbf16> to vector<32x16xbf16>
    %377 = arith.mulf %374, %376 : vector<32x16xbf16>
    %c64_131 = arith.constant 64 : index
    %c0_132 = arith.constant 0 : index
    %378 = vector.load %arg35[%c64_131, %c0_132] : memref<432x256xbf16, #tpu.memory_space<vmem>>, vector<32x16xbf16>
    tpu.vector_store %arg35[%c64_131, %c0_132], %377 {strides = array<i32>} : memref<432x256xbf16, #tpu.memory_space<vmem>>, vector<32x16xbf16>,
    %379 = vector.extract_strided_slice %357 {offsets = [0, 15], sizes = [32, 1], strides = [1, 1]} : vector<32x16xbf16> to vector<32x1xbf16>
    %380 = vector.extract_strided_slice %357 {offsets = [0, 0], sizes = [32, 15], strides = [1, 1]} : vector<32x16xbf16> to vector<32x15xbf16>
    %381 = tpu.concatenate %379, %380 in 1 : vector<32x1xbf16>, vector<32x15xbf16> -> vector<32x16xbf16>
    %382 = vector.extract_strided_slice %2 {offsets = [3, 0], sizes = [1, 16], strides = [1, 1]} : vector<9x16xbf16> to vector<1x16xbf16>
    %383 = vector.broadcast %382 : vector<1x16xbf16> to vector<32x16xbf16>
    %384 = arith.mulf %381, %383 : vector<32x16xbf16>
    %c96_133 = arith.constant 96 : index
    %c0_134 = arith.constant 0 : index
    %385 = vector.load %arg35[%c96_133, %c0_134] : memref<432x256xbf16, #tpu.memory_space<vmem>>, vector<32x16xbf16>
    tpu.vector_store %arg35[%c96_133, %c0_134], %384 {strides = array<i32>} : memref<432x256xbf16, #tpu.memory_space<vmem>>, vector<32x16xbf16>,
    %c128_135 = arith.constant 128 : index
    %c0_136 = arith.constant 0 : index
    %386 = vector.load %arg35[%c128_135, %c0_136] : memref<432x256xbf16, #tpu.memory_space<vmem>>, vector<32x16xbf16>
    tpu.vector_store %arg35[%c128_135, %c0_136], %357 {strides = array<i32>} : memref<432x256xbf16, #tpu.memory_space<vmem>>, vector<32x16xbf16>,
    %387 = vector.extract_strided_slice %357 {offsets = [0, 1], sizes = [32, 15], strides = [1, 1]} : vector<32x16xbf16> to vector<32x15xbf16>
    %388 = vector.extract_strided_slice %357 {offsets = [0, 0], sizes = [32, 1], strides = [1, 1]} : vector<32x16xbf16> to vector<32x1xbf16>
    %389 = tpu.concatenate %387, %388 in 1 : vector<32x15xbf16>, vector<32x1xbf16> -> vector<32x16xbf16>
    %390 = vector.extract_strided_slice %2 {offsets = [5, 0], sizes = [1, 16], strides = [1, 1]} : vector<9x16xbf16> to vector<1x16xbf16>
    %391 = vector.broadcast %390 : vector<1x16xbf16> to vector<32x16xbf16>
    %392 = arith.mulf %389, %391 : vector<32x16xbf16>
    %c160 = arith.constant 160 : index
    %c0_137 = arith.constant 0 : index
    %393 = vector.load %arg35[%c160, %c0_137] : memref<432x256xbf16, #tpu.memory_space<vmem>>, vector<32x16xbf16>
    tpu.vector_store %arg35[%c160, %c0_137], %392 {strides = array<i32>} : memref<432x256xbf16, #tpu.memory_space<vmem>>, vector<32x16xbf16>,
    %394 = vector.extract_strided_slice %357 {offsets = [0, 3], sizes = [32, 13], strides = [1, 1]} : vector<32x16xbf16> to vector<32x13xbf16>
    %395 = vector.extract_strided_slice %357 {offsets = [0, 0], sizes = [32, 3], strides = [1, 1]} : vector<32x16xbf16> to vector<32x3xbf16>
    %396 = tpu.concatenate %394, %395 in 1 : vector<32x13xbf16>, vector<32x3xbf16> -> vector<32x16xbf16>
    %397 = vector.extract_strided_slice %2 {offsets = [6, 0], sizes = [1, 16], strides = [1, 1]} : vector<9x16xbf16> to vector<1x16xbf16>
    %398 = vector.broadcast %397 : vector<1x16xbf16> to vector<32x16xbf16>
    %399 = arith.mulf %396, %398 : vector<32x16xbf16>
    %c192 = arith.constant 192 : index
    %c0_138 = arith.constant 0 : index
    %400 = vector.load %arg35[%c192, %c0_138] : memref<432x256xbf16, #tpu.memory_space<vmem>>, vector<32x16xbf16>
    tpu.vector_store %arg35[%c192, %c0_138], %399 {strides = array<i32>} : memref<432x256xbf16, #tpu.memory_space<vmem>>, vector<32x16xbf16>,
    %401 = vector.extract_strided_slice %357 {offsets = [0, 4], sizes = [32, 12], strides = [1, 1]} : vector<32x16xbf16> to vector<32x12xbf16>
    %402 = vector.extract_strided_slice %357 {offsets = [0, 0], sizes = [32, 4], strides = [1, 1]} : vector<32x16xbf16> to vector<32x4xbf16>
    %403 = tpu.concatenate %401, %402 in 1 : vector<32x12xbf16>, vector<32x4xbf16> -> vector<32x16xbf16>
    %404 = vector.extract_strided_slice %2 {offsets = [7, 0], sizes = [1, 16], strides = [1, 1]} : vector<9x16xbf16> to vector<1x16xbf16>
    %405 = vector.broadcast %404 : vector<1x16xbf16> to vector<32x16xbf16>
    %406 = arith.mulf %403, %405 : vector<32x16xbf16>
    %c224 = arith.constant 224 : index
    %c0_139 = arith.constant 0 : index
    %407 = vector.load %arg35[%c224, %c0_139] : memref<432x256xbf16, #tpu.memory_space<vmem>>, vector<32x16xbf16>
    tpu.vector_store %arg35[%c224, %c0_139], %406 {strides = array<i32>} : memref<432x256xbf16, #tpu.memory_space<vmem>>, vector<32x16xbf16>,
    %408 = vector.extract_strided_slice %357 {offsets = [0, 5], sizes = [32, 11], strides = [1, 1]} : vector<32x16xbf16> to vector<32x11xbf16>
    %409 = vector.extract_strided_slice %357 {offsets = [0, 0], sizes = [32, 5], strides = [1, 1]} : vector<32x16xbf16> to vector<32x5xbf16>
    %410 = tpu.concatenate %408, %409 in 1 : vector<32x11xbf16>, vector<32x5xbf16> -> vector<32x16xbf16>
    %411 = vector.extract_strided_slice %2 {offsets = [8, 0], sizes = [1, 16], strides = [1, 1]} : vector<9x16xbf16> to vector<1x16xbf16>
    %412 = vector.broadcast %411 : vector<1x16xbf16> to vector<32x16xbf16>
    %413 = arith.mulf %410, %412 : vector<32x16xbf16>
    %c256 = arith.constant 256 : index
    %c0_140 = arith.constant 0 : index
    %414 = vector.load %arg35[%c256, %c0_140] : memref<432x256xbf16, #tpu.memory_space<vmem>>, vector<32x16xbf16>
    tpu.vector_store %arg35[%c256, %c0_140], %413 {strides = array<i32>} : memref<432x256xbf16, #tpu.memory_space<vmem>>, vector<32x16xbf16>,
    %c0_141 = arith.constant 0 : index
    %c0_142 = arith.constant 0 : index
    %415 = vector.load %arg19[%c0_141, %c0_142] : memref<32x288xbf16, #tpu.memory_space<vmem>>, vector<32x288xbf16>
    %c0_143 = arith.constant 0 : index
    %c0_144 = arith.constant 0 : index
    %416 = vector.load %arg35[%c0_143, %c0_144] : memref<432x256xbf16, #tpu.memory_space<vmem>>, vector<288x16xbf16>
    %cst_145 = arith.constant dense<0.000000e+00> : vector<32x16xf32>
    %417 = tpu.matmul %415, %416, %cst_145 {dimension_numbers = #tpu.dot_dimension_numbers<[1], [0], [0], [1], [0, 0, 1, 1], [], []>} : vector<32x288xbf16>, vector<288x16xbf16>, vector<32x16xf32> -> vector<32x16xf32>
    %c0_146 = arith.constant 0 : index
    %c0_147 = arith.constant 0 : index
    %418 = vector.load %arg20[%c0_146, %c0_147] : memref<32x1xf32, #tpu.memory_space<vmem>>, vector<32x1xf32>
    %419 = vector.broadcast %418 : vector<32x1xf32> to vector<32x16xf32>
    %420 = arith.addf %417, %419 : vector<32x16xf32>
    %cst_148 = arith.constant 0.000000e+00 : f32
    %421 = vector.broadcast %cst_148 : f32 to vector<32x16xf32>
    %422 = arith.maximumf %420, %421 : vector<32x16xf32>
    %423 = arith.truncf %422 : vector<32x16xf32> to vector<32x16xbf16>
    %c0_149 = arith.constant 0 : index
    %c0_150 = arith.constant 0 : index
    %424 = vector.load %arg7[%c0_149, %c0_150] : memref<16x64xbf16, #tpu.memory_space<vmem>>, vector<16x64xbf16>
    %cst_151 = arith.constant dense<0.000000e+00> : vector<32x64xf32>
    %425 = tpu.matmul %423, %424, %cst_151 {dimension_numbers = #tpu.dot_dimension_numbers<[1], [0], [0], [1], [0, 0, 1, 1], [], []>} : vector<32x16xbf16>, vector<16x64xbf16>, vector<32x64xf32> -> vector<32x64xf32>
    %426 = arith.truncf %425 : vector<32x64xf32> to vector<32x64xbf16>
    %427 = vector.extract_strided_slice %426 {offsets = [0, 55], sizes = [32, 9], strides = [1, 1]} : vector<32x64xbf16> to vector<32x9xbf16>
    %428 = vector.extract_strided_slice %426 {offsets = [0, 0], sizes = [32, 55], strides = [1, 1]} : vector<32x64xbf16> to vector<32x55xbf16>
    %429 = tpu.concatenate %427, %428 in 1 : vector<32x9xbf16>, vector<32x55xbf16> -> vector<32x64xbf16>
    %430 = vector.extract_strided_slice %1 {offsets = [0, 0], sizes = [1, 64], strides = [1, 1]} : vector<9x64xbf16> to vector<1x64xbf16>
    %431 = vector.broadcast %430 : vector<1x64xbf16> to vector<32x64xbf16>
    %432 = arith.mulf %429, %431 : vector<32x64xbf16>
    %c0_152 = arith.constant 0 : index
    %c0_153 = arith.constant 0 : index
    %433 = vector.load %arg35[%c0_152, %c0_153] : memref<432x256xbf16, #tpu.memory_space<vmem>>, vector<32x64xbf16>
    tpu.vector_store %arg35[%c0_152, %c0_153], %432 {strides = array<i32>} : memref<432x256xbf16, #tpu.memory_space<vmem>>, vector<32x64xbf16>,
    %434 = vector.extract_strided_slice %426 {offsets = [0, 56], sizes = [32, 8], strides = [1, 1]} : vector<32x64xbf16> to vector<32x8xbf16>
    %435 = vector.extract_strided_slice %426 {offsets = [0, 0], sizes = [32, 56], strides = [1, 1]} : vector<32x64xbf16> to vector<32x56xbf16>
    %436 = tpu.concatenate %434, %435 in 1 : vector<32x8xbf16>, vector<32x56xbf16> -> vector<32x64xbf16>
    %437 = vector.extract_strided_slice %1 {offsets = [1, 0], sizes = [1, 64], strides = [1, 1]} : vector<9x64xbf16> to vector<1x64xbf16>
    %438 = vector.broadcast %437 : vector<1x64xbf16> to vector<32x64xbf16>
    %439 = arith.mulf %436, %438 : vector<32x64xbf16>
    %c32_154 = arith.constant 32 : index
    %c0_155 = arith.constant 0 : index
    %440 = vector.load %arg35[%c32_154, %c0_155] : memref<432x256xbf16, #tpu.memory_space<vmem>>, vector<32x64xbf16>
    tpu.vector_store %arg35[%c32_154, %c0_155], %439 {strides = array<i32>} : memref<432x256xbf16, #tpu.memory_space<vmem>>, vector<32x64xbf16>,
    %441 = vector.extract_strided_slice %426 {offsets = [0, 57], sizes = [32, 7], strides = [1, 1]} : vector<32x64xbf16> to vector<32x7xbf16>
    %442 = vector.extract_strided_slice %426 {offsets = [0, 0], sizes = [32, 57], strides = [1, 1]} : vector<32x64xbf16> to vector<32x57xbf16>
    %443 = tpu.concatenate %441, %442 in 1 : vector<32x7xbf16>, vector<32x57xbf16> -> vector<32x64xbf16>
    %444 = vector.extract_strided_slice %1 {offsets = [2, 0], sizes = [1, 64], strides = [1, 1]} : vector<9x64xbf16> to vector<1x64xbf16>
    %445 = vector.broadcast %444 : vector<1x64xbf16> to vector<32x64xbf16>
    %446 = arith.mulf %443, %445 : vector<32x64xbf16>
    %c64_156 = arith.constant 64 : index
    %c0_157 = arith.constant 0 : index
    %447 = vector.load %arg35[%c64_156, %c0_157] : memref<432x256xbf16, #tpu.memory_space<vmem>>, vector<32x64xbf16>
    tpu.vector_store %arg35[%c64_156, %c0_157], %446 {strides = array<i32>} : memref<432x256xbf16, #tpu.memory_space<vmem>>, vector<32x64xbf16>,
    %448 = vector.extract_strided_slice %426 {offsets = [0, 63], sizes = [32, 1], strides = [1, 1]} : vector<32x64xbf16> to vector<32x1xbf16>
    %449 = vector.extract_strided_slice %426 {offsets = [0, 0], sizes = [32, 63], strides = [1, 1]} : vector<32x64xbf16> to vector<32x63xbf16>
    %450 = tpu.concatenate %448, %449 in 1 : vector<32x1xbf16>, vector<32x63xbf16> -> vector<32x64xbf16>
    %451 = vector.extract_strided_slice %1 {offsets = [3, 0], sizes = [1, 64], strides = [1, 1]} : vector<9x64xbf16> to vector<1x64xbf16>
    %452 = vector.broadcast %451 : vector<1x64xbf16> to vector<32x64xbf16>
    %453 = arith.mulf %450, %452 : vector<32x64xbf16>
    %c96_158 = arith.constant 96 : index
    %c0_159 = arith.constant 0 : index
    %454 = vector.load %arg35[%c96_158, %c0_159] : memref<432x256xbf16, #tpu.memory_space<vmem>>, vector<32x64xbf16>
    tpu.vector_store %arg35[%c96_158, %c0_159], %453 {strides = array<i32>} : memref<432x256xbf16, #tpu.memory_space<vmem>>, vector<32x64xbf16>,
    %c128_160 = arith.constant 128 : index
    %c0_161 = arith.constant 0 : index
    %455 = vector.load %arg35[%c128_160, %c0_161] : memref<432x256xbf16, #tpu.memory_space<vmem>>, vector<32x64xbf16>
    tpu.vector_store %arg35[%c128_160, %c0_161], %426 {strides = array<i32>} : memref<432x256xbf16, #tpu.memory_space<vmem>>, vector<32x64xbf16>,
    %456 = vector.extract_strided_slice %426 {offsets = [0, 1], sizes = [32, 63], strides = [1, 1]} : vector<32x64xbf16> to vector<32x63xbf16>
    %457 = vector.extract_strided_slice %426 {offsets = [0, 0], sizes = [32, 1], strides = [1, 1]} : vector<32x64xbf16> to vector<32x1xbf16>
    %458 = tpu.concatenate %456, %457 in 1 : vector<32x63xbf16>, vector<32x1xbf16> -> vector<32x64xbf16>
    %459 = vector.extract_strided_slice %1 {offsets = [5, 0], sizes = [1, 64], strides = [1, 1]} : vector<9x64xbf16> to vector<1x64xbf16>
    %460 = vector.broadcast %459 : vector<1x64xbf16> to vector<32x64xbf16>
    %461 = arith.mulf %458, %460 : vector<32x64xbf16>
    %c160_162 = arith.constant 160 : index
    %c0_163 = arith.constant 0 : index
    %462 = vector.load %arg35[%c160_162, %c0_163] : memref<432x256xbf16, #tpu.memory_space<vmem>>, vector<32x64xbf16>
    tpu.vector_store %arg35[%c160_162, %c0_163], %461 {strides = array<i32>} : memref<432x256xbf16, #tpu.memory_space<vmem>>, vector<32x64xbf16>,
    %463 = vector.extract_strided_slice %426 {offsets = [0, 7], sizes = [32, 57], strides = [1, 1]} : vector<32x64xbf16> to vector<32x57xbf16>
    %464 = vector.extract_strided_slice %426 {offsets = [0, 0], sizes = [32, 7], strides = [1, 1]} : vector<32x64xbf16> to vector<32x7xbf16>
    %465 = tpu.concatenate %463, %464 in 1 : vector<32x57xbf16>, vector<32x7xbf16> -> vector<32x64xbf16>
    %466 = vector.extract_strided_slice %1 {offsets = [6, 0], sizes = [1, 64], strides = [1, 1]} : vector<9x64xbf16> to vector<1x64xbf16>
    %467 = vector.broadcast %466 : vector<1x64xbf16> to vector<32x64xbf16>
    %468 = arith.mulf %465, %467 : vector<32x64xbf16>
    %c192_164 = arith.constant 192 : index
    %c0_165 = arith.constant 0 : index
    %469 = vector.load %arg35[%c192_164, %c0_165] : memref<432x256xbf16, #tpu.memory_space<vmem>>, vector<32x64xbf16>
    tpu.vector_store %arg35[%c192_164, %c0_165], %468 {strides = array<i32>} : memref<432x256xbf16, #tpu.memory_space<vmem>>, vector<32x64xbf16>,
    %470 = vector.extract_strided_slice %426 {offsets = [0, 8], sizes = [32, 56], strides = [1, 1]} : vector<32x64xbf16> to vector<32x56xbf16>
    %471 = vector.extract_strided_slice %426 {offsets = [0, 0], sizes = [32, 8], strides = [1, 1]} : vector<32x64xbf16> to vector<32x8xbf16>
    %472 = tpu.concatenate %470, %471 in 1 : vector<32x56xbf16>, vector<32x8xbf16> -> vector<32x64xbf16>
    %473 = vector.extract_strided_slice %1 {offsets = [7, 0], sizes = [1, 64], strides = [1, 1]} : vector<9x64xbf16> to vector<1x64xbf16>
    %474 = vector.broadcast %473 : vector<1x64xbf16> to vector<32x64xbf16>
    %475 = arith.mulf %472, %474 : vector<32x64xbf16>
    %c224_166 = arith.constant 224 : index
    %c0_167 = arith.constant 0 : index
    %476 = vector.load %arg35[%c224_166, %c0_167] : memref<432x256xbf16, #tpu.memory_space<vmem>>, vector<32x64xbf16>
    tpu.vector_store %arg35[%c224_166, %c0_167], %475 {strides = array<i32>} : memref<432x256xbf16, #tpu.memory_space<vmem>>, vector<32x64xbf16>,
    %477 = vector.extract_strided_slice %426 {offsets = [0, 9], sizes = [32, 55], strides = [1, 1]} : vector<32x64xbf16> to vector<32x55xbf16>
    %478 = vector.extract_strided_slice %426 {offsets = [0, 0], sizes = [32, 9], strides = [1, 1]} : vector<32x64xbf16> to vector<32x9xbf16>
    %479 = tpu.concatenate %477, %478 in 1 : vector<32x55xbf16>, vector<32x9xbf16> -> vector<32x64xbf16>
    %480 = vector.extract_strided_slice %1 {offsets = [8, 0], sizes = [1, 64], strides = [1, 1]} : vector<9x64xbf16> to vector<1x64xbf16>
    %481 = vector.broadcast %480 : vector<1x64xbf16> to vector<32x64xbf16>
    %482 = arith.mulf %479, %481 : vector<32x64xbf16>
    %c256_168 = arith.constant 256 : index
    %c0_169 = arith.constant 0 : index
    %483 = vector.load %arg35[%c256_168, %c0_169] : memref<432x256xbf16, #tpu.memory_space<vmem>>, vector<32x64xbf16>
    tpu.vector_store %arg35[%c256_168, %c0_169], %482 {strides = array<i32>} : memref<432x256xbf16, #tpu.memory_space<vmem>>, vector<32x64xbf16>,
    %484 = arith.truncf %279 : vector<16x64xf32> to vector<16x64xbf16>
    %485 = vector.extract_strided_slice %484 {offsets = [0, 55], sizes = [16, 9], strides = [1, 1]} : vector<16x64xbf16> to vector<16x9xbf16>
    %486 = vector.extract_strided_slice %484 {offsets = [0, 0], sizes = [16, 55], strides = [1, 1]} : vector<16x64xbf16> to vector<16x55xbf16>
    %487 = tpu.concatenate %485, %486 in 1 : vector<16x9xbf16>, vector<16x55xbf16> -> vector<16x64xbf16>
    %488 = vector.extract_strided_slice %1 {offsets = [0, 0], sizes = [1, 64], strides = [1, 1]} : vector<9x64xbf16> to vector<1x64xbf16>
    %489 = vector.broadcast %488 : vector<1x64xbf16> to vector<16x64xbf16>
    %490 = arith.mulf %487, %489 : vector<16x64xbf16>
    %c288 = arith.constant 288 : index
    %c0_170 = arith.constant 0 : index
    %491 = vector.load %arg35[%c288, %c0_170] : memref<432x256xbf16, #tpu.memory_space<vmem>>, vector<16x64xbf16>
    tpu.vector_store %arg35[%c288, %c0_170], %490 {strides = array<i32>} : memref<432x256xbf16, #tpu.memory_space<vmem>>, vector<16x64xbf16>,
    %492 = vector.extract_strided_slice %484 {offsets = [0, 56], sizes = [16, 8], strides = [1, 1]} : vector<16x64xbf16> to vector<16x8xbf16>
    %493 = vector.extract_strided_slice %484 {offsets = [0, 0], sizes = [16, 56], strides = [1, 1]} : vector<16x64xbf16> to vector<16x56xbf16>
    %494 = tpu.concatenate %492, %493 in 1 : vector<16x8xbf16>, vector<16x56xbf16> -> vector<16x64xbf16>
    %495 = vector.extract_strided_slice %1 {offsets = [1, 0], sizes = [1, 64], strides = [1, 1]} : vector<9x64xbf16> to vector<1x64xbf16>
    %496 = vector.broadcast %495 : vector<1x64xbf16> to vector<16x64xbf16>
    %497 = arith.mulf %494, %496 : vector<16x64xbf16>
    %c304 = arith.constant 304 : index
    %c0_171 = arith.constant 0 : index
    %498 = vector.load %arg35[%c304, %c0_171] : memref<432x256xbf16, #tpu.memory_space<vmem>>, vector<16x64xbf16>
    tpu.vector_store %arg35[%c304, %c0_171], %497 {strides = array<i32>} : memref<432x256xbf16, #tpu.memory_space<vmem>>, vector<16x64xbf16>,
    %499 = vector.extract_strided_slice %484 {offsets = [0, 57], sizes = [16, 7], strides = [1, 1]} : vector<16x64xbf16> to vector<16x7xbf16>
    %500 = vector.extract_strided_slice %484 {offsets = [0, 0], sizes = [16, 57], strides = [1, 1]} : vector<16x64xbf16> to vector<16x57xbf16>
    %501 = tpu.concatenate %499, %500 in 1 : vector<16x7xbf16>, vector<16x57xbf16> -> vector<16x64xbf16>
    %502 = vector.extract_strided_slice %1 {offsets = [2, 0], sizes = [1, 64], strides = [1, 1]} : vector<9x64xbf16> to vector<1x64xbf16>
    %503 = vector.broadcast %502 : vector<1x64xbf16> to vector<16x64xbf16>
    %504 = arith.mulf %501, %503 : vector<16x64xbf16>
    %c320 = arith.constant 320 : index
    %c0_172 = arith.constant 0 : index
    %505 = vector.load %arg35[%c320, %c0_172] : memref<432x256xbf16, #tpu.memory_space<vmem>>, vector<16x64xbf16>
    tpu.vector_store %arg35[%c320, %c0_172], %504 {strides = array<i32>} : memref<432x256xbf16, #tpu.memory_space<vmem>>, vector<16x64xbf16>,
    %506 = vector.extract_strided_slice %484 {offsets = [0, 63], sizes = [16, 1], strides = [1, 1]} : vector<16x64xbf16> to vector<16x1xbf16>
    %507 = vector.extract_strided_slice %484 {offsets = [0, 0], sizes = [16, 63], strides = [1, 1]} : vector<16x64xbf16> to vector<16x63xbf16>
    %508 = tpu.concatenate %506, %507 in 1 : vector<16x1xbf16>, vector<16x63xbf16> -> vector<16x64xbf16>
    %509 = vector.extract_strided_slice %1 {offsets = [3, 0], sizes = [1, 64], strides = [1, 1]} : vector<9x64xbf16> to vector<1x64xbf16>
    %510 = vector.broadcast %509 : vector<1x64xbf16> to vector<16x64xbf16>
    %511 = arith.mulf %508, %510 : vector<16x64xbf16>
    %c336 = arith.constant 336 : index
    %c0_173 = arith.constant 0 : index
    %512 = vector.load %arg35[%c336, %c0_173] : memref<432x256xbf16, #tpu.memory_space<vmem>>, vector<16x64xbf16>
    tpu.vector_store %arg35[%c336, %c0_173], %511 {strides = array<i32>} : memref<432x256xbf16, #tpu.memory_space<vmem>>, vector<16x64xbf16>,
    %c352 = arith.constant 352 : index
    %c0_174 = arith.constant 0 : index
    %513 = vector.load %arg35[%c352, %c0_174] : memref<432x256xbf16, #tpu.memory_space<vmem>>, vector<16x64xbf16>
    tpu.vector_store %arg35[%c352, %c0_174], %484 {strides = array<i32>} : memref<432x256xbf16, #tpu.memory_space<vmem>>, vector<16x64xbf16>,
    %514 = vector.extract_strided_slice %484 {offsets = [0, 1], sizes = [16, 63], strides = [1, 1]} : vector<16x64xbf16> to vector<16x63xbf16>
    %515 = vector.extract_strided_slice %484 {offsets = [0, 0], sizes = [16, 1], strides = [1, 1]} : vector<16x64xbf16> to vector<16x1xbf16>
    %516 = tpu.concatenate %514, %515 in 1 : vector<16x63xbf16>, vector<16x1xbf16> -> vector<16x64xbf16>
    %517 = vector.extract_strided_slice %1 {offsets = [5, 0], sizes = [1, 64], strides = [1, 1]} : vector<9x64xbf16> to vector<1x64xbf16>
    %518 = vector.broadcast %517 : vector<1x64xbf16> to vector<16x64xbf16>
    %519 = arith.mulf %516, %518 : vector<16x64xbf16>
    %c368 = arith.constant 368 : index
    %c0_175 = arith.constant 0 : index
    %520 = vector.load %arg35[%c368, %c0_175] : memref<432x256xbf16, #tpu.memory_space<vmem>>, vector<16x64xbf16>
    tpu.vector_store %arg35[%c368, %c0_175], %519 {strides = array<i32>} : memref<432x256xbf16, #tpu.memory_space<vmem>>, vector<16x64xbf16>,
    %521 = vector.extract_strided_slice %484 {offsets = [0, 7], sizes = [16, 57], strides = [1, 1]} : vector<16x64xbf16> to vector<16x57xbf16>
    %522 = vector.extract_strided_slice %484 {offsets = [0, 0], sizes = [16, 7], strides = [1, 1]} : vector<16x64xbf16> to vector<16x7xbf16>
    %523 = tpu.concatenate %521, %522 in 1 : vector<16x57xbf16>, vector<16x7xbf16> -> vector<16x64xbf16>
    %524 = vector.extract_strided_slice %1 {offsets = [6, 0], sizes = [1, 64], strides = [1, 1]} : vector<9x64xbf16> to vector<1x64xbf16>
    %525 = vector.broadcast %524 : vector<1x64xbf16> to vector<16x64xbf16>
    %526 = arith.mulf %523, %525 : vector<16x64xbf16>
    %c384 = arith.constant 384 : index
    %c0_176 = arith.constant 0 : index
    %527 = vector.load %arg35[%c384, %c0_176] : memref<432x256xbf16, #tpu.memory_space<vmem>>, vector<16x64xbf16>
    tpu.vector_store %arg35[%c384, %c0_176], %526 {strides = array<i32>} : memref<432x256xbf16, #tpu.memory_space<vmem>>, vector<16x64xbf16>,
    %528 = vector.extract_strided_slice %484 {offsets = [0, 8], sizes = [16, 56], strides = [1, 1]} : vector<16x64xbf16> to vector<16x56xbf16>
    %529 = vector.extract_strided_slice %484 {offsets = [0, 0], sizes = [16, 8], strides = [1, 1]} : vector<16x64xbf16> to vector<16x8xbf16>
    %530 = tpu.concatenate %528, %529 in 1 : vector<16x56xbf16>, vector<16x8xbf16> -> vector<16x64xbf16>
    %531 = vector.extract_strided_slice %1 {offsets = [7, 0], sizes = [1, 64], strides = [1, 1]} : vector<9x64xbf16> to vector<1x64xbf16>
    %532 = vector.broadcast %531 : vector<1x64xbf16> to vector<16x64xbf16>
    %533 = arith.mulf %530, %532 : vector<16x64xbf16>
    %c400 = arith.constant 400 : index
    %c0_177 = arith.constant 0 : index
    %534 = vector.load %arg35[%c400, %c0_177] : memref<432x256xbf16, #tpu.memory_space<vmem>>, vector<16x64xbf16>
    tpu.vector_store %arg35[%c400, %c0_177], %533 {strides = array<i32>} : memref<432x256xbf16, #tpu.memory_space<vmem>>, vector<16x64xbf16>,
    %535 = vector.extract_strided_slice %484 {offsets = [0, 9], sizes = [16, 55], strides = [1, 1]} : vector<16x64xbf16> to vector<16x55xbf16>
    %536 = vector.extract_strided_slice %484 {offsets = [0, 0], sizes = [16, 9], strides = [1, 1]} : vector<16x64xbf16> to vector<16x9xbf16>
    %537 = tpu.concatenate %535, %536 in 1 : vector<16x55xbf16>, vector<16x9xbf16> -> vector<16x64xbf16>
    %538 = vector.extract_strided_slice %1 {offsets = [8, 0], sizes = [1, 64], strides = [1, 1]} : vector<9x64xbf16> to vector<1x64xbf16>
    %539 = vector.broadcast %538 : vector<1x64xbf16> to vector<16x64xbf16>
    %540 = arith.mulf %537, %539 : vector<16x64xbf16>
    %c416 = arith.constant 416 : index
    %c0_178 = arith.constant 0 : index
    %541 = vector.load %arg35[%c416, %c0_178] : memref<432x256xbf16, #tpu.memory_space<vmem>>, vector<16x64xbf16>
    tpu.vector_store %arg35[%c416, %c0_178], %540 {strides = array<i32>} : memref<432x256xbf16, #tpu.memory_space<vmem>>, vector<16x64xbf16>,
    %c0_179 = arith.constant 0 : index
    %c0_180 = arith.constant 0 : index
    %542 = vector.load %arg21[%c0_179, %c0_180] : memref<16x432xbf16, #tpu.memory_space<vmem>>, vector<16x432xbf16>
    %c0_181 = arith.constant 0 : index
    %c0_182 = arith.constant 0 : index
    %543 = vector.load %arg35[%c0_181, %c0_182] : memref<432x256xbf16, #tpu.memory_space<vmem>>, vector<432x64xbf16>
    %cst_183 = arith.constant dense<0.000000e+00> : vector<16x64xf32>
    %544 = tpu.matmul %542, %543, %cst_183 {dimension_numbers = #tpu.dot_dimension_numbers<[1], [0], [0], [1], [0, 0, 1, 1], [], []>} : vector<16x432xbf16>, vector<432x64xbf16>, vector<16x64xf32> -> vector<16x64xf32>
    %c0_184 = arith.constant 0 : index
    %c0_185 = arith.constant 0 : index
    %545 = vector.load %arg22[%c0_184, %c0_185] : memref<16x1xf32, #tpu.memory_space<vmem>>, vector<16x1xf32>
    %546 = vector.broadcast %545 : vector<16x1xf32> to vector<16x64xf32>
    %547 = arith.addf %544, %546 : vector<16x64xf32>
    %cst_186 = arith.constant 0.000000e+00 : f32
    %548 = vector.broadcast %cst_186 : f32 to vector<16x64xf32>
    %549 = arith.maximumf %547, %548 : vector<16x64xf32>
    %550 = arith.truncf %549 : vector<16x64xf32> to vector<16x64xbf16>
    %551 = vector.extract_strided_slice %550 {offsets = [0, 55], sizes = [16, 9], strides = [1, 1]} : vector<16x64xbf16> to vector<16x9xbf16>
    %552 = vector.extract_strided_slice %550 {offsets = [0, 0], sizes = [16, 55], strides = [1, 1]} : vector<16x64xbf16> to vector<16x55xbf16>
    %553 = tpu.concatenate %551, %552 in 1 : vector<16x9xbf16>, vector<16x55xbf16> -> vector<16x64xbf16>
    %554 = vector.extract_strided_slice %1 {offsets = [0, 0], sizes = [1, 64], strides = [1, 1]} : vector<9x64xbf16> to vector<1x64xbf16>
    %555 = vector.broadcast %554 : vector<1x64xbf16> to vector<16x64xbf16>
    %556 = arith.mulf %553, %555 : vector<16x64xbf16>
    %c0_187 = arith.constant 0 : index
    %c0_188 = arith.constant 0 : index
    %557 = vector.load %arg35[%c0_187, %c0_188] : memref<432x256xbf16, #tpu.memory_space<vmem>>, vector<16x64xbf16>
    tpu.vector_store %arg35[%c0_187, %c0_188], %556 {strides = array<i32>} : memref<432x256xbf16, #tpu.memory_space<vmem>>, vector<16x64xbf16>,
    %558 = vector.extract_strided_slice %550 {offsets = [0, 56], sizes = [16, 8], strides = [1, 1]} : vector<16x64xbf16> to vector<16x8xbf16>
    %559 = vector.extract_strided_slice %550 {offsets = [0, 0], sizes = [16, 56], strides = [1, 1]} : vector<16x64xbf16> to vector<16x56xbf16>
    %560 = tpu.concatenate %558, %559 in 1 : vector<16x8xbf16>, vector<16x56xbf16> -> vector<16x64xbf16>
    %561 = vector.extract_strided_slice %1 {offsets = [1, 0], sizes = [1, 64], strides = [1, 1]} : vector<9x64xbf16> to vector<1x64xbf16>
    %562 = vector.broadcast %561 : vector<1x64xbf16> to vector<16x64xbf16>
    %563 = arith.mulf %560, %562 : vector<16x64xbf16>
    %c16_189 = arith.constant 16 : index
    %c0_190 = arith.constant 0 : index
    %564 = vector.load %arg35[%c16_189, %c0_190] : memref<432x256xbf16, #tpu.memory_space<vmem>>, vector<16x64xbf16>
    tpu.vector_store %arg35[%c16_189, %c0_190], %563 {strides = array<i32>} : memref<432x256xbf16, #tpu.memory_space<vmem>>, vector<16x64xbf16>,
    %565 = vector.extract_strided_slice %550 {offsets = [0, 57], sizes = [16, 7], strides = [1, 1]} : vector<16x64xbf16> to vector<16x7xbf16>
    %566 = vector.extract_strided_slice %550 {offsets = [0, 0], sizes = [16, 57], strides = [1, 1]} : vector<16x64xbf16> to vector<16x57xbf16>
    %567 = tpu.concatenate %565, %566 in 1 : vector<16x7xbf16>, vector<16x57xbf16> -> vector<16x64xbf16>
    %568 = vector.extract_strided_slice %1 {offsets = [2, 0], sizes = [1, 64], strides = [1, 1]} : vector<9x64xbf16> to vector<1x64xbf16>
    %569 = vector.broadcast %568 : vector<1x64xbf16> to vector<16x64xbf16>
    %570 = arith.mulf %567, %569 : vector<16x64xbf16>
    %c32_191 = arith.constant 32 : index
    %c0_192 = arith.constant 0 : index
    %571 = vector.load %arg35[%c32_191, %c0_192] : memref<432x256xbf16, #tpu.memory_space<vmem>>, vector<16x64xbf16>
    tpu.vector_store %arg35[%c32_191, %c0_192], %570 {strides = array<i32>} : memref<432x256xbf16, #tpu.memory_space<vmem>>, vector<16x64xbf16>,
    %572 = vector.extract_strided_slice %550 {offsets = [0, 63], sizes = [16, 1], strides = [1, 1]} : vector<16x64xbf16> to vector<16x1xbf16>
    %573 = vector.extract_strided_slice %550 {offsets = [0, 0], sizes = [16, 63], strides = [1, 1]} : vector<16x64xbf16> to vector<16x63xbf16>
    %574 = tpu.concatenate %572, %573 in 1 : vector<16x1xbf16>, vector<16x63xbf16> -> vector<16x64xbf16>
    %575 = vector.extract_strided_slice %1 {offsets = [3, 0], sizes = [1, 64], strides = [1, 1]} : vector<9x64xbf16> to vector<1x64xbf16>
    %576 = vector.broadcast %575 : vector<1x64xbf16> to vector<16x64xbf16>
    %577 = arith.mulf %574, %576 : vector<16x64xbf16>
    %c48_193 = arith.constant 48 : index
    %c0_194 = arith.constant 0 : index
    %578 = vector.load %arg35[%c48_193, %c0_194] : memref<432x256xbf16, #tpu.memory_space<vmem>>, vector<16x64xbf16>
    tpu.vector_store %arg35[%c48_193, %c0_194], %577 {strides = array<i32>} : memref<432x256xbf16, #tpu.memory_space<vmem>>, vector<16x64xbf16>,
    %c64_195 = arith.constant 64 : index
    %c0_196 = arith.constant 0 : index
    %579 = vector.load %arg35[%c64_195, %c0_196] : memref<432x256xbf16, #tpu.memory_space<vmem>>, vector<16x64xbf16>
    tpu.vector_store %arg35[%c64_195, %c0_196], %550 {strides = array<i32>} : memref<432x256xbf16, #tpu.memory_space<vmem>>, vector<16x64xbf16>,
    %580 = vector.extract_strided_slice %550 {offsets = [0, 1], sizes = [16, 63], strides = [1, 1]} : vector<16x64xbf16> to vector<16x63xbf16>
    %581 = vector.extract_strided_slice %550 {offsets = [0, 0], sizes = [16, 1], strides = [1, 1]} : vector<16x64xbf16> to vector<16x1xbf16>
    %582 = tpu.concatenate %580, %581 in 1 : vector<16x63xbf16>, vector<16x1xbf16> -> vector<16x64xbf16>
    %583 = vector.extract_strided_slice %1 {offsets = [5, 0], sizes = [1, 64], strides = [1, 1]} : vector<9x64xbf16> to vector<1x64xbf16>
    %584 = vector.broadcast %583 : vector<1x64xbf16> to vector<16x64xbf16>
    %585 = arith.mulf %582, %584 : vector<16x64xbf16>
    %c80_197 = arith.constant 80 : index
    %c0_198 = arith.constant 0 : index
    %586 = vector.load %arg35[%c80_197, %c0_198] : memref<432x256xbf16, #tpu.memory_space<vmem>>, vector<16x64xbf16>
    tpu.vector_store %arg35[%c80_197, %c0_198], %585 {strides = array<i32>} : memref<432x256xbf16, #tpu.memory_space<vmem>>, vector<16x64xbf16>,
    %587 = vector.extract_strided_slice %550 {offsets = [0, 7], sizes = [16, 57], strides = [1, 1]} : vector<16x64xbf16> to vector<16x57xbf16>
    %588 = vector.extract_strided_slice %550 {offsets = [0, 0], sizes = [16, 7], strides = [1, 1]} : vector<16x64xbf16> to vector<16x7xbf16>
    %589 = tpu.concatenate %587, %588 in 1 : vector<16x57xbf16>, vector<16x7xbf16> -> vector<16x64xbf16>
    %590 = vector.extract_strided_slice %1 {offsets = [6, 0], sizes = [1, 64], strides = [1, 1]} : vector<9x64xbf16> to vector<1x64xbf16>
    %591 = vector.broadcast %590 : vector<1x64xbf16> to vector<16x64xbf16>
    %592 = arith.mulf %589, %591 : vector<16x64xbf16>
    %c96_199 = arith.constant 96 : index
    %c0_200 = arith.constant 0 : index
    %593 = vector.load %arg35[%c96_199, %c0_200] : memref<432x256xbf16, #tpu.memory_space<vmem>>, vector<16x64xbf16>
    tpu.vector_store %arg35[%c96_199, %c0_200], %592 {strides = array<i32>} : memref<432x256xbf16, #tpu.memory_space<vmem>>, vector<16x64xbf16>,
    %594 = vector.extract_strided_slice %550 {offsets = [0, 8], sizes = [16, 56], strides = [1, 1]} : vector<16x64xbf16> to vector<16x56xbf16>
    %595 = vector.extract_strided_slice %550 {offsets = [0, 0], sizes = [16, 8], strides = [1, 1]} : vector<16x64xbf16> to vector<16x8xbf16>
    %596 = tpu.concatenate %594, %595 in 1 : vector<16x56xbf16>, vector<16x8xbf16> -> vector<16x64xbf16>
    %597 = vector.extract_strided_slice %1 {offsets = [7, 0], sizes = [1, 64], strides = [1, 1]} : vector<9x64xbf16> to vector<1x64xbf16>
    %598 = vector.broadcast %597 : vector<1x64xbf16> to vector<16x64xbf16>
    %599 = arith.mulf %596, %598 : vector<16x64xbf16>
    %c112_201 = arith.constant 112 : index
    %c0_202 = arith.constant 0 : index
    %600 = vector.load %arg35[%c112_201, %c0_202] : memref<432x256xbf16, #tpu.memory_space<vmem>>, vector<16x64xbf16>
    tpu.vector_store %arg35[%c112_201, %c0_202], %599 {strides = array<i32>} : memref<432x256xbf16, #tpu.memory_space<vmem>>, vector<16x64xbf16>,
    %601 = vector.extract_strided_slice %550 {offsets = [0, 9], sizes = [16, 55], strides = [1, 1]} : vector<16x64xbf16> to vector<16x55xbf16>
    %602 = vector.extract_strided_slice %550 {offsets = [0, 0], sizes = [16, 9], strides = [1, 1]} : vector<16x64xbf16> to vector<16x9xbf16>
    %603 = tpu.concatenate %601, %602 in 1 : vector<16x55xbf16>, vector<16x9xbf16> -> vector<16x64xbf16>
    %604 = vector.extract_strided_slice %1 {offsets = [8, 0], sizes = [1, 64], strides = [1, 1]} : vector<9x64xbf16> to vector<1x64xbf16>
    %605 = vector.broadcast %604 : vector<1x64xbf16> to vector<16x64xbf16>
    %606 = arith.mulf %603, %605 : vector<16x64xbf16>
    %c128_203 = arith.constant 128 : index
    %c0_204 = arith.constant 0 : index
    %607 = vector.load %arg35[%c128_203, %c0_204] : memref<432x256xbf16, #tpu.memory_space<vmem>>, vector<16x64xbf16>
    tpu.vector_store %arg35[%c128_203, %c0_204], %606 {strides = array<i32>} : memref<432x256xbf16, #tpu.memory_space<vmem>>, vector<16x64xbf16>,
    %c0_205 = arith.constant 0 : index
    %c0_206 = arith.constant 0 : index
    %608 = vector.load %arg23[%c0_205, %c0_206] : memref<16x144xbf16, #tpu.memory_space<vmem>>, vector<16x144xbf16>
    %c0_207 = arith.constant 0 : index
    %c0_208 = arith.constant 0 : index
    %609 = vector.load %arg35[%c0_207, %c0_208] : memref<432x256xbf16, #tpu.memory_space<vmem>>, vector<144x64xbf16>
    %cst_209 = arith.constant dense<0.000000e+00> : vector<16x64xf32>
    %610 = tpu.matmul %608, %609, %cst_209 {dimension_numbers = #tpu.dot_dimension_numbers<[1], [0], [0], [1], [0, 0, 1, 1], [], []>} : vector<16x144xbf16>, vector<144x64xbf16>, vector<16x64xf32> -> vector<16x64xf32>
    %c0_210 = arith.constant 0 : index
    %c0_211 = arith.constant 0 : index
    %611 = vector.load %arg24[%c0_210, %c0_211] : memref<16x1xf32, #tpu.memory_space<vmem>>, vector<16x1xf32>
    %612 = vector.broadcast %611 : vector<16x1xf32> to vector<16x64xf32>
    %613 = arith.addf %610, %612 : vector<16x64xf32>
    %cst_212 = arith.constant 0.000000e+00 : f32
    %614 = vector.broadcast %cst_212 : f32 to vector<16x64xf32>
    %615 = arith.maximumf %613, %614 : vector<16x64xf32>
    %616 = arith.truncf %615 : vector<16x64xf32> to vector<16x64xbf16>
    %c0_213 = arith.constant 0 : index
    %c0_214 = arith.constant 0 : index
    %617 = vector.load %arg8[%c0_213, %c0_214] : memref<64x256xbf16, #tpu.memory_space<vmem>>, vector<64x256xbf16>
    %cst_215 = arith.constant dense<0.000000e+00> : vector<16x256xf32>
    %618 = tpu.matmul %616, %617, %cst_215 {dimension_numbers = #tpu.dot_dimension_numbers<[1], [0], [0], [1], [0, 0, 1, 1], [], []>} : vector<16x64xbf16>, vector<64x256xbf16>, vector<16x256xf32> -> vector<16x256xf32>
    %619 = arith.truncf %618 : vector<16x256xf32> to vector<16x256xbf16>
    %620 = vector.extract_strided_slice %619 {offsets = [0, 239], sizes = [16, 17], strides = [1, 1]} : vector<16x256xbf16> to vector<16x17xbf16>
    %621 = vector.extract_strided_slice %619 {offsets = [0, 0], sizes = [16, 239], strides = [1, 1]} : vector<16x256xbf16> to vector<16x239xbf16>
    %622 = tpu.concatenate %620, %621 in 1 : vector<16x17xbf16>, vector<16x239xbf16> -> vector<16x256xbf16>
    %623 = vector.extract_strided_slice %0 {offsets = [0, 0], sizes = [1, 256], strides = [1, 1]} : vector<9x256xbf16> to vector<1x256xbf16>
    %624 = vector.broadcast %623 : vector<1x256xbf16> to vector<16x256xbf16>
    %625 = arith.mulf %622, %624 : vector<16x256xbf16>
    %c0_216 = arith.constant 0 : index
    %c0_217 = arith.constant 0 : index
    %626 = vector.load %arg35[%c0_216, %c0_217] : memref<432x256xbf16, #tpu.memory_space<vmem>>, vector<16x256xbf16>
    tpu.vector_store %arg35[%c0_216, %c0_217], %625 {strides = array<i32>} : memref<432x256xbf16, #tpu.memory_space<vmem>>, vector<16x256xbf16>,
    %627 = vector.extract_strided_slice %619 {offsets = [0, 240], sizes = [16, 16], strides = [1, 1]} : vector<16x256xbf16> to vector<16x16xbf16>
    %628 = vector.extract_strided_slice %619 {offsets = [0, 0], sizes = [16, 240], strides = [1, 1]} : vector<16x256xbf16> to vector<16x240xbf16>
    %629 = tpu.concatenate %627, %628 in 1 : vector<16x16xbf16>, vector<16x240xbf16> -> vector<16x256xbf16>
    %630 = vector.extract_strided_slice %0 {offsets = [1, 0], sizes = [1, 256], strides = [1, 1]} : vector<9x256xbf16> to vector<1x256xbf16>
    %631 = vector.broadcast %630 : vector<1x256xbf16> to vector<16x256xbf16>
    %632 = arith.mulf %629, %631 : vector<16x256xbf16>
    %c16_218 = arith.constant 16 : index
    %c0_219 = arith.constant 0 : index
    %633 = vector.load %arg35[%c16_218, %c0_219] : memref<432x256xbf16, #tpu.memory_space<vmem>>, vector<16x256xbf16>
    tpu.vector_store %arg35[%c16_218, %c0_219], %632 {strides = array<i32>} : memref<432x256xbf16, #tpu.memory_space<vmem>>, vector<16x256xbf16>,
    %634 = vector.extract_strided_slice %619 {offsets = [0, 241], sizes = [16, 15], strides = [1, 1]} : vector<16x256xbf16> to vector<16x15xbf16>
    %635 = vector.extract_strided_slice %619 {offsets = [0, 0], sizes = [16, 241], strides = [1, 1]} : vector<16x256xbf16> to vector<16x241xbf16>
    %636 = tpu.concatenate %634, %635 in 1 : vector<16x15xbf16>, vector<16x241xbf16> -> vector<16x256xbf16>
    %637 = vector.extract_strided_slice %0 {offsets = [2, 0], sizes = [1, 256], strides = [1, 1]} : vector<9x256xbf16> to vector<1x256xbf16>
    %638 = vector.broadcast %637 : vector<1x256xbf16> to vector<16x256xbf16>
    %639 = arith.mulf %636, %638 : vector<16x256xbf16>
    %c32_220 = arith.constant 32 : index
    %c0_221 = arith.constant 0 : index
    %640 = vector.load %arg35[%c32_220, %c0_221] : memref<432x256xbf16, #tpu.memory_space<vmem>>, vector<16x256xbf16>
    tpu.vector_store %arg35[%c32_220, %c0_221], %639 {strides = array<i32>} : memref<432x256xbf16, #tpu.memory_space<vmem>>, vector<16x256xbf16>,
    %641 = vector.extract_strided_slice %619 {offsets = [0, 255], sizes = [16, 1], strides = [1, 1]} : vector<16x256xbf16> to vector<16x1xbf16>
    %642 = vector.extract_strided_slice %619 {offsets = [0, 0], sizes = [16, 255], strides = [1, 1]} : vector<16x256xbf16> to vector<16x255xbf16>
    %643 = tpu.concatenate %641, %642 in 1 : vector<16x1xbf16>, vector<16x255xbf16> -> vector<16x256xbf16>
    %644 = vector.extract_strided_slice %0 {offsets = [3, 0], sizes = [1, 256], strides = [1, 1]} : vector<9x256xbf16> to vector<1x256xbf16>
    %645 = vector.broadcast %644 : vector<1x256xbf16> to vector<16x256xbf16>
    %646 = arith.mulf %643, %645 : vector<16x256xbf16>
    %c48_222 = arith.constant 48 : index
    %c0_223 = arith.constant 0 : index
    %647 = vector.load %arg35[%c48_222, %c0_223] : memref<432x256xbf16, #tpu.memory_space<vmem>>, vector<16x256xbf16>
    tpu.vector_store %arg35[%c48_222, %c0_223], %646 {strides = array<i32>} : memref<432x256xbf16, #tpu.memory_space<vmem>>, vector<16x256xbf16>,
    %c64_224 = arith.constant 64 : index
    %c0_225 = arith.constant 0 : index
    %648 = vector.load %arg35[%c64_224, %c0_225] : memref<432x256xbf16, #tpu.memory_space<vmem>>, vector<16x256xbf16>
    tpu.vector_store %arg35[%c64_224, %c0_225], %619 {strides = array<i32>} : memref<432x256xbf16, #tpu.memory_space<vmem>>, vector<16x256xbf16>,
    %649 = vector.extract_strided_slice %619 {offsets = [0, 1], sizes = [16, 255], strides = [1, 1]} : vector<16x256xbf16> to vector<16x255xbf16>
    %650 = vector.extract_strided_slice %619 {offsets = [0, 0], sizes = [16, 1], strides = [1, 1]} : vector<16x256xbf16> to vector<16x1xbf16>
    %651 = tpu.concatenate %649, %650 in 1 : vector<16x255xbf16>, vector<16x1xbf16> -> vector<16x256xbf16>
    %652 = vector.extract_strided_slice %0 {offsets = [5, 0], sizes = [1, 256], strides = [1, 1]} : vector<9x256xbf16> to vector<1x256xbf16>
    %653 = vector.broadcast %652 : vector<1x256xbf16> to vector<16x256xbf16>
    %654 = arith.mulf %651, %653 : vector<16x256xbf16>
    %c80_226 = arith.constant 80 : index
    %c0_227 = arith.constant 0 : index
    %655 = vector.load %arg35[%c80_226, %c0_227] : memref<432x256xbf16, #tpu.memory_space<vmem>>, vector<16x256xbf16>
    tpu.vector_store %arg35[%c80_226, %c0_227], %654 {strides = array<i32>} : memref<432x256xbf16, #tpu.memory_space<vmem>>, vector<16x256xbf16>,
    %656 = vector.extract_strided_slice %619 {offsets = [0, 15], sizes = [16, 241], strides = [1, 1]} : vector<16x256xbf16> to vector<16x241xbf16>
    %657 = vector.extract_strided_slice %619 {offsets = [0, 0], sizes = [16, 15], strides = [1, 1]} : vector<16x256xbf16> to vector<16x15xbf16>
    %658 = tpu.concatenate %656, %657 in 1 : vector<16x241xbf16>, vector<16x15xbf16> -> vector<16x256xbf16>
    %659 = vector.extract_strided_slice %0 {offsets = [6, 0], sizes = [1, 256], strides = [1, 1]} : vector<9x256xbf16> to vector<1x256xbf16>
    %660 = vector.broadcast %659 : vector<1x256xbf16> to vector<16x256xbf16>
    %661 = arith.mulf %658, %660 : vector<16x256xbf16>
    %c96_228 = arith.constant 96 : index
    %c0_229 = arith.constant 0 : index
    %662 = vector.load %arg35[%c96_228, %c0_229] : memref<432x256xbf16, #tpu.memory_space<vmem>>, vector<16x256xbf16>
    tpu.vector_store %arg35[%c96_228, %c0_229], %661 {strides = array<i32>} : memref<432x256xbf16, #tpu.memory_space<vmem>>, vector<16x256xbf16>,
    %663 = vector.extract_strided_slice %619 {offsets = [0, 16], sizes = [16, 240], strides = [1, 1]} : vector<16x256xbf16> to vector<16x240xbf16>
    %664 = vector.extract_strided_slice %619 {offsets = [0, 0], sizes = [16, 16], strides = [1, 1]} : vector<16x256xbf16> to vector<16x16xbf16>
    %665 = tpu.concatenate %663, %664 in 1 : vector<16x240xbf16>, vector<16x16xbf16> -> vector<16x256xbf16>
    %666 = vector.extract_strided_slice %0 {offsets = [7, 0], sizes = [1, 256], strides = [1, 1]} : vector<9x256xbf16> to vector<1x256xbf16>
    %667 = vector.broadcast %666 : vector<1x256xbf16> to vector<16x256xbf16>
    %668 = arith.mulf %665, %667 : vector<16x256xbf16>
    %c112_230 = arith.constant 112 : index
    %c0_231 = arith.constant 0 : index
    %669 = vector.load %arg35[%c112_230, %c0_231] : memref<432x256xbf16, #tpu.memory_space<vmem>>, vector<16x256xbf16>
    tpu.vector_store %arg35[%c112_230, %c0_231], %668 {strides = array<i32>} : memref<432x256xbf16, #tpu.memory_space<vmem>>, vector<16x256xbf16>,
    %670 = vector.extract_strided_slice %619 {offsets = [0, 17], sizes = [16, 239], strides = [1, 1]} : vector<16x256xbf16> to vector<16x239xbf16>
    %671 = vector.extract_strided_slice %619 {offsets = [0, 0], sizes = [16, 17], strides = [1, 1]} : vector<16x256xbf16> to vector<16x17xbf16>
    %672 = tpu.concatenate %670, %671 in 1 : vector<16x239xbf16>, vector<16x17xbf16> -> vector<16x256xbf16>
    %673 = vector.extract_strided_slice %0 {offsets = [8, 0], sizes = [1, 256], strides = [1, 1]} : vector<9x256xbf16> to vector<1x256xbf16>
    %674 = vector.broadcast %673 : vector<1x256xbf16> to vector<16x256xbf16>
    %675 = arith.mulf %672, %674 : vector<16x256xbf16>
    %c128_232 = arith.constant 128 : index
    %c0_233 = arith.constant 0 : index
    %676 = vector.load %arg35[%c128_232, %c0_233] : memref<432x256xbf16, #tpu.memory_space<vmem>>, vector<16x256xbf16>
    tpu.vector_store %arg35[%c128_232, %c0_233], %675 {strides = array<i32>} : memref<432x256xbf16, #tpu.memory_space<vmem>>, vector<16x256xbf16>,
    %677 = arith.truncf %136 : vector<8x256xf32> to vector<8x256xbf16>
    %678 = vector.extract_strided_slice %677 {offsets = [0, 239], sizes = [8, 17], strides = [1, 1]} : vector<8x256xbf16> to vector<8x17xbf16>
    %679 = vector.extract_strided_slice %677 {offsets = [0, 0], sizes = [8, 239], strides = [1, 1]} : vector<8x256xbf16> to vector<8x239xbf16>
    %680 = tpu.concatenate %678, %679 in 1 : vector<8x17xbf16>, vector<8x239xbf16> -> vector<8x256xbf16>
    %681 = vector.extract_strided_slice %0 {offsets = [0, 0], sizes = [1, 256], strides = [1, 1]} : vector<9x256xbf16> to vector<1x256xbf16>
    %682 = vector.broadcast %681 : vector<1x256xbf16> to vector<8x256xbf16>
    %683 = arith.mulf %680, %682 : vector<8x256xbf16>
    %c144 = arith.constant 144 : index
    %c0_234 = arith.constant 0 : index
    %684 = vector.load %arg35[%c144, %c0_234] : memref<432x256xbf16, #tpu.memory_space<vmem>>, vector<8x256xbf16>
    tpu.vector_store %arg35[%c144, %c0_234], %683 {strides = array<i32>} : memref<432x256xbf16, #tpu.memory_space<vmem>>, vector<8x256xbf16>,
    %685 = vector.extract_strided_slice %677 {offsets = [0, 240], sizes = [8, 16], strides = [1, 1]} : vector<8x256xbf16> to vector<8x16xbf16>
    %686 = vector.extract_strided_slice %677 {offsets = [0, 0], sizes = [8, 240], strides = [1, 1]} : vector<8x256xbf16> to vector<8x240xbf16>
    %687 = tpu.concatenate %685, %686 in 1 : vector<8x16xbf16>, vector<8x240xbf16> -> vector<8x256xbf16>
    %688 = vector.extract_strided_slice %0 {offsets = [1, 0], sizes = [1, 256], strides = [1, 1]} : vector<9x256xbf16> to vector<1x256xbf16>
    %689 = vector.broadcast %688 : vector<1x256xbf16> to vector<8x256xbf16>
    %690 = arith.mulf %687, %689 : vector<8x256xbf16>
    %c152 = arith.constant 152 : index
    %c0_235 = arith.constant 0 : index
    %691 = vector.load %arg35[%c152, %c0_235] : memref<432x256xbf16, #tpu.memory_space<vmem>>, vector<8x256xbf16>
    tpu.vector_store %arg35[%c152, %c0_235], %690 {strides = array<i32>} : memref<432x256xbf16, #tpu.memory_space<vmem>>, vector<8x256xbf16>,
    %692 = vector.extract_strided_slice %677 {offsets = [0, 241], sizes = [8, 15], strides = [1, 1]} : vector<8x256xbf16> to vector<8x15xbf16>
    %693 = vector.extract_strided_slice %677 {offsets = [0, 0], sizes = [8, 241], strides = [1, 1]} : vector<8x256xbf16> to vector<8x241xbf16>
    %694 = tpu.concatenate %692, %693 in 1 : vector<8x15xbf16>, vector<8x241xbf16> -> vector<8x256xbf16>
    %695 = vector.extract_strided_slice %0 {offsets = [2, 0], sizes = [1, 256], strides = [1, 1]} : vector<9x256xbf16> to vector<1x256xbf16>
    %696 = vector.broadcast %695 : vector<1x256xbf16> to vector<8x256xbf16>
    %697 = arith.mulf %694, %696 : vector<8x256xbf16>
    %c160_236 = arith.constant 160 : index
    %c0_237 = arith.constant 0 : index
    %698 = vector.load %arg35[%c160_236, %c0_237] : memref<432x256xbf16, #tpu.memory_space<vmem>>, vector<8x256xbf16>
    tpu.vector_store %arg35[%c160_236, %c0_237], %697 {strides = array<i32>} : memref<432x256xbf16, #tpu.memory_space<vmem>>, vector<8x256xbf16>,
    %699 = vector.extract_strided_slice %677 {offsets = [0, 255], sizes = [8, 1], strides = [1, 1]} : vector<8x256xbf16> to vector<8x1xbf16>
    %700 = vector.extract_strided_slice %677 {offsets = [0, 0], sizes = [8, 255], strides = [1, 1]} : vector<8x256xbf16> to vector<8x255xbf16>
    %701 = tpu.concatenate %699, %700 in 1 : vector<8x1xbf16>, vector<8x255xbf16> -> vector<8x256xbf16>
    %702 = vector.extract_strided_slice %0 {offsets = [3, 0], sizes = [1, 256], strides = [1, 1]} : vector<9x256xbf16> to vector<1x256xbf16>
    %703 = vector.broadcast %702 : vector<1x256xbf16> to vector<8x256xbf16>
    %704 = arith.mulf %701, %703 : vector<8x256xbf16>
    %c168 = arith.constant 168 : index
    %c0_238 = arith.constant 0 : index
    %705 = vector.load %arg35[%c168, %c0_238] : memref<432x256xbf16, #tpu.memory_space<vmem>>, vector<8x256xbf16>
    tpu.vector_store %arg35[%c168, %c0_238], %704 {strides = array<i32>} : memref<432x256xbf16, #tpu.memory_space<vmem>>, vector<8x256xbf16>,
    %c176 = arith.constant 176 : index
    %c0_239 = arith.constant 0 : index
    %706 = vector.load %arg35[%c176, %c0_239] : memref<432x256xbf16, #tpu.memory_space<vmem>>, vector<8x256xbf16>
    tpu.vector_store %arg35[%c176, %c0_239], %677 {strides = array<i32>} : memref<432x256xbf16, #tpu.memory_space<vmem>>, vector<8x256xbf16>,
    %707 = vector.extract_strided_slice %677 {offsets = [0, 1], sizes = [8, 255], strides = [1, 1]} : vector<8x256xbf16> to vector<8x255xbf16>
    %708 = vector.extract_strided_slice %677 {offsets = [0, 0], sizes = [8, 1], strides = [1, 1]} : vector<8x256xbf16> to vector<8x1xbf16>
    %709 = tpu.concatenate %707, %708 in 1 : vector<8x255xbf16>, vector<8x1xbf16> -> vector<8x256xbf16>
    %710 = vector.extract_strided_slice %0 {offsets = [5, 0], sizes = [1, 256], strides = [1, 1]} : vector<9x256xbf16> to vector<1x256xbf16>
    %711 = vector.broadcast %710 : vector<1x256xbf16> to vector<8x256xbf16>
    %712 = arith.mulf %709, %711 : vector<8x256xbf16>
    %c184 = arith.constant 184 : index
    %c0_240 = arith.constant 0 : index
    %713 = vector.load %arg35[%c184, %c0_240] : memref<432x256xbf16, #tpu.memory_space<vmem>>, vector<8x256xbf16>
    tpu.vector_store %arg35[%c184, %c0_240], %712 {strides = array<i32>} : memref<432x256xbf16, #tpu.memory_space<vmem>>, vector<8x256xbf16>,
    %714 = vector.extract_strided_slice %677 {offsets = [0, 15], sizes = [8, 241], strides = [1, 1]} : vector<8x256xbf16> to vector<8x241xbf16>
    %715 = vector.extract_strided_slice %677 {offsets = [0, 0], sizes = [8, 15], strides = [1, 1]} : vector<8x256xbf16> to vector<8x15xbf16>
    %716 = tpu.concatenate %714, %715 in 1 : vector<8x241xbf16>, vector<8x15xbf16> -> vector<8x256xbf16>
    %717 = vector.extract_strided_slice %0 {offsets = [6, 0], sizes = [1, 256], strides = [1, 1]} : vector<9x256xbf16> to vector<1x256xbf16>
    %718 = vector.broadcast %717 : vector<1x256xbf16> to vector<8x256xbf16>
    %719 = arith.mulf %716, %718 : vector<8x256xbf16>
    %c192_241 = arith.constant 192 : index
    %c0_242 = arith.constant 0 : index
    %720 = vector.load %arg35[%c192_241, %c0_242] : memref<432x256xbf16, #tpu.memory_space<vmem>>, vector<8x256xbf16>
    tpu.vector_store %arg35[%c192_241, %c0_242], %719 {strides = array<i32>} : memref<432x256xbf16, #tpu.memory_space<vmem>>, vector<8x256xbf16>,
    %721 = vector.extract_strided_slice %677 {offsets = [0, 16], sizes = [8, 240], strides = [1, 1]} : vector<8x256xbf16> to vector<8x240xbf16>
    %722 = vector.extract_strided_slice %677 {offsets = [0, 0], sizes = [8, 16], strides = [1, 1]} : vector<8x256xbf16> to vector<8x16xbf16>
    %723 = tpu.concatenate %721, %722 in 1 : vector<8x240xbf16>, vector<8x16xbf16> -> vector<8x256xbf16>
    %724 = vector.extract_strided_slice %0 {offsets = [7, 0], sizes = [1, 256], strides = [1, 1]} : vector<9x256xbf16> to vector<1x256xbf16>
    %725 = vector.broadcast %724 : vector<1x256xbf16> to vector<8x256xbf16>
    %726 = arith.mulf %723, %725 : vector<8x256xbf16>
    %c200 = arith.constant 200 : index
    %c0_243 = arith.constant 0 : index
    %727 = vector.load %arg35[%c200, %c0_243] : memref<432x256xbf16, #tpu.memory_space<vmem>>, vector<8x256xbf16>
    tpu.vector_store %arg35[%c200, %c0_243], %726 {strides = array<i32>} : memref<432x256xbf16, #tpu.memory_space<vmem>>, vector<8x256xbf16>,
    %728 = vector.extract_strided_slice %677 {offsets = [0, 17], sizes = [8, 239], strides = [1, 1]} : vector<8x256xbf16> to vector<8x239xbf16>
    %729 = vector.extract_strided_slice %677 {offsets = [0, 0], sizes = [8, 17], strides = [1, 1]} : vector<8x256xbf16> to vector<8x17xbf16>
    %730 = tpu.concatenate %728, %729 in 1 : vector<8x239xbf16>, vector<8x17xbf16> -> vector<8x256xbf16>
    %731 = vector.extract_strided_slice %0 {offsets = [8, 0], sizes = [1, 256], strides = [1, 1]} : vector<9x256xbf16> to vector<1x256xbf16>
    %732 = vector.broadcast %731 : vector<1x256xbf16> to vector<8x256xbf16>
    %733 = arith.mulf %730, %732 : vector<8x256xbf16>
    %c208 = arith.constant 208 : index
    %c0_244 = arith.constant 0 : index
    %734 = vector.load %arg35[%c208, %c0_244] : memref<432x256xbf16, #tpu.memory_space<vmem>>, vector<8x256xbf16>
    tpu.vector_store %arg35[%c208, %c0_244], %733 {strides = array<i32>} : memref<432x256xbf16, #tpu.memory_space<vmem>>, vector<8x256xbf16>,
    %c0_245 = arith.constant 0 : index
    %c0_246 = arith.constant 0 : index
    %735 = vector.load %arg25[%c0_245, %c0_246] : memref<8x216xbf16, #tpu.memory_space<vmem>>, vector<8x216xbf16>
    %c0_247 = arith.constant 0 : index
    %c0_248 = arith.constant 0 : index
    %736 = vector.load %arg35[%c0_247, %c0_248] : memref<432x256xbf16, #tpu.memory_space<vmem>>, vector<216x256xbf16>
    %cst_249 = arith.constant dense<0.000000e+00> : vector<8x256xf32>
    %737 = tpu.matmul %735, %736, %cst_249 {dimension_numbers = #tpu.dot_dimension_numbers<[1], [0], [0], [1], [0, 0, 1, 1], [], []>} : vector<8x216xbf16>, vector<216x256xbf16>, vector<8x256xf32> -> vector<8x256xf32>
    %c0_250 = arith.constant 0 : index
    %c0_251 = arith.constant 0 : index
    %738 = vector.load %arg26[%c0_250, %c0_251] : memref<8x1xf32, #tpu.memory_space<vmem>>, vector<8x1xf32>
    %739 = vector.broadcast %738 : vector<8x1xf32> to vector<8x256xf32>
    %740 = arith.addf %737, %739 : vector<8x256xf32>
    %cst_252 = arith.constant 0.000000e+00 : f32
    %741 = vector.broadcast %cst_252 : f32 to vector<8x256xf32>
    %742 = arith.maximumf %740, %741 : vector<8x256xf32>
    %743 = arith.truncf %742 : vector<8x256xf32> to vector<8x256xbf16>
    %744 = vector.extract_strided_slice %743 {offsets = [0, 239], sizes = [8, 17], strides = [1, 1]} : vector<8x256xbf16> to vector<8x17xbf16>
    %745 = vector.extract_strided_slice %743 {offsets = [0, 0], sizes = [8, 239], strides = [1, 1]} : vector<8x256xbf16> to vector<8x239xbf16>
    %746 = tpu.concatenate %744, %745 in 1 : vector<8x17xbf16>, vector<8x239xbf16> -> vector<8x256xbf16>
    %747 = vector.extract_strided_slice %0 {offsets = [0, 0], sizes = [1, 256], strides = [1, 1]} : vector<9x256xbf16> to vector<1x256xbf16>
    %748 = vector.broadcast %747 : vector<1x256xbf16> to vector<8x256xbf16>
    %749 = arith.mulf %746, %748 : vector<8x256xbf16>
    %c0_253 = arith.constant 0 : index
    %c0_254 = arith.constant 0 : index
    %750 = vector.load %arg35[%c0_253, %c0_254] : memref<432x256xbf16, #tpu.memory_space<vmem>>, vector<8x256xbf16>
    tpu.vector_store %arg35[%c0_253, %c0_254], %749 {strides = array<i32>} : memref<432x256xbf16, #tpu.memory_space<vmem>>, vector<8x256xbf16>,
    %751 = vector.extract_strided_slice %743 {offsets = [0, 240], sizes = [8, 16], strides = [1, 1]} : vector<8x256xbf16> to vector<8x16xbf16>
    %752 = vector.extract_strided_slice %743 {offsets = [0, 0], sizes = [8, 240], strides = [1, 1]} : vector<8x256xbf16> to vector<8x240xbf16>
    %753 = tpu.concatenate %751, %752 in 1 : vector<8x16xbf16>, vector<8x240xbf16> -> vector<8x256xbf16>
    %754 = vector.extract_strided_slice %0 {offsets = [1, 0], sizes = [1, 256], strides = [1, 1]} : vector<9x256xbf16> to vector<1x256xbf16>
    %755 = vector.broadcast %754 : vector<1x256xbf16> to vector<8x256xbf16>
    %756 = arith.mulf %753, %755 : vector<8x256xbf16>
    %c8_255 = arith.constant 8 : index
    %c0_256 = arith.constant 0 : index
    %757 = vector.load %arg35[%c8_255, %c0_256] : memref<432x256xbf16, #tpu.memory_space<vmem>>, vector<8x256xbf16>
    tpu.vector_store %arg35[%c8_255, %c0_256], %756 {strides = array<i32>} : memref<432x256xbf16, #tpu.memory_space<vmem>>, vector<8x256xbf16>,
    %758 = vector.extract_strided_slice %743 {offsets = [0, 241], sizes = [8, 15], strides = [1, 1]} : vector<8x256xbf16> to vector<8x15xbf16>
    %759 = vector.extract_strided_slice %743 {offsets = [0, 0], sizes = [8, 241], strides = [1, 1]} : vector<8x256xbf16> to vector<8x241xbf16>
    %760 = tpu.concatenate %758, %759 in 1 : vector<8x15xbf16>, vector<8x241xbf16> -> vector<8x256xbf16>
    %761 = vector.extract_strided_slice %0 {offsets = [2, 0], sizes = [1, 256], strides = [1, 1]} : vector<9x256xbf16> to vector<1x256xbf16>
    %762 = vector.broadcast %761 : vector<1x256xbf16> to vector<8x256xbf16>
    %763 = arith.mulf %760, %762 : vector<8x256xbf16>
    %c16_257 = arith.constant 16 : index
    %c0_258 = arith.constant 0 : index
    %764 = vector.load %arg35[%c16_257, %c0_258] : memref<432x256xbf16, #tpu.memory_space<vmem>>, vector<8x256xbf16>
    tpu.vector_store %arg35[%c16_257, %c0_258], %763 {strides = array<i32>} : memref<432x256xbf16, #tpu.memory_space<vmem>>, vector<8x256xbf16>,
    %765 = vector.extract_strided_slice %743 {offsets = [0, 255], sizes = [8, 1], strides = [1, 1]} : vector<8x256xbf16> to vector<8x1xbf16>
    %766 = vector.extract_strided_slice %743 {offsets = [0, 0], sizes = [8, 255], strides = [1, 1]} : vector<8x256xbf16> to vector<8x255xbf16>
    %767 = tpu.concatenate %765, %766 in 1 : vector<8x1xbf16>, vector<8x255xbf16> -> vector<8x256xbf16>
    %768 = vector.extract_strided_slice %0 {offsets = [3, 0], sizes = [1, 256], strides = [1, 1]} : vector<9x256xbf16> to vector<1x256xbf16>
    %769 = vector.broadcast %768 : vector<1x256xbf16> to vector<8x256xbf16>
    %770 = arith.mulf %767, %769 : vector<8x256xbf16>
    %c24_259 = arith.constant 24 : index
    %c0_260 = arith.constant 0 : index
    %771 = vector.load %arg35[%c24_259, %c0_260] : memref<432x256xbf16, #tpu.memory_space<vmem>>, vector<8x256xbf16>
    tpu.vector_store %arg35[%c24_259, %c0_260], %770 {strides = array<i32>} : memref<432x256xbf16, #tpu.memory_space<vmem>>, vector<8x256xbf16>,
    %c32_261 = arith.constant 32 : index
    %c0_262 = arith.constant 0 : index
    %772 = vector.load %arg35[%c32_261, %c0_262] : memref<432x256xbf16, #tpu.memory_space<vmem>>, vector<8x256xbf16>
    tpu.vector_store %arg35[%c32_261, %c0_262], %743 {strides = array<i32>} : memref<432x256xbf16, #tpu.memory_space<vmem>>, vector<8x256xbf16>,
    %773 = vector.extract_strided_slice %743 {offsets = [0, 1], sizes = [8, 255], strides = [1, 1]} : vector<8x256xbf16> to vector<8x255xbf16>
    %774 = vector.extract_strided_slice %743 {offsets = [0, 0], sizes = [8, 1], strides = [1, 1]} : vector<8x256xbf16> to vector<8x1xbf16>
    %775 = tpu.concatenate %773, %774 in 1 : vector<8x255xbf16>, vector<8x1xbf16> -> vector<8x256xbf16>
    %776 = vector.extract_strided_slice %0 {offsets = [5, 0], sizes = [1, 256], strides = [1, 1]} : vector<9x256xbf16> to vector<1x256xbf16>
    %777 = vector.broadcast %776 : vector<1x256xbf16> to vector<8x256xbf16>
    %778 = arith.mulf %775, %777 : vector<8x256xbf16>
    %c40_263 = arith.constant 40 : index
    %c0_264 = arith.constant 0 : index
    %779 = vector.load %arg35[%c40_263, %c0_264] : memref<432x256xbf16, #tpu.memory_space<vmem>>, vector<8x256xbf16>
    tpu.vector_store %arg35[%c40_263, %c0_264], %778 {strides = array<i32>} : memref<432x256xbf16, #tpu.memory_space<vmem>>, vector<8x256xbf16>,
    %780 = vector.extract_strided_slice %743 {offsets = [0, 15], sizes = [8, 241], strides = [1, 1]} : vector<8x256xbf16> to vector<8x241xbf16>
    %781 = vector.extract_strided_slice %743 {offsets = [0, 0], sizes = [8, 15], strides = [1, 1]} : vector<8x256xbf16> to vector<8x15xbf16>
    %782 = tpu.concatenate %780, %781 in 1 : vector<8x241xbf16>, vector<8x15xbf16> -> vector<8x256xbf16>
    %783 = vector.extract_strided_slice %0 {offsets = [6, 0], sizes = [1, 256], strides = [1, 1]} : vector<9x256xbf16> to vector<1x256xbf16>
    %784 = vector.broadcast %783 : vector<1x256xbf16> to vector<8x256xbf16>
    %785 = arith.mulf %782, %784 : vector<8x256xbf16>
    %c48_265 = arith.constant 48 : index
    %c0_266 = arith.constant 0 : index
    %786 = vector.load %arg35[%c48_265, %c0_266] : memref<432x256xbf16, #tpu.memory_space<vmem>>, vector<8x256xbf16>
    tpu.vector_store %arg35[%c48_265, %c0_266], %785 {strides = array<i32>} : memref<432x256xbf16, #tpu.memory_space<vmem>>, vector<8x256xbf16>,
    %787 = vector.extract_strided_slice %743 {offsets = [0, 16], sizes = [8, 240], strides = [1, 1]} : vector<8x256xbf16> to vector<8x240xbf16>
    %788 = vector.extract_strided_slice %743 {offsets = [0, 0], sizes = [8, 16], strides = [1, 1]} : vector<8x256xbf16> to vector<8x16xbf16>
    %789 = tpu.concatenate %787, %788 in 1 : vector<8x240xbf16>, vector<8x16xbf16> -> vector<8x256xbf16>
    %790 = vector.extract_strided_slice %0 {offsets = [7, 0], sizes = [1, 256], strides = [1, 1]} : vector<9x256xbf16> to vector<1x256xbf16>
    %791 = vector.broadcast %790 : vector<1x256xbf16> to vector<8x256xbf16>
    %792 = arith.mulf %789, %791 : vector<8x256xbf16>
    %c56_267 = arith.constant 56 : index
    %c0_268 = arith.constant 0 : index
    %793 = vector.load %arg35[%c56_267, %c0_268] : memref<432x256xbf16, #tpu.memory_space<vmem>>, vector<8x256xbf16>
    tpu.vector_store %arg35[%c56_267, %c0_268], %792 {strides = array<i32>} : memref<432x256xbf16, #tpu.memory_space<vmem>>, vector<8x256xbf16>,
    %794 = vector.extract_strided_slice %743 {offsets = [0, 17], sizes = [8, 239], strides = [1, 1]} : vector<8x256xbf16> to vector<8x239xbf16>
    %795 = vector.extract_strided_slice %743 {offsets = [0, 0], sizes = [8, 17], strides = [1, 1]} : vector<8x256xbf16> to vector<8x17xbf16>
    %796 = tpu.concatenate %794, %795 in 1 : vector<8x239xbf16>, vector<8x17xbf16> -> vector<8x256xbf16>
    %797 = vector.extract_strided_slice %0 {offsets = [8, 0], sizes = [1, 256], strides = [1, 1]} : vector<9x256xbf16> to vector<1x256xbf16>
    %798 = vector.broadcast %797 : vector<1x256xbf16> to vector<8x256xbf16>
    %799 = arith.mulf %796, %798 : vector<8x256xbf16>
    %c64_269 = arith.constant 64 : index
    %c0_270 = arith.constant 0 : index
    %800 = vector.load %arg35[%c64_269, %c0_270] : memref<432x256xbf16, #tpu.memory_space<vmem>>, vector<8x256xbf16>
    tpu.vector_store %arg35[%c64_269, %c0_270], %799 {strides = array<i32>} : memref<432x256xbf16, #tpu.memory_space<vmem>>, vector<8x256xbf16>,
    %c0_271 = arith.constant 0 : index
    %c0_272 = arith.constant 0 : index
    %801 = vector.load %arg27[%c0_271, %c0_272] : memref<8x72xbf16, #tpu.memory_space<vmem>>, vector<8x72xbf16>
    %c0_273 = arith.constant 0 : index
    %c0_274 = arith.constant 0 : index
    %802 = vector.load %arg35[%c0_273, %c0_274] : memref<432x256xbf16, #tpu.memory_space<vmem>>, vector<72x256xbf16>
    %cst_275 = arith.constant dense<0.000000e+00> : vector<8x256xf32>
    %803 = tpu.matmul %801, %802, %cst_275 {dimension_numbers = #tpu.dot_dimension_numbers<[1], [0], [0], [1], [0, 0, 1, 1], [], []>} : vector<8x72xbf16>, vector<72x256xbf16>, vector<8x256xf32> -> vector<8x256xf32>
    %c0_276 = arith.constant 0 : index
    %c0_277 = arith.constant 0 : index
    %804 = vector.load %arg28[%c0_276, %c0_277] : memref<8x1xf32, #tpu.memory_space<vmem>>, vector<8x1xf32>
    %805 = vector.broadcast %804 : vector<8x1xf32> to vector<8x256xf32>
    %806 = arith.addf %803, %805 : vector<8x256xf32>
    %cst_278 = arith.constant 0.000000e+00 : f32
    %807 = vector.broadcast %cst_278 : f32 to vector<8x256xf32>
    %808 = arith.maximumf %806, %807 : vector<8x256xf32>
    %c0_279 = arith.constant 0 : index
    %c0_280 = arith.constant 0 : index
    %809 = vector.load %arg29[%c0_279, %c0_280] : memref<4x8xbf16, #tpu.memory_space<vmem>>, vector<4x8xbf16>
    %810 = arith.truncf %808 : vector<8x256xf32> to vector<8x256xbf16>
    %cst_281 = arith.constant dense<0.000000e+00> : vector<4x256xf32>
    %811 = tpu.matmul %809, %810, %cst_281 {dimension_numbers = #tpu.dot_dimension_numbers<[1], [0], [0], [1], [0, 0, 1, 1], [], []>} : vector<4x8xbf16>, vector<8x256xbf16>, vector<4x256xf32> -> vector<4x256xf32>
    %c0_282 = arith.constant 0 : index
    %c0_283 = arith.constant 0 : index
    %812 = vector.load %arg30[%c0_282, %c0_283] : memref<4x1xf32, #tpu.memory_space<vmem>>, vector<4x1xf32>
    %813 = vector.broadcast %812 : vector<4x1xf32> to vector<4x256xf32>
    %814 = arith.addf %811, %813 : vector<4x256xf32>
    %c0_284 = arith.constant 0 : index
    %c0_285 = arith.constant 0 : index
    %c0_286 = arith.constant 0 : index
    %815 = vector.load %arg33[%c0_284, %c0_285, %c0_286] : memref<1x4x256xf32, #tpu.memory_space<vmem>>, vector<1x4x256xf32>
    %816 = vector.shape_cast %815 : vector<1x4x256xf32> to vector<4x256xf32>
    %817 = vector.shape_cast %814 : vector<4x256xf32> to vector<1x4x256xf32>
    tpu.vector_store %arg33[%c0_284, %c0_285, %c0_286], %817 {strides = array<i32>} : memref<1x4x256xf32, #tpu.memory_space<vmem>>, vector<1x4x256xf32>,
    %c0_287 = arith.constant 0 : index
    %c0_288 = arith.constant 0 : index
    %818 = vector.load %arg31[%c0_287, %c0_288] : memref<8x32xf32, #tpu.memory_space<vmem>>, vector<8x32xf32>
    %cst_289 = arith.constant dense<0.000000e+00> : vector<8x16xf32>
    %819 = tpu.matmul %818, %422, %cst_289 {dimension_numbers = #tpu.dot_dimension_numbers<[1], [0], [0], [1], [0, 0, 1, 1], [], []>} : vector<8x32xf32>, vector<32x16xf32>, vector<8x16xf32> -> vector<8x16xf32>
    %cst_290 = arith.constant dense<0.000000e+00> : vector<8xf32>
    %820 = vector.multi_reduction <add>, %819, %cst_290 [1] : vector<8x16xf32> to vector<8xf32>
    %821 = vector.shape_cast %820 : vector<8xf32> to vector<8x1xf32>
    %cst_291 = arith.constant 1.600000e+01 : f32
    %822 = vector.broadcast %cst_291 : f32 to vector<8x1xf32>
    %823 = arith.divf %821, %822 : vector<8x1xf32>
    %c0_292 = arith.constant 0 : index
    %c0_293 = arith.constant 0 : index
    %824 = vector.load %arg32[%c0_292, %c0_293] : memref<8x1xf32, #tpu.memory_space<vmem>>, vector<8x1xf32>
    %825 = arith.addf %823, %824 : vector<8x1xf32>
    %c0_294 = arith.constant 0 : index
    %c0_295 = arith.constant 0 : index
    %c0_296 = arith.constant 0 : index
    %826 = vector.load %arg34[%c0_294, %c0_295, %c0_296] : memref<1x8x1xf32, #tpu.memory_space<vmem>>, vector<1x8x1xf32>
    %827 = vector.shape_cast %826 : vector<1x8x1xf32> to vector<8x1xf32>
    %828 = vector.shape_cast %825 : vector<8x1xf32> to vector<1x8x1xf32>
    tpu.vector_store %arg34[%c0_294, %c0_295, %c0_296], %828 {strides = array<i32>} : memref<1x8x1xf32, #tpu.memory_space<vmem>>, vector<1x8x1xf32>,
    return
  }
  func.func @transform_0(%arg0: i32) -> (i32, i32, i32) {
    %c0_i32 = arith.constant 0 : i32
    %c0_i32_0 = arith.constant 0 : i32
    %c0_i32_1 = arith.constant 0 : i32
    return %arg0, %c0_i32, %c0_i32_0 : i32, i32, i32
  }
  func.func @transform_1(%arg0: i32) -> (i32, i32) {
    %c0_i32 = arith.constant 0 : i32
    %c0_i32_0 = arith.constant 0 : i32
    %c0_i32_1 = arith.constant 0 : i32
    return %c0_i32, %c0_i32_0 : i32, i32
  }
  func.func @transform_2(%arg0: i32) -> (i32, i32) {
    %c0_i32 = arith.constant 0 : i32
    %c0_i32_0 = arith.constant 0 : i32
    %c0_i32_1 = arith.constant 0 : i32
    return %c0_i32, %c0_i32_0 : i32, i32
  }
  func.func @transform_3(%arg0: i32) -> (i32, i32) {
    %c0_i32 = arith.constant 0 : i32
    %c0_i32_0 = arith.constant 0 : i32
    %c0_i32_1 = arith.constant 0 : i32
    return %c0_i32, %c0_i32_0 : i32, i32
  }
  func.func @transform_4(%arg0: i32) -> (i32, i32) {
    %c0_i32 = arith.constant 0 : i32
    %c0_i32_0 = arith.constant 0 : i32
    %c0_i32_1 = arith.constant 0 : i32
    return %c0_i32, %c0_i32_0 : i32, i32
  }
  func.func @transform_5(%arg0: i32) -> (i32, i32) {
    %c0_i32 = arith.constant 0 : i32
    %c0_i32_0 = arith.constant 0 : i32
    %c0_i32_1 = arith.constant 0 : i32
    return %c0_i32, %c0_i32_0 : i32, i32
  }
  func.func @transform_6(%arg0: i32) -> (i32, i32) {
    %c0_i32 = arith.constant 0 : i32
    %c0_i32_0 = arith.constant 0 : i32
    %c0_i32_1 = arith.constant 0 : i32
    return %c0_i32, %c0_i32_0 : i32, i32
  }
  func.func @transform_7(%arg0: i32) -> (i32, i32) {
    %c0_i32 = arith.constant 0 : i32
    %c0_i32_0 = arith.constant 0 : i32
    %c0_i32_1 = arith.constant 0 : i32
    return %c0_i32, %c0_i32_0 : i32, i32
  }
  func.func @transform_8(%arg0: i32) -> (i32, i32) {
    %c0_i32 = arith.constant 0 : i32
    %c0_i32_0 = arith.constant 0 : i32
    %c0_i32_1 = arith.constant 0 : i32
    return %c0_i32, %c0_i32_0 : i32, i32
  }
  func.func @transform_9(%arg0: i32) -> (i32, i32) {
    %c0_i32 = arith.constant 0 : i32
    %c0_i32_0 = arith.constant 0 : i32
    %c0_i32_1 = arith.constant 0 : i32
    return %c0_i32, %c0_i32_0 : i32, i32
  }
  func.func @transform_10(%arg0: i32) -> (i32, i32) {
    %c0_i32 = arith.constant 0 : i32
    %c0_i32_0 = arith.constant 0 : i32
    %c0_i32_1 = arith.constant 0 : i32
    return %c0_i32, %c0_i32_0 : i32, i32
  }
  func.func @transform_11(%arg0: i32) -> (i32, i32) {
    %c0_i32 = arith.constant 0 : i32
    %c0_i32_0 = arith.constant 0 : i32
    %c0_i32_1 = arith.constant 0 : i32
    return %c0_i32, %c0_i32_0 : i32, i32
  }
  func.func @transform_12(%arg0: i32) -> (i32, i32) {
    %c0_i32 = arith.constant 0 : i32
    %c0_i32_0 = arith.constant 0 : i32
    %c0_i32_1 = arith.constant 0 : i32
    return %c0_i32, %c0_i32_0 : i32, i32
  }
  func.func @transform_13(%arg0: i32) -> (i32, i32) {
    %c0_i32 = arith.constant 0 : i32
    %c0_i32_0 = arith.constant 0 : i32
    %c0_i32_1 = arith.constant 0 : i32
    return %c0_i32, %c0_i32_0 : i32, i32
  }
  func.func @transform_14(%arg0: i32) -> (i32, i32) {
    %c0_i32 = arith.constant 0 : i32
    %c0_i32_0 = arith.constant 0 : i32
    %c0_i32_1 = arith.constant 0 : i32
    return %c0_i32, %c0_i32_0 : i32, i32
  }
  func.func @transform_15(%arg0: i32) -> (i32, i32) {
    %c0_i32 = arith.constant 0 : i32
    %c0_i32_0 = arith.constant 0 : i32
    %c0_i32_1 = arith.constant 0 : i32
    return %c0_i32, %c0_i32_0 : i32, i32
  }
  func.func @transform_16(%arg0: i32) -> (i32, i32) {
    %c0_i32 = arith.constant 0 : i32
    %c0_i32_0 = arith.constant 0 : i32
    %c0_i32_1 = arith.constant 0 : i32
    return %c0_i32, %c0_i32_0 : i32, i32
  }
  func.func @transform_17(%arg0: i32) -> (i32, i32) {
    %c0_i32 = arith.constant 0 : i32
    %c0_i32_0 = arith.constant 0 : i32
    %c0_i32_1 = arith.constant 0 : i32
    return %c0_i32, %c0_i32_0 : i32, i32
  }
  func.func @transform_18(%arg0: i32) -> (i32, i32) {
    %c0_i32 = arith.constant 0 : i32
    %c0_i32_0 = arith.constant 0 : i32
    %c0_i32_1 = arith.constant 0 : i32
    return %c0_i32, %c0_i32_0 : i32, i32
  }
  func.func @transform_19(%arg0: i32) -> (i32, i32) {
    %c0_i32 = arith.constant 0 : i32
    %c0_i32_0 = arith.constant 0 : i32
    %c0_i32_1 = arith.constant 0 : i32
    return %c0_i32, %c0_i32_0 : i32, i32
  }
  func.func @transform_20(%arg0: i32) -> (i32, i32) {
    %c0_i32 = arith.constant 0 : i32
    %c0_i32_0 = arith.constant 0 : i32
    %c0_i32_1 = arith.constant 0 : i32
    return %c0_i32, %c0_i32_0 : i32, i32
  }
  func.func @transform_21(%arg0: i32) -> (i32, i32) {
    %c0_i32 = arith.constant 0 : i32
    %c0_i32_0 = arith.constant 0 : i32
    %c0_i32_1 = arith.constant 0 : i32
    return %c0_i32, %c0_i32_0 : i32, i32
  }
  func.func @transform_22(%arg0: i32) -> (i32, i32) {
    %c0_i32 = arith.constant 0 : i32
    %c0_i32_0 = arith.constant 0 : i32
    %c0_i32_1 = arith.constant 0 : i32
    return %c0_i32, %c0_i32_0 : i32, i32
  }
  func.func @transform_23(%arg0: i32) -> (i32, i32) {
    %c0_i32 = arith.constant 0 : i32
    %c0_i32_0 = arith.constant 0 : i32
    %c0_i32_1 = arith.constant 0 : i32
    return %c0_i32, %c0_i32_0 : i32, i32
  }
  func.func @transform_24(%arg0: i32) -> (i32, i32) {
    %c0_i32 = arith.constant 0 : i32
    %c0_i32_0 = arith.constant 0 : i32
    %c0_i32_1 = arith.constant 0 : i32
    return %c0_i32, %c0_i32_0 : i32, i32
  }
  func.func @transform_25(%arg0: i32) -> (i32, i32) {
    %c0_i32 = arith.constant 0 : i32
    %c0_i32_0 = arith.constant 0 : i32
    %c0_i32_1 = arith.constant 0 : i32
    return %c0_i32, %c0_i32_0 : i32, i32
  }
  func.func @transform_26(%arg0: i32) -> (i32, i32) {
    %c0_i32 = arith.constant 0 : i32
    %c0_i32_0 = arith.constant 0 : i32
    %c0_i32_1 = arith.constant 0 : i32
    return %c0_i32, %c0_i32_0 : i32, i32
  }
  func.func @transform_27(%arg0: i32) -> (i32, i32) {
    %c0_i32 = arith.constant 0 : i32
    %c0_i32_0 = arith.constant 0 : i32
    %c0_i32_1 = arith.constant 0 : i32
    return %c0_i32, %c0_i32_0 : i32, i32
  }
  func.func @transform_28(%arg0: i32) -> (i32, i32) {
    %c0_i32 = arith.constant 0 : i32
    %c0_i32_0 = arith.constant 0 : i32
    %c0_i32_1 = arith.constant 0 : i32
    return %c0_i32, %c0_i32_0 : i32, i32
  }
  func.func @transform_29(%arg0: i32) -> (i32, i32) {
    %c0_i32 = arith.constant 0 : i32
    %c0_i32_0 = arith.constant 0 : i32
    %c0_i32_1 = arith.constant 0 : i32
    return %c0_i32, %c0_i32_0 : i32, i32
  }
  func.func @transform_30(%arg0: i32) -> (i32, i32) {
    %c0_i32 = arith.constant 0 : i32
    %c0_i32_0 = arith.constant 0 : i32
    %c0_i32_1 = arith.constant 0 : i32
    return %c0_i32, %c0_i32_0 : i32, i32
  }
  func.func @transform_31(%arg0: i32) -> (i32, i32) {
    %c0_i32 = arith.constant 0 : i32
    %c0_i32_0 = arith.constant 0 : i32
    %c0_i32_1 = arith.constant 0 : i32
    return %c0_i32, %c0_i32_0 : i32, i32
  }
  func.func @transform_32(%arg0: i32) -> (i32, i32, i32) {
    %c0_i32 = arith.constant 0 : i32
    %c0_i32_0 = arith.constant 0 : i32
    %c0_i32_1 = arith.constant 0 : i32
    return %arg0, %c0_i32, %c0_i32_0 : i32, i32, i32
  }
  func.func @transform_33(%arg0: i32) -> (i32, i32, i32) {
    %c0_i32 = arith.constant 0 : i32
    %c0_i32_0 = arith.constant 0 : i32
    %c0_i32_1 = arith.constant 0 : i32
    return %arg0, %c0_i32, %c0_i32_0 : i32, i32, i32
  }
}

</mosaic_0001>

<llo_original>
// kernel: unet_trainer_forward.1
$region0: #{unet_trainer_forward.1}
  #allocation0 [shape = 'u32[]', space=smem, size = 0x4, offset = 0x4, fixed_abs, tag = 'smem constant byte address 0x4 - core index']
  #allocation1 [shape = 'u32[72,128]{1,0:T(1,128)}', space=vmem, size = 0x9000, scoped, tag = 'internal scratch']
  #allocation2 [shape = 'bf16[432,256]{1,0:T(8,128)(2,1)}', space=vmem, size = 0x36000, scoped, tag = 'scratch operand']
  %s0 = inlined_call_operand.smem [shape: u32[34], index: -1, kind: input, shape index: {}]
  %s1 = sld [smem:[%s0]]
  %s2 = scalar_lea.smem %s0, 1
  %s3 = sld [smem:[%s2]]
  %s4 = scalar_lea.smem %s0, 2
  %s5 = sld [smem:[%s4]]
  %s6 = scalar_lea.smem %s0, 3
  %s7 = sld [smem:[%s6]]
  %s8 = scalar_lea.smem %s0, 4
  %s9 = sld [smem:[%s8]]
  %s10 = scalar_lea.smem %s0, 5
  %s11 = sld [smem:[%s10]]
  %s12 = scalar_lea.smem %s0, 6
  %s13 = sld [smem:[%s12]]
  %s14 = scalar_lea.smem %s0, 7
  %s15 = sld [smem:[%s14]]
  %s16 = scalar_lea.smem %s0, 8
  %s17 = sld [smem:[%s16]]
  %s18 = scalar_lea.smem %s0, 9
  %s19 = sld [smem:[%s18]]
  %s20 = scalar_lea.smem %s0, 10
  %s21 = sld [smem:[%s20]]
  %s22 = scalar_lea.smem %s0, 11
  %s23 = sld [smem:[%s22]]
  %s24 = scalar_lea.smem %s0, 12
  %s25 = sld [smem:[%s24]]
  %s26 = scalar_lea.smem %s0, 13
  %s27 = sld [smem:[%s26]]
  %s28 = scalar_lea.smem %s0, 14
  %s29 = sld [smem:[%s28]]
  %s30 = scalar_lea.smem %s0, 15
  %s31 = sld [smem:[%s30]]
  %s32 = scalar_lea.smem %s0, 16
  %s33 = sld [smem:[%s32]]
  %s34 = scalar_lea.smem %s0, 17
  %s35 = sld [smem:[%s34]]
  %s36 = scalar_lea.smem %s0, 18
  %s37 = sld [smem:[%s36]]
  %s38 = scalar_lea.smem %s0, 19
  %s39 = sld [smem:[%s38]]
  %s40 = scalar_lea.smem %s0, 20
  %s41 = sld [smem:[%s40]]
  %s42 = scalar_lea.smem %s0, 21
  %s43 = sld [smem:[%s42]]
  %s44 = scalar_lea.smem %s0, 22
  %s45 = sld [smem:[%s44]]
  %s46 = scalar_lea.smem %s0, 23
  %s47 = sld [smem:[%s46]]
  %s48 = scalar_lea.smem %s0, 24
  %s49 = sld [smem:[%s48]]
  %s50 = scalar_lea.smem %s0, 25
  %s51 = sld [smem:[%s50]]
  %s52 = scalar_lea.smem %s0, 26
  %s53 = sld [smem:[%s52]]
  %s54 = scalar_lea.smem %s0, 27
  %s55 = sld [smem:[%s54]]
  %s56 = scalar_lea.smem %s0, 28
  %s57 = sld [smem:[%s56]]
  %s58 = scalar_lea.smem %s0, 29
  %s59 = sld [smem:[%s58]]
  %s60 = scalar_lea.smem %s0, 30
  %s61 = sld [smem:[%s60]]
  %s62 = scalar_lea.smem %s0, 31
  %s63 = sld [smem:[%s62]]
  %s64 = scalar_lea.smem %s0, 32
  %s65 = sld [smem:[%s64]]
  %s66 = scalar_lea.smem %s0, 33
  %s67 = sld [smem:[%s66]]
  %68 = xla_tuple %s65, %s67
  %s69 = sld [smem:[#allocation0]]
  $region225: #{unet_trainer_forward.1} parent=0
    _
  %s71 = ssub.s32 1, %s69
  %s72 = scalar_select 0, %s71, %s69
  $region1: #{unet_trainer_forward.1} parent=0
    #allocation3 [shape = 'u8[8192]{0}', space=vmem, size = 0x2000, scoped, tag = 'input window, operand 1, single buffered']
    #allocation4 [shape = 's32[2]{0}', space=sflag, size = 0x8, scoped, tag = 'scoped memory for unet_trainer_forward.1']
    #allocation5 [shape = 'u8[4096]{0}', space=vmem, size = 0x1000, scoped, tag = 'input window, operand 2, single buffered']
    #allocation6 [shape = 's32[1]{0}', space=sflag, size = 0x4, scoped, tag = 'scoped memory for unet_trainer_forward.1']
    #allocation7 [shape = 'u8[4096]{0}', space=vmem, size = 0x1000, scoped, tag = 'input window, operand 3, single buffered']
    #allocation8 [shape = 'u8[16384]{0}', space=vmem, size = 0x4000, scoped, tag = 'input window, operand 5, single buffered']
    #allocation9 [shape = 's32[1]{0}', space=sflag, size = 0x4, scoped, tag = 'scoped memory for unet_trainer_forward.1']
    #allocation10 [shape = 'u8[4096]{0}', space=vmem, size = 0x1000, scoped, tag = 'input window, operand 6, single buffered']
    #allocation11 [shape = 'u8[2048]{0}', space=vmem, size = 0x800, scoped, tag = 'input window, operand 8, single buffered']
    #allocation12 [shape = 's32[1]{0}', space=sflag, size = 0x4, scoped, tag = 'scoped memory for unet_trainer_forward.1']
    #allocation13 [shape = 'u8[2048]{0}', space=vmem, size = 0x800, scoped, tag = 'input window, operand 10, single buffered']
    #allocation14 [shape = 'u8[4096]{0}', space=vmem, size = 0x1000, scoped, tag = 'input window, operand 12, single buffered']
    #allocation15 [shape = 's32[1]{0}', space=sflag, size = 0x4, scoped, tag = 'scoped memory for unet_trainer_forward.1']
    #allocation16 [shape = 'u8[8192]{0}', space=vmem, size = 0x2000, scoped, tag = 'input window, operand 14, single buffered']
    #allocation17 [shape = 'u8[16384]{0}', space=vmem, size = 0x4000, scoped, tag = 'input window, operand 16, single buffered']
    #allocation18 [shape = 's32[1]{0}', space=sflag, size = 0x4, scoped, tag = 'scoped memory for unet_trainer_forward.1']
    #allocation19 [shape = 'u8[24576]{0}', space=vmem, size = 0x6000, scoped, tag = 'input window, operand 18, single buffered']
    #allocation20 [shape = 'u8[8192]{0}', space=vmem, size = 0x2000, scoped, tag = 'input window, operand 22, single buffered']
    #allocation21 [shape = 's32[1]{0}', space=sflag, size = 0x4, scoped, tag = 'scoped memory for unet_trainer_forward.1']
    #allocation22 [shape = 'u8[4096]{0}', space=vmem, size = 0x1000, scoped, tag = 'input window, operand 24, single buffered']
    #allocation23 [shape = 'u8[2048]{0}', space=vmem, size = 0x800, scoped, tag = 'input window, operand 26, single buffered']
    #allocation24 [shape = 's32[1]{0}', space=sflag, size = 0x4, scoped, tag = 'scoped memory for unet_trainer_forward.1']
    %73 = vsyncpa [#allocation4], 0
    %74 = vsyncpa [#allocation6], 0
    %75 = vsyncpa [#allocation9], 0
    %76 = vsyncpa [#allocation12], 0
    %77 = vsyncpa [#allocation15], 0
    %78 = vsyncpa [#allocation18], 0
    %79 = vsyncpa [#allocation21], 0
    %80 = vsyncpa [#allocation24], 0
    loop: start=0, step=1, limit=4
    $region2: #{unet_trainer_forward.1} parent=1 // loop_pre_header
      _
    $region3: #{unet_trainer_forward.1} parent=1 // loop_header
      %s82 = sphi 0, %s86
      %p83 = scmp.ge.s32.totalorder %s82, 4
      %s92 = sphi 0, %s94
      %s95 = sphi 0, %s92
      %s96 = sphi 0, %s95
      %s112 = sphi 0, %s96
      %s116 = sphi 0, %s116
      %s118 = sphi 0, %s116
      %s119 = sphi 0, %s118
      %s133 = sphi 0, %s119
      %s137 = sphi 0, %s137
      %s139 = sphi 0, %s137
      %s140 = sphi 0, %s139
      %s154 = sphi 0, %s140
      %s158 = sphi 0, %s158
      %s160 = sphi 0, %s158
      %s161 = sphi 0, %s160
      %s175 = sphi 0, %s161
      %s179 = sphi 0, %s179
      %s181 = sphi 0, %s179
      %s182 = sphi 0, %s181
      %s196 = sphi 0, %s182
      %s200 = sphi 0, %s200
      %s202 = sphi 0, %s200
      %s203 = sphi 0, %s202
      %s217 = sphi 0, %s203
      %s221 = sphi 0, %s221
      %s223 = sphi 0, %s221
      %s224 = sphi 0, %s223
      %s238 = sphi 0, %s224
      %s242 = sphi 0, %s242
      %s244 = sphi 0, %s242
      %s245 = sphi 0, %s244
      %s259 = sphi 0, %s245
      %s263 = sphi 0, %s263
      %s265 = sphi 0, %s263
      %s266 = sphi 0, %s265
      %s280 = sphi 0, %s266
      %s284 = sphi 0, %s284
      %s286 = sphi 0, %s284
      %s287 = sphi 0, %s286
      %s301 = sphi 0, %s287
      %s305 = sphi 0, %s305
      %s307 = sphi 0, %s305
      %s308 = sphi 0, %s307
      %s322 = sphi 0, %s308
      %s326 = sphi 0, %s326
      %s328 = sphi 0, %s326
      %s329 = sphi 0, %s328
      %s343 = sphi 0, %s329
      %s347 = sphi 0, %s347
      %s349 = sphi 0, %s347
      %s350 = sphi 0, %s349
      %s364 = sphi 0, %s350
      %s368 = sphi 0, %s368
      %s370 = sphi 0, %s368
      %s371 = sphi 0, %s370
      %s385 = sphi 0, %s371
      %s389 = sphi 0, %s389
      %s391 = sphi 0, %s389
      %s392 = sphi 0, %s391
      %s406 = sphi 0, %s392
      %s410 = sphi 0, %s410
      %s412 = sphi 0, %s410
      %s413 = sphi 0, %s412
      %s427 = sphi 0, %s413
      %s431 = sphi 0, %s431
      %s433 = sphi 0, %s431
      %s434 = sphi 0, %s433
      %s448 = sphi 0, %s434
      %s452 = sphi 0, %s452
      %s454 = sphi 0, %s452
      %s455 = sphi 0, %s454
      %s469 = sphi 0, %s455
      %s473 = sphi 0, %s473
      %s475 = sphi 0, %s473
      %s476 = sphi 0, %s475
      %s490 = sphi 0, %s476
      %s494 = sphi 0, %s494
      %s496 = sphi 0, %s494
      %s497 = sphi 0, %s496
      %s511 = sphi 0, %s497
      %s515 = sphi 0, %s515
      %s517 = sphi 0, %s515
      %s518 = sphi 0, %s517
      %s532 = sphi 0, %s518
      %s536 = sphi 0, %s536
      %s538 = sphi 0, %s536
      %s539 = sphi 0, %s538
      %s553 = sphi 0, %s539
      %s557 = sphi 0, %s557
      %s559 = sphi 0, %s557
      %s560 = sphi 0, %s559
      %s574 = sphi 0, %s560
      %s578 = sphi 0, %s578
      %s580 = sphi 0, %s578
      %s581 = sphi 0, %s580
      %s595 = sphi 0, %s581
      %s599 = sphi 0, %s599
      %s601 = sphi 0, %s599
      %s602 = sphi 0, %s601
      %s616 = sphi 0, %s602
      %s620 = sphi 0, %s620
      %s622 = sphi 0, %s620
      %s623 = sphi 0, %s622
      %s637 = sphi 0, %s623
      %s641 = sphi 0, %s641
      %s643 = sphi 0, %s641
      %s644 = sphi 0, %s643
      %s658 = sphi 0, %s644
      %s662 = sphi 0, %s662
      %s664 = sphi 0, %s662
      %s665 = sphi 0, %s664
      %s679 = sphi 0, %s665
      %s683 = sphi 0, %s683
      %s685 = sphi 0, %s683
      %s686 = sphi 0, %s685
      %s700 = sphi 0, %s686
      %s704 = sphi 0, %s704
      %s706 = sphi 0, %s704
      %s707 = sphi 0, %s706
      %s721 = sphi 0, %s707
      %s725 = sphi 0, %s725
      %s727 = sphi 0, %s725
      %s728 = sphi 0, %s727
      %s742 = sphi 0, %s728
      %s746 = sphi 0, %s746
      %s748 = sphi 0, %s746
      %s749 = sphi 0, %s748
      %s763 = sphi 0, %s749
      %s769 = sphi 0, %s771
      %s772 = sphi 0, %s769
      %s773 = sphi 0, %s772
      %s789 = sphi 0, %s773
      %s795 = sphi 0, %s797
      %s798 = sphi 0, %s795
      %s799 = sphi 0, %s798
      %s815 = sphi 0, %s799
    $region4: #{unet_trainer_forward.1} parent=1 // loop_header_branch
      %85 = sbr.rel (%p83) target = $region8
    $region5: #{unet_trainer_forward.1} parent=1 // loop_body
      %s87 = ssub.s32 %s82, 1
      %s88 = ssub.s32 %s82, 2
      %s89 = sadd.s32 %s82, 1
      %s90 = ssub.s32 %s82, %s89
      %p91 = scmp.eq.s32.totalorder %s90, 0
      %s93 = sadd.s32 %s92, 1
      %s94 = scalar_select %p91, %s92, %s93
      %p97 = pneg %p91
      %p98 = scmp.eq.s32.totalorder %s82, 1
      %p99 = por %p97, %p98
      %p100 = scmp.ne.s32.totalorder %s92, %s95
      %p101 = scmp.eq.s32.totalorder %s82, 0
      %p102 = por %p100, %p101
      %p103 = scmp.ne.s32.totalorder %s92, %s95
      %p104 = scmp.eq.s32.totalorder %s87, 1
      %p105 = por %p103, %p104
      %p106 = scmp.ne.s32.totalorder %s95, %s96
      %p107 = scmp.eq.s32.totalorder %s87, 0
      %p108 = por %p106, %p107
      %p109 = scmp.ne.s32.totalorder %s95, %s96
      %p110 = scmp.eq.s32.totalorder %s88, 1
      %p111 = por %p109, %p110
      %p113 = scmp.ne.s32.totalorder %s96, %s112
      %p114 = scmp.eq.s32.totalorder %s88, 0
      %p115 = por %p113, %p114
      %s117 = sadd.s32 %s116, 1
      %p120 = scmp.eq.s32.totalorder %s82, 1
      %p121 = scmp.ne.s32.totalorder %s116, %s118
      %p122 = scmp.eq.s32.totalorder %s82, 0
      %p123 = por %p121, %p122
      %p124 = scmp.ne.s32.totalorder %s116, %s118
      %p125 = scmp.eq.s32.totalorder %s87, 1
      %p126 = por %p124, %p125
      %p127 = scmp.ne.s32.totalorder %s118, %s119
      %p128 = scmp.eq.s32.totalorder %s87, 0
      %p129 = por %p127, %p128
      %p130 = scmp.ne.s32.totalorder %s118, %s119
      %p131 = scmp.eq.s32.totalorder %s88, 1
      %p132 = por %p130, %p131
      %p134 = scmp.ne.s32.totalorder %s119, %s133
      %p135 = scmp.eq.s32.totalorder %s88, 0
      %p136 = por %p134, %p135
      %s138 = sadd.s32 %s137, 1
      %p141 = scmp.eq.s32.totalorder %s82, 1
      %p142 = scmp.ne.s32.totalorder %s137, %s139
      %p143 = scmp.eq.s32.totalorder %s82, 0
      %p144 = por %p142, %p143
      %p145 = scmp.ne.s32.totalorder %s137, %s139
      %p146 = scmp.eq.s32.totalorder %s87, 1
      %p147 = por %p145, %p146
      %p148 = scmp.ne.s32.totalorder %s139, %s140
      %p149 = scmp.eq.s32.totalorder %s87, 0
      %p150 = por %p148, %p149
      %p151 = scmp.ne.s32.totalorder %s139, %s140
      %p152 = scmp.eq.s32.totalorder %s88, 1
      %p153 = por %p151, %p152
      %p155 = scmp.ne.s32.totalorder %s140, %s154
      %p156 = scmp.eq.s32.totalorder %s88, 0
      %p157 = por %p155, %p156
      %s159 = sadd.s32 %s158, 1
      %p162 = scmp.eq.s32.totalorder %s82, 1
      %p163 = scmp.ne.s32.totalorder %s158, %s160
      %p164 = scmp.eq.s32.totalorder %s82, 0
      %p165 = por %p163, %p164
      %p166 = scmp.ne.s32.totalorder %s158, %s160
      %p167 = scmp.eq.s32.totalorder %s87, 1
      %p168 = por %p166, %p167
      %p169 = scmp.ne.s32.totalorder %s160, %s161
      %p170 = scmp.eq.s32.totalorder %s87, 0
      %p171 = por %p169, %p170
      %p172 = scmp.ne.s32.totalorder %s160, %s161
      %p173 = scmp.eq.s32.totalorder %s88, 1
      %p174 = por %p172, %p173
      %p176 = scmp.ne.s32.totalorder %s161, %s175
      %p177 = scmp.eq.s32.totalorder %s88, 0
      %p178 = por %p176, %p177
      %s180 = sadd.s32 %s179, 1
      %p183 = scmp.eq.s32.totalorder %s82, 1
      %p184 = scmp.ne.s32.totalorder %s179, %s181
      %p185 = scmp.eq.s32.totalorder %s82, 0
      %p186 = por %p184, %p185
      %p187 = scmp.ne.s32.totalorder %s179, %s181
      %p188 = scmp.eq.s32.totalorder %s87, 1
      %p189 = por %p187, %p188
      %p190 = scmp.ne.s32.totalorder %s181, %s182
      %p191 = scmp.eq.s32.totalorder %s87, 0
      %p192 = por %p190, %p191
      %p193 = scmp.ne.s32.totalorder %s181, %s182
      %p194 = scmp.eq.s32.totalorder %s88, 1
      %p195 = por %p193, %p194
      %p197 = scmp.ne.s32.totalorder %s182, %s196
      %p198 = scmp.eq.s32.totalorder %s88, 0
      %p199 = por %p197, %p198
      %s201 = sadd.s32 %s200, 1
      %p204 = scmp.eq.s32.totalorder %s82, 1
      %p205 = scmp.ne.s32.totalorder %s200, %s202
      %p206 = scmp.eq.s32.totalorder %s82, 0
      %p207 = por %p205, %p206
      %p208 = scmp.ne.s32.totalorder %s200, %s202
      %p209 = scmp.eq.s32.totalorder %s87, 1
      %p210 = por %p208, %p209
      %p211 = scmp.ne.s32.totalorder %s202, %s203
      %p212 = scmp.eq.s32.totalorder %s87, 0
      %p213 = por %p211, %p212
      %p214 = scmp.ne.s32.totalorder %s202, %s203
      %p215 = scmp.eq.s32.totalorder %s88, 1
      %p216 = por %p214, %p215
      %p218 = scmp.ne.s32.totalorder %s203, %s217
      %p219 = scmp.eq.s32.totalorder %s88, 0
      %p220 = por %p218, %p219
      %s222 = sadd.s32 %s221, 1
      %p225 = scmp.eq.s32.totalorder %s82, 1
      %p226 = scmp.ne.s32.totalorder %s221, %s223
      %p227 = scmp.eq.s32.totalorder %s82, 0
      %p228 = por %p226, %p227
      %p229 = scmp.ne.s32.totalorder %s221, %s223
      %p230 = scmp.eq.s32.totalorder %s87, 1
      %p231 = por %p229, %p230
      %p232 = scmp.ne.s32.totalorder %s223, %s224
      %p233 = scmp.eq.s32.totalorder %s87, 0
      %p234 = por %p232, %p233
      %p235 = scmp.ne.s32.totalorder %s223, %s224
      %p236 = scmp.eq.s32.totalorder %s88, 1
      %p237 = por %p235, %p236
      %p239 = scmp.ne.s32.totalorder %s224, %s238
      %p240 = scmp.eq.s32.totalorder %s88, 0
      %p241 = por %p239, %p240
      %s243 = sadd.s32 %s242, 1
      %p246 = scmp.eq.s32.totalorder %s82, 1
      %p247 = scmp.ne.s32.totalorder %s242, %s244
      %p248 = scmp.eq.s32.totalorder %s82, 0
      %p249 = por %p247, %p248
      %p250 = scmp.ne.s32.totalorder %s242, %s244
      %p251 = scmp.eq.s32.totalorder %s87, 1
      %p252 = por %p250, %p251
      %p253 = scmp.ne.s32.totalorder %s244, %s245
      %p254 = scmp.eq.s32.totalorder %s87, 0
      %p255 = por %p253, %p254
      %p256 = scmp.ne.s32.totalorder %s244, %s245
      %p257 = scmp.eq.s32.totalorder %s88, 1
      %p258 = por %p256, %p257
      %p260 = scmp.ne.s32.totalorder %s245, %s259
      %p261 = scmp.eq.s32.totalorder %s88, 0
      %p262 = por %p260, %p261
      %s264 = sadd.s32 %s263, 1
      %p267 = scmp.eq.s32.totalorder %s82, 1
      %p268 = scmp.ne.s32.totalorder %s263, %s265
      %p269 = scmp.eq.s32.totalorder %s82, 0
      %p270 = por %p268, %p269
      %p271 = scmp.ne.s32.totalorder %s263, %s265
      %p272 = scmp.eq.s32.totalorder %s87, 1
      %p273 = por %p271, %p272
      %p274 = scmp.ne.s32.totalorder %s265, %s266
      %p275 = scmp.eq.s32.totalorder %s87, 0
      %p276 = por %p274, %p275
      %p277 = scmp.ne.s32.totalorder %s265, %s266
      %p278 = scmp.eq.s32.totalorder %s88, 1
      %p279 = por %p277, %p278
      %p281 = scmp.ne.s32.totalorder %s266, %s280
      %p282 = scmp.eq.s32.totalorder %s88, 0
      %p283 = por %p281, %p282
      %s285 = sadd.s32 %s284, 1
      %p288 = scmp.eq.s32.totalorder %s82, 1
      %p289 = scmp.ne.s32.totalorder %s284, %s286
      %p290 = scmp.eq.s32.totalorder %s82, 0
      %p291 = por %p289, %p290
      %p292 = scmp.ne.s32.totalorder %s284, %s286
      %p293 = scmp.eq.s32.totalorder %s87, 1
      %p294 = por %p292, %p293
      %p295 = scmp.ne.s32.totalorder %s286, %s287
      %p296 = scmp.eq.s32.totalorder %s87, 0
      %p297 = por %p295, %p296
      %p298 = scmp.ne.s32.totalorder %s286, %s287
      %p299 = scmp.eq.s32.totalorder %s88, 1
      %p300 = por %p298, %p299
      %p302 = scmp.ne.s32.totalorder %s287, %s301
      %p303 = scmp.eq.s32.totalorder %s88, 0
      %p304 = por %p302, %p303
      %s306 = sadd.s32 %s305, 1
      %p309 = scmp.eq.s32.totalorder %s82, 1
      %p310 = scmp.ne.s32.totalorder %s305, %s307
      %p311 = scmp.eq.s32.totalorder %s82, 0
      %p312 = por %p310, %p311
      %p313 = scmp.ne.s32.totalorder %s305, %s307
      %p314 = scmp.eq.s32.totalorder %s87, 1
      %p315 = por %p313, %p314
      %p316 = scmp.ne.s32.totalorder %s307, %s308
      %p317 = scmp.eq.s32.totalorder %s87, 0
      %p318 = por %p316, %p317
      %p319 = scmp.ne.s32.totalorder %s307, %s308
      %p320 = scmp.eq.s32.totalorder %s88, 1
      %p321 = por %p319, %p320
      %p323 = scmp.ne.s32.totalorder %s308, %s322
      %p324 = scmp.eq.s32.totalorder %s88, 0
      %p325 = por %p323, %p324
      %s327 = sadd.s32 %s326, 1
      %p330 = scmp.eq.s32.totalorder %s82, 1
      %p331 = scmp.ne.s32.totalorder %s326, %s328
      %p332 = scmp.eq.s32.totalorder %s82, 0
      %p333 = por %p331, %p332
      %p334 = scmp.ne.s32.totalorder %s326, %s328
      %p335 = scmp.eq.s32.totalorder %s87, 1
      %p336 = por %p334, %p335
      %p337 = scmp.ne.s32.totalorder %s328, %s329
      %p338 = scmp.eq.s32.totalorder %s87, 0
      %p339 = por %p337, %p338
      %p340 = scmp.ne.s32.totalorder %s328, %s329
      %p341 = scmp.eq.s32.totalorder %s88, 1
      %p342 = por %p340, %p341
      %p344 = scmp.ne.s32.totalorder %s329, %s343
      %p345 = scmp.eq.s32.totalorder %s88, 0
      %p346 = por %p344, %p345
      %s348 = sadd.s32 %s347, 1
      %p351 = scmp.eq.s32.totalorder %s82, 1
      %p352 = scmp.ne.s32.totalorder %s347, %s349
      %p353 = scmp.eq.s32.totalorder %s82, 0
      %p354 = por %p352, %p353
      %p355 = scmp.ne.s32.totalorder %s347, %s349
      %p356 = scmp.eq.s32.totalorder %s87, 1
      %p357 = por %p355, %p356
      %p358 = scmp.ne.s32.totalorder %s349, %s350
      %p359 = scmp.eq.s32.totalorder %s87, 0
      %p360 = por %p358, %p359
      %p361 = scmp.ne.s32.totalorder %s349, %s350
      %p362 = scmp.eq.s32.totalorder %s88, 1
      %p363 = por %p361, %p362
      %p365 = scmp.ne.s32.totalorder %s350, %s364
      %p366 = scmp.eq.s32.totalorder %s88, 0
      %p367 = por %p365, %p366
      %s369 = sadd.s32 %s368, 1
      %p372 = scmp.eq.s32.totalorder %s82, 1
      %p373 = scmp.ne.s32.totalorder %s368, %s370
      %p374 = scmp.eq.s32.totalorder %s82, 0
      %p375 = por %p373, %p374
      %p376 = scmp.ne.s32.totalorder %s368, %s370
      %p377 = scmp.eq.s32.totalorder %s87, 1
      %p378 = por %p376, %p377
      %p379 = scmp.ne.s32.totalorder %s370, %s371
      %p380 = scmp.eq.s32.totalorder %s87, 0
      %p381 = por %p379, %p380
      %p382 = scmp.ne.s32.totalorder %s370, %s371
      %p383 = scmp.eq.s32.totalorder %s88, 1
      %p384 = por %p382, %p383
      %p386 = scmp.ne.s32.totalorder %s371, %s385
      %p387 = scmp.eq.s32.totalorder %s88, 0
      %p388 = por %p386, %p387
      %s390 = sadd.s32 %s389, 1
      %p393 = scmp.eq.s32.totalorder %s82, 1
      %p394 = scmp.ne.s32.totalorder %s389, %s391
      %p395 = scmp.eq.s32.totalorder %s82, 0
      %p396 = por %p394, %p395
      %p397 = scmp.ne.s32.totalorder %s389, %s391
      %p398 = scmp.eq.s32.totalorder %s87, 1
      %p399 = por %p397, %p398
      %p400 = scmp.ne.s32.totalorder %s391, %s392
      %p401 = scmp.eq.s32.totalorder %s87, 0
      %p402 = por %p400, %p401
      %p403 = scmp.ne.s32.totalorder %s391, %s392
      %p404 = scmp.eq.s32.totalorder %s88, 1
      %p405 = por %p403, %p404
      %p407 = scmp.ne.s32.totalorder %s392, %s406
      %p408 = scmp.eq.s32.totalorder %s88, 0
      %p409 = por %p407, %p408
      %s411 = sadd.s32 %s410, 1
      %p414 = scmp.eq.s32.totalorder %s82, 1
      %p415 = scmp.ne.s32.totalorder %s410, %s412
      %p416 = scmp.eq.s32.totalorder %s82, 0
      %p417 = por %p415, %p416
      %p418 = scmp.ne.s32.totalorder %s410, %s412
      %p419 = scmp.eq.s32.totalorder %s87, 1
      %p420 = por %p418, %p419
      %p421 = scmp.ne.s32.totalorder %s412, %s413
      %p422 = scmp.eq.s32.totalorder %s87, 0
      %p423 = por %p421, %p422
      %p424 = scmp.ne.s32.totalorder %s412, %s413
      %p425 = scmp.eq.s32.totalorder %s88, 1
      %p426 = por %p424, %p425
      %p428 = scmp.ne.s32.totalorder %s413, %s427
      %p429 = scmp.eq.s32.totalorder %s88, 0
      %p430 = por %p428, %p429
      %s432 = sadd.s32 %s431, 1
      %p435 = scmp.eq.s32.totalorder %s82, 1
      %p436 = scmp.ne.s32.totalorder %s431, %s433
      %p437 = scmp.eq.s32.totalorder %s82, 0
      %p438 = por %p436, %p437
      %p439 = scmp.ne.s32.totalorder %s431, %s433
      %p440 = scmp.eq.s32.totalorder %s87, 1
      %p441 = por %p439, %p440
      %p442 = scmp.ne.s32.totalorder %s433, %s434
      %p443 = scmp.eq.s32.totalorder %s87, 0
      %p444 = por %p442, %p443
      %p445 = scmp.ne.s32.totalorder %s433, %s434
      %p446 = scmp.eq.s32.totalorder %s88, 1
      %p447 = por %p445, %p446
      %p449 = scmp.ne.s32.totalorder %s434, %s448
      %p450 = scmp.eq.s32.totalorder %s88, 0
      %p451 = por %p449, %p450
      %s453 = sadd.s32 %s452, 1
      %p456 = scmp.eq.s32.totalorder %s82, 1
      %p457 = scmp.ne.s32.totalorder %s452, %s454
      %p458 = scmp.eq.s32.totalorder %s82, 0
      %p459 = por %p457, %p458
      %p460 = scmp.ne.s32.totalorder %s452, %s454
      %p461 = scmp.eq.s32.totalorder %s87, 1
      %p462 = por %p460, %p461
      %p463 = scmp.ne.s32.totalorder %s454, %s455
      %p464 = scmp.eq.s32.totalorder %s87, 0
      %p465 = por %p463, %p464
      %p466 = scmp.ne.s32.totalorder %s454, %s455
      %p467 = scmp.eq.s32.totalorder %s88, 1
      %p468 = por %p466, %p467
      %p470 = scmp.ne.s32.totalorder %s455, %s469
      %p471 = scmp.eq.s32.totalorder %s88, 0
      %p472 = por %p470, %p471
      %s474 = sadd.s32 %s473, 1
      %p477 = scmp.eq.s32.totalorder %s82, 1
      %p478 = scmp.ne.s32.totalorder %s473, %s475
      %p479 = scmp.eq.s32.totalorder %s82, 0
      %p480 = por %p478, %p479
      %p481 = scmp.ne.s32.totalorder %s473, %s475
      %p482 = scmp.eq.s32.totalorder %s87, 1
      %p483 = por %p481, %p482
      %p484 = scmp.ne.s32.totalorder %s475, %s476
      %p485 = scmp.eq.s32.totalorder %s87, 0
      %p486 = por %p484, %p485
      %p487 = scmp.ne.s32.totalorder %s475, %s476
      %p488 = scmp.eq.s32.totalorder %s88, 1
      %p489 = por %p487, %p488
      %p491 = scmp.ne.s32.totalorder %s476, %s490
      %p492 = scmp.eq.s32.totalorder %s88, 0
      %p493 = por %p491, %p492
      %s495 = sadd.s32 %s494, 1
      %p498 = scmp.eq.s32.totalorder %s82, 1
      %p499 = scmp.ne.s32.totalorder %s494, %s496
      %p500 = scmp.eq.s32.totalorder %s82, 0
      %p501 = por %p499, %p500
      %p502 = scmp.ne.s32.totalorder %s494, %s496
      %p503 = scmp.eq.s32.totalorder %s87, 1
      %p504 = por %p502, %p503
      %p505 = scmp.ne.s32.totalorder %s496, %s497
      %p506 = scmp.eq.s32.totalorder %s87, 0
      %p507 = por %p505, %p506
      %p508 = scmp.ne.s32.totalorder %s496, %s497
      %p509 = scmp.eq.s32.totalorder %s88, 1
      %p510 = por %p508, %p509
      %p512 = scmp.ne.s32.totalorder %s497, %s511
      %p513 = scmp.eq.s32.totalorder %s88, 0
      %p514 = por %p512, %p513
      %s516 = sadd.s32 %s515, 1
      %p519 = scmp.eq.s32.totalorder %s82, 1
      %p520 = scmp.ne.s32.totalorder %s515, %s517
      %p521 = scmp.eq.s32.totalorder %s82, 0
      %p522 = por %p520, %p521
      %p523 = scmp.ne.s32.totalorder %s515, %s517
      %p524 = scmp.eq.s32.totalorder %s87, 1
      %p525 = por %p523, %p524
      %p526 = scmp.ne.s32.totalorder %s517, %s518
      %p527 = scmp.eq.s32.totalorder %s87, 0
      %p528 = por %p526, %p527
      %p529 = scmp.ne.s32.totalorder %s517, %s518
      %p530 = scmp.eq.s32.totalorder %s88, 1
      %p531 = por %p529, %p530
      %p533 = scmp.ne.s32.totalorder %s518, %s532
      %p534 = scmp.eq.s32.totalorder %s88, 0
      %p535 = por %p533, %p534
      %s537 = sadd.s32 %s536, 1
      %p540 = scmp.eq.s32.totalorder %s82, 1
      %p541 = scmp.ne.s32.totalorder %s536, %s538
      %p542 = scmp.eq.s32.totalorder %s82, 0
      %p543 = por %p541, %p542
      %p544 = scmp.ne.s32.totalorder %s536, %s538
      %p545 = scmp.eq.s32.totalorder %s87, 1
      %p546 = por %p544, %p545
      %p547 = scmp.ne.s32.totalorder %s538, %s539
      %p548 = scmp.eq.s32.totalorder %s87, 0
      %p549 = por %p547, %p548
      %p550 = scmp.ne.s32.totalorder %s538, %s539
      %p551 = scmp.eq.s32.totalorder %s88, 1
      %p552 = por %p550, %p551
      %p554 = scmp.ne.s32.totalorder %s539, %s553
      %p555 = scmp.eq.s32.totalorder %s88, 0
      %p556 = por %p554, %p555
      %s558 = sadd.s32 %s557, 1
      %p561 = scmp.eq.s32.totalorder %s82, 1
      %p562 = scmp.ne.s32.totalorder %s557, %s559
      %p563 = scmp.eq.s32.totalorder %s82, 0
      %p564 = por %p562, %p563
      %p565 = scmp.ne.s32.totalorder %s557, %s559
      %p566 = scmp.eq.s32.totalorder %s87, 1
      %p567 = por %p565, %p566
      %p568 = scmp.ne.s32.totalorder %s559, %s560
      %p569 = scmp.eq.s32.totalorder %s87, 0
      %p570 = por %p568, %p569
      %p571 = scmp.ne.s32.totalorder %s559, %s560
      %p572 = scmp.eq.s32.totalorder %s88, 1
      %p573 = por %p571, %p572
      %p575 = scmp.ne.s32.totalorder %s560, %s574
      %p576 = scmp.eq.s32.totalorder %s88, 0
      %p577 = por %p575, %p576
      %s579 = sadd.s32 %s578, 1
      %p582 = scmp.eq.s32.totalorder %s82, 1
      %p583 = scmp.ne.s32.totalorder %s578, %s580
      %p584 = scmp.eq.s32.totalorder %s82, 0
      %p585 = por %p583, %p584
      %p586 = scmp.ne.s32.totalorder %s578, %s580
      %p587 = scmp.eq.s32.totalorder %s87, 1
      %p588 = por %p586, %p587
      %p589 = scmp.ne.s32.totalorder %s580, %s581
      %p590 = scmp.eq.s32.totalorder %s87, 0
      %p591 = por %p589, %p590
      %p592 = scmp.ne.s32.totalorder %s580, %s581
      %p593 = scmp.eq.s32.totalorder %s88, 1
      %p594 = por %p592, %p593
      %p596 = scmp.ne.s32.totalorder %s581, %s595
      %p597 = scmp.eq.s32.totalorder %s88, 0
      %p598 = por %p596, %p597
      %s600 = sadd.s32 %s599, 1
      %p603 = scmp.eq.s32.totalorder %s82, 1
      %p604 = scmp.ne.s32.totalorder %s599, %s601
      %p605 = scmp.eq.s32.totalorder %s82, 0
      %p606 = por %p604, %p605
      %p607 = scmp.ne.s32.totalorder %s599, %s601
      %p608 = scmp.eq.s32.totalorder %s87, 1
      %p609 = por %p607, %p608
      %p610 = scmp.ne.s32.totalorder %s601, %s602
      %p611 = scmp.eq.s32.totalorder %s87, 0
      %p612 = por %p610, %p611
      %p613 = scmp.ne.s32.totalorder %s601, %s602
      %p614 = scmp.eq.s32.totalorder %s88, 1
      %p615 = por %p613, %p614
      %p617 = scmp.ne.s32.totalorder %s602, %s616
      %p618 = scmp.eq.s32.totalorder %s88, 0
      %p619 = por %p617, %p618
      %s621 = sadd.s32 %s620, 1
      %p624 = scmp.eq.s32.totalorder %s82, 1
      %p625 = scmp.ne.s32.totalorder %s620, %s622
      %p626 = scmp.eq.s32.totalorder %s82, 0
      %p627 = por %p625, %p626
      %p628 = scmp.ne.s32.totalorder %s620, %s622
      %p629 = scmp.eq.s32.totalorder %s87, 1
      %p630 = por %p628, %p629
      %p631 = scmp.ne.s32.totalorder %s622, %s623
      %p632 = scmp.eq.s32.totalorder %s87, 0
      %p633 = por %p631, %p632
      %p634 = scmp.ne.s32.totalorder %s622, %s623
      %p635 = scmp.eq.s32.totalorder %s88, 1
      %p636 = por %p634, %p635
      %p638 = scmp.ne.s32.totalorder %s623, %s637
      %p639 = scmp.eq.s32.totalorder %s88, 0
      %p640 = por %p638, %p639
      %s642 = sadd.s32 %s641, 1
      %p645 = scmp.eq.s32.totalorder %s82, 1
      %p646 = scmp.ne.s32.totalorder %s641, %s643
      %p647 = scmp.eq.s32.totalorder %s82, 0
      %p648 = por %p646, %p647
      %p649 = scmp.ne.s32.totalorder %s641, %s643
      %p650 = scmp.eq.s32.totalorder %s87, 1
      %p651 = por %p649, %p650
      %p652 = scmp.ne.s32.totalorder %s643, %s644
      %p653 = scmp.eq.s32.totalorder %s87, 0
      %p654 = por %p652, %p653
      %p655 = scmp.ne.s32.totalorder %s643, %s644
      %p656 = scmp.eq.s32.totalorder %s88, 1
      %p657 = por %p655, %p656
      %p659 = scmp.ne.s32.totalorder %s644, %s658
      %p660 = scmp.eq.s32.totalorder %s88, 0
      %p661 = por %p659, %p660
      %s663 = sadd.s32 %s662, 1
      %p666 = scmp.eq.s32.totalorder %s82, 1
      %p667 = scmp.ne.s32.totalorder %s662, %s664
      %p668 = scmp.eq.s32.totalorder %s82, 0
      %p669 = por %p667, %p668
      %p670 = scmp.ne.s32.totalorder %s662, %s664
      %p671 = scmp.eq.s32.totalorder %s87, 1
      %p672 = por %p670, %p671
      %p673 = scmp.ne.s32.totalorder %s664, %s665
      %p674 = scmp.eq.s32.totalorder %s87, 0
      %p675 = por %p673, %p674
      %p676 = scmp.ne.s32.totalorder %s664, %s665
      %p677 = scmp.eq.s32.totalorder %s88, 1
      %p678 = por %p676, %p677
      %p680 = scmp.ne.s32.totalorder %s665, %s679
      %p681 = scmp.eq.s32.totalorder %s88, 0
      %p682 = por %p680, %p681
      %s684 = sadd.s32 %s683, 1
      %p687 = scmp.eq.s32.totalorder %s82, 1
      %p688 = scmp.ne.s32.totalorder %s683, %s685
      %p689 = scmp.eq.s32.totalorder %s82, 0
      %p690 = por %p688, %p689
      %p691 = scmp.ne.s32.totalorder %s683, %s685
      %p692 = scmp.eq.s32.totalorder %s87, 1
      %p693 = por %p691, %p692
      %p694 = scmp.ne.s32.totalorder %s685, %s686
      %p695 = scmp.eq.s32.totalorder %s87, 0
      %p696 = por %p694, %p695
      %p697 = scmp.ne.s32.totalorder %s685, %s686
      %p698 = scmp.eq.s32.totalorder %s88, 1
      %p699 = por %p697, %p698
      %p701 = scmp.ne.s32.totalorder %s686, %s700
      %p702 = scmp.eq.s32.totalorder %s88, 0
      %p703 = por %p701, %p702
      %s705 = sadd.s32 %s704, 1
      %p708 = scmp.eq.s32.totalorder %s82, 1
      %p709 = scmp.ne.s32.totalorder %s704, %s706
      %p710 = scmp.eq.s32.totalorder %s82, 0
      %p711 = por %p709, %p710
      %p712 = scmp.ne.s32.totalorder %s704, %s706
      %p713 = scmp.eq.s32.totalorder %s87, 1
      %p714 = por %p712, %p713
      %p715 = scmp.ne.s32.totalorder %s706, %s707
      %p716 = scmp.eq.s32.totalorder %s87, 0
      %p717 = por %p715, %p716
      %p718 = scmp.ne.s32.totalorder %s706, %s707
      %p719 = scmp.eq.s32.totalorder %s88, 1
      %p720 = por %p718, %p719
      %p722 = scmp.ne.s32.totalorder %s707, %s721
      %p723 = scmp.eq.s32.totalorder %s88, 0
      %p724 = por %p722, %p723
      %s726 = sadd.s32 %s725, 1
      %p729 = scmp.eq.s32.totalorder %s82, 1
      %p730 = scmp.ne.s32.totalorder %s725, %s727
      %p731 = scmp.eq.s32.totalorder %s82, 0
      %p732 = por %p730, %p731
      %p733 = scmp.ne.s32.totalorder %s725, %s727
      %p734 = scmp.eq.s32.totalorder %s87, 1
      %p735 = por %p733, %p734
      %p736 = scmp.ne.s32.totalorder %s727, %s728
      %p737 = scmp.eq.s32.totalorder %s87, 0
      %p738 = por %p736, %p737
      %p739 = scmp.ne.s32.totalorder %s727, %s728
      %p740 = scmp.eq.s32.totalorder %s88, 1
      %p741 = por %p739, %p740
      %p743 = scmp.ne.s32.totalorder %s728, %s742
      %p744 = scmp.eq.s32.totalorder %s88, 0
      %p745 = por %p743, %p744
      %s747 = sadd.s32 %s746, 1
      %p750 = scmp.eq.s32.totalorder %s82, 1
      %p751 = scmp.ne.s32.totalorder %s746, %s748
      %p752 = scmp.eq.s32.totalorder %s82, 0
      %p753 = por %p751, %p752
      %p754 = scmp.ne.s32.totalorder %s746, %s748
      %p755 = scmp.eq.s32.totalorder %s87, 1
      %p756 = por %p754, %p755
      %p757 = scmp.ne.s32.totalorder %s748, %s749
      %p758 = scmp.eq.s32.totalorder %s87, 0
      %p759 = por %p757, %p758
      %p760 = scmp.ne.s32.totalorder %s748, %s749
      %p761 = scmp.eq.s32.totalorder %s88, 1
      %p762 = por %p760, %p761
      %p764 = scmp.ne.s32.totalorder %s749, %s763
      %p765 = scmp.eq.s32.totalorder %s88, 0
      %p766 = por %p764, %p765
      %s767 = ssub.s32 %s82, %s89
      %p768 = scmp.eq.s32.totalorder %s767, 0
      %s770 = sadd.s32 %s769, 1
      %s771 = scalar_select %p768, %s769, %s770
      %p774 = pneg %p768
      %p775 = scmp.eq.s32.totalorder %s82, 1
      %p776 = por %p774, %p775
      %p777 = scmp.ne.s32.totalorder %s769, %s772
      %p778 = scmp.eq.s32.totalorder %s82, 0
      %p779 = por %p777, %p778
      %p780 = scmp.ne.s32.totalorder %s769, %s772
      %p781 = scmp.eq.s32.totalorder %s87, 1
      %p782 = por %p780, %p781
      %p783 = scmp.ne.s32.totalorder %s772, %s773
      %p784 = scmp.eq.s32.totalorder %s87, 0
      %p785 = por %p783, %p784
      %p786 = scmp.ne.s32.totalorder %s772, %s773
      %p787 = scmp.eq.s32.totalorder %s88, 1
      %p788 = por %p786, %p787
      %p790 = scmp.ne.s32.totalorder %s773, %s789
      %p791 = scmp.eq.s32.totalorder %s88, 0
      %p792 = por %p790, %p791
      %s793 = ssub.s32 %s82, %s89
      %p794 = scmp.eq.s32.totalorder %s793, 0
      %s796 = sadd.s32 %s795, 1
      %s797 = scalar_select %p794, %s795, %s796
      %p800 = pneg %p794
      %p801 = scmp.eq.s32.totalorder %s82, 1
      %p802 = por %p800, %p801
      %p803 = scmp.ne.s32.totalorder %s795, %s798
      %p804 = scmp.eq.s32.totalorder %s82, 0
      %p805 = por %p803, %p804
      %p806 = scmp.ne.s32.totalorder %s795, %s798
      %p807 = scmp.eq.s32.totalorder %s87, 1
      %p808 = por %p806, %p807
      %p809 = scmp.ne.s32.totalorder %s798, %s799
      %p810 = scmp.eq.s32.totalorder %s87, 0
      %p811 = por %p809, %p810
      %p812 = scmp.ne.s32.totalorder %s798, %s799
      %p813 = scmp.eq.s32.totalorder %s88, 1
      %p814 = por %p812, %p813
      %p816 = scmp.ne.s32.totalorder %s799, %s815
      %p817 = scmp.eq.s32.totalorder %s88, 0
      %p818 = por %p816, %p817
      %p819 = scmp.le.s32.totalorder 1, %s82
      %p820 = scmp.lt.s32.totalorder %s82, 3
      %p821 = pnand %p819, %p820
      %p822 = pneg %p821
      // Predicated region
      $region9: #{unet_trainer_forward.1} parent=5 // pred_check
        _
      $region10: #{unet_trainer_forward.1} parent=5 // pred_check_branch
        %824 = sbr.rel (%p821) target = $region12
      $region11: #{unet_trainer_forward.1} parent=5 // pred_region
        %s825 = ssub.s32 %s82, 1
        // Predicated region
        $region13: #{unet_trainer_forward.1} parent=11 // pred_check
          %p826 = pneg %p129
        $region14: #{unet_trainer_forward.1} parent=11 // pred_check_branch
          %828 = sbr.rel (%p826) target = $region16
        $region15: #{unet_trainer_forward.1} parent=11 // pred_region
          %830 = vsyncadd [#allocation4], 0
          %s831 = sshll.u32 %s3, 4
          %s832 = int_to_ptr.hbm [resolvable:$true] %s831
          %s833 = sshll.u32 [#allocation3], 4
          %s834 = int_to_ptr.vmem [resolvable:$true] %s833
          %839 = dma.hbm_to_vmem [thread:$0]  %s832, 256, %s834, [#allocation4], 128, 128, 8
        $region16: #{unet_trainer_forward.1} parent=11 // pred_fallthru
          _
        // Predicated region
        $region17: #{unet_trainer_forward.1} parent=11 // pred_check
          %p840 = pneg %p150
        $region18: #{unet_trainer_forward.1} parent=11 // pred_check_branch
          %842 = sbr.rel (%p840) target = $region20
        $region19: #{unet_trainer_forward.1} parent=11 // pred_region
          %844 = vsyncadd [#allocation6], 0
          %s845 = sshll.u32 %s5, 4
          %s846 = int_to_ptr.hbm [resolvable:$true] %s845
          %s847 = sshll.u32 [#allocation5], 4
          %s848 = int_to_ptr.vmem [resolvable:$true] %s847
          %853 = dma.hbm_to_vmem [thread:$0]  %s846, 128, %s848, [#allocation6], 64, 64, 4
        $region20: #{unet_trainer_forward.1} parent=11 // pred_fallthru
          _
        // Predicated region
        $region21: #{unet_trainer_forward.1} parent=11 // pred_check
          %p854 = pneg %p171
        $region22: #{unet_trainer_forward.1} parent=11 // pred_check_branch
          %856 = sbr.rel (%p854) target = $region24
        $region23: #{unet_trainer_forward.1} parent=11 // pred_region
          %858 = vsyncadd [#allocation6], 0
          %s859 = sshll.u32 %s7, 4
          %s860 = int_to_ptr.hbm [resolvable:$true] %s859
          %s861 = sshll.u32 [#allocation7], 4
          %s862 = int_to_ptr.vmem [resolvable:$true] %s861
          %867 = dma.hbm_to_vmem [thread:$0]  %s860, 128, %s862, [#allocation6], 64, 64, 4
        $region24: #{unet_trainer_forward.1} parent=11 // pred_fallthru
          _
        // Predicated region
        $region25: #{unet_trainer_forward.1} parent=11 // pred_check
          %p868 = pneg %p192
        $region26: #{unet_trainer_forward.1} parent=11 // pred_check_branch
          %870 = sbr.rel (%p868) target = $region28
        $region27: #{unet_trainer_forward.1} parent=11 // pred_region
          _
        $region28: #{unet_trainer_forward.1} parent=11 // pred_fallthru
          _
        // Predicated region
        $region29: #{unet_trainer_forward.1} parent=11 // pred_check
          %p871 = pneg %p213
        $region30: #{unet_trainer_forward.1} parent=11 // pred_check_branch
          %873 = sbr.rel (%p871) target = $region32
        $region31: #{unet_trainer_forward.1} parent=11 // pred_region
          %875 = vsyncadd [#allocation9], 0
          %s876 = sshll.u32 %s11, 4
          %s877 = int_to_ptr.hbm [resolvable:$true] %s876
          %s878 = sshll.u32 [#allocation8], 4
          %s879 = int_to_ptr.vmem [resolvable:$true] %s878
          %884 = dma.hbm_to_vmem [thread:$0]  %s877, 512, %s879, [#allocation9], 64, 64, 4
        $region32: #{unet_trainer_forward.1} parent=11 // pred_fallthru
          _
        // Predicated region
        $region33: #{unet_trainer_forward.1} parent=11 // pred_check
          %p885 = pneg %p234
        $region34: #{unet_trainer_forward.1} parent=11 // pred_check_branch
          %887 = sbr.rel (%p885) target = $region36
        $region35: #{unet_trainer_forward.1} parent=11 // pred_region
          %889 = vsyncadd [#allocation9], 0
          %s890 = sshll.u32 %s13, 4
          %s891 = int_to_ptr.hbm [resolvable:$true] %s890
          %s892 = sshll.u32 [#allocation10], 4
          %s893 = int_to_ptr.vmem [resolvable:$true] %s892
          %898 = dma.hbm_to_vmem [thread:$0]  %s891, 128, %s893, [#allocation9], 64, 64, 4
        $region36: #{unet_trainer_forward.1} parent=11 // pred_fallthru
          _
        // Predicated region
        $region37: #{unet_trainer_forward.1} parent=11 // pred_check
          %p899 = pneg %p255
        $region38: #{unet_trainer_forward.1} parent=11 // pred_check_branch
          %901 = sbr.rel (%p899) target = $region40
        $region39: #{unet_trainer_forward.1} parent=11 // pred_region
          _
        $region40: #{unet_trainer_forward.1} parent=11 // pred_fallthru
          _
        // Predicated region
        $region41: #{unet_trainer_forward.1} parent=11 // pred_check
          %p902 = pneg %p276
        $region42: #{unet_trainer_forward.1} parent=11 // pred_check_branch
          %904 = sbr.rel (%p902) target = $region44
        $region43: #{unet_trainer_forward.1} parent=11 // pred_region
          %906 = vsyncadd [#allocation12], 0
          %s908 = sshll.u32 %s17, 4
          %s909 = int_to_ptr.hbm [resolvable:$true] %s908
          %s910 = sshll.u32 [#allocation11], 4
          %s911 = int_to_ptr.vmem [resolvable:$true] %s910
          %913 = dma.hbm_to_vmem [thread:$0]  %s909, 64, %s911, [#allocation12]
        $region44: #{unet_trainer_forward.1} parent=11 // pred_fallthru
          _
        // Predicated region
        $region45: #{unet_trainer_forward.1} parent=11 // pred_check
          %p914 = pneg %p297
        $region46: #{unet_trainer_forward.1} parent=11 // pred_check_branch
          %916 = sbr.rel (%p914) target = $region48
        $region47: #{unet_trainer_forward.1} parent=11 // pred_region
          _
        $region48: #{unet_trainer_forward.1} parent=11 // pred_fallthru
          _
        // Predicated region
        $region49: #{unet_trainer_forward.1} parent=11 // pred_check
          %p917 = pneg %p318
        $region50: #{unet_trainer_forward.1} parent=11 // pred_check_branch
          %919 = sbr.rel (%p917) target = $region52
        $region51: #{unet_trainer_forward.1} parent=11 // pred_region
          %921 = vsyncadd [#allocation12], 0
          %s923 = sshll.u32 %s21, 4
          %s924 = int_to_ptr.hbm [resolvable:$true] %s923
          %s925 = sshll.u32 [#allocation13], 4
          %s926 = int_to_ptr.vmem [resolvable:$true] %s925
          %928 = dma.hbm_to_vmem [thread:$0]  %s924, 64, %s926, [#allocation12]
        $region52: #{unet_trainer_forward.1} parent=11 // pred_fallthru
          _
        // Predicated region
        $region53: #{unet_trainer_forward.1} parent=11 // pred_check
          %p929 = pneg %p339
        $region54: #{unet_trainer_forward.1} parent=11 // pred_check_branch
          %931 = sbr.rel (%p929) target = $region56
        $region55: #{unet_trainer_forward.1} parent=11 // pred_region
          _
        $region56: #{unet_trainer_forward.1} parent=11 // pred_fallthru
          _
        // Predicated region
        $region57: #{unet_trainer_forward.1} parent=11 // pred_check
          %p932 = pneg %p360
        $region58: #{unet_trainer_forward.1} parent=11 // pred_check_branch
          %934 = sbr.rel (%p932) target = $region60
        $region59: #{unet_trainer_forward.1} parent=11 // pred_region
          %936 = vsyncadd [#allocation15], 0
          %s937 = sshll.u32 %s25, 4
          %s938 = int_to_ptr.hbm [resolvable:$true] %s937
          %s939 = sshll.u32 [#allocation14], 4
          %s940 = int_to_ptr.vmem [resolvable:$true] %s939
          %945 = dma.hbm_to_vmem [thread:$0]  %s938, 128, %s940, [#allocation15], 64, 64, 4
        $region60: #{unet_trainer_forward.1} parent=11 // pred_fallthru
          _
        // Predicated region
        $region61: #{unet_trainer_forward.1} parent=11 // pred_check
          %p946 = pneg %p381
        $region62: #{unet_trainer_forward.1} parent=11 // pred_check_branch
          %948 = sbr.rel (%p946) target = $region64
        $region63: #{unet_trainer_forward.1} parent=11 // pred_region
          _
        $region64: #{unet_trainer_forward.1} parent=11 // pred_fallthru
          _
        // Predicated region
        $region65: #{unet_trainer_forward.1} parent=11 // pred_check
          %p949 = pneg %p402
        $region66: #{unet_trainer_forward.1} parent=11 // pred_check_branch
          %951 = sbr.rel (%p949) target = $region68
        $region67: #{unet_trainer_forward.1} parent=11 // pred_region
          %953 = vsyncadd [#allocation15], 0
          %s954 = sshll.u32 %s29, 4
          %s955 = int_to_ptr.hbm [resolvable:$true] %s954
          %s956 = sshll.u32 [#allocation16], 4
          %s957 = int_to_ptr.vmem [resolvable:$true] %s956
          %962 = dma.hbm_to_vmem [thread:$0]  %s955, 256, %s957, [#allocation15], 128, 128, 8
        $region68: #{unet_trainer_forward.1} parent=11 // pred_fallthru
          _
        // Predicated region
        $region69: #{unet_trainer_forward.1} parent=11 // pred_check
          %p963 = pneg %p423
        $region70: #{unet_trainer_forward.1} parent=11 // pred_check_branch
          %965 = sbr.rel (%p963) target = $region72
        $region71: #{unet_trainer_forward.1} parent=11 // pred_region
          _
        $region72: #{unet_trainer_forward.1} parent=11 // pred_fallthru
          _
        // Predicated region
        $region73: #{unet_trainer_forward.1} parent=11 // pred_check
          %p966 = pneg %p444
        $region74: #{unet_trainer_forward.1} parent=11 // pred_check_branch
          %968 = sbr.rel (%p966) target = $region76
        $region75: #{unet_trainer_forward.1} parent=11 // pred_region
          %970 = vsyncadd [#allocation18], 0
          %s971 = sshll.u32 %s33, 4
          %s972 = int_to_ptr.hbm [resolvable:$true] %s971
          %s973 = sshll.u32 [#allocation17], 4
          %s974 = int_to_ptr.vmem [resolvable:$true] %s973
          %979 = dma.hbm_to_vmem [thread:$0]  %s972, 512, %s974, [#allocation18], 128, 128, 8
        $region76: #{unet_trainer_forward.1} parent=11 // pred_fallthru
          _
        // Predicated region
        $region77: #{unet_trainer_forward.1} parent=11 // pred_check
          %p980 = pneg %p465
        $region78: #{unet_trainer_forward.1} parent=11 // pred_check_branch
          %982 = sbr.rel (%p980) target = $region80
        $region79: #{unet_trainer_forward.1} parent=11 // pred_region
          _
        $region80: #{unet_trainer_forward.1} parent=11 // pred_fallthru
          _
        // Predicated region
        $region81: #{unet_trainer_forward.1} parent=11 // pred_check
          %p983 = pneg %p486
        $region82: #{unet_trainer_forward.1} parent=11 // pred_check_branch
          %985 = sbr.rel (%p983) target = $region84
        $region83: #{unet_trainer_forward.1} parent=11 // pred_region
          %987 = vsyncadd [#allocation18], 0
          %s988 = sshll.u32 %s37, 4
          %s989 = int_to_ptr.hbm [resolvable:$true] %s988
          %s990 = sshll.u32 [#allocation19], 4
          %s991 = int_to_ptr.vmem [resolvable:$true] %s990
          %996 = dma.hbm_to_vmem [thread:$0]  %s989, 768, %s991, [#allocation18], 192, 192, 12
        $region84: #{unet_trainer_forward.1} parent=11 // pred_fallthru
          _
        // Predicated region
        $region85: #{unet_trainer_forward.1} parent=11 // pred_check
          %p997 = pneg %p507
        $region86: #{unet_trainer_forward.1} parent=11 // pred_check_branch
          %999 = sbr.rel (%p997) target = $region88
        $region87: #{unet_trainer_forward.1} parent=11 // pred_region
          _
        $region88: #{unet_trainer_forward.1} parent=11 // pred_fallthru
          _
        // Predicated region
        $region89: #{unet_trainer_forward.1} parent=11 // pred_check
          %p1000 = pneg %p528
        $region90: #{unet_trainer_forward.1} parent=11 // pred_check_branch
          %1002 = sbr.rel (%p1000) target = $region92
        $region91: #{unet_trainer_forward.1} parent=11 // pred_region
          _
        $region92: #{unet_trainer_forward.1} parent=11 // pred_fallthru
          _
        // Predicated region
        $region93: #{unet_trainer_forward.1} parent=11 // pred_check
          %p1003 = pneg %p549
        $region94: #{unet_trainer_forward.1} parent=11 // pred_check_branch
          %1005 = sbr.rel (%p1003) target = $region96
        $region95: #{unet_trainer_forward.1} parent=11 // pred_region
          _
        $region96: #{unet_trainer_forward.1} parent=11 // pred_fallthru
          _
        // Predicated region
        $region97: #{unet_trainer_forward.1} parent=11 // pred_check
          %p1006 = pneg %p570
        $region98: #{unet_trainer_forward.1} parent=11 // pred_check_branch
          %1008 = sbr.rel (%p1006) target = $region100
        $region99: #{unet_trainer_forward.1} parent=11 // pred_region
          %1010 = vsyncadd [#allocation21], 0
          %s1011 = sshll.u32 %s45, 4
          %s1012 = int_to_ptr.hbm [resolvable:$true] %s1011
          %s1013 = sshll.u32 [#allocation20], 4
          %s1014 = int_to_ptr.vmem [resolvable:$true] %s1013
          %1019 = dma.hbm_to_vmem [thread:$0]  %s1012, 256, %s1014, [#allocation21], 128, 128, 8
        $region100: #{unet_trainer_forward.1} parent=11 // pred_fallthru
          _
        // Predicated region
        $region101: #{unet_trainer_forward.1} parent=11 // pred_check
          %p1020 = pneg %p591
        $region102: #{unet_trainer_forward.1} parent=11 // pred_check_branch
          %1022 = sbr.rel (%p1020) target = $region104
        $region103: #{unet_trainer_forward.1} parent=11 // pred_region
          _
        $region104: #{unet_trainer_forward.1} parent=11 // pred_fallthru
          _
        // Predicated region
        $region105: #{unet_trainer_forward.1} parent=11 // pred_check
          %p1023 = pneg %p612
        $region106: #{unet_trainer_forward.1} parent=11 // pred_check_branch
          %1025 = sbr.rel (%p1023) target = $region108
        $region107: #{unet_trainer_forward.1} parent=11 // pred_region
          %1027 = vsyncadd [#allocation21], 0
          %s1029 = sshll.u32 %s49, 4
          %s1030 = int_to_ptr.hbm [resolvable:$true] %s1029
          %s1031 = sshll.u32 [#allocation22], 4
          %s1032 = int_to_ptr.vmem [resolvable:$true] %s1031
          %1034 = dma.hbm_to_vmem [thread:$0]  %s1030, 128, %s1032, [#allocation21]
        $region108: #{unet_trainer_forward.1} parent=11 // pred_fallthru
          _
        // Predicated region
        $region109: #{unet_trainer_forward.1} parent=11 // pred_check
          %p1035 = pneg %p633
        $region110: #{unet_trainer_forward.1} parent=11 // pred_check_branch
          %1037 = sbr.rel (%p1035) target = $region112
        $region111: #{unet_trainer_forward.1} parent=11 // pred_region
          _
        $region112: #{unet_trainer_forward.1} parent=11 // pred_fallthru
          _
        // Predicated region
        $region113: #{unet_trainer_forward.1} parent=11 // pred_check
          %p1038 = pneg %p654
        $region114: #{unet_trainer_forward.1} parent=11 // pred_check_branch
          %1040 = sbr.rel (%p1038) target = $region116
        $region115: #{unet_trainer_forward.1} parent=11 // pred_region
          %1042 = vsyncadd [#allocation24], 0
          %s1044 = sshll.u32 %s53, 4
          %s1045 = int_to_ptr.hbm [resolvable:$true] %s1044
          %s1046 = sshll.u32 [#allocation23], 4
          %s1047 = int_to_ptr.vmem [resolvable:$true] %s1046
          %1049 = dma.hbm_to_vmem [thread:$0]  %s1045, 64, %s1047, [#allocation24]
        $region116: #{unet_trainer_forward.1} parent=11 // pred_fallthru
          _
        // Predicated region
        $region117: #{unet_trainer_forward.1} parent=11 // pred_check
          %p1050 = pneg %p675
        $region118: #{unet_trainer_forward.1} parent=11 // pred_check_branch
          %1052 = sbr.rel (%p1050) target = $region120
        $region119: #{unet_trainer_forward.1} parent=11 // pred_region
          _
        $region120: #{unet_trainer_forward.1} parent=11 // pred_fallthru
          _
        // Predicated region
        $region121: #{unet_trainer_forward.1} parent=11 // pred_check
          %p1053 = pneg %p696
        $region122: #{unet_trainer_forward.1} parent=11 // pred_check_branch
          %1055 = sbr.rel (%p1053) target = $region124
        $region123: #{unet_trainer_forward.1} parent=11 // pred_region
          _
        $region124: #{unet_trainer_forward.1} parent=11 // pred_fallthru
          _
        // Predicated region
        $region125: #{unet_trainer_forward.1} parent=11 // pred_check
          %p1056 = pneg %p717
        $region126: #{unet_trainer_forward.1} parent=11 // pred_check_branch
          %1058 = sbr.rel (%p1056) target = $region128
        $region127: #{unet_trainer_forward.1} parent=11 // pred_region
          _
        $region128: #{unet_trainer_forward.1} parent=11 // pred_fallthru
          _
        // Predicated region
        $region129: #{unet_trainer_forward.1} parent=11 // pred_check
          %p1059 = pneg %p738
        $region130: #{unet_trainer_forward.1} parent=11 // pred_check_branch
          %1061 = sbr.rel (%p1059) target = $region132
        $region131: #{unet_trainer_forward.1} parent=11 // pred_region
          _
        $region132: #{unet_trainer_forward.1} parent=11 // pred_fallthru
          _
        // Predicated region
        $region133: #{unet_trainer_forward.1} parent=11 // pred_check
          %p1062 = pneg %p759
        $region134: #{unet_trainer_forward.1} parent=11 // pred_check_branch
          %1064 = sbr.rel (%p1062) target = $region136
        $region135: #{unet_trainer_forward.1} parent=11 // pred_region
          _
        $region136: #{unet_trainer_forward.1} parent=11 // pred_fallthru
          _
      $region12: #{unet_trainer_forward.1} parent=5 // pred_fallthru
        _
      %p1065 = scmp.lt.s32.totalorder %s82, 2
      // Predicated region
      $region137: #{unet_trainer_forward.1} parent=5 // pred_check
        %p1066 = pneg %p1065
      $region138: #{unet_trainer_forward.1} parent=5 // pred_check_branch
        %1068 = sbr.rel (%p1066) target = $region140
      $region139: #{unet_trainer_forward.1} parent=5 // pred_region
        // Predicated region
        $region141: #{unet_trainer_forward.1} parent=139 // pred_check
          %p1069 = pneg %p102
        $region142: #{unet_trainer_forward.1} parent=139 // pred_check_branch
          %1071 = sbr.rel (%p1069) target = $region144
        $region143: #{unet_trainer_forward.1} parent=139 // pred_region
          %p1072 = scmp.lt.s32.totalorder %s82, 1
          %s1073 = scalar_select %p1072, %s82, 1
          %s1074 = smul.addr %s1073, 2
          %s1075 = smul.addr %s1074, 4
          %s1076 = scalar_lea.vmem %s1, %s1075
        $region144: #{unet_trainer_forward.1} parent=139 // pred_fallthru
          _
      $region140: #{unet_trainer_forward.1} parent=5 // pred_fallthru
        _
      %p1077 = scmp.le.s32.totalorder 1, %s82
      %p1078 = scmp.lt.s32.totalorder %s82, 3
      %p1079 = pnand %p1077, %p1078
      %p1080 = pneg %p1079
      // Predicated region
      $region145: #{unet_trainer_forward.1} parent=5 // pred_check
        _
      $region146: #{unet_trainer_forward.1} parent=5 // pred_check_branch
        %1082 = sbr.rel (%p1079) target = $region148
      $region147: #{unet_trainer_forward.1} parent=5 // pred_region
        %s1083 = ssub.s32 %s82, 1
        // Predicated region
        $region149: #{unet_trainer_forward.1} parent=147 // pred_check
          %p1084 = pneg %p129
        $region150: #{unet_trainer_forward.1} parent=147 // pred_check_branch
          %1086 = sbr.rel (%p1084) target = $region152
        $region151: #{unet_trainer_forward.1} parent=147 // pred_region
          %1088 = dma.done [#allocation4], 256
        $region152: #{unet_trainer_forward.1} parent=147 // pred_fallthru
          _
        // Predicated region
        $region153: #{unet_trainer_forward.1} parent=147 // pred_check
          %p1089 = pneg %p150
        $region154: #{unet_trainer_forward.1} parent=147 // pred_check_branch
          %1091 = sbr.rel (%p1089) target = $region156
        $region155: #{unet_trainer_forward.1} parent=147 // pred_region
          %1093 = dma.done [#allocation6], 128
        $region156: #{unet_trainer_forward.1} parent=147 // pred_fallthru
          _
        // Predicated region
        $region157: #{unet_trainer_forward.1} parent=147 // pred_check
          %p1094 = pneg %p171
        $region158: #{unet_trainer_forward.1} parent=147 // pred_check_branch
          %1096 = sbr.rel (%p1094) target = $region160
        $region159: #{unet_trainer_forward.1} parent=147 // pred_region
          %1098 = dma.done [#allocation6], 128
        $region160: #{unet_trainer_forward.1} parent=147 // pred_fallthru
          _
        // Predicated region
        $region161: #{unet_trainer_forward.1} parent=147 // pred_check
          %p1099 = pneg %p213
        $region162: #{unet_trainer_forward.1} parent=147 // pred_check_branch
          %1101 = sbr.rel (%p1099) target = $region164
        $region163: #{unet_trainer_forward.1} parent=147 // pred_region
          %1103 = dma.done [#allocation9], 512
        $region164: #{unet_trainer_forward.1} parent=147 // pred_fallthru
          _
        // Predicated region
        $region165: #{unet_trainer_forward.1} parent=147 // pred_check
          %p1104 = pneg %p234
        $region166: #{unet_trainer_forward.1} parent=147 // pred_check_branch
          %1106 = sbr.rel (%p1104) target = $region168
        $region167: #{unet_trainer_forward.1} parent=147 // pred_region
          %1108 = dma.done [#allocation9], 128
        $region168: #{unet_trainer_forward.1} parent=147 // pred_fallthru
          _
        // Predicated region
        $region169: #{unet_trainer_forward.1} parent=147 // pred_check
          %p1109 = pneg %p276
        $region170: #{unet_trainer_forward.1} parent=147 // pred_check_branch
          %1111 = sbr.rel (%p1109) target = $region172
        $region171: #{unet_trainer_forward.1} parent=147 // pred_region
          %1113 = dma.done [#allocation12], 64
        $region172: #{unet_trainer_forward.1} parent=147 // pred_fallthru
          _
        // Predicated region
        $region173: #{unet_trainer_forward.1} parent=147 // pred_check
          %p1114 = pneg %p318
        $region174: #{unet_trainer_forward.1} parent=147 // pred_check_branch
          %1116 = sbr.rel (%p1114) target = $region176
        $region175: #{unet_trainer_forward.1} parent=147 // pred_region
          %1118 = dma.done [#allocation12], 64
        $region176: #{unet_trainer_forward.1} parent=147 // pred_fallthru
          _
        // Predicated region
        $region177: #{unet_trainer_forward.1} parent=147 // pred_check
          %p1119 = pneg %p360
        $region178: #{unet_trainer_forward.1} parent=147 // pred_check_branch
          %1121 = sbr.rel (%p1119) target = $region180
        $region179: #{unet_trainer_forward.1} parent=147 // pred_region
          %1123 = dma.done [#allocation15], 128
        $region180: #{unet_trainer_forward.1} parent=147 // pred_fallthru
          _
        // Predicated region
        $region181: #{unet_trainer_forward.1} parent=147 // pred_check
          %p1124 = pneg %p402
        $region182: #{unet_trainer_forward.1} parent=147 // pred_check_branch
          %1126 = sbr.rel (%p1124) target = $region184
        $region183: #{unet_trainer_forward.1} parent=147 // pred_region
          %1128 = dma.done [#allocation15], 256
        $region184: #{unet_trainer_forward.1} parent=147 // pred_fallthru
          _
        // Predicated region
        $region185: #{unet_trainer_forward.1} parent=147 // pred_check
          %p1129 = pneg %p444
        $region186: #{unet_trainer_forward.1} parent=147 // pred_check_branch
          %1131 = sbr.rel (%p1129) target = $region188
        $region187: #{unet_trainer_forward.1} parent=147 // pred_region
          %1133 = dma.done [#allocation18], 512
        $region188: #{unet_trainer_forward.1} parent=147 // pred_fallthru
          _
        // Predicated region
        $region189: #{unet_trainer_forward.1} parent=147 // pred_check
          %p1134 = pneg %p486
        $region190: #{unet_trainer_forward.1} parent=147 // pred_check_branch
          %1136 = sbr.rel (%p1134) target = $region192
        $region191: #{unet_trainer_forward.1} parent=147 // pred_region
          %1138 = dma.done [#allocation18], 768
        $region192: #{unet_trainer_forward.1} parent=147 // pred_fallthru
          _
        // Predicated region
        $region193: #{unet_trainer_forward.1} parent=147 // pred_check
          %p1139 = pneg %p570
        $region194: #{unet_trainer_forward.1} parent=147 // pred_check_branch
          %1141 = sbr.rel (%p1139) target = $region196
        $region195: #{unet_trainer_forward.1} parent=147 // pred_region
          %1143 = dma.done [#allocation21], 256
        $region196: #{unet_trainer_forward.1} parent=147 // pred_fallthru
          _
        // Predicated region
        $region197: #{unet_trainer_forward.1} parent=147 // pred_check
          %p1144 = pneg %p612
        $region198: #{unet_trainer_forward.1} parent=147 // pred_check_branch
          %1146 = sbr.rel (%p1144) target = $region200
        $region199: #{unet_trainer_forward.1} parent=147 // pred_region
          %1148 = dma.done [#allocation21], 128
        $region200: #{unet_trainer_forward.1} parent=147 // pred_fallthru
          _
        // Predicated region
        $region201: #{unet_trainer_forward.1} parent=147 // pred_check
          %p1149 = pneg %p654
        $region202: #{unet_trainer_forward.1} parent=147 // pred_check_branch
          %1151 = sbr.rel (%p1149) target = $region204
        $region203: #{unet_trainer_forward.1} parent=147 // pred_region
          %1153 = dma.done [#allocation24], 64
        $region204: #{unet_trainer_forward.1} parent=147 // pred_fallthru
          _
        %p1154 = scmp.lt.s32.totalorder %s87, 1
        %s1155 = scalar_select %p1154, %s87, 1
        %s1156 = smul.addr %s1155, 2
        %s1157 = smul.addr %s1156, 4
        %s1158 = scalar_lea.vmem %s1, %s1157
        %p1159 = pneg %p108
        %p1160 = pneg %p105
        %p1161 = pneg %p129
        %p1162 = pneg %p126
        %p1163 = pneg %p150
        %p1164 = pneg %p147
        %p1165 = pneg %p171
        %p1166 = pneg %p168
        %p1167 = pneg %p192
        %p1168 = pneg %p189
        %p1169 = pneg %p213
        %p1170 = pneg %p210
        %p1171 = pneg %p234
        %p1172 = pneg %p231
        %p1173 = pneg %p255
        %p1174 = pneg %p252
        %p1175 = pneg %p276
        %p1176 = pneg %p273
        %p1177 = pneg %p297
        %p1178 = pneg %p294
        %p1179 = pneg %p318
        %p1180 = pneg %p315
        %p1181 = pneg %p339
        %p1182 = pneg %p336
        %p1183 = pneg %p360
        %p1184 = pneg %p357
        %p1185 = pneg %p381
        %p1186 = pneg %p378
        %p1187 = pneg %p402
        %p1188 = pneg %p399
        %p1189 = pneg %p423
        %p1190 = pneg %p420
        %p1191 = pneg %p444
        %p1192 = pneg %p441
        %p1193 = pneg %p465
        %p1194 = pneg %p462
        %p1195 = pneg %p486
        %p1196 = pneg %p483
        %p1197 = pneg %p507
        %p1198 = pneg %p504
        %p1199 = pneg %p528
        %p1200 = pneg %p525
        %p1201 = pneg %p549
        %p1202 = pneg %p546
        %p1203 = pneg %p570
        %p1204 = pneg %p567
        %p1205 = pneg %p591
        %p1206 = pneg %p588
        %p1207 = pneg %p612
        %p1208 = pneg %p609
        %p1209 = pneg %p633
        %p1210 = pneg %p630
        %p1211 = pneg %p654
        %p1212 = pneg %p651
        %p1213 = pneg %p675
        %p1214 = pneg %p672
        %p1215 = pneg %p696
        %p1216 = pneg %p693
        %p1217 = pneg %p717
        %p1218 = pneg %p714
        %p1219 = pneg %p738
        %p1220 = pneg %p735
        %p1221 = pneg %p759
        %p1222 = pneg %p756
        %p1223 = pneg %p785
        %p1224 = pneg %p782
        %p1225 = scmp.lt.s32.totalorder %s87, 1
        %s1226 = scalar_select %p1225, %s87, 1
        %s1227 = smul.addr %s1226, 2
        %s1228 = smul.addr %s1227, 4
        %s1229 = scalar_lea.vmem %s65, %s1228
        %p1230 = pneg %p811
        %p1231 = pneg %p808
        %p1232 = scmp.lt.s32.totalorder %s87, 1
        %s1233 = scalar_select %p1232, %s87, 1
        %s1234 = smul.addr %s1233, 8
        %s1235 = scalar_lea.vmem %s67, %s1234
        %p1236 = scmp.lt.s32.totalorder %s87, 1
        %s1237 = scalar_select %p1236, %s87, 1
        %s1238 = smul.addr %s1237, 2
        %s1239 = smul.addr %s1238, 4
        %s1240 = scalar_lea.vmem %s1, %s1239
        %p1241 = scmp.lt.s32.totalorder %s87, 1
        %s1242 = scalar_select %p1241, %s87, 1
        %s1243 = smul.addr %s1242, 2
        %s1244 = smul.addr %s1243, 4
        %s1245 = scalar_lea.vmem %s65, %s1244
        %p1246 = scmp.lt.s32.totalorder %s87, 1
        %s1247 = scalar_select %p1246, %s87, 1
        %s1248 = smul.addr %s1247, 8
        %s1249 = scalar_lea.vmem %s67, %s1248
        %v1251 = vld [vmem:[#allocation3] sm:$0xff]
        %v1252 = vld [vmem:[#allocation3 + $0x8] sm:$0x11]
        %v1253 = vld [vmem:[#allocation5] sm:$0xf]
        %v1254 = vld [vmem:[#allocation5 + $0x4] sm:$0x1]
        %v1255 = vld [vmem:[#allocation7] sm:$0xf]
        %v1256 = vld [vmem:[#allocation7 + $0x4] sm:$0x1]
        %v1257 = vld [vmem:[%s1240] sm:$0xff]
        %1259 = vst [vmem:[#allocation1] ss:$2 sm:$0xff] %v1257
        %v1260 = vld.sshfl [vmem:[#allocation1] sm:$0xff pattern:$0x75316420]
        %v1261 = vld.sshfl [vmem:[#allocation1 + $0x8] sm:$0xff pattern:$0x75316420]
        %v1264 = vpack.c.bf16 %v1261, %v1260
        %v1266 = vunpack.c.h.b16 %v1264
        %v1267 = vpack.c.b16 %v1266, %v1266
        %1268 = vrot.lane.b32.xlu0 %v1267, 17
        %v1269 = vpop.permute.xlu0 %1268
        %v1270 = vunpack.c.l.b16 %v1264
        %v1271 = vpack.c.b16 %v1270, %v1270
        %1272 = vrot.lane.b32.xlu0 %v1271, 17
        %v1273 = vpop.permute.xlu0 %1272
        %vm1274 = vcmask 138240
        %v1275 = vsel %vm1274, %v1273, %v1269
        %vm1277 = vcmask 138240
        %v1280 = vsel %vm1277, %v1269, %v1273
        %v1283 = vunpack.c.l.b16 %v1251
        %v1284 = vunpack.c.h.b16 %v1251
        %v1285 = vpack.c.b16 %v1283, %v1283
        %v1286 = vpack.c.b16 %v1284, %v1284
        %v1288 = vpack.i.b16 %v1285, %v1285
        %v1290 = vperm.slane %v1288, 0
        %v1292 = vpack.i.b16 %v1286, %v1286
        %v1294 = vperm.slane %v1292, 0
        %v1295 = vunpack.c.l.bf16 %v1280
        %v1296 = vunpack.c.l.bf16 %v1275
        %v1297 = vunpack.c.l.bf16 %v1290
        %v1298 = vunpack.c.l.bf16 %v1294
        %v1299 = vmul.f32 %v1295, %v1297
        %v1300 = vmul.f32 %v1296, %v1298
        %v1301 = vpack.c.bf16 %v1300, %v1299
        %1302 = vst [vmem:[#allocation2] sm:$0x33] %v1301
        %1303 = vrot.lane.b32.xlu0 %v1267, 16
        %v1304 = vpop.permute.xlu0 %1303
        %1305 = vrot.lane.b32.xlu0 %v1271, 16
        %v1306 = vpop.permute.xlu0 %1305
        %vm1307 = vcmask 130048
        %v1308 = vsel %vm1307, %v1306, %v1304
        %vm1310 = vcmask 130048
        %v1313 = vsel %vm1310, %v1304, %v1306
        %v1315 = vshrl.u32 %v1285, 16
        %v1316 = vpack.i.b16 %v1315, %v1315
        %v1318 = vperm.slane %v1316, 0
        %v1319 = vshrl.u32 %v1286, 16
        %v1320 = vpack.i.b16 %v1319, %v1319
        %v1322 = vperm.slane %v1320, 0
        %v1323 = vunpack.c.l.bf16 %v1313
        %v1324 = vunpack.c.l.bf16 %v1308
        %v1325 = vunpack.c.l.bf16 %v1318
        %v1326 = vunpack.c.l.bf16 %v1322
        %v1327 = vmul.f32 %v1323, %v1325
        %v1328 = vmul.f32 %v1324, %v1326
        %v1329 = vpack.c.bf16 %v1328, %v1327
        %v1331 = vrot.slane %v1329, 6
        %1333 = vst [vmem:[#allocation2] sm:$0xcc] %v1331
        %1334 = vrot.lane.b32.xlu0 %v1267, 15
        %v1335 = vpop.permute.xlu0 %1334
        %1336 = vrot.lane.b32.xlu0 %v1271, 15
        %v1337 = vpop.permute.xlu0 %1336
        %vm1338 = vcmask 121856
        %v1339 = vsel %vm1338, %v1337, %v1335
        %vm1341 = vcmask 121856
        %v1344 = vsel %vm1341, %v1335, %v1337
        %v1346 = vperm.slane %v1288, 1
        %v1347 = vperm.slane %v1292, 1
        %v1348 = vunpack.c.l.bf16 %v1344
        %v1349 = vunpack.c.l.bf16 %v1339
        %v1350 = vunpack.c.l.bf16 %v1346
        %v1351 = vunpack.c.l.bf16 %v1347
        %v1352 = vmul.f32 %v1348, %v1350
        %v1353 = vmul.f32 %v1349, %v1351
        %v1354 = vpack.c.bf16 %v1353, %v1352
        %1355 = vst [vmem:[#allocation2 + $0x8] sm:$0x33] %v1354
        %1356 = vrot.lane.b32.xlu0 %v1267, 1
        %v1357 = vpop.permute.xlu0 %1356
        %1358 = vrot.lane.b32.xlu0 %v1271, 1
        %v1359 = vpop.permute.xlu0 %1358
        %vm1360 = vcmask 7168
        %v1361 = vsel %vm1360, %v1359, %v1357
        %vm1363 = vcmask 7168
        %v1366 = vsel %vm1363, %v1357, %v1359
        %v1368 = vperm.slane %v1316, 1
        %v1369 = vperm.slane %v1320, 1
        %v1370 = vunpack.c.l.bf16 %v1366
        %v1371 = vunpack.c.l.bf16 %v1361
        %v1372 = vunpack.c.l.bf16 %v1368
        %v1373 = vunpack.c.l.bf16 %v1369
        %v1374 = vmul.f32 %v1370, %v1372
        %v1375 = vmul.f32 %v1371, %v1373
        %v1376 = vpack.c.bf16 %v1375, %v1374
        %v1378 = vrot.slane %v1376, 6
        %1380 = vst [vmem:[#allocation2 + $0x8] sm:$0xcc] %v1378
        %1381 = vst [vmem:[#allocation2 + $0x10] sm:$0x33] %v1264
        %1382 = vrot.lane.b32.xlu0 %v1271, 127
        %v1383 = vpop.permute.xlu0 %1382
        %1384 = vrot.lane.b32.xlu0 %v1267, 127
        %v1385 = vpop.permute.xlu0 %1384
        %vm1386 = vcmask 1039360
        %v1387 = vsel %vm1386, %v1383, %v1385
        %vm1389 = vcmask 1039360
        %v1392 = vsel %vm1389, %v1385, %v1383
        %v1394 = vperm.slane %v1316, 2
        %v1395 = vperm.slane %v1320, 2
        %v1396 = vunpack.c.l.bf16 %v1387
        %v1397 = vunpack.c.l.bf16 %v1392
        %v1398 = vunpack.c.l.bf16 %v1394
        %v1399 = vunpack.c.l.bf16 %v1395
        %v1400 = vmul.f32 %v1396, %v1398
        %v1401 = vmul.f32 %v1397, %v1399
        %v1402 = vpack.c.bf16 %v1401, %v1400
        %v1404 = vrot.slane %v1402, 6
        %1406 = vst [vmem:[#allocation2 + $0x10] sm:$0xcc] %v1404
        %1407 = vrot.lane.b32.xlu0 %v1271, 113
        %v1408 = vpop.permute.xlu0 %1407
        %1409 = vrot.lane.b32.xlu0 %v1267, 113
        %v1410 = vpop.permute.xlu0 %1409
        %vm1411 = vcmask 924672
        %v1412 = vsel %vm1411, %v1408, %v1410
        %vm1414 = vcmask 924672
        %v1417 = vsel %vm1414, %v1410, %v1408
        %v1419 = vperm.slane %v1288, 3
        %v1420 = vperm.slane %v1292, 3
        %v1421 = vunpack.c.l.bf16 %v1412
        %v1422 = vunpack.c.l.bf16 %v1417
        %v1423 = vunpack.c.l.bf16 %v1419
        %v1424 = vunpack.c.l.bf16 %v1420
        %v1425 = vmul.f32 %v1421, %v1423
        %v1426 = vmul.f32 %v1422, %v1424
        %v1427 = vpack.c.bf16 %v1426, %v1425
        %1428 = vst [vmem:[#allocation2 + $0x18] sm:$0x33] %v1427
        %1429 = vrot.lane.b32.xlu0 %v1271, 112
        %v1430 = vpop.permute.xlu0 %1429
        %1431 = vrot.lane.b32.xlu0 %v1267, 112
        %v1432 = vpop.permute.xlu0 %1431
        %vm1433 = vcmask 916480
        %v1434 = vsel %vm1433, %v1430, %v1432
        %vm1436 = vcmask 916480
        %v1439 = vsel %vm1436, %v1432, %v1430
        %v1441 = vperm.slane %v1316, 3
        %v1442 = vperm.slane %v1320, 3
        %v1443 = vunpack.c.l.bf16 %v1434
        %v1444 = vunpack.c.l.bf16 %v1439
        %v1445 = vunpack.c.l.bf16 %v1441
        %v1446 = vunpack.c.l.bf16 %v1442
        %v1447 = vmul.f32 %v1443, %v1445
        %v1448 = vmul.f32 %v1444, %v1446
        %v1449 = vpack.c.bf16 %v1448, %v1447
        %v1451 = vrot.slane %v1449, 6
        %1453 = vst [vmem:[#allocation2 + $0x18] sm:$0xcc] %v1451
        %1454 = vrot.lane.b32.xlu0 %v1271, 111
        %v1455 = vpop.permute.xlu0 %1454
        %1456 = vrot.lane.b32.xlu0 %v1267, 111
        %v1457 = vpop.permute.xlu0 %1456
        %vm1458 = vcmask 908288
        %v1459 = vsel %vm1458, %v1455, %v1457
        %vm1461 = vcmask 908288
        %v1464 = vsel %vm1461, %v1457, %v1455
        %v1467 = vunpack.c.l.b16 %v1252
        %v1468 = vunpack.c.h.b16 %v1252
        %v1469 = vpack.c.b16 %v1467, %v1467
        %v1470 = vpack.c.b16 %v1468, %v1468
        %v1472 = vpack.i.b16 %v1469, %v1469
        %v1474 = vperm.slane %v1472, 0
        %v1476 = vpack.i.b16 %v1470, %v1470
        %v1478 = vperm.slane %v1476, 0
        %v1479 = vunpack.c.l.bf16 %v1459
        %v1480 = vunpack.c.l.bf16 %v1464
        %v1481 = vunpack.c.l.bf16 %v1474
        %v1482 = vunpack.c.l.bf16 %v1478
        %v1483 = vmul.f32 %v1479, %v1481
        %v1484 = vmul.f32 %v1480, %v1482
        %v1485 = vpack.c.bf16 %v1484, %v1483
        %1486 = vst [vmem:[#allocation2 + $0x20] sm:$0x33] %v1485
        %v1487 = vld [vmem:[#allocation11] sm:$0xf]
        %v1488 = vld [vmem:[#allocation2] sm:$0xff]
        %v1489 = vld [vmem:[#allocation2 + $0x8] sm:$0xff]
        %v1490 = vld [vmem:[#allocation2 + $0x10] sm:$0xff]
        %v1491 = vld [vmem:[#allocation2 + $0x18] sm:$0xff]
        %v1492 = vld [vmem:[#allocation2 + $0x20] sm:$0x33]
        %v1493 = vld [vmem:[%s19] sm:$0xff]
        %1495 = vset.pattern.permute.xlu0 0
        %1496 = vperm.xlu0 %1495, %v1493
        %v1497 = vpop.permute.xlu0 %1496
        %v1504 = vunpack.c.l.b16 %v1488
        %v1505 = vunpack.c.h.b16 %v1488
        %v1506 = vunpack.c.l.b16 %v1489
        %v1507 = vunpack.c.h.b16 %v1489
        %v1508 = vunpack.c.l.b16 %v1490
        %v1509 = vunpack.c.h.b16 %v1490
        %v1510 = vunpack.c.l.b16 %v1491
        %v1511 = vunpack.c.h.b16 %v1491
        %v1512 = vunpack.c.l.b16 %v1492
        %v1513 = vunpack.c.h.b16 %v1492
        %v1514 = vpack.c.b16 %v1506, %v1504
        %v1515 = vpack.c.b16 %v1507, %v1505
        %v1516 = vpack.c.b16 %v1510, %v1508
        %v1517 = vpack.c.b16 %v1511, %v1509
        %v1518 = vpack.c.b16 %v1512, %v1512
        %v1519 = vpack.c.b16 %v1513, %v1513
        %vm1524 = vcmask 293888
        %v1526 = vsel %vm1524, %v1487, 0
        %vm1528 = vcmask 1041408
        %v1530 = vsel %vm1528, %v1518, 0
        %v1533 = vsel %vm1528, %v1519, 0
        %1535 = vmatpush.bf16.msra.mxu0 0
        %1536 = vmatpush.bf16.msra.mxu0 0
        %1537 = vmatpush.bf16.msra.mxu0 0
        %1538 = vmatpush.bf16.msra.mxu0 0
        %1539 = vmatpush.bf16.msra.mxu0 0
        %1540 = vmatpush.bf16.msra.mxu0 %v1530
        %1541 = vmatpush.bf16.msra.mxu0 %v1516
        %1542 = vmatpush.bf16.msra.mxu0 %v1514
        %1543 = vmatmul.bf16.gmra.mxu0 %v1526
        %v1544 = vpop.f32.mrf.mxu0
        %v1545 = vadd.f32 %v1497, %v1544
        %v1546 = vpop.f32.mrf.mxu0
        %1547 = vdwg.mxu0
        %1548 = vmatpush.bf16.msra.mxu0 0
        %1549 = vmatpush.bf16.msra.mxu0 0
        %1550 = vmatpush.bf16.msra.mxu0 0
        %1551 = vmatpush.bf16.msra.mxu0 0
        %1552 = vmatpush.bf16.msra.mxu0 0
        %1553 = vmatpush.bf16.msra.mxu0 %v1533
        %1554 = vmatpush.bf16.msra.mxu0 %v1517
        %1555 = vmatpush.bf16.msra.mxu0 %v1515
        %1556 = vmatmul.bf16.gmra.mxu0 %v1526
        %v1557 = vpop.f32.mrf.mxu0
        %v1558 = vadd.f32 %v1497, %v1557
        %v1559 = vpop.f32.mrf.mxu0
        %1560 = vdwg.mxu0
        %v1561 = vmax.f32 %v1545, 0.0
        %v1562 = vmax.f32 %v1558, 0.0
        %v1563 = vpack.c.bf16 %v1562, %v1561
        %v1565 = vunpack.c.h.b16 %v1563
        %v1566 = vpack.c.b16 %v1565, %v1565
        %1567 = vrot.lane.b32.xlu0 %v1566, 17
        %v1568 = vpop.permute.xlu0 %1567
        %v1569 = vunpack.c.l.b16 %v1563
        %v1570 = vpack.c.b16 %v1569, %v1569
        %1571 = vrot.lane.b32.xlu0 %v1570, 17
        %v1572 = vpop.permute.xlu0 %1571
        %v1573 = vsel %vm1274, %v1572, %v1568
        %v1577 = vsel %vm1277, %v1568, %v1572
        %v1579 = vunpack.c.l.bf16 %v1577
        %v1580 = vunpack.c.l.bf16 %v1573
        %v1581 = vmul.f32 %v1579, %v1297
        %v1582 = vmul.f32 %v1580, %v1298
        %v1583 = vpack.c.bf16 %v1582, %v1581
        %1584 = vst [vmem:[#allocation2] sm:$0xff] %v1583
        %1585 = vrot.lane.b32.xlu0 %v1566, 16
        %v1586 = vpop.permute.xlu0 %1585
        %1587 = vrot.lane.b32.xlu0 %v1570, 16
        %v1588 = vpop.permute.xlu0 %1587
        %v1589 = vsel %vm1307, %v1588, %v1586
        %v1593 = vsel %vm1310, %v1586, %v1588
        %v1595 = vunpack.c.l.bf16 %v1593
        %v1596 = vunpack.c.l.bf16 %v1589
        %v1597 = vmul.f32 %v1595, %v1325
        %v1598 = vmul.f32 %v1596, %v1326
        %v1599 = vpack.c.bf16 %v1598, %v1597
        %1600 = vst [vmem:[#allocation2 + $0x8] sm:$0xff] %v1599
        %1601 = vrot.lane.b32.xlu0 %v1566, 15
        %v1602 = vpop.permute.xlu0 %1601
        %1603 = vrot.lane.b32.xlu0 %v1570, 15
        %v1604 = vpop.permute.xlu0 %1603
        %v1605 = vsel %vm1338, %v1604, %v1602
        %v1609 = vsel %vm1341, %v1602, %v1604
        %v1611 = vunpack.c.l.bf16 %v1609
        %v1612 = vunpack.c.l.bf16 %v1605
        %v1613 = vmul.f32 %v1611, %v1350
        %v1614 = vmul.f32 %v1612, %v1351
        %v1615 = vpack.c.bf16 %v1614, %v1613
        %1616 = vst [vmem:[#allocation2 + $0x10] sm:$0xff] %v1615
        %1617 = vrot.lane.b32.xlu0 %v1566, 1
        %v1618 = vpop.permute.xlu0 %1617
        %1619 = vrot.lane.b32.xlu0 %v1570, 1
        %v1620 = vpop.permute.xlu0 %1619
        %v1621 = vsel %vm1360, %v1620, %v1618
        %v1625 = vsel %vm1363, %v1618, %v1620
        %v1627 = vunpack.c.l.bf16 %v1625
        %v1628 = vunpack.c.l.bf16 %v1621
        %v1629 = vmul.f32 %v1627, %v1372
        %v1630 = vmul.f32 %v1628, %v1373
        %v1631 = vpack.c.bf16 %v1630, %v1629
        %1632 = vst [vmem:[#allocation2 + $0x18] sm:$0xff] %v1631
        %1633 = vst [vmem:[#allocation2 + $0x20] sm:$0xff] %v1563
        %1634 = vrot.lane.b32.xlu0 %v1570, 127
        %v1635 = vpop.permute.xlu0 %1634
        %1636 = vrot.lane.b32.xlu0 %v1566, 127
        %v1637 = vpop.permute.xlu0 %1636
        %v1638 = vsel %vm1386, %v1635, %v1637
        %v1642 = vsel %vm1389, %v1637, %v1635
        %v1644 = vunpack.c.l.bf16 %v1638
        %v1645 = vunpack.c.l.bf16 %v1642
        %v1646 = vmul.f32 %v1644, %v1398
        %v1647 = vmul.f32 %v1645, %v1399
        %v1648 = vpack.c.bf16 %v1647, %v1646
        %1649 = vst [vmem:[#allocation2 + $0x28] sm:$0xff] %v1648
        %1650 = vrot.lane.b32.xlu0 %v1570, 113
        %v1651 = vpop.permute.xlu0 %1650
        %1652 = vrot.lane.b32.xlu0 %v1566, 113
        %v1653 = vpop.permute.xlu0 %1652
        %v1654 = vsel %vm1411, %v1651, %v1653
        %v1658 = vsel %vm1414, %v1653, %v1651
        %v1660 = vunpack.c.l.bf16 %v1654
        %v1661 = vunpack.c.l.bf16 %v1658
        %v1662 = vmul.f32 %v1660, %v1423
        %v1663 = vmul.f32 %v1661, %v1424
        %v1664 = vpack.c.bf16 %v1663, %v1662
        %1665 = vst [vmem:[#allocation2 + $0x30] sm:$0xff] %v1664
        %1666 = vrot.lane.b32.xlu0 %v1570, 112
        %v1667 = vpop.permute.xlu0 %1666
        %1668 = vrot.lane.b32.xlu0 %v1566, 112
        %v1669 = vpop.permute.xlu0 %1668
        %v1670 = vsel %vm1433, %v1667, %v1669
        %v1674 = vsel %vm1436, %v1669, %v1667
        %v1676 = vunpack.c.l.bf16 %v1670
        %v1677 = vunpack.c.l.bf16 %v1674
        %v1678 = vmul.f32 %v1676, %v1445
        %v1679 = vmul.f32 %v1677, %v1446
        %v1680 = vpack.c.bf16 %v1679, %v1678
        %1681 = vst [vmem:[#allocation2 + $0x38] sm:$0xff] %v1680
        %1682 = vrot.lane.b32.xlu0 %v1570, 111
        %v1683 = vpop.permute.xlu0 %1682
        %1684 = vrot.lane.b32.xlu0 %v1566, 111
        %v1685 = vpop.permute.xlu0 %1684
        %v1686 = vsel %vm1458, %v1683, %v1685
        %v1690 = vsel %vm1461, %v1685, %v1683
        %v1692 = vunpack.c.l.bf16 %v1686
        %v1693 = vunpack.c.l.bf16 %v1690
        %v1694 = vmul.f32 %v1692, %v1481
        %v1695 = vmul.f32 %v1693, %v1482
        %v1696 = vpack.c.bf16 %v1695, %v1694
        %1697 = vst [vmem:[#allocation2 + $0x40] sm:$0xff] %v1696
        %v1698 = vld [vmem:[#allocation13] sm:$0xf]
        %v1699 = vld [vmem:[#allocation2] sm:$0xff]
        %v1700 = vld [vmem:[#allocation2 + $0x8] sm:$0xff]
        %v1701 = vld [vmem:[#allocation2 + $0x10] sm:$0xff]
        %v1702 = vld [vmem:[#allocation2 + $0x18] sm:$0xff]
        %v1703 = vld [vmem:[#allocation2 + $0x20] sm:$0xff]
        %v1704 = vld [vmem:[#allocation2 + $0x28] sm:$0xff]
        %v1705 = vld [vmem:[#allocation2 + $0x30] sm:$0xff]
        %v1706 = vld [vmem:[#allocation2 + $0x38] sm:$0xff]
        %v1707 = vld [vmem:[#allocation2 + $0x40] sm:$0xff]
        %v1708 = vld [vmem:[%s23] sm:$0xff]
        %1710 = vset.pattern.permute.xlu0 0
        %1711 = vperm.xlu0 %1710, %v1708
        %v1712 = vpop.permute.xlu0 %1711
        %v1723 = vunpack.c.l.b16 %v1699
        %v1724 = vunpack.c.h.b16 %v1699
        %v1725 = vunpack.c.l.b16 %v1700
        %v1726 = vunpack.c.h.b16 %v1700
        %v1727 = vunpack.c.l.b16 %v1701
        %v1728 = vunpack.c.h.b16 %v1701
        %v1729 = vunpack.c.l.b16 %v1702
        %v1730 = vunpack.c.h.b16 %v1702
        %v1731 = vunpack.c.l.b16 %v1703
        %v1732 = vunpack.c.h.b16 %v1703
        %v1733 = vunpack.c.l.b16 %v1704
        %v1734 = vunpack.c.h.b16 %v1704
        %v1735 = vunpack.c.l.b16 %v1705
        %v1736 = vunpack.c.h.b16 %v1705
        %v1737 = vunpack.c.l.b16 %v1706
        %v1738 = vunpack.c.h.b16 %v1706
        %v1739 = vunpack.c.l.b16 %v1707
        %v1740 = vunpack.c.h.b16 %v1707
        %v1741 = vpack.c.b16 %v1725, %v1723
        %v1742 = vpack.c.b16 %v1726, %v1724
        %v1743 = vpack.c.b16 %v1729, %v1727
        %v1744 = vpack.c.b16 %v1730, %v1728
        %v1745 = vpack.c.b16 %v1733, %v1731
        %v1746 = vpack.c.b16 %v1734, %v1732
        %v1747 = vpack.c.b16 %v1737, %v1735
        %v1748 = vpack.c.b16 %v1738, %v1736
        %v1749 = vpack.c.b16 %v1739, %v1739
        %v1750 = vpack.c.b16 %v1740, %v1740
        %vm1759 = vcmask 588800
        %v1761 = vsel %vm1759, %v1698, 0
        %vm1763 = vcmask 1043456
        %v1765 = vsel %vm1763, %v1749, 0
        %v1768 = vsel %vm1763, %v1750, 0
        %1770 = vmatpush.bf16.msra.mxu0 0
        %1771 = vmatpush.bf16.msra.mxu0 0
        %1772 = vmatpush.bf16.msra.mxu0 0
        %1773 = vmatpush.bf16.msra.mxu0 %v1765
        %1774 = vmatpush.bf16.msra.mxu0 %v1747
        %1775 = vmatpush.bf16.msra.mxu0 %v1745
        %1776 = vmatpush.bf16.msra.mxu0 %v1743
        %1777 = vmatpush.bf16.msra.mxu0 %v1741
        %1778 = vmatmul.bf16.gmra.mxu0 %v1761
        %v1779 = vpop.f32.mrf.mxu0
        %v1780 = vadd.f32 %v1712, %v1779
        %v1781 = vpop.f32.mrf.mxu0
        %1782 = vdwg.mxu0
        %1783 = vmatpush.bf16.msra.mxu0 0
        %1784 = vmatpush.bf16.msra.mxu0 0
        %1785 = vmatpush.bf16.msra.mxu0 0
        %1786 = vmatpush.bf16.msra.mxu0 %v1768
        %1787 = vmatpush.bf16.msra.mxu0 %v1748
        %1788 = vmatpush.bf16.msra.mxu0 %v1746
        %1789 = vmatpush.bf16.msra.mxu0 %v1744
        %1790 = vmatpush.bf16.msra.mxu0 %v1742
        %1791 = vmatmul.bf16.gmra.mxu0 %v1761
        %v1792 = vpop.f32.mrf.mxu0
        %v1793 = vadd.f32 %v1712, %v1792
        %v1794 = vpop.f32.mrf.mxu0
        %1795 = vdwg.mxu0
        %v1796 = vmax.f32 %v1780, 0.0
        %v1797 = vmax.f32 %v1793, 0.0
        %1800 = vrot.lane.b32.xlu0 %v1796, 127
        %v1801 = vpop.permute.xlu0 %1800
        %1802 = vrot.lane.b32.xlu0 %v1797, 127
        %v1803 = vpop.permute.xlu0 %1802
        %v1804 = vsel %vm1389, %v1801, %v1803
        %v1808 = vsel %vm1389, %v1803, %v1801
        %v1809 = vmax.f32 %v1796, %v1804
        %v1810 = vmax.f32 %v1797, %v1808
        %1813 = vrot.lane.b32.xlu0 %v1809, 112
        %v1814 = vpop.permute.xlu0 %1813
        %1815 = vrot.lane.b32.xlu0 %v1810, 112
        %v1816 = vpop.permute.xlu0 %1815
        %v1817 = vsel %vm1436, %v1814, %v1816
        %v1821 = vsel %vm1436, %v1816, %v1814
        %v1822 = vmax.f32 %v1809, %v1817
        %v1823 = vmax.f32 %v1810, %v1821
        %v1824 = vpack.c.bf16 %v1822, %v1822
        %v1825 = vpack.c.bf16 %v1823, %v1823
        %v1826 = vld [vmem:[%s9] sm:$0xf]
        %v1827 = vld [vmem:[%s9 + $0x4] sm:$0xf]
        %v1828 = vld [vmem:[%s9 + $0x8] sm:$0xf]
        %v1829 = vld [vmem:[%s9 + $0xc] sm:$0xf]
        %v1830 = vld [vmem:[%s9 + $0x10] sm:$0xf]
        %v1831 = vld [vmem:[%s9 + $0x14] sm:$0xf]
        %v1832 = vld [vmem:[%s9 + $0x18] sm:$0xf]
        %v1833 = vld [vmem:[%s9 + $0x1c] sm:$0xf]
        %v1834 = vld [vmem:[%s9 + $0x20] sm:$0xf]
        %v1835 = vld [vmem:[%s9 + $0x24] sm:$0xf]
        %v1836 = vld [vmem:[%s9 + $0x28] sm:$0xf]
        %v1837 = vld [vmem:[%s9 + $0x2c] sm:$0xf]
        %v1838 = vld [vmem:[%s9 + $0x30] sm:$0xf]
        %v1839 = vld [vmem:[%s9 + $0x34] sm:$0xf]
        %v1840 = vld [vmem:[%s9 + $0x38] sm:$0xf]
        %v1841 = vld [vmem:[%s9 + $0x3c] sm:$0xf]
        %v1842 = vld [vmem:[%s9 + $0x40] sm:$0xf]
        %v1843 = vld [vmem:[%s9 + $0x44] sm:$0xf]
        %v1844 = vld [vmem:[%s9 + $0x48] sm:$0xf]
        %v1845 = vld [vmem:[%s9 + $0x4c] sm:$0xf]
        %v1846 = vld [vmem:[%s9 + $0x50] sm:$0xf]
        %v1847 = vld [vmem:[%s9 + $0x54] sm:$0xf]
        %v1848 = vld [vmem:[%s9 + $0x58] sm:$0xf]
        %v1849 = vld [vmem:[%s9 + $0x5c] sm:$0xf]
        %v1850 = vld [vmem:[%s9 + $0x60] sm:$0xf]
        %v1851 = vld [vmem:[%s9 + $0x64] sm:$0xf]
        %v1852 = vld [vmem:[%s9 + $0x68] sm:$0xf]
        %v1853 = vld [vmem:[%s9 + $0x6c] sm:$0xf]
        %v1854 = vld [vmem:[%s9 + $0x70] sm:$0xf]
        %v1855 = vld [vmem:[%s9 + $0x74] sm:$0xf]
        %v1856 = vld [vmem:[%s9 + $0x78] sm:$0xf]
        %v1857 = vld [vmem:[%s9 + $0x7c] sm:$0xf]
        %v1890 = vunpack.c.l.b16 %v1826
        %v1891 = vunpack.c.l.b16 %v1827
        %v1892 = vunpack.c.l.b16 %v1828
        %v1893 = vunpack.c.l.b16 %v1829
        %v1894 = vunpack.c.l.b16 %v1830
        %v1895 = vunpack.c.l.b16 %v1831
        %v1896 = vunpack.c.l.b16 %v1832
        %v1897 = vunpack.c.l.b16 %v1833
        %v1898 = vunpack.c.l.b16 %v1834
        %v1899 = vunpack.c.l.b16 %v1835
        %v1900 = vunpack.c.l.b16 %v1836
        %v1901 = vunpack.c.l.b16 %v1837
        %v1902 = vunpack.c.l.b16 %v1838
        %v1903 = vunpack.c.l.b16 %v1839
        %v1904 = vunpack.c.l.b16 %v1840
        %v1905 = vunpack.c.l.b16 %v1841
        %v1906 = vunpack.c.l.b16 %v1842
        %v1907 = vunpack.c.l.b16 %v1843
        %v1908 = vunpack.c.l.b16 %v1844
        %v1909 = vunpack.c.l.b16 %v1845
        %v1910 = vunpack.c.l.b16 %v1846
        %v1911 = vunpack.c.l.b16 %v1847
        %v1912 = vunpack.c.l.b16 %v1848
        %v1913 = vunpack.c.l.b16 %v1849
        %v1914 = vunpack.c.l.b16 %v1850
        %v1915 = vunpack.c.l.b16 %v1851
        %v1916 = vunpack.c.l.b16 %v1852
        %v1917 = vunpack.c.l.b16 %v1853
        %v1918 = vunpack.c.l.b16 %v1854
        %v1919 = vunpack.c.l.b16 %v1855
        %v1920 = vunpack.c.l.b16 %v1856
        %v1921 = vunpack.c.l.b16 %v1857
        %v1922 = vpack.c.b16 %v1891, %v1890
        %v1923 = vpack.c.b16 %v1893, %v1892
        %v1924 = vpack.c.b16 %v1895, %v1894
        %v1925 = vpack.c.b16 %v1897, %v1896
        %v1926 = vpack.c.b16 %v1899, %v1898
        %v1927 = vpack.c.b16 %v1901, %v1900
        %v1928 = vpack.c.b16 %v1903, %v1902
        %v1929 = vpack.c.b16 %v1905, %v1904
        %v1930 = vpack.c.b16 %v1907, %v1906
        %v1931 = vpack.c.b16 %v1909, %v1908
        %v1932 = vpack.c.b16 %v1911, %v1910
        %v1933 = vpack.c.b16 %v1913, %v1912
        %v1934 = vpack.c.b16 %v1915, %v1914
        %v1935 = vpack.c.b16 %v1917, %v1916
        %v1936 = vpack.c.b16 %v1919, %v1918
        %v1937 = vpack.c.b16 %v1921, %v1920
        %1954 = vmatpush.bf16.msra.mxu0 %v1929
        %1955 = vmatpush.bf16.msra.mxu0 %v1928
        %1956 = vmatpush.bf16.msra.mxu0 %v1927
        %1957 = vmatpush.bf16.msra.mxu0 %v1926
        %1958 = vmatpush.bf16.msra.mxu0 %v1925
        %1959 = vmatpush.bf16.msra.mxu0 %v1924
        %1960 = vmatpush.bf16.msra.mxu0 %v1923
        %1961 = vmatpush.bf16.msra.mxu0 %v1922
        %1962 = vmatmul.bf16.gmra.mxu0 %v1824
        %v1963 = vpop.f32.mrf.mxu0
        %v1964 = vadd.f32 0.0, %v1963
        %v1965 = vpop.f32.mrf.mxu0
        %1966 = vdwg.mxu0
        %1967 = vmatpush.bf16.msra.mxu0 %v1937
        %1968 = vmatpush.bf16.msra.mxu0 %v1936
        %1969 = vmatpush.bf16.msra.mxu0 %v1935
        %1970 = vmatpush.bf16.msra.mxu0 %v1934
        %1971 = vmatpush.bf16.msra.mxu0 %v1933
        %1972 = vmatpush.bf16.msra.mxu0 %v1932
        %1973 = vmatpush.bf16.msra.mxu0 %v1931
        %1974 = vmatpush.bf16.msra.mxu0 %v1930
        %1975 = vmatmul.bf16.gmra.mxu0 %v1825
        %v1976 = vpop.f32.mrf.mxu0
        %v1977 = vadd.f32 %v1964, %v1976
        %v1978 = vpop.f32.mrf.mxu0
        %1979 = vdwg.mxu0
        %v1980 = vpack.c.bf16 %v1977, %v1977
        %v1982 = vunpack.c.l.b16 %v1980
        %v1983 = vpack.c.b16 %v1982, %v1982
        %1984 = vrot.lane.b32.xlu0 %v1983, 73
        %v1985 = vpop.permute.xlu0 %1984
        %1986 = vrot.lane.b32.xlu0 %v1983, 9
        %v1987 = vpop.permute.xlu0 %1986
        %vm1988 = vcmask 72704
        %v1991 = vsel %vm1988, %v1985, %v1987
        %v1994 = vpack.i.b16 %v1253, %v1253
        %v1996 = vperm.slane %v1994, 0
        %v1997 = vunpack.c.l.bf16 %v1991
        %v1998 = vunpack.c.l.bf16 %v1996
        %v1999 = vmul.f32 %v1997, %v1998
        %v2000 = vpack.c.bf16 %v1999, %v1999
        %vm2001 = vcmask 519168
        %2002 = vst.msk [vmem:[#allocation2] sm:$0xf] %vm2001, %v2000
        %2003 = vrot.lane.b32.xlu0 %v1983, 72
        %v2004 = vpop.permute.xlu0 %2003
        %2005 = vrot.lane.b32.xlu0 %v1983, 8
        %v2006 = vpop.permute.xlu0 %2005
        %vm2007 = vcmask 64512
        %v2010 = vsel %vm2007, %v2004, %v2006
        %v2012 = vshrl.u32 %v1253, 16
        %v2013 = vpack.i.b16 %v2012, %v2012
        %v2015 = vperm.slane %v2013, 0
        %v2016 = vunpack.c.l.bf16 %v2010
        %v2017 = vunpack.c.l.bf16 %v2015
        %v2018 = vmul.f32 %v2016, %v2017
        %v2019 = vpack.c.bf16 %v2018, %v2018
        %2020 = vst.msk [vmem:[#allocation2 + $0x8] sm:$0xf] %vm2001, %v2019
        %2021 = vrot.lane.b32.xlu0 %v1983, 71
        %v2022 = vpop.permute.xlu0 %2021
        %2023 = vrot.lane.b32.xlu0 %v1983, 7
        %v2024 = vpop.permute.xlu0 %2023
        %vm2025 = vcmask 56320
        %v2028 = vsel %vm2025, %v2022, %v2024
        %v2030 = vperm.slane %v1994, 1
        %v2031 = vunpack.c.l.bf16 %v2028
        %v2032 = vunpack.c.l.bf16 %v2030
        %v2033 = vmul.f32 %v2031, %v2032
        %v2034 = vpack.c.bf16 %v2033, %v2033
        %2035 = vst.msk [vmem:[#allocation2 + $0x10] sm:$0xf] %vm2001, %v2034
        %2036 = vrot.lane.b32.xlu0 %v1983, 65
        %v2037 = vpop.permute.xlu0 %2036
        %2038 = vrot.lane.b32.xlu0 %v1983, 1
        %v2039 = vpop.permute.xlu0 %2038
        %v2042 = vsel %vm1363, %v2037, %v2039
        %v2044 = vperm.slane %v2013, 1
        %v2045 = vunpack.c.l.bf16 %v2042
        %v2046 = vunpack.c.l.bf16 %v2044
        %v2047 = vmul.f32 %v2045, %v2046
        %v2048 = vpack.c.bf16 %v2047, %v2047
        %2049 = vst.msk [vmem:[#allocation2 + $0x18] sm:$0xf] %vm2001, %v2048
        %2050 = vst.msk [vmem:[#allocation2 + $0x20] sm:$0xf] %vm2001, %v1980
        %2051 = vrot.lane.b32.xlu0 %v1983, 127
        %v2052 = vpop.permute.xlu0 %2051
        %2053 = vrot.lane.b32.xlu0 %v1983, 63
        %v2054 = vpop.permute.xlu0 %2053
        %vm2055 = vcmask 515072
        %v2058 = vsel %vm2055, %v2052, %v2054
        %v2060 = vperm.slane %v2013, 2
        %v2061 = vunpack.c.l.bf16 %v2058
        %v2062 = vunpack.c.l.bf16 %v2060
        %v2063 = vmul.f32 %v2061, %v2062
        %v2064 = vpack.c.bf16 %v2063, %v2063
        %2065 = vst.msk [vmem:[#allocation2 + $0x28] sm:$0xf] %vm2001, %v2064
        %2066 = vrot.lane.b32.xlu0 %v1983, 121
        %v2067 = vpop.permute.xlu0 %2066
        %2068 = vrot.lane.b32.xlu0 %v1983, 57
        %v2069 = vpop.permute.xlu0 %2068
        %vm2070 = vcmask 465920
        %v2073 = vsel %vm2070, %v2067, %v2069
        %v2075 = vperm.slane %v1994, 3
        %v2076 = vunpack.c.l.bf16 %v2073
        %v2077 = vunpack.c.l.bf16 %v2075
        %v2078 = vmul.f32 %v2076, %v2077
        %v2079 = vpack.c.bf16 %v2078, %v2078
        %2080 = vst.msk [vmem:[#allocation2 + $0x30] sm:$0xf] %vm2001, %v2079
        %2081 = vrot.lane.b32.xlu0 %v1983, 120
        %v2082 = vpop.permute.xlu0 %2081
        %2083 = vrot.lane.b32.xlu0 %v1983, 56
        %v2084 = vpop.permute.xlu0 %2083
        %vm2085 = vcmask 457728
        %v2088 = vsel %vm2085, %v2082, %v2084
        %v2090 = vperm.slane %v2013, 3
        %v2091 = vunpack.c.l.bf16 %v2088
        %v2092 = vunpack.c.l.bf16 %v2090
        %v2093 = vmul.f32 %v2091, %v2092
        %v2094 = vpack.c.bf16 %v2093, %v2093
        %2095 = vst.msk [vmem:[#allocation2 + $0x38] sm:$0xf] %vm2001, %v2094
        %2096 = vrot.lane.b32.xlu0 %v1983, 119
        %v2097 = vpop.permute.xlu0 %2096
        %2098 = vrot.lane.b32.xlu0 %v1983, 55
        %v2099 = vpop.permute.xlu0 %2098
        %vm2100 = vcmask 449536
        %v2103 = vsel %vm2100, %v2097, %v2099
        %v2106 = vpack.i.b16 %v1254, %v1254
        %v2108 = vperm.slane %v2106, 0
        %v2109 = vunpack.c.l.bf16 %v2103
        %v2110 = vunpack.c.l.bf16 %v2108
        %v2111 = vmul.f32 %v2109, %v2110
        %v2112 = vpack.c.bf16 %v2111, %v2111
        %2113 = vst.msk [vmem:[#allocation2 + $0x40] sm:$0xf] %vm2001, %v2112
        %v2114 = vld [vmem:[#allocation14] sm:$0xf]
        %v2115 = vld [vmem:[#allocation14 + $0x4] sm:$0xf]
        %v2116 = vld [vmem:[#allocation2] sm:$0xf]
        %v2117 = vld [vmem:[#allocation2 + $0x8] sm:$0xf]
        %v2118 = vld [vmem:[#allocation2 + $0x10] sm:$0xf]
        %v2119 = vld [vmem:[#allocation2 + $0x18] sm:$0xf]
        %v2120 = vld [vmem:[#allocation2 + $0x20] sm:$0xf]
        %v2121 = vld [vmem:[#allocation2 + $0x28] sm:$0xf]
        %v2122 = vld [vmem:[#allocation2 + $0x30] sm:$0xf]
        %v2123 = vld [vmem:[#allocation2 + $0x38] sm:$0xf]
        %v2124 = vld [vmem:[#allocation2 + $0x40] sm:$0xf]
        %v2125 = vld [vmem:[%s27] sm:$0xff]
        %v2126 = vld [vmem:[%s27 + $0x8] sm:$0xff]
        %2128 = vset.pattern.permute.xlu0 0
        %2129 = vperm.xlu0 %2128, %v2125
        %v2130 = vpop.permute.xlu0 %2129
        %2133 = vset.pattern.permute.xlu0 0
        %2134 = vperm.xlu0 %2133, %v2126
        %v2135 = vpop.permute.xlu0 %2134
        %v2139 = vunpack.c.l.b16 %v2114
        %v2140 = vunpack.c.l.b16 %v2115
        %v2141 = vpack.c.b16 %v2140, %v2139
        %v2151 = vunpack.c.l.b16 %v2116
        %v2152 = vunpack.c.l.b16 %v2117
        %v2153 = vunpack.c.l.b16 %v2118
        %v2154 = vunpack.c.l.b16 %v2119
        %v2155 = vunpack.c.l.b16 %v2120
        %v2156 = vunpack.c.l.b16 %v2121
        %v2157 = vunpack.c.l.b16 %v2122
        %v2158 = vunpack.c.l.b16 %v2123
        %v2159 = vunpack.c.l.b16 %v2124
        %v2160 = vpack.c.b16 %v2152, %v2151
        %v2161 = vpack.c.b16 %v2154, %v2153
        %v2162 = vpack.c.b16 %v2156, %v2155
        %v2163 = vpack.c.b16 %v2158, %v2157
        %v2164 = vpack.c.b16 %v2159, %v2159
        %v2170 = vsel %vm1759, %v2141, 0
        %v2173 = vsel %vm1763, %v2164, 0
        %2175 = vmatpush.bf16.msra.mxu0 0
        %2176 = vmatpush.bf16.msra.mxu0 0
        %2177 = vmatpush.bf16.msra.mxu0 0
        %2178 = vmatpush.bf16.msra.mxu0 %v2173
        %2179 = vmatpush.bf16.msra.mxu0 %v2163
        %2180 = vmatpush.bf16.msra.mxu0 %v2162
        %2181 = vmatpush.bf16.msra.mxu0 %v2161
        %2182 = vmatpush.bf16.msra.mxu0 %v2160
        %2183 = vmatmul.bf16.gmra.mxu0 %v2170
        %v2184 = vpop.f32.mrf.mxu0
        %v2185 = vadd.f32 %v2130, %v2184
        %v2186 = vpop.f32.mrf.mxu0
        %v2187 = vadd.f32 %v2135, %v2186
        %2188 = vdwg.mxu0
        %v2189 = vmax.f32 %v2185, 0.0
        %v2190 = vmax.f32 %v2187, 0.0
        %v2191 = vpack.c.bf16 %v2189, %v2189
        %v2192 = vpack.c.bf16 %v2190, %v2190
        %v2195 = vunpack.c.l.b16 %v2191
        %v2196 = vunpack.c.l.b16 %v2192
        %v2197 = vpack.c.b16 %v2196, %v2195
        %2198 = vrot.lane.b32.xlu0 %v2197, 73
        %v2199 = vpop.permute.xlu0 %2198
        %2200 = vrot.lane.b32.xlu0 %v2197, 9
        %v2201 = vpop.permute.xlu0 %2200
        %v2204 = vsel %vm1988, %v2199, %v2201
        %v2206 = vunpack.c.l.bf16 %v2204
        %v2207 = vunpack.c.h.bf16 %v2204
        %v2208 = vmul.f32 %v2206, %v1998
        %v2209 = vmul.f32 %v2207, %v1998
        %v2210 = vpack.c.bf16 %v2208, %v2208
        %v2211 = vpack.c.bf16 %v2209, %v2209
        %2212 = vst.msk [vmem:[#allocation2] sm:$0xf] %vm2001, %v2210
        %2213 = vst.msk [vmem:[#allocation2 + $0x8] sm:$0xf] %vm2001, %v2211
        %2214 = vrot.lane.b32.xlu0 %v2197, 72
        %v2215 = vpop.permute.xlu0 %2214
        %2216 = vrot.lane.b32.xlu0 %v2197, 8
        %v2217 = vpop.permute.xlu0 %2216
        %v2220 = vsel %vm2007, %v2215, %v2217
        %v2222 = vunpack.c.l.bf16 %v2220
        %v2223 = vunpack.c.h.bf16 %v2220
        %v2224 = vmul.f32 %v2222, %v2017
        %v2225 = vmul.f32 %v2223, %v2017
        %v2226 = vpack.c.bf16 %v2224, %v2224
        %v2227 = vpack.c.bf16 %v2225, %v2225
        %2228 = vst.msk [vmem:[#allocation2 + $0x10] sm:$0xf] %vm2001, %v2226
        %2229 = vst.msk [vmem:[#allocation2 + $0x18] sm:$0xf] %vm2001, %v2227
        %2230 = vrot.lane.b32.xlu0 %v2197, 71
        %v2231 = vpop.permute.xlu0 %2230
        %2232 = vrot.lane.b32.xlu0 %v2197, 7
        %v2233 = vpop.permute.xlu0 %2232
        %v2236 = vsel %vm2025, %v2231, %v2233
        %v2238 = vunpack.c.l.bf16 %v2236
        %v2239 = vunpack.c.h.bf16 %v2236
        %v2240 = vmul.f32 %v2238, %v2032
        %v2241 = vmul.f32 %v2239, %v2032
        %v2242 = vpack.c.bf16 %v2240, %v2240
        %v2243 = vpack.c.bf16 %v2241, %v2241
        %2244 = vst.msk [vmem:[#allocation2 + $0x20] sm:$0xf] %vm2001, %v2242
        %2245 = vst.msk [vmem:[#allocation2 + $0x28] sm:$0xf] %vm2001, %v2243
        %2246 = vrot.lane.b32.xlu0 %v2197, 65
        %v2247 = vpop.permute.xlu0 %2246
        %2248 = vrot.lane.b32.xlu0 %v2197, 1
        %v2249 = vpop.permute.xlu0 %2248
        %v2252 = vsel %vm1363, %v2247, %v2249
        %v2254 = vunpack.c.l.bf16 %v2252
        %v2255 = vunpack.c.h.bf16 %v2252
        %v2256 = vmul.f32 %v2254, %v2046
        %v2257 = vmul.f32 %v2255, %v2046
        %v2258 = vpack.c.bf16 %v2256, %v2256
        %v2259 = vpack.c.bf16 %v2257, %v2257
        %2260 = vst.msk [vmem:[#allocation2 + $0x30] sm:$0xf] %vm2001, %v2258
        %2261 = vst.msk [vmem:[#allocation2 + $0x38] sm:$0xf] %vm2001, %v2259
        %2262 = vst.msk [vmem:[#allocation2 + $0x40] sm:$0xf] %vm2001, %v2191
        %2263 = vst.msk [vmem:[#allocation2 + $0x48] sm:$0xf] %vm2001, %v2192
        %2264 = vrot.lane.b32.xlu0 %v2197, 127
        %v2265 = vpop.permute.xlu0 %2264
        %2266 = vrot.lane.b32.xlu0 %v2197, 63
        %v2267 = vpop.permute.xlu0 %2266
        %v2270 = vsel %vm2055, %v2265, %v2267
        %v2272 = vunpack.c.l.bf16 %v2270
        %v2273 = vunpack.c.h.bf16 %v2270
        %v2274 = vmul.f32 %v2272, %v2062
        %v2275 = vmul.f32 %v2273, %v2062
        %v2276 = vpack.c.bf16 %v2274, %v2274
        %v2277 = vpack.c.bf16 %v2275, %v2275
        %2278 = vst.msk [vmem:[#allocation2 + $0x50] sm:$0xf] %vm2001, %v2276
        %2279 = vst.msk [vmem:[#allocation2 + $0x58] sm:$0xf] %vm2001, %v2277
        %2280 = vrot.lane.b32.xlu0 %v2197, 121
        %v2281 = vpop.permute.xlu0 %2280
        %2282 = vrot.lane.b32.xlu0 %v2197, 57
        %v2283 = vpop.permute.xlu0 %2282
        %v2286 = vsel %vm2070, %v2281, %v2283
        %v2288 = vunpack.c.l.bf16 %v2286
        %v2289 = vunpack.c.h.bf16 %v2286
        %v2290 = vmul.f32 %v2288, %v2077
        %v2291 = vmul.f32 %v2289, %v2077
        %v2292 = vpack.c.bf16 %v2290, %v2290
        %v2293 = vpack.c.bf16 %v2291, %v2291
        %2294 = vst.msk [vmem:[#allocation2 + $0x60] sm:$0xf] %vm2001, %v2292
        %2295 = vst.msk [vmem:[#allocation2 + $0x68] sm:$0xf] %vm2001, %v2293
        %2296 = vrot.lane.b32.xlu0 %v2197, 120
        %v2297 = vpop.permute.xlu0 %2296
        %2298 = vrot.lane.b32.xlu0 %v2197, 56
        %v2299 = vpop.permute.xlu0 %2298
        %v2302 = vsel %vm2085, %v2297, %v2299
        %v2304 = vunpack.c.l.bf16 %v2302
        %v2305 = vunpack.c.h.bf16 %v2302
        %v2306 = vmul.f32 %v2304, %v2092
        %v2307 = vmul.f32 %v2305, %v2092
        %v2308 = vpack.c.bf16 %v2306, %v2306
        %v2309 = vpack.c.bf16 %v2307, %v2307
        %2310 = vst.msk [vmem:[#allocation2 + $0x70] sm:$0xf] %vm2001, %v2308
        %2311 = vst.msk [vmem:[#allocation2 + $0x78] sm:$0xf] %vm2001, %v2309
        %2312 = vrot.lane.b32.xlu0 %v2197, 119
        %v2313 = vpop.permute.xlu0 %2312
        %2314 = vrot.lane.b32.xlu0 %v2197, 55
        %v2315 = vpop.permute.xlu0 %2314
        %v2318 = vsel %vm2100, %v2313, %v2315
        %v2320 = vunpack.c.l.bf16 %v2318
        %v2321 = vunpack.c.h.bf16 %v2318
        %v2322 = vmul.f32 %v2320, %v2110
        %v2323 = vmul.f32 %v2321, %v2110
        %v2324 = vpack.c.bf16 %v2322, %v2322
        %v2325 = vpack.c.bf16 %v2323, %v2323
        %2326 = vst.msk [vmem:[#allocation2 + $0x80] sm:$0xf] %vm2001, %v2324
        %2327 = vst.msk [vmem:[#allocation2 + $0x88] sm:$0xf] %vm2001, %v2325
        %v2328 = vld [vmem:[#allocation16] sm:$0xff]
        %v2329 = vld [vmem:[#allocation16 + $0x8] sm:$0xff]
        %v2330 = vld [vmem:[#allocation2] sm:$0xf]
        %v2331 = vld [vmem:[#allocation2 + $0x8] sm:$0xf]
        %v2332 = vld [vmem:[#allocation2 + $0x10] sm:$0xf]
        %v2333 = vld [vmem:[#allocation2 + $0x18] sm:$0xf]
        %v2334 = vld [vmem:[#allocation2 + $0x20] sm:$0xf]
        %v2335 = vld [vmem:[#allocation2 + $0x28] sm:$0xf]
        %v2336 = vld [vmem:[#allocation2 + $0x30] sm:$0xf]
        %v2337 = vld [vmem:[#allocation2 + $0x38] sm:$0xf]
        %v2338 = vld [vmem:[#allocation2 + $0x40] sm:$0xf]
        %v2339 = vld [vmem:[#allocation2 + $0x48] sm:$0xf]
        %v2340 = vld [vmem:[#allocation2 + $0x50] sm:$0xf]
        %v2341 = vld [vmem:[#allocation2 + $0x58] sm:$0xf]
        %v2342 = vld [vmem:[#allocation2 + $0x60] sm:$0xf]
        %v2343 = vld [vmem:[#allocation2 + $0x68] sm:$0xf]
        %v2344 = vld [vmem:[#allocation2 + $0x70] sm:$0xf]
        %v2345 = vld [vmem:[#allocation2 + $0x78] sm:$0xf]
        %v2346 = vld [vmem:[#allocation2 + $0x80] sm:$0xf]
        %v2347 = vld [vmem:[#allocation2 + $0x88] sm:$0xf]
        %v2348 = vld [vmem:[%s31] sm:$0xff]
        %v2349 = vld [vmem:[%s31 + $0x8] sm:$0xff]
        %2351 = vset.pattern.permute.xlu0 0
        %2352 = vperm.xlu0 %2351, %v2348
        %v2353 = vpop.permute.xlu0 %2352
        %2356 = vset.pattern.permute.xlu0 0
        %2357 = vperm.xlu0 %2356, %v2349
        %v2358 = vpop.permute.xlu0 %2357
        %v2362 = vunpack.c.l.b16 %v2328
        %v2363 = vunpack.c.h.b16 %v2328
        %v2364 = vunpack.c.l.b16 %v2329
        %v2365 = vunpack.c.h.b16 %v2329
        %v2366 = vpack.c.b16 %v2364, %v2362
        %v2367 = vpack.c.b16 %v2365, %v2363
        %v2387 = vunpack.c.l.b16 %v2330
        %v2388 = vunpack.c.l.b16 %v2331
        %v2389 = vunpack.c.l.b16 %v2332
        %v2390 = vunpack.c.l.b16 %v2333
        %v2391 = vunpack.c.l.b16 %v2334
        %v2392 = vunpack.c.l.b16 %v2335
        %v2393 = vunpack.c.l.b16 %v2336
        %v2394 = vunpack.c.l.b16 %v2337
        %v2395 = vunpack.c.l.b16 %v2338
        %v2396 = vunpack.c.l.b16 %v2339
        %v2397 = vunpack.c.l.b16 %v2340
        %v2398 = vunpack.c.l.b16 %v2341
        %v2399 = vunpack.c.l.b16 %v2342
        %v2400 = vunpack.c.l.b16 %v2343
        %v2401 = vunpack.c.l.b16 %v2344
        %v2402 = vunpack.c.l.b16 %v2345
        %v2403 = vunpack.c.l.b16 %v2346
        %v2404 = vunpack.c.l.b16 %v2347
        %v2405 = vpack.c.b16 %v2388, %v2387
        %v2406 = vpack.c.b16 %v2390, %v2389
        %v2407 = vpack.c.b16 %v2392, %v2391
        %v2408 = vpack.c.b16 %v2394, %v2393
        %v2409 = vpack.c.b16 %v2396, %v2395
        %v2410 = vpack.c.b16 %v2398, %v2397
        %v2411 = vpack.c.b16 %v2400, %v2399
        %v2412 = vpack.c.b16 %v2402, %v2401
        %v2413 = vpack.c.b16 %v2404, %v2403
        %v2424 = vsel %vm1310, %v2367, 0
        %2426 = vmatpush.bf16.msra.mxu0 %v2412
        %2427 = vmatpush.bf16.msra.mxu0 %v2411
        %2428 = vmatpush.bf16.msra.mxu0 %v2410
        %2429 = vmatpush.bf16.msra.mxu0 %v2409
        %2430 = vmatpush.bf16.msra.mxu0 %v2408
        %2431 = vmatpush.bf16.msra.mxu0 %v2407
        %2432 = vmatpush.bf16.msra.mxu0 %v2406
        %2433 = vmatpush.bf16.msra.mxu0 %v2405
        %2434 = vmatmul.bf16.gmra.mxu0 %v2366
        %v2435 = vpop.f32.mrf.mxu0
        %v2436 = vadd.f32 %v2353, %v2435
        %v2437 = vpop.f32.mrf.mxu0
        %v2438 = vadd.f32 %v2358, %v2437
        %2439 = vdwg.mxu0
        %2440 = vmatpush.bf16.msra.mxu0 0
        %2441 = vmatpush.bf16.msra.mxu0 0
        %2442 = vmatpush.bf16.msra.mxu0 0
        %2443 = vmatpush.bf16.msra.mxu0 0
        %2444 = vmatpush.bf16.msra.mxu0 0
        %2445 = vmatpush.bf16.msra.mxu0 0
        %2446 = vmatpush.bf16.msra.mxu0 0
        %2447 = vmatpush.bf16.msra.mxu0 %v2413
        %2448 = vmatmul.bf16.gmra.mxu0 %v2424
        %v2449 = vpop.f32.mrf.mxu0
        %v2450 = vadd.f32 %v2436, %v2449
        %v2451 = vpop.f32.mrf.mxu0
        %v2452 = vadd.f32 %v2438, %v2451
        %2453 = vdwg.mxu0
        %v2454 = vmax.f32 %v2450, 0.0
        %v2455 = vmax.f32 %v2452, 0.0
        %2458 = vrot.lane.b32.xlu0 %v2454, 127
        %v2459 = vpop.permute.xlu0 %2458
        %2460 = vrot.lane.b32.xlu0 %v2455, 127
        %v2461 = vpop.permute.xlu0 %2460
        %2464 = vrot.lane.b32.xlu0 %v2454, 63
        %v2465 = vpop.permute.xlu0 %2464
        %2466 = vrot.lane.b32.xlu0 %v2455, 63
        %v2467 = vpop.permute.xlu0 %2466
        %v2470 = vsel %vm2055, %v2459, %v2465
        %v2471 = vsel %vm2055, %v2461, %v2467
        %v2472 = vmax.f32 %v2454, %v2470
        %v2473 = vmax.f32 %v2455, %v2471
        %2476 = vrot.lane.b32.xlu0 %v2472, 120
        %v2477 = vpop.permute.xlu0 %2476
        %2478 = vrot.lane.b32.xlu0 %v2473, 120
        %v2479 = vpop.permute.xlu0 %2478
        %2482 = vrot.lane.b32.xlu0 %v2472, 56
        %v2483 = vpop.permute.xlu0 %2482
        %2484 = vrot.lane.b32.xlu0 %v2473, 56
        %v2485 = vpop.permute.xlu0 %2484
        %v2488 = vsel %vm2085, %v2477, %v2483
        %v2489 = vsel %vm2085, %v2479, %v2485
        %v2490 = vmax.f32 %v2472, %v2488
        %v2491 = vmax.f32 %v2473, %v2489
        %v2492 = vpack.c.bf16 %v2491, %v2490
        %v2493 = vld [vmem:[#allocation8] sm:$0xf]
        %v2494 = vld [vmem:[#allocation8 + $0x4] sm:$0xf]
        %v2495 = vld [vmem:[#allocation8 + $0x8] sm:$0xf]
        %v2496 = vld [vmem:[#allocation8 + $0xc] sm:$0xf]
        %v2497 = vld [vmem:[#allocation8 + $0x10] sm:$0xf]
        %v2498 = vld [vmem:[#allocation8 + $0x14] sm:$0xf]
        %v2499 = vld [vmem:[#allocation8 + $0x18] sm:$0xf]
        %v2500 = vld [vmem:[#allocation8 + $0x1c] sm:$0xf]
        %v2509 = vunpack.c.l.b16 %v2493
        %v2510 = vunpack.c.l.b16 %v2494
        %v2511 = vunpack.c.l.b16 %v2495
        %v2512 = vunpack.c.l.b16 %v2496
        %v2513 = vunpack.c.l.b16 %v2497
        %v2514 = vunpack.c.l.b16 %v2498
        %v2515 = vunpack.c.l.b16 %v2499
        %v2516 = vunpack.c.l.b16 %v2500
        %v2517 = vpack.c.b16 %v2510, %v2509
        %v2518 = vpack.c.b16 %v2512, %v2511
        %v2519 = vpack.c.b16 %v2514, %v2513
        %v2520 = vpack.c.b16 %v2516, %v2515
        %vm2525 = vcmask 523264
        %v2527 = vsel %vm2525, %v2492, 0
        %2529 = vmatpush.bf16.msra.mxu0 0
        %2530 = vmatpush.bf16.msra.mxu0 0
        %2531 = vmatpush.bf16.msra.mxu0 0
        %2532 = vmatpush.bf16.msra.mxu0 0
        %2533 = vmatpush.bf16.msra.mxu0 %v2520
        %2534 = vmatpush.bf16.msra.mxu0 %v2519
        %2535 = vmatpush.bf16.msra.mxu0 %v2518
        %2536 = vmatpush.bf16.msra.mxu0 %v2517
        %2537 = vmatmul.bf16.gmra.mxu0 %v2527
        %v2538 = vpop.f32.mrf.mxu0
        %v2539 = vadd.f32 0.0, %v2538
        %v2540 = vpop.f32.mrf.mxu0
        %v2541 = vadd.f32 0.0, %v2540
        %2542 = vdwg.mxu0
        %v2543 = vpack.c.bf16 %v2539, %v2539
        %v2544 = vpack.c.bf16 %v2541, %v2541
        %v2547 = vunpack.c.l.b16 %v2543
        %v2548 = vunpack.c.l.b16 %v2544
        %v2549 = vpack.c.b16 %v2548, %v2547
        %2550 = vrot.lane.b32.xlu0 %v2549, 117
        %v2551 = vpop.permute.xlu0 %2550
        %2552 = vrot.lane.b32.xlu0 %v2549, 5
        %v2553 = vpop.permute.xlu0 %2552
        %vm2554 = vcmask 39936
        %v2557 = vsel %vm2554, %v2551, %v2553
        %v2560 = vpack.i.b16 %v1255, %v1255
        %v2562 = vperm.slane %v2560, 0
        %v2563 = vunpack.c.l.bf16 %v2557
        %v2564 = vunpack.c.h.bf16 %v2557
        %v2565 = vunpack.c.l.bf16 %v2562
        %v2566 = vmul.f32 %v2563, %v2565
        %v2567 = vmul.f32 %v2564, %v2565
        %v2568 = vpack.c.bf16 %v2566, %v2566
        %v2569 = vpack.c.bf16 %v2567, %v2567
        %vm2570 = vcmask 125952
        %2571 = vst.msk [vmem:[#allocation2] sm:$0xf] %vm2570, %v2568
        %2572 = vst.msk [vmem:[#allocation2 + $0x8] sm:$0xf] %vm2570, %v2569
        %2573 = vrot.lane.b32.xlu0 %v2549, 116
        %v2574 = vpop.permute.xlu0 %2573
        %2575 = vrot.lane.b32.xlu0 %v2549, 4
        %v2576 = vpop.permute.xlu0 %2575
        %vm2577 = vcmask 31744
        %v2580 = vsel %vm2577, %v2574, %v2576
        %v2582 = vshrl.u32 %v1255, 16
        %v2583 = vpack.i.b16 %v2582, %v2582
        %v2585 = vperm.slane %v2583, 0
        %v2586 = vunpack.c.l.bf16 %v2580
        %v2587 = vunpack.c.h.bf16 %v2580
        %v2588 = vunpack.c.l.bf16 %v2585
        %v2589 = vmul.f32 %v2586, %v2588
        %v2590 = vmul.f32 %v2587, %v2588
        %v2591 = vpack.c.bf16 %v2589, %v2589
        %v2592 = vpack.c.bf16 %v2590, %v2590
        %2593 = vst.msk [vmem:[#allocation2 + $0x10] sm:$0xf] %vm2570, %v2591
        %2594 = vst.msk [vmem:[#allocation2 + $0x18] sm:$0xf] %vm2570, %v2592
        %2595 = vrot.lane.b32.xlu0 %v2549, 115
        %v2596 = vpop.permute.xlu0 %2595
        %2597 = vrot.lane.b32.xlu0 %v2549, 3
        %v2598 = vpop.permute.xlu0 %2597
        %vm2599 = vcmask 23552
        %v2602 = vsel %vm2599, %v2596, %v2598
        %v2604 = vperm.slane %v2560, 1
        %v2605 = vunpack.c.l.bf16 %v2602
        %v2606 = vunpack.c.h.bf16 %v2602
        %v2607 = vunpack.c.l.bf16 %v2604
        %v2608 = vmul.f32 %v2605, %v2607
        %v2609 = vmul.f32 %v2606, %v2607
        %v2610 = vpack.c.bf16 %v2608, %v2608
        %v2611 = vpack.c.bf16 %v2609, %v2609
        %2612 = vst.msk [vmem:[#allocation2 + $0x20] sm:$0xf] %vm2570, %v2610
        %2613 = vst.msk [vmem:[#allocation2 + $0x28] sm:$0xf] %vm2570, %v2611
        %2614 = vrot.lane.b32.xlu0 %v2549, 113
        %v2615 = vpop.permute.xlu0 %2614
        %2616 = vrot.lane.b32.xlu0 %v2549, 1
        %v2617 = vpop.permute.xlu0 %2616
        %v2620 = vsel %vm1363, %v2615, %v2617
        %v2622 = vperm.slane %v2583, 1
        %v2623 = vunpack.c.l.bf16 %v2620
        %v2624 = vunpack.c.h.bf16 %v2620
        %v2625 = vunpack.c.l.bf16 %v2622
        %v2626 = vmul.f32 %v2623, %v2625
        %v2627 = vmul.f32 %v2624, %v2625
        %v2628 = vpack.c.bf16 %v2626, %v2626
        %v2629 = vpack.c.bf16 %v2627, %v2627
        %2630 = vst.msk [vmem:[#allocation2 + $0x30] sm:$0xf] %vm2570, %v2628
        %2631 = vst.msk [vmem:[#allocation2 + $0x38] sm:$0xf] %vm2570, %v2629
        %2632 = vst.msk [vmem:[#allocation2 + $0x40] sm:$0xf] %vm2570, %v2543
        %2633 = vst.msk [vmem:[#allocation2 + $0x48] sm:$0xf] %vm2570, %v2544
        %2634 = vrot.lane.b32.xlu0 %v2549, 127
        %v2635 = vpop.permute.xlu0 %2634
        %2636 = vrot.lane.b32.xlu0 %v2549, 15
        %v2637 = vpop.permute.xlu0 %2636
        %v2640 = vsel %vm1341, %v2635, %v2637
        %v2642 = vperm.slane %v2583, 2
        %v2643 = vunpack.c.l.bf16 %v2640
        %v2644 = vunpack.c.h.bf16 %v2640
        %v2645 = vunpack.c.l.bf16 %v2642
        %v2646 = vmul.f32 %v2643, %v2645
        %v2647 = vmul.f32 %v2644, %v2645
        %v2648 = vpack.c.bf16 %v2646, %v2646
        %v2649 = vpack.c.bf16 %v2647, %v2647
        %2650 = vst.msk [vmem:[#allocation2 + $0x50] sm:$0xf] %vm2570, %v2648
        %2651 = vst.msk [vmem:[#allocation2 + $0x58] sm:$0xf] %vm2570, %v2649
        %2652 = vrot.lane.b32.xlu0 %v2549, 125
        %v2653 = vpop.permute.xlu0 %2652
        %2654 = vrot.lane.b32.xlu0 %v2549, 13
        %v2655 = vpop.permute.xlu0 %2654
        %vm2656 = vcmask 105472
        %v2659 = vsel %vm2656, %v2653, %v2655
        %v2661 = vperm.slane %v2560, 3
        %v2662 = vunpack.c.l.bf16 %v2659
        %v2663 = vunpack.c.h.bf16 %v2659
        %v2664 = vunpack.c.l.bf16 %v2661
        %v2665 = vmul.f32 %v2662, %v2664
        %v2666 = vmul.f32 %v2663, %v2664
        %v2667 = vpack.c.bf16 %v2665, %v2665
        %v2668 = vpack.c.bf16 %v2666, %v2666
        %2669 = vst.msk [vmem:[#allocation2 + $0x60] sm:$0xf] %vm2570, %v2667
        %2670 = vst.msk [vmem:[#allocation2 + $0x68] sm:$0xf] %vm2570, %v2668
        %2671 = vrot.lane.b32.xlu0 %v2549, 124
        %v2672 = vpop.permute.xlu0 %2671
        %2673 = vrot.lane.b32.xlu0 %v2549, 12
        %v2674 = vpop.permute.xlu0 %2673
        %vm2675 = vcmask 97280
        %v2678 = vsel %vm2675, %v2672, %v2674
        %v2680 = vperm.slane %v2583, 3
        %v2681 = vunpack.c.l.bf16 %v2678
        %v2682 = vunpack.c.h.bf16 %v2678
        %v2683 = vunpack.c.l.bf16 %v2680
        %v2684 = vmul.f32 %v2681, %v2683
        %v2685 = vmul.f32 %v2682, %v2683
        %v2686 = vpack.c.bf16 %v2684, %v2684
        %v2687 = vpack.c.bf16 %v2685, %v2685
        %2688 = vst.msk [vmem:[#allocation2 + $0x70] sm:$0xf] %vm2570, %v2686
        %2689 = vst.msk [vmem:[#allocation2 + $0x78] sm:$0xf] %vm2570, %v2687
        %2690 = vrot.lane.b32.xlu0 %v2549, 123
        %v2691 = vpop.permute.xlu0 %2690
        %2692 = vrot.lane.b32.xlu0 %v2549, 11
        %v2693 = vpop.permute.xlu0 %2692
        %vm2694 = vcmask 89088
        %v2697 = vsel %vm2694, %v2691, %v2693
        %v2700 = vpack.i.b16 %v1256, %v1256
        %v2702 = vperm.slane %v2700, 0
        %v2703 = vunpack.c.l.bf16 %v2697
        %v2704 = vunpack.c.h.bf16 %v2697
        %v2705 = vunpack.c.l.bf16 %v2702
        %v2706 = vmul.f32 %v2703, %v2705
        %v2707 = vmul.f32 %v2704, %v2705
        %v2708 = vpack.c.bf16 %v2706, %v2706
        %v2709 = vpack.c.bf16 %v2707, %v2707
        %2710 = vst.msk [vmem:[#allocation2 + $0x80] sm:$0xf] %vm2570, %v2708
        %2711 = vst.msk [vmem:[#allocation2 + $0x88] sm:$0xf] %vm2570, %v2709
        %v2712 = vld [vmem:[#allocation17] sm:$0xff]
        %v2713 = vld [vmem:[#allocation17 + $0x8] sm:$0xff]
        %v2714 = vld [vmem:[#allocation17 + $0x10] sm:$0xff]
        %v2715 = vld [vmem:[#allocation17 + $0x18] sm:$0xff]
        %v2716 = vld [vmem:[#allocation2] sm:$0xf]
        %v2717 = vld [vmem:[#allocation2 + $0x8] sm:$0xf]
        %v2718 = vld [vmem:[#allocation2 + $0x10] sm:$0xf]
        %v2719 = vld [vmem:[#allocation2 + $0x18] sm:$0xf]
        %v2720 = vld [vmem:[#allocation2 + $0x20] sm:$0xf]
        %v2721 = vld [vmem:[#allocation2 + $0x28] sm:$0xf]
        %v2722 = vld [vmem:[#allocation2 + $0x30] sm:$0xf]
        %v2723 = vld [vmem:[#allocation2 + $0x38] sm:$0xf]
        %v2724 = vld [vmem:[#allocation2 + $0x40] sm:$0xf]
        %v2725 = vld [vmem:[#allocation2 + $0x48] sm:$0xf]
        %v2726 = vld [vmem:[#allocation2 + $0x50] sm:$0xf]
        %v2727 = vld [vmem:[#allocation2 + $0x58] sm:$0xf]
        %v2728 = vld [vmem:[#allocation2 + $0x60] sm:$0xf]
        %v2729 = vld [vmem:[#allocation2 + $0x68] sm:$0xf]
        %v2730 = vld [vmem:[#allocation2 + $0x70] sm:$0xf]
        %v2731 = vld [vmem:[#allocation2 + $0x78] sm:$0xf]
        %v2732 = vld [vmem:[#allocation2 + $0x80] sm:$0xf]
        %v2733 = vld [vmem:[#allocation2 + $0x88] sm:$0xf]
        %v2734 = vld [vmem:[%s35] sm:$0xff]
        %v2735 = vld [vmem:[%s35 + $0x8] sm:$0xff]
        %v2736 = vld [vmem:[%s35 + $0x10] sm:$0xff]
        %v2737 = vld [vmem:[%s35 + $0x18] sm:$0xff]
        %2739 = vset.pattern.permute.xlu0 0
        %2740 = vperm.xlu0 %2739, %v2734
        %v2741 = vpop.permute.xlu0 %2740
        %2744 = vset.pattern.permute.xlu0 0
        %2745 = vperm.xlu0 %2744, %v2735
        %v2746 = vpop.permute.xlu0 %2745
        %2749 = vset.pattern.permute.xlu0 0
        %2750 = vperm.xlu0 %2749, %v2736
        %v2751 = vpop.permute.xlu0 %2750
        %2754 = vset.pattern.permute.xlu0 0
        %2755 = vperm.xlu0 %2754, %v2737
        %v2756 = vpop.permute.xlu0 %2755
        %v2762 = vunpack.c.l.b16 %v2712
        %v2763 = vunpack.c.h.b16 %v2712
        %v2764 = vunpack.c.l.b16 %v2713
        %v2765 = vunpack.c.h.b16 %v2713
        %v2766 = vunpack.c.l.b16 %v2714
        %v2767 = vunpack.c.h.b16 %v2714
        %v2768 = vunpack.c.l.b16 %v2715
        %v2769 = vunpack.c.h.b16 %v2715
        %v2770 = vpack.c.b16 %v2764, %v2762
        %v2771 = vpack.c.b16 %v2765, %v2763
        %v2772 = vpack.c.b16 %v2768, %v2766
        %v2773 = vpack.c.b16 %v2769, %v2767
        %v2794 = vunpack.c.l.b16 %v2716
        %v2795 = vunpack.c.l.b16 %v2717
        %v2796 = vunpack.c.l.b16 %v2718
        %v2797 = vunpack.c.l.b16 %v2719
        %v2798 = vunpack.c.l.b16 %v2720
        %v2799 = vunpack.c.l.b16 %v2721
        %v2800 = vunpack.c.l.b16 %v2722
        %v2801 = vunpack.c.l.b16 %v2723
        %v2802 = vunpack.c.l.b16 %v2724
        %v2803 = vunpack.c.l.b16 %v2725
        %v2804 = vunpack.c.l.b16 %v2726
        %v2805 = vunpack.c.l.b16 %v2727
        %v2806 = vunpack.c.l.b16 %v2728
        %v2807 = vunpack.c.l.b16 %v2729
        %v2808 = vunpack.c.l.b16 %v2730
        %v2809 = vunpack.c.l.b16 %v2731
        %v2810 = vunpack.c.l.b16 %v2732
        %v2811 = vunpack.c.l.b16 %v2733
        %v2812 = vpack.c.b16 %v2795, %v2794
        %v2813 = vpack.c.b16 %v2797, %v2796
        %v2814 = vpack.c.b16 %v2799, %v2798
        %v2815 = vpack.c.b16 %v2801, %v2800
        %v2816 = vpack.c.b16 %v2803, %v2802
        %v2817 = vpack.c.b16 %v2805, %v2804
        %v2818 = vpack.c.b16 %v2807, %v2806
        %v2819 = vpack.c.b16 %v2809, %v2808
        %v2820 = vpack.c.b16 %v2811, %v2810
        %v2831 = vsel %vm1310, %v2771, 0
        %v2834 = vsel %vm1310, %v2773, 0
        %2836 = vmatpush.bf16.msra.mxu0 %v2819
        %2837 = vmatpush.bf16.msra.mxu0 %v2818
        %2838 = vmatpush.bf16.msra.mxu0 %v2817
        %2839 = vmatpush.bf16.msra.mxu0 %v2816
        %2840 = vmatpush.bf16.msra.mxu0 %v2815
        %2841 = vmatpush.bf16.msra.mxu0 %v2814
        %2842 = vmatpush.bf16.msra.mxu0 %v2813
        %2843 = vmatpush.bf16.msra.mxu0 %v2812
        %2844 = vmatmul.bf16.gmra.mxu0 %v2770
        %v2845 = vpop.f32.mrf.mxu0
        %v2846 = vadd.f32 %v2741, %v2845
        %v2847 = vpop.f32.mrf.mxu0
        %v2848 = vadd.f32 %v2746, %v2847
        %2849 = vmatmul.bf16.gmra.mxu0 %v2772
        %v2850 = vpop.f32.mrf.mxu0
        %v2851 = vadd.f32 %v2751, %v2850
        %v2852 = vpop.f32.mrf.mxu0
        %v2853 = vadd.f32 %v2756, %v2852
        %2854 = vdwg.mxu0
        %2855 = vmatpush.bf16.msra.mxu0 0
        %2856 = vmatpush.bf16.msra.mxu0 0
        %2857 = vmatpush.bf16.msra.mxu0 0
        %2858 = vmatpush.bf16.msra.mxu0 0
        %2859 = vmatpush.bf16.msra.mxu0 0
        %2860 = vmatpush.bf16.msra.mxu0 0
        %2861 = vmatpush.bf16.msra.mxu0 0
        %2862 = vmatpush.bf16.msra.mxu0 %v2820
        %2863 = vmatmul.bf16.gmra.mxu0 %v2831
        %v2864 = vpop.f32.mrf.mxu0
        %v2865 = vadd.f32 %v2846, %v2864
        %v2866 = vpop.f32.mrf.mxu0
        %v2867 = vadd.f32 %v2848, %v2866
        %2868 = vmatmul.bf16.gmra.mxu0 %v2834
        %v2869 = vpop.f32.mrf.mxu0
        %v2870 = vadd.f32 %v2851, %v2869
        %v2871 = vpop.f32.mrf.mxu0
        %v2872 = vadd.f32 %v2853, %v2871
        %2873 = vdwg.mxu0
        %v2874 = vmax.f32 %v2865, 0.0
        %v2875 = vmax.f32 %v2867, 0.0
        %v2876 = vmax.f32 %v2870, 0.0
        %v2877 = vmax.f32 %v2872, 0.0
        %v2878 = vpack.c.bf16 %v2874, %v2874
        %v2879 = vpack.c.bf16 %v2875, %v2875
        %v2880 = vpack.c.bf16 %v2876, %v2876
        %v2881 = vpack.c.bf16 %v2877, %v2877
        %v2886 = vunpack.c.l.b16 %v2878
        %v2887 = vunpack.c.l.b16 %v2879
        %v2888 = vunpack.c.l.b16 %v2880
        %v2889 = vunpack.c.l.b16 %v2881
        %v2890 = vpack.c.b16 %v2887, %v2886
        %v2891 = vpack.c.b16 %v2889, %v2888
        %2892 = vrot.lane.b32.xlu0 %v2890, 117
        %v2893 = vpop.permute.xlu0 %2892
        %2894 = vrot.lane.b32.xlu0 %v2891, 117
        %v2895 = vpop.permute.xlu0 %2894
        %2896 = vrot.lane.b32.xlu0 %v2890, 5
        %v2897 = vpop.permute.xlu0 %2896
        %2898 = vrot.lane.b32.xlu0 %v2891, 5
        %v2899 = vpop.permute.xlu0 %2898
        %v2902 = vsel %vm2554, %v2893, %v2897
        %v2906 = vsel %vm2554, %v2895, %v2899
        %v2908 = vunpack.c.l.bf16 %v2902
        %v2909 = vunpack.c.h.bf16 %v2902
        %v2910 = vunpack.c.l.bf16 %v2906
        %v2911 = vunpack.c.h.bf16 %v2906
        %v2912 = vmul.f32 %v2908, %v2565
        %v2913 = vmul.f32 %v2909, %v2565
        %v2914 = vmul.f32 %v2910, %v2565
        %v2915 = vmul.f32 %v2911, %v2565
        %v2916 = vpack.c.bf16 %v2912, %v2912
        %v2917 = vpack.c.bf16 %v2913, %v2913
        %v2918 = vpack.c.bf16 %v2914, %v2914
        %v2919 = vpack.c.bf16 %v2915, %v2915
        %2920 = vst.msk [vmem:[#allocation2] sm:$0xf] %vm2570, %v2916
        %2921 = vst.msk [vmem:[#allocation2 + $0x8] sm:$0xf] %vm2570, %v2917
        %2922 = vst.msk [vmem:[#allocation2 + $0x10] sm:$0xf] %vm2570, %v2918
        %2923 = vst.msk [vmem:[#allocation2 + $0x18] sm:$0xf] %vm2570, %v2919
        %2924 = vrot.lane.b32.xlu0 %v2890, 116
        %v2925 = vpop.permute.xlu0 %2924
        %2926 = vrot.lane.b32.xlu0 %v2891, 116
        %v2927 = vpop.permute.xlu0 %2926
        %2928 = vrot.lane.b32.xlu0 %v2890, 4
        %v2929 = vpop.permute.xlu0 %2928
        %2930 = vrot.lane.b32.xlu0 %v2891, 4
        %v2931 = vpop.permute.xlu0 %2930
        %v2934 = vsel %vm2577, %v2925, %v2929
        %v2938 = vsel %vm2577, %v2927, %v2931
        %v2940 = vunpack.c.l.bf16 %v2934
        %v2941 = vunpack.c.h.bf16 %v2934
        %v2942 = vunpack.c.l.bf16 %v2938
        %v2943 = vunpack.c.h.bf16 %v2938
        %v2944 = vmul.f32 %v2940, %v2588
        %v2945 = vmul.f32 %v2941, %v2588
        %v2946 = vmul.f32 %v2942, %v2588
        %v2947 = vmul.f32 %v2943, %v2588
        %v2948 = vpack.c.bf16 %v2944, %v2944
        %v2949 = vpack.c.bf16 %v2945, %v2945
        %v2950 = vpack.c.bf16 %v2946, %v2946
        %v2951 = vpack.c.bf16 %v2947, %v2947
        %2952 = vst.msk [vmem:[#allocation2 + $0x20] sm:$0xf] %vm2570, %v2948
        %2953 = vst.msk [vmem:[#allocation2 + $0x28] sm:$0xf] %vm2570, %v2949
        %2954 = vst.msk [vmem:[#allocation2 + $0x30] sm:$0xf] %vm2570, %v2950
        %2955 = vst.msk [vmem:[#allocation2 + $0x38] sm:$0xf] %vm2570, %v2951
        %2956 = vrot.lane.b32.xlu0 %v2890, 115
        %v2957 = vpop.permute.xlu0 %2956
        %2958 = vrot.lane.b32.xlu0 %v2891, 115
        %v2959 = vpop.permute.xlu0 %2958
        %2960 = vrot.lane.b32.xlu0 %v2890, 3
        %v2961 = vpop.permute.xlu0 %2960
        %2962 = vrot.lane.b32.xlu0 %v2891, 3
        %v2963 = vpop.permute.xlu0 %2962
        %v2966 = vsel %vm2599, %v2957, %v2961
        %v2970 = vsel %vm2599, %v2959, %v2963
        %v2972 = vunpack.c.l.bf16 %v2966
        %v2973 = vunpack.c.h.bf16 %v2966
        %v2974 = vunpack.c.l.bf16 %v2970
        %v2975 = vunpack.c.h.bf16 %v2970
        %v2976 = vmul.f32 %v2972, %v2607
        %v2977 = vmul.f32 %v2973, %v2607
        %v2978 = vmul.f32 %v2974, %v2607
        %v2979 = vmul.f32 %v2975, %v2607
        %v2980 = vpack.c.bf16 %v2976, %v2976
        %v2981 = vpack.c.bf16 %v2977, %v2977
        %v2982 = vpack.c.bf16 %v2978, %v2978
        %v2983 = vpack.c.bf16 %v2979, %v2979
        %2984 = vst.msk [vmem:[#allocation2 + $0x40] sm:$0xf] %vm2570, %v2980
        %2985 = vst.msk [vmem:[#allocation2 + $0x48] sm:$0xf] %vm2570, %v2981
        %2986 = vst.msk [vmem:[#allocation2 + $0x50] sm:$0xf] %vm2570, %v2982
        %2987 = vst.msk [vmem:[#allocation2 + $0x58] sm:$0xf] %vm2570, %v2983
        %2988 = vrot.lane.b32.xlu0 %v2890, 113
        %v2989 = vpop.permute.xlu0 %2988
        %2990 = vrot.lane.b32.xlu0 %v2891, 113
        %v2991 = vpop.permute.xlu0 %2990
        %2992 = vrot.lane.b32.xlu0 %v2890, 1
        %v2993 = vpop.permute.xlu0 %2992
        %2994 = vrot.lane.b32.xlu0 %v2891, 1
        %v2995 = vpop.permute.xlu0 %2994
        %v2998 = vsel %vm1363, %v2989, %v2993
        %v3002 = vsel %vm1363, %v2991, %v2995
        %v3004 = vunpack.c.l.bf16 %v2998
        %v3005 = vunpack.c.h.bf16 %v2998
        %v3006 = vunpack.c.l.bf16 %v3002
        %v3007 = vunpack.c.h.bf16 %v3002
        %v3008 = vmul.f32 %v3004, %v2625
        %v3009 = vmul.f32 %v3005, %v2625
        %v3010 = vmul.f32 %v3006, %v2625
        %v3011 = vmul.f32 %v3007, %v2625
        %v3012 = vpack.c.bf16 %v3008, %v3008
        %v3013 = vpack.c.bf16 %v3009, %v3009
        %v3014 = vpack.c.bf16 %v3010, %v3010
        %v3015 = vpack.c.bf16 %v3011, %v3011
        %3016 = vst.msk [vmem:[#allocation2 + $0x60] sm:$0xf] %vm2570, %v3012
        %3017 = vst.msk [vmem:[#allocation2 + $0x68] sm:$0xf] %vm2570, %v3013
        %3018 = vst.msk [vmem:[#allocation2 + $0x70] sm:$0xf] %vm2570, %v3014
        %3019 = vst.msk [vmem:[#allocation2 + $0x78] sm:$0xf] %vm2570, %v3015
        %3020 = vst.msk [vmem:[#allocation2 + $0x80] sm:$0xf] %vm2570, %v2878
        %3021 = vst.msk [vmem:[#allocation2 + $0x88] sm:$0xf] %vm2570, %v2879
        %3022 = vst.msk [vmem:[#allocation2 + $0x90] sm:$0xf] %vm2570, %v2880
        %3023 = vst.msk [vmem:[#allocation2 + $0x98] sm:$0xf] %vm2570, %v2881
        %3024 = vrot.lane.b32.xlu0 %v2890, 127
        %v3025 = vpop.permute.xlu0 %3024
        %3026 = vrot.lane.b32.xlu0 %v2891, 127
        %v3027 = vpop.permute.xlu0 %3026
        %3028 = vrot.lane.b32.xlu0 %v2890, 15
        %v3029 = vpop.permute.xlu0 %3028
        %3030 = vrot.lane.b32.xlu0 %v2891, 15
        %v3031 = vpop.permute.xlu0 %3030
        %v3034 = vsel %vm1341, %v3025, %v3029
        %v3038 = vsel %vm1341, %v3027, %v3031
        %v3040 = vunpack.c.l.bf16 %v3034
        %v3041 = vunpack.c.h.bf16 %v3034
        %v3042 = vunpack.c.l.bf16 %v3038
        %v3043 = vunpack.c.h.bf16 %v3038
        %v3044 = vmul.f32 %v3040, %v2645
        %v3045 = vmul.f32 %v3041, %v2645
        %v3046 = vmul.f32 %v3042, %v2645
        %v3047 = vmul.f32 %v3043, %v2645
        %v3048 = vpack.c.bf16 %v3044, %v3044
        %v3049 = vpack.c.bf16 %v3045, %v3045
        %v3050 = vpack.c.bf16 %v3046, %v3046
        %v3051 = vpack.c.bf16 %v3047, %v3047
        %3052 = vst.msk [vmem:[#allocation2 + $0xa0] sm:$0xf] %vm2570, %v3048
        %3053 = vst.msk [vmem:[#allocation2 + $0xa8] sm:$0xf] %vm2570, %v3049
        %3054 = vst.msk [vmem:[#allocation2 + $0xb0] sm:$0xf] %vm2570, %v3050
        %3055 = vst.msk [vmem:[#allocation2 + $0xb8] sm:$0xf] %vm2570, %v3051
        %3056 = vrot.lane.b32.xlu0 %v2890, 125
        %v3057 = vpop.permute.xlu0 %3056
        %3058 = vrot.lane.b32.xlu0 %v2891, 125
        %v3059 = vpop.permute.xlu0 %3058
        %3060 = vrot.lane.b32.xlu0 %v2890, 13
        %v3061 = vpop.permute.xlu0 %3060
        %3062 = vrot.lane.b32.xlu0 %v2891, 13
        %v3063 = vpop.permute.xlu0 %3062
        %v3066 = vsel %vm2656, %v3057, %v3061
        %v3070 = vsel %vm2656, %v3059, %v3063
        %v3072 = vunpack.c.l.bf16 %v3066
        %v3073 = vunpack.c.h.bf16 %v3066
        %v3074 = vunpack.c.l.bf16 %v3070
        %v3075 = vunpack.c.h.bf16 %v3070
        %v3076 = vmul.f32 %v3072, %v2664
        %v3077 = vmul.f32 %v3073, %v2664
        %v3078 = vmul.f32 %v3074, %v2664
        %v3079 = vmul.f32 %v3075, %v2664
        %v3080 = vpack.c.bf16 %v3076, %v3076
        %v3081 = vpack.c.bf16 %v3077, %v3077
        %v3082 = vpack.c.bf16 %v3078, %v3078
        %v3083 = vpack.c.bf16 %v3079, %v3079
        %3084 = vst.msk [vmem:[#allocation2 + $0xc0] sm:$0xf] %vm2570, %v3080
        %3085 = vst.msk [vmem:[#allocation2 + $0xc8] sm:$0xf] %vm2570, %v3081
        %3086 = vst.msk [vmem:[#allocation2 + $0xd0] sm:$0xf] %vm2570, %v3082
        %3087 = vst.msk [vmem:[#allocation2 + $0xd8] sm:$0xf] %vm2570, %v3083
        %3088 = vrot.lane.b32.xlu0 %v2890, 124
        %v3089 = vpop.permute.xlu0 %3088
        %3090 = vrot.lane.b32.xlu0 %v2891, 124
        %v3091 = vpop.permute.xlu0 %3090
        %3092 = vrot.lane.b32.xlu0 %v2890, 12
        %v3093 = vpop.permute.xlu0 %3092
        %3094 = vrot.lane.b32.xlu0 %v2891, 12
        %v3095 = vpop.permute.xlu0 %3094
        %v3098 = vsel %vm2675, %v3089, %v3093
        %v3102 = vsel %vm2675, %v3091, %v3095
        %v3104 = vunpack.c.l.bf16 %v3098
        %v3105 = vunpack.c.h.bf16 %v3098
        %v3106 = vunpack.c.l.bf16 %v3102
        %v3107 = vunpack.c.h.bf16 %v3102
        %v3108 = vmul.f32 %v3104, %v2683
        %v3109 = vmul.f32 %v3105, %v2683
        %v3110 = vmul.f32 %v3106, %v2683
        %v3111 = vmul.f32 %v3107, %v2683
        %v3112 = vpack.c.bf16 %v3108, %v3108
        %v3113 = vpack.c.bf16 %v3109, %v3109
        %v3114 = vpack.c.bf16 %v3110, %v3110
        %v3115 = vpack.c.bf16 %v3111, %v3111
        %3116 = vst.msk [vmem:[#allocation2 + $0xe0] sm:$0xf] %vm2570, %v3112
        %3117 = vst.msk [vmem:[#allocation2 + $0xe8] sm:$0xf] %vm2570, %v3113
        %3118 = vst.msk [vmem:[#allocation2 + $0xf0] sm:$0xf] %vm2570, %v3114
        %3119 = vst.msk [vmem:[#allocation2 + $0xf8] sm:$0xf] %vm2570, %v3115
        %3120 = vrot.lane.b32.xlu0 %v2890, 123
        %v3121 = vpop.permute.xlu0 %3120
        %3122 = vrot.lane.b32.xlu0 %v2891, 123
        %v3123 = vpop.permute.xlu0 %3122
        %3124 = vrot.lane.b32.xlu0 %v2890, 11
        %v3125 = vpop.permute.xlu0 %3124
        %3126 = vrot.lane.b32.xlu0 %v2891, 11
        %v3127 = vpop.permute.xlu0 %3126
        %v3130 = vsel %vm2694, %v3121, %v3125
        %v3134 = vsel %vm2694, %v3123, %v3127
        %v3136 = vunpack.c.l.bf16 %v3130
        %v3137 = vunpack.c.h.bf16 %v3130
        %v3138 = vunpack.c.l.bf16 %v3134
        %v3139 = vunpack.c.h.bf16 %v3134
        %v3140 = vmul.f32 %v3136, %v2705
        %v3141 = vmul.f32 %v3137, %v2705
        %v3142 = vmul.f32 %v3138, %v2705
        %v3143 = vmul.f32 %v3139, %v2705
        %v3144 = vpack.c.bf16 %v3140, %v3140
        %v3145 = vpack.c.bf16 %v3141, %v3141
        %v3146 = vpack.c.bf16 %v3142, %v3142
        %v3147 = vpack.c.bf16 %v3143, %v3143
        %3148 = vst.msk [vmem:[#allocation2 + $0x100] sm:$0xf] %vm2570, %v3144
        %3149 = vst.msk [vmem:[#allocation2 + $0x108] sm:$0xf] %vm2570, %v3145
        %3150 = vst.msk [vmem:[#allocation2 + $0x110] sm:$0xf] %vm2570, %v3146
        %3151 = vst.msk [vmem:[#allocation2 + $0x118] sm:$0xf] %vm2570, %v3147
        %v3152 = vld [vmem:[#allocation19] sm:$0xff]
        %v3153 = vld [vmem:[#allocation19 + $0x8] sm:$0xf]
        %v3154 = vld [vmem:[#allocation19 + $0xc] sm:$0xff]
        %v3155 = vld [vmem:[#allocation19 + $0x14] sm:$0xf]
        %v3156 = vld [vmem:[#allocation19 + $0x18] sm:$0xff]
        %v3157 = vld [vmem:[#allocation19 + $0x20] sm:$0xf]
        %v3158 = vld [vmem:[#allocation19 + $0x24] sm:$0xff]
        %v3159 = vld [vmem:[#allocation19 + $0x2c] sm:$0xf]
        %v3160 = vld [vmem:[#allocation2] sm:$0xf]
        %v3161 = vld [vmem:[#allocation2 + $0x8] sm:$0xf]
        %v3162 = vld [vmem:[#allocation2 + $0x10] sm:$0xf]
        %v3163 = vld [vmem:[#allocation2 + $0x18] sm:$0xf]
        %v3164 = vld [vmem:[#allocation2 + $0x20] sm:$0xf]
        %v3165 = vld [vmem:[#allocation2 + $0x28] sm:$0xf]
        %v3166 = vld [vmem:[#allocation2 + $0x30] sm:$0xf]
        %v3167 = vld [vmem:[#allocation2 + $0x38] sm:$0xf]
        %v3168 = vld [vmem:[#allocation2 + $0x40] sm:$0xf]
        %v3169 = vld [vmem:[#allocation2 + $0x48] sm:$0xf]
        %v3170 = vld [vmem:[#allocation2 + $0x50] sm:$0xf]
        %v3171 = vld [vmem:[#allocation2 + $0x58] sm:$0xf]
        %v3172 = vld [vmem:[#allocation2 + $0x60] sm:$0xf]
        %v3173 = vld [vmem:[#allocation2 + $0x68] sm:$0xf]
        %v3174 = vld [vmem:[#allocation2 + $0x70] sm:$0xf]
        %v3175 = vld [vmem:[#allocation2 + $0x78] sm:$0xf]
        %v3176 = vld [vmem:[#allocation2 + $0x80] sm:$0xf]
        %v3177 = vld [vmem:[#allocation2 + $0x88] sm:$0xf]
        %v3178 = vld [vmem:[#allocation2 + $0x90] sm:$0xf]
        %v3179 = vld [vmem:[#allocation2 + $0x98] sm:$0xf]
        %v3180 = vld [vmem:[#allocation2 + $0xa0] sm:$0xf]
        %v3181 = vld [vmem:[#allocation2 + $0xa8] sm:$0xf]
        %v3182 = vld [vmem:[#allocation2 + $0xb0] sm:$0xf]
        %v3183 = vld [vmem:[#allocation2 + $0xb8] sm:$0xf]
        %v3184 = vld [vmem:[#allocation2 + $0xc0] sm:$0xf]
        %v3185 = vld [vmem:[#allocation2 + $0xc8] sm:$0xf]
        %v3186 = vld [vmem:[#allocation2 + $0xd0] sm:$0xf]
        %v3187 = vld [vmem:[#allocation2 + $0xd8] sm:$0xf]
        %v3188 = vld [vmem:[#allocation2 + $0xe0] sm:$0xf]
        %v3189 = vld [vmem:[#allocation2 + $0xe8] sm:$0xf]
        %v3190 = vld [vmem:[#allocation2 + $0xf0] sm:$0xf]
        %v3191 = vld [vmem:[#allocation2 + $0xf8] sm:$0xf]
        %v3192 = vld [vmem:[#allocation2 + $0x100] sm:$0xf]
        %v3193 = vld [vmem:[#allocation2 + $0x108] sm:$0xf]
        %v3194 = vld [vmem:[#allocation2 + $0x110] sm:$0xf]
        %v3195 = vld [vmem:[#allocation2 + $0x118] sm:$0xf]
        %v3196 = vld [vmem:[%s39] sm:$0xff]
        %v3197 = vld [vmem:[%s39 + $0x8] sm:$0xff]
        %v3198 = vld [vmem:[%s39 + $0x10] sm:$0xff]
        %v3199 = vld [vmem:[%s39 + $0x18] sm:$0xff]
        %3201 = vset.pattern.permute.xlu0 0
        %3202 = vperm.xlu0 %3201, %v3196
        %v3203 = vpop.permute.xlu0 %3202
        %3206 = vset.pattern.permute.xlu0 0
        %3207 = vperm.xlu0 %3206, %v3197
        %v3208 = vpop.permute.xlu0 %3207
        %3211 = vset.pattern.permute.xlu0 0
        %3212 = vperm.xlu0 %3211, %v3198
        %v3213 = vpop.permute.xlu0 %3212
        %3216 = vset.pattern.permute.xlu0 0
        %3217 = vperm.xlu0 %3216, %v3199
        %v3218 = vpop.permute.xlu0 %3217
        %v3228 = vunpack.c.l.b16 %v3152
        %v3229 = vunpack.c.h.b16 %v3152
        %v3230 = vunpack.c.l.b16 %v3153
        %v3231 = vunpack.c.l.b16 %v3154
        %v3232 = vunpack.c.h.b16 %v3154
        %v3233 = vunpack.c.l.b16 %v3155
        %v3234 = vunpack.c.l.b16 %v3156
        %v3235 = vunpack.c.h.b16 %v3156
        %v3236 = vunpack.c.l.b16 %v3157
        %v3237 = vunpack.c.l.b16 %v3158
        %v3238 = vunpack.c.h.b16 %v3158
        %v3239 = vunpack.c.l.b16 %v3159
        %v3240 = vpack.c.b16 %v3231, %v3228
        %v3241 = vpack.c.b16 %v3232, %v3229
        %v3242 = vpack.c.b16 %v3233, %v3230
        %v3243 = vpack.c.b16 %v3237, %v3234
        %v3244 = vpack.c.b16 %v3238, %v3235
        %v3245 = vpack.c.b16 %v3239, %v3236
        %v3286 = vunpack.c.l.b16 %v3160
        %v3287 = vunpack.c.l.b16 %v3161
        %v3288 = vunpack.c.l.b16 %v3162
        %v3289 = vunpack.c.l.b16 %v3163
        %v3290 = vunpack.c.l.b16 %v3164
        %v3291 = vunpack.c.l.b16 %v3165
        %v3292 = vunpack.c.l.b16 %v3166
        %v3293 = vunpack.c.l.b16 %v3167
        %v3294 = vunpack.c.l.b16 %v3168
        %v3295 = vunpack.c.l.b16 %v3169
        %v3296 = vunpack.c.l.b16 %v3170
        %v3297 = vunpack.c.l.b16 %v3171
        %v3298 = vunpack.c.l.b16 %v3172
        %v3299 = vunpack.c.l.b16 %v3173
        %v3300 = vunpack.c.l.b16 %v3174
        %v3301 = vunpack.c.l.b16 %v3175
        %v3302 = vunpack.c.l.b16 %v3176
        %v3303 = vunpack.c.l.b16 %v3177
        %v3304 = vunpack.c.l.b16 %v3178
        %v3305 = vunpack.c.l.b16 %v3179
        %v3306 = vunpack.c.l.b16 %v3180
        %v3307 = vunpack.c.l.b16 %v3181
        %v3308 = vunpack.c.l.b16 %v3182
        %v3309 = vunpack.c.l.b16 %v3183
        %v3310 = vunpack.c.l.b16 %v3184
        %v3311 = vunpack.c.l.b16 %v3185
        %v3312 = vunpack.c.l.b16 %v3186
        %v3313 = vunpack.c.l.b16 %v3187
        %v3314 = vunpack.c.l.b16 %v3188
        %v3315 = vunpack.c.l.b16 %v3189
        %v3316 = vunpack.c.l.b16 %v3190
        %v3317 = vunpack.c.l.b16 %v3191
        %v3318 = vunpack.c.l.b16 %v3192
        %v3319 = vunpack.c.l.b16 %v3193
        %v3320 = vunpack.c.l.b16 %v3194
        %v3321 = vunpack.c.l.b16 %v3195
        %v3322 = vpack.c.b16 %v3287, %v3286
        %v3323 = vpack.c.b16 %v3289, %v3288
        %v3324 = vpack.c.b16 %v3291, %v3290
        %v3325 = vpack.c.b16 %v3293, %v3292
        %v3326 = vpack.c.b16 %v3295, %v3294
        %v3327 = vpack.c.b16 %v3297, %v3296
        %v3328 = vpack.c.b16 %v3299, %v3298
        %v3329 = vpack.c.b16 %v3301, %v3300
        %v3330 = vpack.c.b16 %v3303, %v3302
        %v3331 = vpack.c.b16 %v3305, %v3304
        %v3332 = vpack.c.b16 %v3307, %v3306
        %v3333 = vpack.c.b16 %v3309, %v3308
        %v3334 = vpack.c.b16 %v3311, %v3310
        %v3335 = vpack.c.b16 %v3313, %v3312
        %v3336 = vpack.c.b16 %v3315, %v3314
        %v3337 = vpack.c.b16 %v3317, %v3316
        %v3338 = vpack.c.b16 %v3319, %v3318
        %v3339 = vpack.c.b16 %v3321, %v3320
        %vm3358 = vcmask 261120
        %v3360 = vsel %vm3358, %v3242, 0
        %v3363 = vsel %vm3358, %v3245, 0
        %3365 = vmatpush.bf16.msra.mxu0 %v3329
        %3366 = vmatpush.bf16.msra.mxu0 %v3328
        %3367 = vmatpush.bf16.msra.mxu0 %v3327
        %3368 = vmatpush.bf16.msra.mxu0 %v3326
        %3369 = vmatpush.bf16.msra.mxu0 %v3325
        %3370 = vmatpush.bf16.msra.mxu0 %v3324
        %3371 = vmatpush.bf16.msra.mxu0 %v3323
        %3372 = vmatpush.bf16.msra.mxu0 %v3322
        %3373 = vmatmul.bf16.gmra.mxu0 %v3240
        %v3374 = vpop.f32.mrf.mxu0
        %v3375 = vadd.f32 %v3203, %v3374
        %v3376 = vpop.f32.mrf.mxu0
        %v3377 = vadd.f32 %v3208, %v3376
        %3378 = vmatmul.bf16.gmra.mxu0 %v3243
        %v3379 = vpop.f32.mrf.mxu0
        %v3380 = vadd.f32 %v3213, %v3379
        %v3381 = vpop.f32.mrf.mxu0
        %v3382 = vadd.f32 %v3218, %v3381
        %3383 = vdwg.mxu0
        %3384 = vmatpush.bf16.msra.mxu0 %v3337
        %3385 = vmatpush.bf16.msra.mxu0 %v3336
        %3386 = vmatpush.bf16.msra.mxu0 %v3335
        %3387 = vmatpush.bf16.msra.mxu0 %v3334
        %3388 = vmatpush.bf16.msra.mxu0 %v3333
        %3389 = vmatpush.bf16.msra.mxu0 %v3332
        %3390 = vmatpush.bf16.msra.mxu0 %v3331
        %3391 = vmatpush.bf16.msra.mxu0 %v3330
        %3392 = vmatmul.bf16.gmra.mxu0 %v3241
        %v3393 = vpop.f32.mrf.mxu0
        %v3394 = vadd.f32 %v3375, %v3393
        %v3395 = vpop.f32.mrf.mxu0
        %v3396 = vadd.f32 %v3377, %v3395
        %3397 = vmatmul.bf16.gmra.mxu0 %v3244
        %v3398 = vpop.f32.mrf.mxu0
        %v3399 = vadd.f32 %v3380, %v3398
        %v3400 = vpop.f32.mrf.mxu0
        %v3401 = vadd.f32 %v3382, %v3400
        %3402 = vdwg.mxu0
        %3403 = vmatpush.bf16.msra.mxu0 0
        %3404 = vmatpush.bf16.msra.mxu0 0
        %3405 = vmatpush.bf16.msra.mxu0 0
        %3406 = vmatpush.bf16.msra.mxu0 0
        %3407 = vmatpush.bf16.msra.mxu0 0
        %3408 = vmatpush.bf16.msra.mxu0 0
        %3409 = vmatpush.bf16.msra.mxu0 %v3339
        %3410 = vmatpush.bf16.msra.mxu0 %v3338
        %3411 = vmatmul.bf16.gmra.mxu0 %v3360
        %v3412 = vpop.f32.mrf.mxu0
        %v3413 = vadd.f32 %v3394, %v3412
        %v3414 = vpop.f32.mrf.mxu0
        %v3415 = vadd.f32 %v3396, %v3414
        %3416 = vmatmul.bf16.gmra.mxu0 %v3363
        %v3417 = vpop.f32.mrf.mxu0
        %v3418 = vadd.f32 %v3399, %v3417
        %v3419 = vpop.f32.mrf.mxu0
        %v3420 = vadd.f32 %v3401, %v3419
        %3421 = vdwg.mxu0
        %v3422 = vmax.f32 %v3413, 0.0
        %v3423 = vmax.f32 %v3415, 0.0
        %v3424 = vmax.f32 %v3418, 0.0
        %v3425 = vmax.f32 %v3420, 0.0
        %v3426 = vpack.c.bf16 %v3423, %v3422
        %v3427 = vpack.c.bf16 %v3425, %v3424
        %v3428 = vld [vmem:[#allocation10] sm:$0xf]
        %v3429 = vld [vmem:[#allocation10 + $0x4] sm:$0xf]
        %v3432 = vunpack.c.l.b16 %v3428
        %v3433 = vunpack.c.l.b16 %v3429
        %v3434 = vpack.c.b16 %v3433, %v3432
        %v3437 = vsel %vm1310, %v3426, 0
        %v3440 = vsel %vm1310, %v3427, 0
        %3442 = vmatpush.bf16.msra.mxu0 0
        %3443 = vmatpush.bf16.msra.mxu0 0
        %3444 = vmatpush.bf16.msra.mxu0 0
        %3445 = vmatpush.bf16.msra.mxu0 0
        %3446 = vmatpush.bf16.msra.mxu0 0
        %3447 = vmatpush.bf16.msra.mxu0 0
        %3448 = vmatpush.bf16.msra.mxu0 0
        %3449 = vmatpush.bf16.msra.mxu0 %v3434
        %3450 = vmatmul.bf16.gmra.mxu0 %v3437
        %v3451 = vpop.f32.mrf.mxu0
        %v3452 = vadd.f32 0.0, %v3451
        %v3453 = vpop.f32.mrf.mxu0
        %v3454 = vadd.f32 0.0, %v3453
        %3455 = vmatmul.bf16.gmra.mxu0 %v3440
        %v3456 = vpop.f32.mrf.mxu0
        %v3457 = vadd.f32 0.0, %v3456
        %v3458 = vpop.f32.mrf.mxu0
        %v3459 = vadd.f32 0.0, %v3458
        %3460 = vdwg.mxu0
        %v3461 = vpack.c.bf16 %v3452, %v3452
        %v3462 = vpack.c.bf16 %v3454, %v3454
        %v3463 = vpack.c.bf16 %v3457, %v3457
        %v3464 = vpack.c.bf16 %v3459, %v3459
        %v3469 = vunpack.c.l.b16 %v3461
        %v3470 = vunpack.c.l.b16 %v3462
        %v3471 = vunpack.c.l.b16 %v3463
        %v3472 = vunpack.c.l.b16 %v3464
        %v3473 = vpack.c.b16 %v3470, %v3469
        %v3474 = vpack.c.b16 %v3472, %v3471
        %3475 = vrot.lane.b32.xlu0 %v3473, 73
        %v3476 = vpop.permute.xlu0 %3475
        %3477 = vrot.lane.b32.xlu0 %v3474, 73
        %v3478 = vpop.permute.xlu0 %3477
        %3479 = vrot.lane.b32.xlu0 %v3473, 9
        %v3480 = vpop.permute.xlu0 %3479
        %3481 = vrot.lane.b32.xlu0 %v3474, 9
        %v3482 = vpop.permute.xlu0 %3481
        %v3485 = vsel %vm1988, %v3476, %v3480
        %v3489 = vsel %vm1988, %v3478, %v3482
        %v3491 = vunpack.c.l.bf16 %v3485
        %v3492 = vunpack.c.h.bf16 %v3485
        %v3493 = vunpack.c.l.bf16 %v3489
        %v3494 = vunpack.c.h.bf16 %v3489
        %v3495 = vmul.f32 %v3491, %v1998
        %v3496 = vmul.f32 %v3492, %v1998
        %v3497 = vmul.f32 %v3493, %v1998
        %v3498 = vmul.f32 %v3494, %v1998
        %v3499 = vpack.c.bf16 %v3495, %v3495
        %v3500 = vpack.c.bf16 %v3496, %v3496
        %v3501 = vpack.c.bf16 %v3497, %v3497
        %v3502 = vpack.c.bf16 %v3498, %v3498
        %3503 = vst.msk [vmem:[#allocation2] sm:$0xf] %vm2001, %v3499
        %3504 = vst.msk [vmem:[#allocation2 + $0x8] sm:$0xf] %vm2001, %v3500
        %3505 = vst.msk [vmem:[#allocation2 + $0x10] sm:$0xf] %vm2001, %v3501
        %3506 = vst.msk [vmem:[#allocation2 + $0x18] sm:$0xf] %vm2001, %v3502
        %3507 = vrot.lane.b32.xlu0 %v3473, 72
        %v3508 = vpop.permute.xlu0 %3507
        %3509 = vrot.lane.b32.xlu0 %v3474, 72
        %v3510 = vpop.permute.xlu0 %3509
        %3511 = vrot.lane.b32.xlu0 %v3473, 8
        %v3512 = vpop.permute.xlu0 %3511
        %3513 = vrot.lane.b32.xlu0 %v3474, 8
        %v3514 = vpop.permute.xlu0 %3513
        %v3517 = vsel %vm2007, %v3508, %v3512
        %v3521 = vsel %vm2007, %v3510, %v3514
        %v3523 = vunpack.c.l.bf16 %v3517
        %v3524 = vunpack.c.h.bf16 %v3517
        %v3525 = vunpack.c.l.bf16 %v3521
        %v3526 = vunpack.c.h.bf16 %v3521
        %v3527 = vmul.f32 %v3523, %v2017
        %v3528 = vmul.f32 %v3524, %v2017
        %v3529 = vmul.f32 %v3525, %v2017
        %v3530 = vmul.f32 %v3526, %v2017
        %v3531 = vpack.c.bf16 %v3527, %v3527
        %v3532 = vpack.c.bf16 %v3528, %v3528
        %v3533 = vpack.c.bf16 %v3529, %v3529
        %v3534 = vpack.c.bf16 %v3530, %v3530
        %3535 = vst.msk [vmem:[#allocation2 + $0x20] sm:$0xf] %vm2001, %v3531
        %3536 = vst.msk [vmem:[#allocation2 + $0x28] sm:$0xf] %vm2001, %v3532
        %3537 = vst.msk [vmem:[#allocation2 + $0x30] sm:$0xf] %vm2001, %v3533
        %3538 = vst.msk [vmem:[#allocation2 + $0x38] sm:$0xf] %vm2001, %v3534
        %3539 = vrot.lane.b32.xlu0 %v3473, 71
        %v3540 = vpop.permute.xlu0 %3539
        %3541 = vrot.lane.b32.xlu0 %v3474, 71
        %v3542 = vpop.permute.xlu0 %3541
        %3543 = vrot.lane.b32.xlu0 %v3473, 7
        %v3544 = vpop.permute.xlu0 %3543
        %3545 = vrot.lane.b32.xlu0 %v3474, 7
        %v3546 = vpop.permute.xlu0 %3545
        %v3549 = vsel %vm2025, %v3540, %v3544
        %v3553 = vsel %vm2025, %v3542, %v3546
        %v3555 = vunpack.c.l.bf16 %v3549
        %v3556 = vunpack.c.h.bf16 %v3549
        %v3557 = vunpack.c.l.bf16 %v3553
        %v3558 = vunpack.c.h.bf16 %v3553
        %v3559 = vmul.f32 %v3555, %v2032
        %v3560 = vmul.f32 %v3556, %v2032
        %v3561 = vmul.f32 %v3557, %v2032
        %v3562 = vmul.f32 %v3558, %v2032
        %v3563 = vpack.c.bf16 %v3559, %v3559
        %v3564 = vpack.c.bf16 %v3560, %v3560
        %v3565 = vpack.c.bf16 %v3561, %v3561
        %v3566 = vpack.c.bf16 %v3562, %v3562
        %3567 = vst.msk [vmem:[#allocation2 + $0x40] sm:$0xf] %vm2001, %v3563
        %3568 = vst.msk [vmem:[#allocation2 + $0x48] sm:$0xf] %vm2001, %v3564
        %3569 = vst.msk [vmem:[#allocation2 + $0x50] sm:$0xf] %vm2001, %v3565
        %3570 = vst.msk [vmem:[#allocation2 + $0x58] sm:$0xf] %vm2001, %v3566
        %3571 = vrot.lane.b32.xlu0 %v3473, 65
        %v3572 = vpop.permute.xlu0 %3571
        %3573 = vrot.lane.b32.xlu0 %v3474, 65
        %v3574 = vpop.permute.xlu0 %3573
        %3575 = vrot.lane.b32.xlu0 %v3473, 1
        %v3576 = vpop.permute.xlu0 %3575
        %3577 = vrot.lane.b32.xlu0 %v3474, 1
        %v3578 = vpop.permute.xlu0 %3577
        %v3581 = vsel %vm1363, %v3572, %v3576
        %v3585 = vsel %vm1363, %v3574, %v3578
        %v3587 = vunpack.c.l.bf16 %v3581
        %v3588 = vunpack.c.h.bf16 %v3581
        %v3589 = vunpack.c.l.bf16 %v3585
        %v3590 = vunpack.c.h.bf16 %v3585
        %v3591 = vmul.f32 %v3587, %v2046
        %v3592 = vmul.f32 %v3588, %v2046
        %v3593 = vmul.f32 %v3589, %v2046
        %v3594 = vmul.f32 %v3590, %v2046
        %v3595 = vpack.c.bf16 %v3591, %v3591
        %v3596 = vpack.c.bf16 %v3592, %v3592
        %v3597 = vpack.c.bf16 %v3593, %v3593
        %v3598 = vpack.c.bf16 %v3594, %v3594
        %3599 = vst.msk [vmem:[#allocation2 + $0x60] sm:$0xf] %vm2001, %v3595
        %3600 = vst.msk [vmem:[#allocation2 + $0x68] sm:$0xf] %vm2001, %v3596
        %3601 = vst.msk [vmem:[#allocation2 + $0x70] sm:$0xf] %vm2001, %v3597
        %3602 = vst.msk [vmem:[#allocation2 + $0x78] sm:$0xf] %vm2001, %v3598
        %3603 = vst.msk [vmem:[#allocation2 + $0x80] sm:$0xf] %vm2001, %v3461
        %3604 = vst.msk [vmem:[#allocation2 + $0x88] sm:$0xf] %vm2001, %v3462
        %3605 = vst.msk [vmem:[#allocation2 + $0x90] sm:$0xf] %vm2001, %v3463
        %3606 = vst.msk [vmem:[#allocation2 + $0x98] sm:$0xf] %vm2001, %v3464
        %3607 = vrot.lane.b32.xlu0 %v3473, 127
        %v3608 = vpop.permute.xlu0 %3607
        %3609 = vrot.lane.b32.xlu0 %v3474, 127
        %v3610 = vpop.permute.xlu0 %3609
        %3611 = vrot.lane.b32.xlu0 %v3473, 63
        %v3612 = vpop.permute.xlu0 %3611
        %3613 = vrot.lane.b32.xlu0 %v3474, 63
        %v3614 = vpop.permute.xlu0 %3613
        %v3617 = vsel %vm2055, %v3608, %v3612
        %v3621 = vsel %vm2055, %v3610, %v3614
        %v3623 = vunpack.c.l.bf16 %v3617
        %v3624 = vunpack.c.h.bf16 %v3617
        %v3625 = vunpack.c.l.bf16 %v3621
        %v3626 = vunpack.c.h.bf16 %v3621
        %v3627 = vmul.f32 %v3623, %v2062
        %v3628 = vmul.f32 %v3624, %v2062
        %v3629 = vmul.f32 %v3625, %v2062
        %v3630 = vmul.f32 %v3626, %v2062
        %v3631 = vpack.c.bf16 %v3627, %v3627
        %v3632 = vpack.c.bf16 %v3628, %v3628
        %v3633 = vpack.c.bf16 %v3629, %v3629
        %v3634 = vpack.c.bf16 %v3630, %v3630
        %3635 = vst.msk [vmem:[#allocation2 + $0xa0] sm:$0xf] %vm2001, %v3631
        %3636 = vst.msk [vmem:[#allocation2 + $0xa8] sm:$0xf] %vm2001, %v3632
        %3637 = vst.msk [vmem:[#allocation2 + $0xb0] sm:$0xf] %vm2001, %v3633
        %3638 = vst.msk [vmem:[#allocation2 + $0xb8] sm:$0xf] %vm2001, %v3634
        %3639 = vrot.lane.b32.xlu0 %v3473, 121
        %v3640 = vpop.permute.xlu0 %3639
        %3641 = vrot.lane.b32.xlu0 %v3474, 121
        %v3642 = vpop.permute.xlu0 %3641
        %3643 = vrot.lane.b32.xlu0 %v3473, 57
        %v3644 = vpop.permute.xlu0 %3643
        %3645 = vrot.lane.b32.xlu0 %v3474, 57
        %v3646 = vpop.permute.xlu0 %3645
        %v3649 = vsel %vm2070, %v3640, %v3644
        %v3653 = vsel %vm2070, %v3642, %v3646
        %v3655 = vunpack.c.l.bf16 %v3649
        %v3656 = vunpack.c.h.bf16 %v3649
        %v3657 = vunpack.c.l.bf16 %v3653
        %v3658 = vunpack.c.h.bf16 %v3653
        %v3659 = vmul.f32 %v3655, %v2077
        %v3660 = vmul.f32 %v3656, %v2077
        %v3661 = vmul.f32 %v3657, %v2077
        %v3662 = vmul.f32 %v3658, %v2077
        %v3663 = vpack.c.bf16 %v3659, %v3659
        %v3664 = vpack.c.bf16 %v3660, %v3660
        %v3665 = vpack.c.bf16 %v3661, %v3661
        %v3666 = vpack.c.bf16 %v3662, %v3662
        %3667 = vst.msk [vmem:[#allocation2 + $0xc0] sm:$0xf] %vm2001, %v3663
        %3668 = vst.msk [vmem:[#allocation2 + $0xc8] sm:$0xf] %vm2001, %v3664
        %3669 = vst.msk [vmem:[#allocation2 + $0xd0] sm:$0xf] %vm2001, %v3665
        %3670 = vst.msk [vmem:[#allocation2 + $0xd8] sm:$0xf] %vm2001, %v3666
        %3671 = vrot.lane.b32.xlu0 %v3473, 120
        %v3672 = vpop.permute.xlu0 %3671
        %3673 = vrot.lane.b32.xlu0 %v3474, 120
        %v3674 = vpop.permute.xlu0 %3673
        %3675 = vrot.lane.b32.xlu0 %v3473, 56
        %v3676 = vpop.permute.xlu0 %3675
        %3677 = vrot.lane.b32.xlu0 %v3474, 56
        %v3678 = vpop.permute.xlu0 %3677
        %v3681 = vsel %vm2085, %v3672, %v3676
        %v3685 = vsel %vm2085, %v3674, %v3678
        %v3687 = vunpack.c.l.bf16 %v3681
        %v3688 = vunpack.c.h.bf16 %v3681
        %v3689 = vunpack.c.l.bf16 %v3685
        %v3690 = vunpack.c.h.bf16 %v3685
        %v3691 = vmul.f32 %v3687, %v2092
        %v3692 = vmul.f32 %v3688, %v2092
        %v3693 = vmul.f32 %v3689, %v2092
        %v3694 = vmul.f32 %v3690, %v2092
        %v3695 = vpack.c.bf16 %v3691, %v3691
        %v3696 = vpack.c.bf16 %v3692, %v3692
        %v3697 = vpack.c.bf16 %v3693, %v3693
        %v3698 = vpack.c.bf16 %v3694, %v3694
        %3699 = vst.msk [vmem:[#allocation2 + $0xe0] sm:$0xf] %vm2001, %v3695
        %3700 = vst.msk [vmem:[#allocation2 + $0xe8] sm:$0xf] %vm2001, %v3696
        %3701 = vst.msk [vmem:[#allocation2 + $0xf0] sm:$0xf] %vm2001, %v3697
        %3702 = vst.msk [vmem:[#allocation2 + $0xf8] sm:$0xf] %vm2001, %v3698
        %3703 = vrot.lane.b32.xlu0 %v3473, 119
        %v3704 = vpop.permute.xlu0 %3703
        %3705 = vrot.lane.b32.xlu0 %v3474, 119
        %v3706 = vpop.permute.xlu0 %3705
        %3707 = vrot.lane.b32.xlu0 %v3473, 55
        %v3708 = vpop.permute.xlu0 %3707
        %3709 = vrot.lane.b32.xlu0 %v3474, 55
        %v3710 = vpop.permute.xlu0 %3709
        %v3713 = vsel %vm2100, %v3704, %v3708
        %v3717 = vsel %vm2100, %v3706, %v3710
        %v3719 = vunpack.c.l.bf16 %v3713
        %v3720 = vunpack.c.h.bf16 %v3713
        %v3721 = vunpack.c.l.bf16 %v3717
        %v3722 = vunpack.c.h.bf16 %v3717
        %v3723 = vmul.f32 %v3719, %v2110
        %v3724 = vmul.f32 %v3720, %v2110
        %v3725 = vmul.f32 %v3721, %v2110
        %v3726 = vmul.f32 %v3722, %v2110
        %v3727 = vpack.c.bf16 %v3723, %v3723
        %v3728 = vpack.c.bf16 %v3724, %v3724
        %v3729 = vpack.c.bf16 %v3725, %v3725
        %v3730 = vpack.c.bf16 %v3726, %v3726
        %3731 = vst.msk [vmem:[#allocation2 + $0x100] sm:$0xf] %vm2001, %v3727
        %3732 = vst.msk [vmem:[#allocation2 + $0x108] sm:$0xf] %vm2001, %v3728
        %3733 = vst.msk [vmem:[#allocation2 + $0x110] sm:$0xf] %vm2001, %v3729
        %3734 = vst.msk [vmem:[#allocation2 + $0x118] sm:$0xf] %vm2001, %v3730
        %v3735 = vpack.c.bf16 %v2454, %v2454
        %v3736 = vpack.c.bf16 %v2455, %v2455
        %v3739 = vunpack.c.l.b16 %v3735
        %v3740 = vunpack.c.l.b16 %v3736
        %v3741 = vpack.c.b16 %v3740, %v3739
        %3742 = vrot.lane.b32.xlu0 %v3741, 73
        %v3743 = vpop.permute.xlu0 %3742
        %3744 = vrot.lane.b32.xlu0 %v3741, 9
        %v3745 = vpop.permute.xlu0 %3744
        %v3748 = vsel %vm1988, %v3743, %v3745
        %v3750 = vunpack.c.l.bf16 %v3748
        %v3751 = vunpack.c.h.bf16 %v3748
        %v3752 = vmul.f32 %v3750, %v1998
        %v3753 = vmul.f32 %v3751, %v1998
        %v3754 = vpack.c.bf16 %v3752, %v3752
        %v3755 = vpack.c.bf16 %v3753, %v3753
        %3756 = vst.msk [vmem:[#allocation2 + $0x120] sm:$0xf] %vm2001, %v3754
        %3757 = vst.msk [vmem:[#allocation2 + $0x128] sm:$0xf] %vm2001, %v3755
        %3758 = vrot.lane.b32.xlu0 %v3741, 72
        %v3759 = vpop.permute.xlu0 %3758
        %3760 = vrot.lane.b32.xlu0 %v3741, 8
        %v3761 = vpop.permute.xlu0 %3760
        %v3764 = vsel %vm2007, %v3759, %v3761
        %v3766 = vunpack.c.l.bf16 %v3764
        %v3767 = vunpack.c.h.bf16 %v3764
        %v3768 = vmul.f32 %v3766, %v2017
        %v3769 = vmul.f32 %v3767, %v2017
        %v3770 = vpack.c.bf16 %v3768, %v3768
        %v3771 = vpack.c.bf16 %v3769, %v3769
        %3772 = vst.msk [vmem:[#allocation2 + $0x130] sm:$0xf] %vm2001, %v3770
        %3773 = vst.msk [vmem:[#allocation2 + $0x138] sm:$0xf] %vm2001, %v3771
        %3774 = vrot.lane.b32.xlu0 %v3741, 71
        %v3775 = vpop.permute.xlu0 %3774
        %3776 = vrot.lane.b32.xlu0 %v3741, 7
        %v3777 = vpop.permute.xlu0 %3776
        %v3780 = vsel %vm2025, %v3775, %v3777
        %v3782 = vunpack.c.l.bf16 %v3780
        %v3783 = vunpack.c.h.bf16 %v3780
        %v3784 = vmul.f32 %v3782, %v2032
        %v3785 = vmul.f32 %v3783, %v2032
        %v3786 = vpack.c.bf16 %v3784, %v3784
        %v3787 = vpack.c.bf16 %v3785, %v3785
        %3788 = vst.msk [vmem:[#allocation2 + $0x140] sm:$0xf] %vm2001, %v3786
        %3789 = vst.msk [vmem:[#allocation2 + $0x148] sm:$0xf] %vm2001, %v3787
        %3790 = vrot.lane.b32.xlu0 %v3741, 65
        %v3791 = vpop.permute.xlu0 %3790
        %3792 = vrot.lane.b32.xlu0 %v3741, 1
        %v3793 = vpop.permute.xlu0 %3792
        %v3796 = vsel %vm1363, %v3791, %v3793
        %v3798 = vunpack.c.l.bf16 %v3796
        %v3799 = vunpack.c.h.bf16 %v3796
        %v3800 = vmul.f32 %v3798, %v2046
        %v3801 = vmul.f32 %v3799, %v2046
        %v3802 = vpack.c.bf16 %v3800, %v3800
        %v3803 = vpack.c.bf16 %v3801, %v3801
        %3804 = vst.msk [vmem:[#allocation2 + $0x150] sm:$0xf] %vm2001, %v3802
        %3805 = vst.msk [vmem:[#allocation2 + $0x158] sm:$0xf] %vm2001, %v3803
        %3806 = vst.msk [vmem:[#allocation2 + $0x160] sm:$0xf] %vm2001, %v3735
        %3807 = vst.msk [vmem:[#allocation2 + $0x168] sm:$0xf] %vm2001, %v3736
        %3808 = vrot.lane.b32.xlu0 %v3741, 127
        %v3809 = vpop.permute.xlu0 %3808
        %3810 = vrot.lane.b32.xlu0 %v3741, 63
        %v3811 = vpop.permute.xlu0 %3810
        %v3814 = vsel %vm2055, %v3809, %v3811
        %v3816 = vunpack.c.l.bf16 %v3814
        %v3817 = vunpack.c.h.bf16 %v3814
        %v3818 = vmul.f32 %v3816, %v2062
        %v3819 = vmul.f32 %v3817, %v2062
        %v3820 = vpack.c.bf16 %v3818, %v3818
        %v3821 = vpack.c.bf16 %v3819, %v3819
        %3822 = vst.msk [vmem:[#allocation2 + $0x170] sm:$0xf] %vm2001, %v3820
        %3823 = vst.msk [vmem:[#allocation2 + $0x178] sm:$0xf] %vm2001, %v3821
        %3824 = vrot.lane.b32.xlu0 %v3741, 121
        %v3825 = vpop.permute.xlu0 %3824
        %3826 = vrot.lane.b32.xlu0 %v3741, 57
        %v3827 = vpop.permute.xlu0 %3826
        %v3830 = vsel %vm2070, %v3825, %v3827
        %v3832 = vunpack.c.l.bf16 %v3830
        %v3833 = vunpack.c.h.bf16 %v3830
        %v3834 = vmul.f32 %v3832, %v2077
        %v3835 = vmul.f32 %v3833, %v2077
        %v3836 = vpack.c.bf16 %v3834, %v3834
        %v3837 = vpack.c.bf16 %v3835, %v3835
        %3838 = vst.msk [vmem:[#allocation2 + $0x180] sm:$0xf] %vm2001, %v3836
        %3839 = vst.msk [vmem:[#allocation2 + $0x188] sm:$0xf] %vm2001, %v3837
        %3840 = vrot.lane.b32.xlu0 %v3741, 120
        %v3841 = vpop.permute.xlu0 %3840
        %3842 = vrot.lane.b32.xlu0 %v3741, 56
        %v3843 = vpop.permute.xlu0 %3842
        %v3846 = vsel %vm2085, %v3841, %v3843
        %v3848 = vunpack.c.l.bf16 %v3846
        %v3849 = vunpack.c.h.bf16 %v3846
        %v3850 = vmul.f32 %v3848, %v2092
        %v3851 = vmul.f32 %v3849, %v2092
        %v3852 = vpack.c.bf16 %v3850, %v3850
        %v3853 = vpack.c.bf16 %v3851, %v3851
        %3854 = vst.msk [vmem:[#allocation2 + $0x190] sm:$0xf] %vm2001, %v3852
        %3855 = vst.msk [vmem:[#allocation2 + $0x198] sm:$0xf] %vm2001, %v3853
        %3856 = vrot.lane.b32.xlu0 %v3741, 119
        %v3857 = vpop.permute.xlu0 %3856
        %3858 = vrot.lane.b32.xlu0 %v3741, 55
        %v3859 = vpop.permute.xlu0 %3858
        %v3862 = vsel %vm2100, %v3857, %v3859
        %v3864 = vunpack.c.l.bf16 %v3862
        %v3865 = vunpack.c.h.bf16 %v3862
        %v3866 = vmul.f32 %v3864, %v2110
        %v3867 = vmul.f32 %v3865, %v2110
        %v3868 = vpack.c.bf16 %v3866, %v3866
        %v3869 = vpack.c.bf16 %v3867, %v3867
        %3870 = vst.msk [vmem:[#allocation2 + $0x1a0] sm:$0xf] %vm2001, %v3868
        %3871 = vst.msk [vmem:[#allocation2 + $0x1a8] sm:$0xf] %vm2001, %v3869
        %v3872 = vld [vmem:[%s41] sm:$0xff]
        %v3873 = vld [vmem:[%s41 + $0x8] sm:$0xff]
        %v3874 = vld [vmem:[%s41 + $0x10] sm:$0xff]
        %v3875 = vld [vmem:[%s41 + $0x18] sm:$0xff]
        %v3876 = vld [vmem:[#allocation2] sm:$0xf]
        %v3877 = vld [vmem:[#allocation2 + $0x8] sm:$0xf]
        %v3878 = vld [vmem:[#allocation2 + $0x10] sm:$0xf]
        %v3879 = vld [vmem:[#allocation2 + $0x18] sm:$0xf]
        %v3880 = vld [vmem:[#allocation2 + $0x20] sm:$0xf]
        %v3881 = vld [vmem:[#allocation2 + $0x28] sm:$0xf]
        %v3882 = vld [vmem:[#allocation2 + $0x30] sm:$0xf]
        %v3883 = vld [vmem:[#allocation2 + $0x38] sm:$0xf]
        %v3884 = vld [vmem:[#allocation2 + $0x40] sm:$0xf]
        %v3885 = vld [vmem:[#allocation2 + $0x48] sm:$0xf]
        %v3886 = vld [vmem:[#allocation2 + $0x50] sm:$0xf]
        %v3887 = vld [vmem:[#allocation2 + $0x58] sm:$0xf]
        %v3888 = vld [vmem:[#allocation2 + $0x60] sm:$0xf]
        %v3889 = vld [vmem:[#allocation2 + $0x68] sm:$0xf]
        %v3890 = vld [vmem:[#allocation2 + $0x70] sm:$0xf]
        %v3891 = vld [vmem:[#allocation2 + $0x78] sm:$0xf]
        %v3892 = vld [vmem:[#allocation2 + $0x80] sm:$0xf]
        %v3893 = vld [vmem:[#allocation2 + $0x88] sm:$0xf]
        %v3894 = vld [vmem:[#allocation2 + $0x90] sm:$0xf]
        %v3895 = vld [vmem:[#allocation2 + $0x98] sm:$0xf]
        %v3896 = vld [vmem:[#allocation2 + $0xa0] sm:$0xf]
        %v3897 = vld [vmem:[#allocation2 + $0xa8] sm:$0xf]
        %v3898 = vld [vmem:[#allocation2 + $0xb0] sm:$0xf]
        %v3899 = vld [vmem:[#allocation2 + $0xb8] sm:$0xf]
        %v3900 = vld [vmem:[#allocation2 + $0xc0] sm:$0xf]
        %v3901 = vld [vmem:[#allocation2 + $0xc8] sm:$0xf]
        %v3902 = vld [vmem:[#allocation2 + $0xd0] sm:$0xf]
        %v3903 = vld [vmem:[#allocation2 + $0xd8] sm:$0xf]
        %v3904 = vld [vmem:[#allocation2 + $0xe0] sm:$0xf]
        %v3905 = vld [vmem:[#allocation2 + $0xe8] sm:$0xf]
        %v3906 = vld [vmem:[#allocation2 + $0xf0] sm:$0xf]
        %v3907 = vld [vmem:[#allocation2 + $0xf8] sm:$0xf]
        %v3908 = vld [vmem:[#allocation2 + $0x100] sm:$0xf]
        %v3909 = vld [vmem:[#allocation2 + $0x108] sm:$0xf]
        %v3910 = vld [vmem:[#allocation2 + $0x110] sm:$0xf]
        %v3911 = vld [vmem:[#allocation2 + $0x118] sm:$0xf]
        %v3912 = vld [vmem:[#allocation2 + $0x120] sm:$0xf]
        %v3913 = vld [vmem:[#allocation2 + $0x128] sm:$0xf]
        %v3914 = vld [vmem:[#allocation2 + $0x130] sm:$0xf]
        %v3915 = vld [vmem:[#allocation2 + $0x138] sm:$0xf]
        %v3916 = vld [vmem:[#allocation2 + $0x140] sm:$0xf]
        %v3917 = vld [vmem:[#allocation2 + $0x148] sm:$0xf]
        %v3918 = vld [vmem:[#allocation2 + $0x150] sm:$0xf]
        %v3919 = vld [vmem:[#allocation2 + $0x158] sm:$0xf]
        %v3920 = vld [vmem:[#allocation2 + $0x160] sm:$0xf]
        %v3921 = vld [vmem:[#allocation2 + $0x168] sm:$0xf]
        %v3922 = vld [vmem:[#allocation2 + $0x170] sm:$0xf]
        %v3923 = vld [vmem:[#allocation2 + $0x178] sm:$0xf]
        %v3924 = vld [vmem:[#allocation2 + $0x180] sm:$0xf]
        %v3925 = vld [vmem:[#allocation2 + $0x188] sm:$0xf]
        %v3926 = vld [vmem:[#allocation2 + $0x190] sm:$0xf]
        %v3927 = vld [vmem:[#allocation2 + $0x198] sm:$0xf]
        %v3928 = vld [vmem:[#allocation2 + $0x1a0] sm:$0xf]
        %v3929 = vld [vmem:[#allocation2 + $0x1a8] sm:$0xf]
        %v3930 = vld [vmem:[%s43] sm:$0xff]
        %v3931 = vld [vmem:[%s43 + $0x8] sm:$0xff]
        %3933 = vset.pattern.permute.xlu0 0
        %3934 = vperm.xlu0 %3933, %v3930
        %v3935 = vpop.permute.xlu0 %3934
        %3938 = vset.pattern.permute.xlu0 0
        %3939 = vperm.xlu0 %3938, %v3931
        %v3940 = vpop.permute.xlu0 %3939
        %v3946 = vunpack.c.l.b16 %v3872
        %v3947 = vunpack.c.h.b16 %v3872
        %v3948 = vunpack.c.l.b16 %v3873
        %v3949 = vunpack.c.h.b16 %v3873
        %v3950 = vunpack.c.l.b16 %v3874
        %v3951 = vunpack.c.h.b16 %v3874
        %v3952 = vunpack.c.l.b16 %v3875
        %v3953 = vunpack.c.h.b16 %v3875
        %v3954 = vpack.c.b16 %v3950, %v3946
        %v3955 = vpack.c.b16 %v3951, %v3947
        %v3956 = vpack.c.b16 %v3952, %v3948
        %v3957 = vpack.c.b16 %v3953, %v3949
        %v4015 = vunpack.c.l.b16 %v3876
        %v4016 = vunpack.c.l.b16 %v3877
        %v4017 = vunpack.c.l.b16 %v3878
        %v4018 = vunpack.c.l.b16 %v3879
        %v4019 = vunpack.c.l.b16 %v3880
        %v4020 = vunpack.c.l.b16 %v3881
        %v4021 = vunpack.c.l.b16 %v3882
        %v4022 = vunpack.c.l.b16 %v3883
        %v4023 = vunpack.c.l.b16 %v3884
        %v4024 = vunpack.c.l.b16 %v3885
        %v4025 = vunpack.c.l.b16 %v3886
        %v4026 = vunpack.c.l.b16 %v3887
        %v4027 = vunpack.c.l.b16 %v3888
        %v4028 = vunpack.c.l.b16 %v3889
        %v4029 = vunpack.c.l.b16 %v3890
        %v4030 = vunpack.c.l.b16 %v3891
        %v4031 = vunpack.c.l.b16 %v3892
        %v4032 = vunpack.c.l.b16 %v3893
        %v4033 = vunpack.c.l.b16 %v3894
        %v4034 = vunpack.c.l.b16 %v3895
        %v4035 = vunpack.c.l.b16 %v3896
        %v4036 = vunpack.c.l.b16 %v3897
        %v4037 = vunpack.c.l.b16 %v3898
        %v4038 = vunpack.c.l.b16 %v3899
        %v4039 = vunpack.c.l.b16 %v3900
        %v4040 = vunpack.c.l.b16 %v3901
        %v4041 = vunpack.c.l.b16 %v3902
        %v4042 = vunpack.c.l.b16 %v3903
        %v4043 = vunpack.c.l.b16 %v3904
        %v4044 = vunpack.c.l.b16 %v3905
        %v4045 = vunpack.c.l.b16 %v3906
        %v4046 = vunpack.c.l.b16 %v3907
        %v4047 = vunpack.c.l.b16 %v3908
        %v4048 = vunpack.c.l.b16 %v3909
        %v4049 = vunpack.c.l.b16 %v3910
        %v4050 = vunpack.c.l.b16 %v3911
        %v4051 = vunpack.c.l.b16 %v3912
        %v4052 = vunpack.c.l.b16 %v3913
        %v4053 = vunpack.c.l.b16 %v3914
        %v4054 = vunpack.c.l.b16 %v3915
        %v4055 = vunpack.c.l.b16 %v3916
        %v4056 = vunpack.c.l.b16 %v3917
        %v4057 = vunpack.c.l.b16 %v3918
        %v4058 = vunpack.c.l.b16 %v3919
        %v4059 = vunpack.c.l.b16 %v3920
        %v4060 = vunpack.c.l.b16 %v3921
        %v4061 = vunpack.c.l.b16 %v3922
        %v4062 = vunpack.c.l.b16 %v3923
        %v4063 = vunpack.c.l.b16 %v3924
        %v4064 = vunpack.c.l.b16 %v3925
        %v4065 = vunpack.c.l.b16 %v3926
        %v4066 = vunpack.c.l.b16 %v3927
        %v4067 = vunpack.c.l.b16 %v3928
        %v4068 = vunpack.c.l.b16 %v3929
        %v4069 = vpack.c.b16 %v4016, %v4015
        %v4070 = vpack.c.b16 %v4018, %v4017
        %v4071 = vpack.c.b16 %v4020, %v4019
        %v4072 = vpack.c.b16 %v4022, %v4021
        %v4073 = vpack.c.b16 %v4024, %v4023
        %v4074 = vpack.c.b16 %v4026, %v4025
        %v4075 = vpack.c.b16 %v4028, %v4027
        %v4076 = vpack.c.b16 %v4030, %v4029
        %v4077 = vpack.c.b16 %v4032, %v4031
        %v4078 = vpack.c.b16 %v4034, %v4033
        %v4079 = vpack.c.b16 %v4036, %v4035
        %v4080 = vpack.c.b16 %v4038, %v4037
        %v4081 = vpack.c.b16 %v4040, %v4039
        %v4082 = vpack.c.b16 %v4042, %v4041
        %v4083 = vpack.c.b16 %v4044, %v4043
        %v4084 = vpack.c.b16 %v4046, %v4045
        %v4085 = vpack.c.b16 %v4048, %v4047
        %v4086 = vpack.c.b16 %v4050, %v4049
        %v4087 = vpack.c.b16 %v4052, %v4051
        %v4088 = vpack.c.b16 %v4054, %v4053
        %v4089 = vpack.c.b16 %v4056, %v4055
        %v4090 = vpack.c.b16 %v4058, %v4057
        %v4091 = vpack.c.b16 %v4060, %v4059
        %v4092 = vpack.c.b16 %v4062, %v4061
        %v4093 = vpack.c.b16 %v4064, %v4063
        %v4094 = vpack.c.b16 %v4066, %v4065
        %v4095 = vpack.c.b16 %v4068, %v4067
        %vm4123 = vcmask 392192
        %v4125 = vsel %vm4123, %v3957, 0
        %4127 = vmatpush.bf16.msra.mxu0 %v4076
        %4128 = vmatpush.bf16.msra.mxu0 %v4075
        %4129 = vmatpush.bf16.msra.mxu0 %v4074
        %4130 = vmatpush.bf16.msra.mxu0 %v4073
        %4131 = vmatpush.bf16.msra.mxu0 %v4072
        %4132 = vmatpush.bf16.msra.mxu0 %v4071
        %4133 = vmatpush.bf16.msra.mxu0 %v4070
        %4134 = vmatpush.bf16.msra.mxu0 %v4069
        %4135 = vmatmul.bf16.gmra.mxu0 %v3954
        %v4136 = vpop.f32.mrf.mxu0
        %v4137 = vadd.f32 %v3935, %v4136
        %v4138 = vpop.f32.mrf.mxu0
        %v4139 = vadd.f32 %v3940, %v4138
        %4140 = vdwg.mxu0
        %4141 = vmatpush.bf16.msra.mxu0 %v4084
        %4142 = vmatpush.bf16.msra.mxu0 %v4083
        %4143 = vmatpush.bf16.msra.mxu0 %v4082
        %4144 = vmatpush.bf16.msra.mxu0 %v4081
        %4145 = vmatpush.bf16.msra.mxu0 %v4080
        %4146 = vmatpush.bf16.msra.mxu0 %v4079
        %4147 = vmatpush.bf16.msra.mxu0 %v4078
        %4148 = vmatpush.bf16.msra.mxu0 %v4077
        %4149 = vmatmul.bf16.gmra.mxu0 %v3955
        %v4150 = vpop.f32.mrf.mxu0
        %v4151 = vadd.f32 %v4137, %v4150
        %v4152 = vpop.f32.mrf.mxu0
        %v4153 = vadd.f32 %v4139, %v4152
        %4154 = vdwg.mxu0
        %4155 = vmatpush.bf16.msra.mxu0 %v4092
        %4156 = vmatpush.bf16.msra.mxu0 %v4091
        %4157 = vmatpush.bf16.msra.mxu0 %v4090
        %4158 = vmatpush.bf16.msra.mxu0 %v4089
        %4159 = vmatpush.bf16.msra.mxu0 %v4088
        %4160 = vmatpush.bf16.msra.mxu0 %v4087
        %4161 = vmatpush.bf16.msra.mxu0 %v4086
        %4162 = vmatpush.bf16.msra.mxu0 %v4085
        %4163 = vmatmul.bf16.gmra.mxu0 %v3956
        %v4164 = vpop.f32.mrf.mxu0
        %v4165 = vadd.f32 %v4151, %v4164
        %v4166 = vpop.f32.mrf.mxu0
        %v4167 = vadd.f32 %v4153, %v4166
        %4168 = vdwg.mxu0
        %4169 = vmatpush.bf16.msra.mxu0 0
        %4170 = vmatpush.bf16.msra.mxu0 0
        %4171 = vmatpush.bf16.msra.mxu0 0
        %4172 = vmatpush.bf16.msra.mxu0 0
        %4173 = vmatpush.bf16.msra.mxu0 0
        %4174 = vmatpush.bf16.msra.mxu0 %v4095
        %4175 = vmatpush.bf16.msra.mxu0 %v4094
        %4176 = vmatpush.bf16.msra.mxu0 %v4093
        %4177 = vmatmul.bf16.gmra.mxu0 %v4125
        %v4178 = vpop.f32.mrf.mxu0
        %v4179 = vadd.f32 %v4165, %v4178
        %v4180 = vpop.f32.mrf.mxu0
        %v4181 = vadd.f32 %v4167, %v4180
        %4182 = vdwg.mxu0
        %v4183 = vmax.f32 %v4179, 0.0
        %v4184 = vmax.f32 %v4181, 0.0
        %v4185 = vpack.c.bf16 %v4183, %v4183
        %v4186 = vpack.c.bf16 %v4184, %v4184
        %v4189 = vunpack.c.l.b16 %v4185
        %v4190 = vunpack.c.l.b16 %v4186
        %v4191 = vpack.c.b16 %v4190, %v4189
        %4192 = vrot.lane.b32.xlu0 %v4191, 73
        %v4193 = vpop.permute.xlu0 %4192
        %4194 = vrot.lane.b32.xlu0 %v4191, 9
        %v4195 = vpop.permute.xlu0 %4194
        %v4198 = vsel %vm1988, %v4193, %v4195
        %v4200 = vunpack.c.l.bf16 %v4198
        %v4201 = vunpack.c.h.bf16 %v4198
        %v4202 = vmul.f32 %v4200, %v1998
        %v4203 = vmul.f32 %v4201, %v1998
        %v4204 = vpack.c.bf16 %v4202, %v4202
        %v4205 = vpack.c.bf16 %v4203, %v4203
        %4206 = vst.msk [vmem:[#allocation2] sm:$0xf] %vm2001, %v4204
        %4207 = vst.msk [vmem:[#allocation2 + $0x8] sm:$0xf] %vm2001, %v4205
        %4208 = vrot.lane.b32.xlu0 %v4191, 72
        %v4209 = vpop.permute.xlu0 %4208
        %4210 = vrot.lane.b32.xlu0 %v4191, 8
        %v4211 = vpop.permute.xlu0 %4210
        %v4214 = vsel %vm2007, %v4209, %v4211
        %v4216 = vunpack.c.l.bf16 %v4214
        %v4217 = vunpack.c.h.bf16 %v4214
        %v4218 = vmul.f32 %v4216, %v2017
        %v4219 = vmul.f32 %v4217, %v2017
        %v4220 = vpack.c.bf16 %v4218, %v4218
        %v4221 = vpack.c.bf16 %v4219, %v4219
        %4222 = vst.msk [vmem:[#allocation2 + $0x10] sm:$0xf] %vm2001, %v4220
        %4223 = vst.msk [vmem:[#allocation2 + $0x18] sm:$0xf] %vm2001, %v4221
        %4224 = vrot.lane.b32.xlu0 %v4191, 71
        %v4225 = vpop.permute.xlu0 %4224
        %4226 = vrot.lane.b32.xlu0 %v4191, 7
        %v4227 = vpop.permute.xlu0 %4226
        %v4230 = vsel %vm2025, %v4225, %v4227
        %v4232 = vunpack.c.l.bf16 %v4230
        %v4233 = vunpack.c.h.bf16 %v4230
        %v4234 = vmul.f32 %v4232, %v2032
        %v4235 = vmul.f32 %v4233, %v2032
        %v4236 = vpack.c.bf16 %v4234, %v4234
        %v4237 = vpack.c.bf16 %v4235, %v4235
        %4238 = vst.msk [vmem:[#allocation2 + $0x20] sm:$0xf] %vm2001, %v4236
        %4239 = vst.msk [vmem:[#allocation2 + $0x28] sm:$0xf] %vm2001, %v4237
        %4240 = vrot.lane.b32.xlu0 %v4191, 65
        %v4241 = vpop.permute.xlu0 %4240
        %4242 = vrot.lane.b32.xlu0 %v4191, 1
        %v4243 = vpop.permute.xlu0 %4242
        %v4246 = vsel %vm1363, %v4241, %v4243
        %v4248 = vunpack.c.l.bf16 %v4246
        %v4249 = vunpack.c.h.bf16 %v4246
        %v4250 = vmul.f32 %v4248, %v2046
        %v4251 = vmul.f32 %v4249, %v2046
        %v4252 = vpack.c.bf16 %v4250, %v4250
        %v4253 = vpack.c.bf16 %v4251, %v4251
        %4254 = vst.msk [vmem:[#allocation2 + $0x30] sm:$0xf] %vm2001, %v4252
        %4255 = vst.msk [vmem:[#allocation2 + $0x38] sm:$0xf] %vm2001, %v4253
        %4256 = vst.msk [vmem:[#allocation2 + $0x40] sm:$0xf] %vm2001, %v4185
        %4257 = vst.msk [vmem:[#allocation2 + $0x48] sm:$0xf] %vm2001, %v4186
        %4258 = vrot.lane.b32.xlu0 %v4191, 127
        %v4259 = vpop.permute.xlu0 %4258
        %4260 = vrot.lane.b32.xlu0 %v4191, 63
        %v4261 = vpop.permute.xlu0 %4260
        %v4264 = vsel %vm2055, %v4259, %v4261
        %v4266 = vunpack.c.l.bf16 %v4264
        %v4267 = vunpack.c.h.bf16 %v4264
        %v4268 = vmul.f32 %v4266, %v2062
        %v4269 = vmul.f32 %v4267, %v2062
        %v4270 = vpack.c.bf16 %v4268, %v4268
        %v4271 = vpack.c.bf16 %v4269, %v4269
        %4272 = vst.msk [vmem:[#allocation2 + $0x50] sm:$0xf] %vm2001, %v4270
        %4273 = vst.msk [vmem:[#allocation2 + $0x58] sm:$0xf] %vm2001, %v4271
        %4274 = vrot.lane.b32.xlu0 %v4191, 121
        %v4275 = vpop.permute.xlu0 %4274
        %4276 = vrot.lane.b32.xlu0 %v4191, 57
        %v4277 = vpop.permute.xlu0 %4276
        %v4280 = vsel %vm2070, %v4275, %v4277
        %v4282 = vunpack.c.l.bf16 %v4280
        %v4283 = vunpack.c.h.bf16 %v4280
        %v4284 = vmul.f32 %v4282, %v2077
        %v4285 = vmul.f32 %v4283, %v2077
        %v4286 = vpack.c.bf16 %v4284, %v4284
        %v4287 = vpack.c.bf16 %v4285, %v4285
        %4288 = vst.msk [vmem:[#allocation2 + $0x60] sm:$0xf] %vm2001, %v4286
        %4289 = vst.msk [vmem:[#allocation2 + $0x68] sm:$0xf] %vm2001, %v4287
        %4290 = vrot.lane.b32.xlu0 %v4191, 120
        %v4291 = vpop.permute.xlu0 %4290
        %4292 = vrot.lane.b32.xlu0 %v4191, 56
        %v4293 = vpop.permute.xlu0 %4292
        %v4296 = vsel %vm2085, %v4291, %v4293
        %v4298 = vunpack.c.l.bf16 %v4296
        %v4299 = vunpack.c.h.bf16 %v4296
        %v4300 = vmul.f32 %v4298, %v2092
        %v4301 = vmul.f32 %v4299, %v2092
        %v4302 = vpack.c.bf16 %v4300, %v4300
        %v4303 = vpack.c.bf16 %v4301, %v4301
        %4304 = vst.msk [vmem:[#allocation2 + $0x70] sm:$0xf] %vm2001, %v4302
        %4305 = vst.msk [vmem:[#allocation2 + $0x78] sm:$0xf] %vm2001, %v4303
        %4306 = vrot.lane.b32.xlu0 %v4191, 119
        %v4307 = vpop.permute.xlu0 %4306
        %4308 = vrot.lane.b32.xlu0 %v4191, 55
        %v4309 = vpop.permute.xlu0 %4308
        %v4312 = vsel %vm2100, %v4307, %v4309
        %v4314 = vunpack.c.l.bf16 %v4312
        %v4315 = vunpack.c.h.bf16 %v4312
        %v4316 = vmul.f32 %v4314, %v2110
        %v4317 = vmul.f32 %v4315, %v2110
        %v4318 = vpack.c.bf16 %v4316, %v4316
        %v4319 = vpack.c.bf16 %v4317, %v4317
        %4320 = vst.msk [vmem:[#allocation2 + $0x80] sm:$0xf] %vm2001, %v4318
        %4321 = vst.msk [vmem:[#allocation2 + $0x88] sm:$0xf] %vm2001, %v4319
        %v4322 = vld [vmem:[#allocation20] sm:$0xff]
        %v4323 = vld [vmem:[#allocation20 + $0x8] sm:$0xff]
        %v4324 = vld [vmem:[#allocation2] sm:$0xf]
        %v4325 = vld [vmem:[#allocation2 + $0x8] sm:$0xf]
        %v4326 = vld [vmem:[#allocation2 + $0x10] sm:$0xf]
        %v4327 = vld [vmem:[#allocation2 + $0x18] sm:$0xf]
        %v4328 = vld [vmem:[#allocation2 + $0x20] sm:$0xf]
        %v4329 = vld [vmem:[#allocation2 + $0x28] sm:$0xf]
        %v4330 = vld [vmem:[#allocation2 + $0x30] sm:$0xf]
        %v4331 = vld [vmem:[#allocation2 + $0x38] sm:$0xf]
        %v4332 = vld [vmem:[#allocation2 + $0x40] sm:$0xf]
        %v4333 = vld [vmem:[#allocation2 + $0x48] sm:$0xf]
        %v4334 = vld [vmem:[#allocation2 + $0x50] sm:$0xf]
        %v4335 = vld [vmem:[#allocation2 + $0x58] sm:$0xf]
        %v4336 = vld [vmem:[#allocation2 + $0x60] sm:$0xf]
        %v4337 = vld [vmem:[#allocation2 + $0x68] sm:$0xf]
        %v4338 = vld [vmem:[#allocation2 + $0x70] sm:$0xf]
        %v4339 = vld [vmem:[#allocation2 + $0x78] sm:$0xf]
        %v4340 = vld [vmem:[#allocation2 + $0x80] sm:$0xf]
        %v4341 = vld [vmem:[#allocation2 + $0x88] sm:$0xf]
        %v4342 = vld [vmem:[%s47] sm:$0xff]
        %v4343 = vld [vmem:[%s47 + $0x8] sm:$0xff]
        %4345 = vset.pattern.permute.xlu0 0
        %4346 = vperm.xlu0 %4345, %v4342
        %v4347 = vpop.permute.xlu0 %4346
        %4350 = vset.pattern.permute.xlu0 0
        %4351 = vperm.xlu0 %4350, %v4343
        %v4352 = vpop.permute.xlu0 %4351
        %v4356 = vunpack.c.l.b16 %v4322
        %v4357 = vunpack.c.h.b16 %v4322
        %v4358 = vunpack.c.l.b16 %v4323
        %v4359 = vunpack.c.h.b16 %v4323
        %v4360 = vpack.c.b16 %v4358, %v4356
        %v4361 = vpack.c.b16 %v4359, %v4357
        %v4381 = vunpack.c.l.b16 %v4324
        %v4382 = vunpack.c.l.b16 %v4325
        %v4383 = vunpack.c.l.b16 %v4326
        %v4384 = vunpack.c.l.b16 %v4327
        %v4385 = vunpack.c.l.b16 %v4328
        %v4386 = vunpack.c.l.b16 %v4329
        %v4387 = vunpack.c.l.b16 %v4330
        %v4388 = vunpack.c.l.b16 %v4331
        %v4389 = vunpack.c.l.b16 %v4332
        %v4390 = vunpack.c.l.b16 %v4333
        %v4391 = vunpack.c.l.b16 %v4334
        %v4392 = vunpack.c.l.b16 %v4335
        %v4393 = vunpack.c.l.b16 %v4336
        %v4394 = vunpack.c.l.b16 %v4337
        %v4395 = vunpack.c.l.b16 %v4338
        %v4396 = vunpack.c.l.b16 %v4339
        %v4397 = vunpack.c.l.b16 %v4340
        %v4398 = vunpack.c.l.b16 %v4341
        %v4399 = vpack.c.b16 %v4382, %v4381
        %v4400 = vpack.c.b16 %v4384, %v4383
        %v4401 = vpack.c.b16 %v4386, %v4385
        %v4402 = vpack.c.b16 %v4388, %v4387
        %v4403 = vpack.c.b16 %v4390, %v4389
        %v4404 = vpack.c.b16 %v4392, %v4391
        %v4405 = vpack.c.b16 %v4394, %v4393
        %v4406 = vpack.c.b16 %v4396, %v4395
        %v4407 = vpack.c.b16 %v4398, %v4397
        %v4418 = vsel %vm1310, %v4361, 0
        %4420 = vmatpush.bf16.msra.mxu0 %v4406
        %4421 = vmatpush.bf16.msra.mxu0 %v4405
        %4422 = vmatpush.bf16.msra.mxu0 %v4404
        %4423 = vmatpush.bf16.msra.mxu0 %v4403
        %4424 = vmatpush.bf16.msra.mxu0 %v4402
        %4425 = vmatpush.bf16.msra.mxu0 %v4401
        %4426 = vmatpush.bf16.msra.mxu0 %v4400
        %4427 = vmatpush.bf16.msra.mxu0 %v4399
        %4428 = vmatmul.bf16.gmra.mxu0 %v4360
        %v4429 = vpop.f32.mrf.mxu0
        %v4430 = vadd.f32 %v4347, %v4429
        %v4431 = vpop.f32.mrf.mxu0
        %v4432 = vadd.f32 %v4352, %v4431
        %4433 = vdwg.mxu0
        %4434 = vmatpush.bf16.msra.mxu0 0
        %4435 = vmatpush.bf16.msra.mxu0 0
        %4436 = vmatpush.bf16.msra.mxu0 0
        %4437 = vmatpush.bf16.msra.mxu0 0
        %4438 = vmatpush.bf16.msra.mxu0 0
        %4439 = vmatpush.bf16.msra.mxu0 0
        %4440 = vmatpush.bf16.msra.mxu0 0
        %4441 = vmatpush.bf16.msra.mxu0 %v4407
        %4442 = vmatmul.bf16.gmra.mxu0 %v4418
        %v4443 = vpop.f32.mrf.mxu0
        %v4444 = vadd.f32 %v4430, %v4443
        %v4445 = vpop.f32.mrf.mxu0
        %v4446 = vadd.f32 %v4432, %v4445
        %4447 = vdwg.mxu0
        %v4448 = vmax.f32 %v4444, 0.0
        %v4449 = vmax.f32 %v4446, 0.0
        %v4450 = vpack.c.bf16 %v4449, %v4448
        %v4451 = vld [vmem:[%s15] sm:$0xff]
        %v4452 = vld [vmem:[%s15 + $0x8] sm:$0xff]
        %v4453 = vld [vmem:[%s15 + $0x10] sm:$0xff]
        %v4454 = vld [vmem:[%s15 + $0x18] sm:$0xff]
        %v4455 = vld [vmem:[%s15 + $0x20] sm:$0xff]
        %v4456 = vld [vmem:[%s15 + $0x28] sm:$0xff]
        %v4457 = vld [vmem:[%s15 + $0x30] sm:$0xff]
        %v4458 = vld [vmem:[%s15 + $0x38] sm:$0xff]
        %v4467 = vunpack.c.l.b16 %v4451
        %v4468 = vunpack.c.h.b16 %v4451
        %v4469 = vunpack.c.l.b16 %v4452
        %v4470 = vunpack.c.h.b16 %v4452
        %v4471 = vunpack.c.l.b16 %v4453
        %v4472 = vunpack.c.h.b16 %v4453
        %v4473 = vunpack.c.l.b16 %v4454
        %v4474 = vunpack.c.h.b16 %v4454
        %v4475 = vunpack.c.l.b16 %v4455
        %v4476 = vunpack.c.h.b16 %v4455
        %v4477 = vunpack.c.l.b16 %v4456
        %v4478 = vunpack.c.h.b16 %v4456
        %v4479 = vunpack.c.l.b16 %v4457
        %v4480 = vunpack.c.h.b16 %v4457
        %v4481 = vunpack.c.l.b16 %v4458
        %v4482 = vunpack.c.h.b16 %v4458
        %v4483 = vpack.c.b16 %v4469, %v4467
        %v4484 = vpack.c.b16 %v4470, %v4468
        %v4485 = vpack.c.b16 %v4473, %v4471
        %v4486 = vpack.c.b16 %v4474, %v4472
        %v4487 = vpack.c.b16 %v4477, %v4475
        %v4488 = vpack.c.b16 %v4478, %v4476
        %v4489 = vpack.c.b16 %v4481, %v4479
        %v4490 = vpack.c.b16 %v4482, %v4480
        %v4500 = vsel %vm2525, %v4450, 0
        %4502 = vmatpush.bf16.msra.mxu0 0
        %4503 = vmatpush.bf16.msra.mxu0 0
        %4504 = vmatpush.bf16.msra.mxu0 0
        %4505 = vmatpush.bf16.msra.mxu0 0
        %4506 = vmatpush.bf16.msra.mxu0 %v4489
        %4507 = vmatpush.bf16.msra.mxu0 %v4487
        %4508 = vmatpush.bf16.msra.mxu0 %v4485
        %4509 = vmatpush.bf16.msra.mxu0 %v4483
        %4510 = vmatmul.bf16.gmra.mxu0 %v4500
        %v4511 = vpop.f32.mrf.mxu0
        %v4512 = vadd.f32 0.0, %v4511
        %v4513 = vpop.f32.mrf.mxu0
        %v4514 = vadd.f32 0.0, %v4513
        %4515 = vdwg.mxu0
        %4516 = vmatpush.bf16.msra.mxu0 0
        %4517 = vmatpush.bf16.msra.mxu0 0
        %4518 = vmatpush.bf16.msra.mxu0 0
        %4519 = vmatpush.bf16.msra.mxu0 0
        %4520 = vmatpush.bf16.msra.mxu0 %v4490
        %4521 = vmatpush.bf16.msra.mxu0 %v4488
        %4522 = vmatpush.bf16.msra.mxu0 %v4486
        %4523 = vmatpush.bf16.msra.mxu0 %v4484
        %4524 = vmatmul.bf16.gmra.mxu0 %v4500
        %v4525 = vpop.f32.mrf.mxu0
        %v4526 = vadd.f32 0.0, %v4525
        %v4527 = vpop.f32.mrf.mxu0
        %v4528 = vadd.f32 0.0, %v4527
        %4529 = vdwg.mxu0
        %v4530 = vpack.c.bf16 %v4526, %v4512
        %v4531 = vpack.c.bf16 %v4528, %v4514
        %v4534 = vunpack.c.h.b16 %v4530
        %v4535 = vunpack.c.h.b16 %v4531
        %v4536 = vpack.c.b16 %v4535, %v4534
        %4537 = vrot.lane.b32.xlu0 %v4536, 17
        %v4538 = vpop.permute.xlu0 %4537
        %v4539 = vunpack.c.l.b16 %v4530
        %v4540 = vunpack.c.l.b16 %v4531
        %v4541 = vpack.c.b16 %v4540, %v4539
        %4542 = vrot.lane.b32.xlu0 %v4541, 17
        %v4543 = vpop.permute.xlu0 %4542
        %v4544 = vsel %vm1274, %v4543, %v4538
        %v4548 = vsel %vm1277, %v4538, %v4543
        %v4550 = vunpack.c.l.bf16 %v4548
        %v4551 = vunpack.c.l.bf16 %v4544
        %v4552 = vunpack.c.h.bf16 %v4548
        %v4553 = vunpack.c.h.bf16 %v4544
        %v4554 = vmul.f32 %v4550, %v1297
        %v4555 = vmul.f32 %v4551, %v1298
        %v4556 = vmul.f32 %v4552, %v1297
        %v4557 = vmul.f32 %v4553, %v1298
        %v4558 = vpack.c.bf16 %v4555, %v4554
        %v4559 = vpack.c.bf16 %v4557, %v4556
        %4560 = vst [vmem:[#allocation2] sm:$0xff] %v4558
        %4561 = vst [vmem:[#allocation2 + $0x8] sm:$0xff] %v4559
        %4562 = vrot.lane.b32.xlu0 %v4536, 16
        %v4563 = vpop.permute.xlu0 %4562
        %4564 = vrot.lane.b32.xlu0 %v4541, 16
        %v4565 = vpop.permute.xlu0 %4564
        %v4566 = vsel %vm1307, %v4565, %v4563
        %v4570 = vsel %vm1310, %v4563, %v4565
        %v4572 = vunpack.c.l.bf16 %v4570
        %v4573 = vunpack.c.l.bf16 %v4566
        %v4574 = vunpack.c.h.bf16 %v4570
        %v4575 = vunpack.c.h.bf16 %v4566
        %v4576 = vmul.f32 %v4572, %v1325
        %v4577 = vmul.f32 %v4573, %v1326
        %v4578 = vmul.f32 %v4574, %v1325
        %v4579 = vmul.f32 %v4575, %v1326
        %v4580 = vpack.c.bf16 %v4577, %v4576
        %v4581 = vpack.c.bf16 %v4579, %v4578
        %4582 = vst [vmem:[#allocation2 + $0x10] sm:$0xff] %v4580
        %4583 = vst [vmem:[#allocation2 + $0x18] sm:$0xff] %v4581
        %4584 = vrot.lane.b32.xlu0 %v4536, 15
        %v4585 = vpop.permute.xlu0 %4584
        %4586 = vrot.lane.b32.xlu0 %v4541, 15
        %v4587 = vpop.permute.xlu0 %4586
        %v4588 = vsel %vm1338, %v4587, %v4585
        %v4592 = vsel %vm1341, %v4585, %v4587
        %v4594 = vunpack.c.l.bf16 %v4592
        %v4595 = vunpack.c.l.bf16 %v4588
        %v4596 = vunpack.c.h.bf16 %v4592
        %v4597 = vunpack.c.h.bf16 %v4588
        %v4598 = vmul.f32 %v4594, %v1350
        %v4599 = vmul.f32 %v4595, %v1351
        %v4600 = vmul.f32 %v4596, %v1350
        %v4601 = vmul.f32 %v4597, %v1351
        %v4602 = vpack.c.bf16 %v4599, %v4598
        %v4603 = vpack.c.bf16 %v4601, %v4600
        %4604 = vst [vmem:[#allocation2 + $0x20] sm:$0xff] %v4602
        %4605 = vst [vmem:[#allocation2 + $0x28] sm:$0xff] %v4603
        %4606 = vrot.lane.b32.xlu0 %v4536, 1
        %v4607 = vpop.permute.xlu0 %4606
        %4608 = vrot.lane.b32.xlu0 %v4541, 1
        %v4609 = vpop.permute.xlu0 %4608
        %v4610 = vsel %vm1360, %v4609, %v4607
        %v4614 = vsel %vm1363, %v4607, %v4609
        %v4616 = vunpack.c.l.bf16 %v4614
        %v4617 = vunpack.c.l.bf16 %v4610
        %v4618 = vunpack.c.h.bf16 %v4614
        %v4619 = vunpack.c.h.bf16 %v4610
        %v4620 = vmul.f32 %v4616, %v1372
        %v4621 = vmul.f32 %v4617, %v1373
        %v4622 = vmul.f32 %v4618, %v1372
        %v4623 = vmul.f32 %v4619, %v1373
        %v4624 = vpack.c.bf16 %v4621, %v4620
        %v4625 = vpack.c.bf16 %v4623, %v4622
        %4626 = vst [vmem:[#allocation2 + $0x30] sm:$0xff] %v4624
        %4627 = vst [vmem:[#allocation2 + $0x38] sm:$0xff] %v4625
        %4628 = vst [vmem:[#allocation2 + $0x40] sm:$0xff] %v4530
        %4629 = vst [vmem:[#allocation2 + $0x48] sm:$0xff] %v4531
        %4630 = vrot.lane.b32.xlu0 %v4541, 127
        %v4631 = vpop.permute.xlu0 %4630
        %4632 = vrot.lane.b32.xlu0 %v4536, 127
        %v4633 = vpop.permute.xlu0 %4632
        %v4634 = vsel %vm1386, %v4631, %v4633
        %v4638 = vsel %vm1389, %v4633, %v4631
        %v4640 = vunpack.c.l.bf16 %v4634
        %v4641 = vunpack.c.l.bf16 %v4638
        %v4642 = vunpack.c.h.bf16 %v4634
        %v4643 = vunpack.c.h.bf16 %v4638
        %v4644 = vmul.f32 %v4640, %v1398
        %v4645 = vmul.f32 %v4641, %v1399
        %v4646 = vmul.f32 %v4642, %v1398
        %v4647 = vmul.f32 %v4643, %v1399
        %v4648 = vpack.c.bf16 %v4645, %v4644
        %v4649 = vpack.c.bf16 %v4647, %v4646
        %4650 = vst [vmem:[#allocation2 + $0x50] sm:$0xff] %v4648
        %4651 = vst [vmem:[#allocation2 + $0x58] sm:$0xff] %v4649
        %4652 = vrot.lane.b32.xlu0 %v4541, 113
        %v4653 = vpop.permute.xlu0 %4652
        %4654 = vrot.lane.b32.xlu0 %v4536, 113
        %v4655 = vpop.permute.xlu0 %4654
        %v4656 = vsel %vm1411, %v4653, %v4655
        %v4660 = vsel %vm1414, %v4655, %v4653
        %v4662 = vunpack.c.l.bf16 %v4656
        %v4663 = vunpack.c.l.bf16 %v4660
        %v4664 = vunpack.c.h.bf16 %v4656
        %v4665 = vunpack.c.h.bf16 %v4660
        %v4666 = vmul.f32 %v4662, %v1423
        %v4667 = vmul.f32 %v4663, %v1424
        %v4668 = vmul.f32 %v4664, %v1423
        %v4669 = vmul.f32 %v4665, %v1424
        %v4670 = vpack.c.bf16 %v4667, %v4666
        %v4671 = vpack.c.bf16 %v4669, %v4668
        %4672 = vst [vmem:[#allocation2 + $0x60] sm:$0xff] %v4670
        %4673 = vst [vmem:[#allocation2 + $0x68] sm:$0xff] %v4671
        %4674 = vrot.lane.b32.xlu0 %v4541, 112
        %v4675 = vpop.permute.xlu0 %4674
        %4676 = vrot.lane.b32.xlu0 %v4536, 112
        %v4677 = vpop.permute.xlu0 %4676
        %v4678 = vsel %vm1433, %v4675, %v4677
        %v4682 = vsel %vm1436, %v4677, %v4675
        %v4684 = vunpack.c.l.bf16 %v4678
        %v4685 = vunpack.c.l.bf16 %v4682
        %v4686 = vunpack.c.h.bf16 %v4678
        %v4687 = vunpack.c.h.bf16 %v4682
        %v4688 = vmul.f32 %v4684, %v1445
        %v4689 = vmul.f32 %v4685, %v1446
        %v4690 = vmul.f32 %v4686, %v1445
        %v4691 = vmul.f32 %v4687, %v1446
        %v4692 = vpack.c.bf16 %v4689, %v4688
        %v4693 = vpack.c.bf16 %v4691, %v4690
        %4694 = vst [vmem:[#allocation2 + $0x70] sm:$0xff] %v4692
        %4695 = vst [vmem:[#allocation2 + $0x78] sm:$0xff] %v4693
        %4696 = vrot.lane.b32.xlu0 %v4541, 111
        %v4697 = vpop.permute.xlu0 %4696
        %4698 = vrot.lane.b32.xlu0 %v4536, 111
        %v4699 = vpop.permute.xlu0 %4698
        %v4700 = vsel %vm1458, %v4697, %v4699
        %v4704 = vsel %vm1461, %v4699, %v4697
        %v4706 = vunpack.c.l.bf16 %v4700
        %v4707 = vunpack.c.l.bf16 %v4704
        %v4708 = vunpack.c.h.bf16 %v4700
        %v4709 = vunpack.c.h.bf16 %v4704
        %v4710 = vmul.f32 %v4706, %v1481
        %v4711 = vmul.f32 %v4707, %v1482
        %v4712 = vmul.f32 %v4708, %v1481
        %v4713 = vmul.f32 %v4709, %v1482
        %v4714 = vpack.c.bf16 %v4711, %v4710
        %v4715 = vpack.c.bf16 %v4713, %v4712
        %4716 = vst [vmem:[#allocation2 + $0x80] sm:$0xff] %v4714
        %4717 = vst [vmem:[#allocation2 + $0x88] sm:$0xff] %v4715
        %v4718 = vpack.c.bf16 %v1797, %v1796
        %v4720 = vunpack.c.h.b16 %v4718
        %v4721 = vpack.c.b16 %v4720, %v4720
        %4722 = vrot.lane.b32.xlu0 %v4721, 17
        %v4723 = vpop.permute.xlu0 %4722
        %v4724 = vunpack.c.l.b16 %v4718
        %v4725 = vpack.c.b16 %v4724, %v4724
        %4726 = vrot.lane.b32.xlu0 %v4725, 17
        %v4727 = vpop.permute.xlu0 %4726
        %v4728 = vsel %vm1274, %v4727, %v4723
        %v4732 = vsel %vm1277, %v4723, %v4727
        %v4734 = vunpack.c.l.bf16 %v4732
        %v4735 = vunpack.c.l.bf16 %v4728
        %v4736 = vmul.f32 %v4734, %v1297
        %v4737 = vmul.f32 %v4735, %v1298
        %v4738 = vpack.c.bf16 %v4737, %v4736
        %4739 = vst [vmem:[#allocation2 + $0x90] sm:$0xff] %v4738
        %4740 = vrot.lane.b32.xlu0 %v4721, 16
        %v4741 = vpop.permute.xlu0 %4740
        %4742 = vrot.lane.b32.xlu0 %v4725, 16
        %v4743 = vpop.permute.xlu0 %4742
        %v4744 = vsel %vm1307, %v4743, %v4741
        %v4748 = vsel %vm1310, %v4741, %v4743
        %v4750 = vunpack.c.l.bf16 %v4748
        %v4751 = vunpack.c.l.bf16 %v4744
        %v4752 = vmul.f32 %v4750, %v1325
        %v4753 = vmul.f32 %v4751, %v1326
        %v4754 = vpack.c.bf16 %v4753, %v4752
        %4755 = vst [vmem:[#allocation2 + $0x98] sm:$0xff] %v4754
        %4756 = vrot.lane.b32.xlu0 %v4721, 15
        %v4757 = vpop.permute.xlu0 %4756
        %4758 = vrot.lane.b32.xlu0 %v4725, 15
        %v4759 = vpop.permute.xlu0 %4758
        %v4760 = vsel %vm1338, %v4759, %v4757
        %v4764 = vsel %vm1341, %v4757, %v4759
        %v4766 = vunpack.c.l.bf16 %v4764
        %v4767 = vunpack.c.l.bf16 %v4760
        %v4768 = vmul.f32 %v4766, %v1350
        %v4769 = vmul.f32 %v4767, %v1351
        %v4770 = vpack.c.bf16 %v4769, %v4768
        %4771 = vst [vmem:[#allocation2 + $0xa0] sm:$0xff] %v4770
        %4772 = vrot.lane.b32.xlu0 %v4721, 1
        %v4773 = vpop.permute.xlu0 %4772
        %4774 = vrot.lane.b32.xlu0 %v4725, 1
        %v4775 = vpop.permute.xlu0 %4774
        %v4776 = vsel %vm1360, %v4775, %v4773
        %v4780 = vsel %vm1363, %v4773, %v4775
        %v4782 = vunpack.c.l.bf16 %v4780
        %v4783 = vunpack.c.l.bf16 %v4776
        %v4784 = vmul.f32 %v4782, %v1372
        %v4785 = vmul.f32 %v4783, %v1373
        %v4786 = vpack.c.bf16 %v4785, %v4784
        %4787 = vst [vmem:[#allocation2 + $0xa8] sm:$0xff] %v4786
        %4788 = vst [vmem:[#allocation2 + $0xb0] sm:$0xff] %v4718
        %4789 = vrot.lane.b32.xlu0 %v4725, 127
        %v4790 = vpop.permute.xlu0 %4789
        %4791 = vrot.lane.b32.xlu0 %v4721, 127
        %v4792 = vpop.permute.xlu0 %4791
        %v4793 = vsel %vm1386, %v4790, %v4792
        %v4797 = vsel %vm1389, %v4792, %v4790
        %v4799 = vunpack.c.l.bf16 %v4793
        %v4800 = vunpack.c.l.bf16 %v4797
        %v4801 = vmul.f32 %v4799, %v1398
        %v4802 = vmul.f32 %v4800, %v1399
        %v4803 = vpack.c.bf16 %v4802, %v4801
        %4804 = vst [vmem:[#allocation2 + $0xb8] sm:$0xff] %v4803
        %4805 = vrot.lane.b32.xlu0 %v4725, 113
        %v4806 = vpop.permute.xlu0 %4805
        %4807 = vrot.lane.b32.xlu0 %v4721, 113
        %v4808 = vpop.permute.xlu0 %4807
        %v4809 = vsel %vm1411, %v4806, %v4808
        %v4813 = vsel %vm1414, %v4808, %v4806
        %v4815 = vunpack.c.l.bf16 %v4809
        %v4816 = vunpack.c.l.bf16 %v4813
        %v4817 = vmul.f32 %v4815, %v1423
        %v4818 = vmul.f32 %v4816, %v1424
        %v4819 = vpack.c.bf16 %v4818, %v4817
        %4820 = vst [vmem:[#allocation2 + $0xc0] sm:$0xff] %v4819
        %4821 = vrot.lane.b32.xlu0 %v4725, 112
        %v4822 = vpop.permute.xlu0 %4821
        %4823 = vrot.lane.b32.xlu0 %v4721, 112
        %v4824 = vpop.permute.xlu0 %4823
        %v4825 = vsel %vm1433, %v4822, %v4824
        %v4829 = vsel %vm1436, %v4824, %v4822
        %v4831 = vunpack.c.l.bf16 %v4825
        %v4832 = vunpack.c.l.bf16 %v4829
        %v4833 = vmul.f32 %v4831, %v1445
        %v4834 = vmul.f32 %v4832, %v1446
        %v4835 = vpack.c.bf16 %v4834, %v4833
        %4836 = vst [vmem:[#allocation2 + $0xc8] sm:$0xff] %v4835
        %4837 = vrot.lane.b32.xlu0 %v4725, 111
        %v4838 = vpop.permute.xlu0 %4837
        %4839 = vrot.lane.b32.xlu0 %v4721, 111
        %v4840 = vpop.permute.xlu0 %4839
        %v4841 = vsel %vm1458, %v4838, %v4840
        %v4845 = vsel %vm1461, %v4840, %v4838
        %v4847 = vunpack.c.l.bf16 %v4841
        %v4848 = vunpack.c.l.bf16 %v4845
        %v4849 = vmul.f32 %v4847, %v1481
        %v4850 = vmul.f32 %v4848, %v1482
        %v4851 = vpack.c.bf16 %v4850, %v4849
        %4852 = vst [vmem:[#allocation2 + $0xd0] sm:$0xff] %v4851
        %v4853 = vld [vmem:[#allocation22] sm:$0xff]
        %v4854 = vld [vmem:[#allocation2] sm:$0xff]
        %v4855 = vld [vmem:[#allocation2 + $0x8] sm:$0xff]
        %v4856 = vld [vmem:[#allocation2 + $0x10] sm:$0xff]
        %v4857 = vld [vmem:[#allocation2 + $0x18] sm:$0xff]
        %v4858 = vld [vmem:[#allocation2 + $0x20] sm:$0xff]
        %v4859 = vld [vmem:[#allocation2 + $0x28] sm:$0xff]
        %v4860 = vld [vmem:[#allocation2 + $0x30] sm:$0xff]
        %v4861 = vld [vmem:[#allocation2 + $0x38] sm:$0xff]
        %v4862 = vld [vmem:[#allocation2 + $0x40] sm:$0xff]
        %v4863 = vld [vmem:[#allocation2 + $0x48] sm:$0xff]
        %v4864 = vld [vmem:[#allocation2 + $0x50] sm:$0xff]
        %v4865 = vld [vmem:[#allocation2 + $0x58] sm:$0xff]
        %v4866 = vld [vmem:[#allocation2 + $0x60] sm:$0xff]
        %v4867 = vld [vmem:[#allocation2 + $0x68] sm:$0xff]
        %v4868 = vld [vmem:[#allocation2 + $0x70] sm:$0xff]
        %v4869 = vld [vmem:[#allocation2 + $0x78] sm:$0xff]
        %v4870 = vld [vmem:[#allocation2 + $0x80] sm:$0xff]
        %v4871 = vld [vmem:[#allocation2 + $0x88] sm:$0xff]
        %v4872 = vld [vmem:[#allocation2 + $0x90] sm:$0xff]
        %v4873 = vld [vmem:[#allocation2 + $0x98] sm:$0xff]
        %v4874 = vld [vmem:[#allocation2 + $0xa0] sm:$0xff]
        %v4875 = vld [vmem:[#allocation2 + $0xa8] sm:$0xff]
        %v4876 = vld [vmem:[#allocation2 + $0xb0] sm:$0xff]
        %v4877 = vld [vmem:[#allocation2 + $0xb8] sm:$0xff]
        %v4878 = vld [vmem:[#allocation2 + $0xc0] sm:$0xff]
        %v4879 = vld [vmem:[#allocation2 + $0xc8] sm:$0xff]
        %v4880 = vld [vmem:[#allocation2 + $0xd0] sm:$0xff]
        %v4881 = vld [vmem:[%s51] sm:$0xff]
        %4883 = vset.pattern.permute.xlu0 0
        %4884 = vperm.xlu0 %4883, %v4881
        %v4885 = vpop.permute.xlu0 %4884
        %v4888 = vunpack.c.l.b16 %v4853
        %v4889 = vunpack.c.h.b16 %v4853
        %v4890 = vpack.c.b16 %v4888, %v4888
        %v4891 = vpack.c.b16 %v4889, %v4889
        %v4920 = vunpack.c.l.b16 %v4854
        %v4921 = vunpack.c.h.b16 %v4854
        %v4922 = vunpack.c.l.b16 %v4855
        %v4923 = vunpack.c.h.b16 %v4855
        %v4924 = vunpack.c.l.b16 %v4856
        %v4925 = vunpack.c.h.b16 %v4856
        %v4926 = vunpack.c.l.b16 %v4857
        %v4927 = vunpack.c.h.b16 %v4857
        %v4928 = vunpack.c.l.b16 %v4858
        %v4929 = vunpack.c.h.b16 %v4858
        %v4930 = vunpack.c.l.b16 %v4859
        %v4931 = vunpack.c.h.b16 %v4859
        %v4932 = vunpack.c.l.b16 %v4860
        %v4933 = vunpack.c.h.b16 %v4860
        %v4934 = vunpack.c.l.b16 %v4861
        %v4935 = vunpack.c.h.b16 %v4861
        %v4936 = vunpack.c.l.b16 %v4862
        %v4937 = vunpack.c.h.b16 %v4862
        %v4938 = vunpack.c.l.b16 %v4863
        %v4939 = vunpack.c.h.b16 %v4863
        %v4940 = vunpack.c.l.b16 %v4864
        %v4941 = vunpack.c.h.b16 %v4864
        %v4942 = vunpack.c.l.b16 %v4865
        %v4943 = vunpack.c.h.b16 %v4865
        %v4944 = vunpack.c.l.b16 %v4866
        %v4945 = vunpack.c.h.b16 %v4866
        %v4946 = vunpack.c.l.b16 %v4867
        %v4947 = vunpack.c.h.b16 %v4867
        %v4948 = vunpack.c.l.b16 %v4868
        %v4949 = vunpack.c.h.b16 %v4868
        %v4950 = vunpack.c.l.b16 %v4869
        %v4951 = vunpack.c.h.b16 %v4869
        %v4952 = vunpack.c.l.b16 %v4870
        %v4953 = vunpack.c.h.b16 %v4870
        %v4954 = vunpack.c.l.b16 %v4871
        %v4955 = vunpack.c.h.b16 %v4871
        %v4956 = vunpack.c.l.b16 %v4872
        %v4957 = vunpack.c.h.b16 %v4872
        %v4958 = vunpack.c.l.b16 %v4873
        %v4959 = vunpack.c.h.b16 %v4873
        %v4960 = vunpack.c.l.b16 %v4874
        %v4961 = vunpack.c.h.b16 %v4874
        %v4962 = vunpack.c.l.b16 %v4875
        %v4963 = vunpack.c.h.b16 %v4875
        %v4964 = vunpack.c.l.b16 %v4876
        %v4965 = vunpack.c.h.b16 %v4876
        %v4966 = vunpack.c.l.b16 %v4877
        %v4967 = vunpack.c.h.b16 %v4877
        %v4968 = vunpack.c.l.b16 %v4878
        %v4969 = vunpack.c.h.b16 %v4878
        %v4970 = vunpack.c.l.b16 %v4879
        %v4971 = vunpack.c.h.b16 %v4879
        %v4972 = vunpack.c.l.b16 %v4880
        %v4973 = vunpack.c.h.b16 %v4880
        %v4974 = vpack.c.b16 %v4922, %v4920
        %v4975 = vpack.c.b16 %v4923, %v4921
        %v4976 = vpack.c.b16 %v4926, %v4924
        %v4977 = vpack.c.b16 %v4927, %v4925
        %v4978 = vpack.c.b16 %v4930, %v4928
        %v4979 = vpack.c.b16 %v4931, %v4929
        %v4980 = vpack.c.b16 %v4934, %v4932
        %v4981 = vpack.c.b16 %v4935, %v4933
        %v4982 = vpack.c.b16 %v4938, %v4936
        %v4983 = vpack.c.b16 %v4939, %v4937
        %v4984 = vpack.c.b16 %v4942, %v4940
        %v4985 = vpack.c.b16 %v4943, %v4941
        %v4986 = vpack.c.b16 %v4946, %v4944
        %v4987 = vpack.c.b16 %v4947, %v4945
        %v4988 = vpack.c.b16 %v4950, %v4948
        %v4989 = vpack.c.b16 %v4951, %v4949
        %v4990 = vpack.c.b16 %v4954, %v4952
        %v4991 = vpack.c.b16 %v4955, %v4953
        %v4992 = vpack.c.b16 %v4958, %v4956
        %v4993 = vpack.c.b16 %v4959, %v4957
        %v4994 = vpack.c.b16 %v4962, %v4960
        %v4995 = vpack.c.b16 %v4963, %v4961
        %v4996 = vpack.c.b16 %v4966, %v4964
        %v4997 = vpack.c.b16 %v4967, %v4965
        %v4998 = vpack.c.b16 %v4970, %v4968
        %v4999 = vpack.c.b16 %v4971, %v4969
        %v5000 = vpack.c.b16 %v4972, %v4972
        %v5001 = vpack.c.b16 %v4973, %v4973
        %vm5028 = vcmask 719872
        %v5030 = vsel %vm5028, %v4891, 0
        %v5033 = vsel %vm1763, %v5000, 0
        %v5036 = vsel %vm1763, %v5001, 0
        %5038 = vmatpush.bf16.msra.mxu0 %v4988
        %5039 = vmatpush.bf16.msra.mxu0 %v4986
        %5040 = vmatpush.bf16.msra.mxu0 %v4984
        %5041 = vmatpush.bf16.msra.mxu0 %v4982
        %5042 = vmatpush.bf16.msra.mxu0 %v4980
        %5043 = vmatpush.bf16.msra.mxu0 %v4978
        %5044 = vmatpush.bf16.msra.mxu0 %v4976
        %5045 = vmatpush.bf16.msra.mxu0 %v4974
        %5046 = vmatmul.bf16.gmra.mxu0 %v4890
        %v5047 = vpop.f32.mrf.mxu0
        %v5048 = vadd.f32 %v4885, %v5047
        %v5049 = vpop.f32.mrf.mxu0
        %5050 = vdwg.mxu0
        %5051 = vmatpush.bf16.msra.mxu0 0
        %5052 = vmatpush.bf16.msra.mxu0 0
        %5053 = vmatpush.bf16.msra.mxu0 %v5033
        %5054 = vmatpush.bf16.msra.mxu0 %v4998
        %5055 = vmatpush.bf16.msra.mxu0 %v4996
        %5056 = vmatpush.bf16.msra.mxu0 %v4994
        %5057 = vmatpush.bf16.msra.mxu0 %v4992
        %5058 = vmatpush.bf16.msra.mxu0 %v4990
        %5059 = vmatmul.bf16.gmra.mxu0 %v5030
        %v5060 = vpop.f32.mrf.mxu0
        %v5061 = vadd.f32 %v5048, %v5060
        %v5062 = vpop.f32.mrf.mxu0
        %5063 = vdwg.mxu0
        %5064 = vmatpush.bf16.msra.mxu0 %v4989
        %5065 = vmatpush.bf16.msra.mxu0 %v4987
        %5066 = vmatpush.bf16.msra.mxu0 %v4985
        %5067 = vmatpush.bf16.msra.mxu0 %v4983
        %5068 = vmatpush.bf16.msra.mxu0 %v4981
        %5069 = vmatpush.bf16.msra.mxu0 %v4979
        %5070 = vmatpush.bf16.msra.mxu0 %v4977
        %5071 = vmatpush.bf16.msra.mxu0 %v4975
        %5072 = vmatmul.bf16.gmra.mxu0 %v4890
        %v5073 = vpop.f32.mrf.mxu0
        %v5074 = vadd.f32 %v4885, %v5073
        %v5075 = vpop.f32.mrf.mxu0
        %5076 = vdwg.mxu0
        %5077 = vmatpush.bf16.msra.mxu0 0
        %5078 = vmatpush.bf16.msra.mxu0 0
        %5079 = vmatpush.bf16.msra.mxu0 %v5036
        %5080 = vmatpush.bf16.msra.mxu0 %v4999
        %5081 = vmatpush.bf16.msra.mxu0 %v4997
        %5082 = vmatpush.bf16.msra.mxu0 %v4995
        %5083 = vmatpush.bf16.msra.mxu0 %v4993
        %5084 = vmatpush.bf16.msra.mxu0 %v4991
        %5085 = vmatmul.bf16.gmra.mxu0 %v5030
        %v5086 = vpop.f32.mrf.mxu0
        %v5087 = vadd.f32 %v5074, %v5086
        %v5088 = vpop.f32.mrf.mxu0
        %5089 = vdwg.mxu0
        %v5090 = vmax.f32 %v5061, 0.0
        %v5091 = vmax.f32 %v5087, 0.0
        %v5092 = vpack.c.bf16 %v5091, %v5090
        %v5094 = vunpack.c.h.b16 %v5092
        %v5095 = vpack.c.b16 %v5094, %v5094
        %5096 = vrot.lane.b32.xlu0 %v5095, 17
        %v5097 = vpop.permute.xlu0 %5096
        %v5098 = vunpack.c.l.b16 %v5092
        %v5099 = vpack.c.b16 %v5098, %v5098
        %5100 = vrot.lane.b32.xlu0 %v5099, 17
        %v5101 = vpop.permute.xlu0 %5100
        %v5102 = vsel %vm1274, %v5101, %v5097
        %v5106 = vsel %vm1277, %v5097, %v5101
        %v5108 = vunpack.c.l.bf16 %v5106
        %v5109 = vunpack.c.l.bf16 %v5102
        %v5110 = vmul.f32 %v5108, %v1297
        %v5111 = vmul.f32 %v5109, %v1298
        %v5112 = vpack.c.bf16 %v5111, %v5110
        %5113 = vst [vmem:[#allocation2] sm:$0xff] %v5112
        %5114 = vrot.lane.b32.xlu0 %v5095, 16
        %v5115 = vpop.permute.xlu0 %5114
        %5116 = vrot.lane.b32.xlu0 %v5099, 16
        %v5117 = vpop.permute.xlu0 %5116
        %v5118 = vsel %vm1307, %v5117, %v5115
        %v5122 = vsel %vm1310, %v5115, %v5117
        %v5124 = vunpack.c.l.bf16 %v5122
        %v5125 = vunpack.c.l.bf16 %v5118
        %v5126 = vmul.f32 %v5124, %v1325
        %v5127 = vmul.f32 %v5125, %v1326
        %v5128 = vpack.c.bf16 %v5127, %v5126
        %5129 = vst [vmem:[#allocation2 + $0x8] sm:$0xff] %v5128
        %5130 = vrot.lane.b32.xlu0 %v5095, 15
        %v5131 = vpop.permute.xlu0 %5130
        %5132 = vrot.lane.b32.xlu0 %v5099, 15
        %v5133 = vpop.permute.xlu0 %5132
        %v5134 = vsel %vm1338, %v5133, %v5131
        %v5138 = vsel %vm1341, %v5131, %v5133
        %v5140 = vunpack.c.l.bf16 %v5138
        %v5141 = vunpack.c.l.bf16 %v5134
        %v5142 = vmul.f32 %v5140, %v1350
        %v5143 = vmul.f32 %v5141, %v1351
        %v5144 = vpack.c.bf16 %v5143, %v5142
        %5145 = vst [vmem:[#allocation2 + $0x10] sm:$0xff] %v5144
        %5146 = vrot.lane.b32.xlu0 %v5095, 1
        %v5147 = vpop.permute.xlu0 %5146
        %5148 = vrot.lane.b32.xlu0 %v5099, 1
        %v5149 = vpop.permute.xlu0 %5148
        %v5150 = vsel %vm1360, %v5149, %v5147
        %v5154 = vsel %vm1363, %v5147, %v5149
        %v5156 = vunpack.c.l.bf16 %v5154
        %v5157 = vunpack.c.l.bf16 %v5150
        %v5158 = vmul.f32 %v5156, %v1372
        %v5159 = vmul.f32 %v5157, %v1373
        %v5160 = vpack.c.bf16 %v5159, %v5158
        %5161 = vst [vmem:[#allocation2 + $0x18] sm:$0xff] %v5160
        %5162 = vst [vmem:[#allocation2 + $0x20] sm:$0xff] %v5092
        %5163 = vrot.lane.b32.xlu0 %v5099, 127
        %v5164 = vpop.permute.xlu0 %5163
        %5165 = vrot.lane.b32.xlu0 %v5095, 127
        %v5166 = vpop.permute.xlu0 %5165
        %v5167 = vsel %vm1386, %v5164, %v5166
        %v5171 = vsel %vm1389, %v5166, %v5164
        %v5173 = vunpack.c.l.bf16 %v5167
        %v5174 = vunpack.c.l.bf16 %v5171
        %v5175 = vmul.f32 %v5173, %v1398
        %v5176 = vmul.f32 %v5174, %v1399
        %v5177 = vpack.c.bf16 %v5176, %v5175
        %5178 = vst [vmem:[#allocation2 + $0x28] sm:$0xff] %v5177
        %5179 = vrot.lane.b32.xlu0 %v5099, 113
        %v5180 = vpop.permute.xlu0 %5179
        %5181 = vrot.lane.b32.xlu0 %v5095, 113
        %v5182 = vpop.permute.xlu0 %5181
        %v5183 = vsel %vm1411, %v5180, %v5182
        %v5187 = vsel %vm1414, %v5182, %v5180
        %v5189 = vunpack.c.l.bf16 %v5183
        %v5190 = vunpack.c.l.bf16 %v5187
        %v5191 = vmul.f32 %v5189, %v1423
        %v5192 = vmul.f32 %v5190, %v1424
        %v5193 = vpack.c.bf16 %v5192, %v5191
        %5194 = vst [vmem:[#allocation2 + $0x30] sm:$0xff] %v5193
        %5195 = vrot.lane.b32.xlu0 %v5099, 112
        %v5196 = vpop.permute.xlu0 %5195
        %5197 = vrot.lane.b32.xlu0 %v5095, 112
        %v5198 = vpop.permute.xlu0 %5197
        %v5199 = vsel %vm1433, %v5196, %v5198
        %v5203 = vsel %vm1436, %v5198, %v5196
        %v5205 = vunpack.c.l.bf16 %v5199
        %v5206 = vunpack.c.l.bf16 %v5203
        %v5207 = vmul.f32 %v5205, %v1445
        %v5208 = vmul.f32 %v5206, %v1446
        %v5209 = vpack.c.bf16 %v5208, %v5207
        %5210 = vst [vmem:[#allocation2 + $0x38] sm:$0xff] %v5209
        %5211 = vrot.lane.b32.xlu0 %v5099, 111
        %v5212 = vpop.permute.xlu0 %5211
        %5213 = vrot.lane.b32.xlu0 %v5095, 111
        %v5214 = vpop.permute.xlu0 %5213
        %v5215 = vsel %vm1458, %v5212, %v5214
        %v5219 = vsel %vm1461, %v5214, %v5212
        %v5221 = vunpack.c.l.bf16 %v5215
        %v5222 = vunpack.c.l.bf16 %v5219
        %v5223 = vmul.f32 %v5221, %v1481
        %v5224 = vmul.f32 %v5222, %v1482
        %v5225 = vpack.c.bf16 %v5224, %v5223
        %5226 = vst [vmem:[#allocation2 + $0x40] sm:$0xff] %v5225
        %v5227 = vld [vmem:[#allocation23] sm:$0xf]
        %v5228 = vld [vmem:[#allocation2] sm:$0xff]
        %v5229 = vld [vmem:[#allocation2 + $0x8] sm:$0xff]
        %v5230 = vld [vmem:[#allocation2 + $0x10] sm:$0xff]
        %v5231 = vld [vmem:[#allocation2 + $0x18] sm:$0xff]
        %v5232 = vld [vmem:[#allocation2 + $0x20] sm:$0xff]
        %v5233 = vld [vmem:[#allocation2 + $0x28] sm:$0xff]
        %v5234 = vld [vmem:[#allocation2 + $0x30] sm:$0xff]
        %v5235 = vld [vmem:[#allocation2 + $0x38] sm:$0xff]
        %v5236 = vld [vmem:[#allocation2 + $0x40] sm:$0xff]
        %v5237 = vld [vmem:[%s55] sm:$0xff]
        %5239 = vset.pattern.permute.xlu0 0
        %5240 = vperm.xlu0 %5239, %v5237
        %v5241 = vpop.permute.xlu0 %5240
        %v5252 = vunpack.c.l.b16 %v5228
        %v5253 = vunpack.c.h.b16 %v5228
        %v5254 = vunpack.c.l.b16 %v5229
        %v5255 = vunpack.c.h.b16 %v5229
        %v5256 = vunpack.c.l.b16 %v5230
        %v5257 = vunpack.c.h.b16 %v5230
        %v5258 = vunpack.c.l.b16 %v5231
        %v5259 = vunpack.c.h.b16 %v5231
        %v5260 = vunpack.c.l.b16 %v5232
        %v5261 = vunpack.c.h.b16 %v5232
        %v5262 = vunpack.c.l.b16 %v5233
        %v5263 = vunpack.c.h.b16 %v5233
        %v5264 = vunpack.c.l.b16 %v5234
        %v5265 = vunpack.c.h.b16 %v5234
        %v5266 = vunpack.c.l.b16 %v5235
        %v5267 = vunpack.c.h.b16 %v5235
        %v5268 = vunpack.c.l.b16 %v5236
        %v5269 = vunpack.c.h.b16 %v5236
        %v5270 = vpack.c.b16 %v5254, %v5252
        %v5271 = vpack.c.b16 %v5255, %v5253
        %v5272 = vpack.c.b16 %v5258, %v5256
        %v5273 = vpack.c.b16 %v5259, %v5257
        %v5274 = vpack.c.b16 %v5262, %v5260
        %v5275 = vpack.c.b16 %v5263, %v5261
        %v5276 = vpack.c.b16 %v5266, %v5264
        %v5277 = vpack.c.b16 %v5267, %v5265
        %v5278 = vpack.c.b16 %v5268, %v5268
        %v5279 = vpack.c.b16 %v5269, %v5269
        %v5289 = vsel %vm1759, %v5227, 0
        %v5292 = vsel %vm1763, %v5278, 0
        %v5295 = vsel %vm1763, %v5279, 0
        %5297 = vmatpush.bf16.msra.mxu0 0
        %5298 = vmatpush.bf16.msra.mxu0 0
        %5299 = vmatpush.bf16.msra.mxu0 0
        %5300 = vmatpush.bf16.msra.mxu0 %v5292
        %5301 = vmatpush.bf16.msra.mxu0 %v5276
        %5302 = vmatpush.bf16.msra.mxu0 %v5274
        %5303 = vmatpush.bf16.msra.mxu0 %v5272
        %5304 = vmatpush.bf16.msra.mxu0 %v5270
        %5305 = vmatmul.bf16.gmra.mxu0 %v5289
        %v5306 = vpop.f32.mrf.mxu0
        %v5307 = vadd.f32 %v5241, %v5306
        %v5308 = vpop.f32.mrf.mxu0
        %5309 = vdwg.mxu0
        %5310 = vmatpush.bf16.msra.mxu0 0
        %5311 = vmatpush.bf16.msra.mxu0 0
        %5312 = vmatpush.bf16.msra.mxu0 0
        %5313 = vmatpush.bf16.msra.mxu0 %v5295
        %5314 = vmatpush.bf16.msra.mxu0 %v5277
        %5315 = vmatpush.bf16.msra.mxu0 %v5275
        %5316 = vmatpush.bf16.msra.mxu0 %v5273
        %5317 = vmatpush.bf16.msra.mxu0 %v5271
        %5318 = vmatmul.bf16.gmra.mxu0 %v5289
        %v5319 = vpop.f32.mrf.mxu0
        %v5320 = vadd.f32 %v5241, %v5319
        %v5321 = vpop.f32.mrf.mxu0
        %5322 = vdwg.mxu0
        %v5323 = vmax.f32 %v5307, 0.0
        %v5324 = vmax.f32 %v5320, 0.0
        %v5325 = vld [vmem:[%s57] sm:$0x3]
        %v5326 = vpack.c.bf16 %v5323, %v5323
        %v5327 = vpack.c.bf16 %v5324, %v5324
        %v5328 = vld [vmem:[%s59] sm:$0xf]
        %5330 = vset.pattern.permute.xlu0 0
        %5331 = vperm.xlu0 %5330, %v5328
        %v5332 = vpop.permute.xlu0 %5331
        %v5335 = vsel %vm2007, %v5325, 0
        %v5338 = vsel %vm1763, %v5326, 0
        %v5341 = vsel %vm1763, %v5327, 0
        %5343 = vmatpush.bf16.msra.mxu0 0
        %5344 = vmatpush.bf16.msra.mxu0 0
        %5345 = vmatpush.bf16.msra.mxu0 0
        %5346 = vmatpush.bf16.msra.mxu0 0
        %5347 = vmatpush.bf16.msra.mxu0 0
        %5348 = vmatpush.bf16.msra.mxu0 0
        %5349 = vmatpush.bf16.msra.mxu0 0
        %5350 = vmatpush.bf16.msra.mxu0 %v5338
        %5351 = vmatmul.bf16.gmra.mxu0 %v5335
        %v5352 = vpop.f32.mrf.mxu0
        %v5353 = vadd.f32 %v5332, %v5352
        %v5354 = vpop.f32.mrf.mxu0
        %5355 = vdwg.mxu0
        %5356 = vmatpush.bf16.msra.mxu0 0
        %5357 = vmatpush.bf16.msra.mxu0 0
        %5358 = vmatpush.bf16.msra.mxu0 0
        %5359 = vmatpush.bf16.msra.mxu0 0
        %5360 = vmatpush.bf16.msra.mxu0 0
        %5361 = vmatpush.bf16.msra.mxu0 0
        %5362 = vmatpush.bf16.msra.mxu0 0
        %5363 = vmatpush.bf16.msra.mxu0 %v5341
        %5364 = vmatmul.bf16.gmra.mxu0 %v5335
        %v5365 = vpop.f32.mrf.mxu0
        %v5366 = vadd.f32 %v5332, %v5365
        %v5367 = vpop.f32.mrf.mxu0
        %5368 = vdwg.mxu0
        %v5371 = vrot.slane %v5366, 4
        %v5372 = vsel %vm1763, %v5353, %v5371
        %5374 = vst [vmem:[%s1245] sm:$0xff] %v5372
        %v5375 = vld [vmem:[%s61] sm:$0xff]
        %v5377 = vsel %vm3358, %v5375, 0
        %5379 = vmatpush.msra.mxu0 0.0
        %5380 = vmatpush.msra.mxu0 0.0
        %5381 = vmatpush.msra.mxu0 0.0
        %5382 = vmatpush.msra.mxu0 0.0
        %5383 = vmatpush.msra.mxu0 0.0
        %5384 = vmatpush.msra.mxu0 0.0
        %5385 = vmatpush.msra.mxu0 0.0
        %5386 = vmatpush.msra.mxu0 0.0
        %5387 = vmatpush.msra.mxu0 0.0
        %5388 = vmatpush.msra.mxu0 0.0
        %5389 = vmatpush.msra.mxu0 0.0
        %5390 = vmatpush.msra.mxu0 0.0
        %5391 = vmatpush.msra.mxu0 %v3425
        %5392 = vmatpush.msra.mxu0 %v3424
        %5393 = vmatpush.msra.mxu0 %v3423
        %5394 = vmatpush.msra.mxu0 %v3422
        %5395 = vmatmul.f32.gmra.mxu0 %v5377
        %v5396 = vpop.f32.mrf.mxu0
        %v5397 = vadd.f32 0.0, %v5396
        %5398 = vdwg.mxu0
        %v5399 = vsel %vm1310, %v5397, 0.0
        %5400 = vadd.xlane.f32.xlu0 %v5399
        %v5401 = vpop.xlane.xlu0 %5400
        %v5402 = vrcp.pop 16.0
        %v5403 = vmul.f32 16.0, %v5402
        %v5404 = vsub.f32 1.0, %v5403
        %v5405 = vmul.f32 %v5402, %v5404
        %v5406 = vadd.f32 %v5402, %v5405
        %vm5407 = vweird.f32 %v5402
        %v5408 = vsel %vm5407, %v5402, %v5406
        %v5409 = vmul.f32 %v5401, %v5408
        %v5410 = vld [vmem:[%s63] sm:$0xff]
        %v5411 = vadd.f32 %v5409, %v5410
        %5412 = vst.msk [vmem:[%s1249] sm:$0xff] %vm1363, %v5411
        %p5413 = scmp.lt.s32.totalorder %s87, 1
        %s5414 = scalar_select %p5413, %s87, 1
        %s5415 = smul.addr %s5414, 2
        %s5416 = smul.addr %s5415, 4
        %s5417 = scalar_lea.vmem %s65, %s5416
        %p5418 = scmp.lt.s32.totalorder %s87, 1
        %s5419 = scalar_select %p5418, %s87, 1
        %s5420 = smul.addr %s5419, 8
        %s5421 = scalar_lea.vmem %s67, %s5420
        // Predicated region
        $region205: #{unet_trainer_forward.1} parent=147 // pred_check
          %p5422 = pneg %p782
        $region206: #{unet_trainer_forward.1} parent=147 // pred_check_branch
          %5424 = sbr.rel (%p5422) target = $region208
        $region207: #{unet_trainer_forward.1} parent=147 // pred_region
          _
        $region208: #{unet_trainer_forward.1} parent=147 // pred_fallthru
          _
        // Predicated region
        $region209: #{unet_trainer_forward.1} parent=147 // pred_check
          %p5425 = pneg %p808
        $region210: #{unet_trainer_forward.1} parent=147 // pred_check_branch
          %5427 = sbr.rel (%p5425) target = $region212
        $region211: #{unet_trainer_forward.1} parent=147 // pred_region
          _
        $region212: #{unet_trainer_forward.1} parent=147 // pred_fallthru
          _
      $region148: #{unet_trainer_forward.1} parent=5 // pred_fallthru
        _
      %p5428 = scmp.le.s32.totalorder 2, %s82
      // Predicated region
      $region213: #{unet_trainer_forward.1} parent=5 // pred_check
        %p5429 = pneg %p5428
      $region214: #{unet_trainer_forward.1} parent=5 // pred_check_branch
        %5431 = sbr.rel (%p5429) target = $region216
      $region215: #{unet_trainer_forward.1} parent=5 // pred_region
        %s5432 = ssub.s32 %s82, 2
        // Predicated region
        $region217: #{unet_trainer_forward.1} parent=215 // pred_check
          %p5433 = pneg %p788
        $region218: #{unet_trainer_forward.1} parent=215 // pred_check_branch
          %5435 = sbr.rel (%p5433) target = $region220
        $region219: #{unet_trainer_forward.1} parent=215 // pred_region
          %p5436 = scmp.lt.s32.totalorder %s88, 1
          %s5437 = scalar_select %p5436, %s88, 1
          %s5438 = smul.addr %s5437, 2
          %s5439 = smul.addr %s5438, 4
          %s5440 = scalar_lea.vmem %s65, %s5439
        $region220: #{unet_trainer_forward.1} parent=215 // pred_fallthru
          _
        // Predicated region
        $region221: #{unet_trainer_forward.1} parent=215 // pred_check
          %p5441 = pneg %p814
        $region222: #{unet_trainer_forward.1} parent=215 // pred_check_branch
          %5443 = sbr.rel (%p5441) target = $region224
        $region223: #{unet_trainer_forward.1} parent=215 // pred_region
          %p5444 = scmp.lt.s32.totalorder %s88, 1
          %s5445 = scalar_select %p5444, %s88, 1
          %s5446 = smul.addr %s5445, 8
          %s5447 = scalar_lea.vmem %s67, %s5446
        $region224: #{unet_trainer_forward.1} parent=215 // pred_fallthru
          _
      $region216: #{unet_trainer_forward.1} parent=5 // pred_fallthru
        _
    $region6: #{unet_trainer_forward.1} parent=1 // loop_footer
      %s86 = sadd.s32 1, %s82
    $region7: #{unet_trainer_forward.1} parent=1 // loop_footer_branch
      %81 = sbr.rel target = $region3
    $region8: #{unet_trainer_forward.1} parent=1 // loop_exit
      _
    %5448 = vsyncpa [#allocation4], 1
    %s5449 = scalar_lea.sflag [#allocation4], 1
    %5450 = vsyncpa %s5449, 1
    %5451 = vsyncpa [#allocation6], 1
    %5452 = vsyncpa [#allocation9], 1
    %5453 = vsyncpa [#allocation12], 1
    %5454 = vsyncpa [#allocation15], 1
    %5455 = vsyncpa [#allocation18], 1
    %5456 = vsyncpa [#allocation21], 1
    %5457 = vsyncpa [#allocation24], 1

</llo_original>
